<compile_context>
chip_gen: v5e
topology: v5e:2x2
jax: 0.10.0
libtpu: 0.0.40
codegen_flags: <defaults>
</compile_context>

<pallas_src>
import functools

import jax
import jax.numpy as jnp
from jax import lax
from jax.experimental import pallas as pl
from jax.experimental.pallas import tpu as pltpu


# ----------------------------------------------------------------------------
# In-kernel helpers
# ----------------------------------------------------------------------------
def _conv3x3_accum(sources, w_ref, H, W, n_out, mxu_dtype):
    """3x3 'same' conv as 3 deep-K MXU matmuls (one per kernel row).

    sources : list of (padded_array (H+2, W+2, C), C) whose concatenation order
              must match the K ordering of w_ref[ky]
              (kx-major, channel-minor within each source, sources in list order).
    w_ref   : Ref (3, K, n_out) with K = 3 * sum(C).
    Returns f32 (H*W, n_out).
    """
    acc = jnp.zeros((H * W, n_out), jnp.float32)
    for ky in range(3):
        pieces = []
        for arr, c in sources:
            for kx in range(3):
                pieces.append(arr[ky:ky + H, kx:kx + W, :].reshape(H * W, c))
        patch = jnp.concatenate(pieces, axis=-1).astype(mxu_dtype)
        acc = acc + jnp.dot(patch, w_ref[ky], preferred_element_type=jnp.float32)
    return acc


def _cell_update(xpad, w_ref, b_ref, hpad_scr, c_scr, mxu_dtype):
    """One ConvLSTM cell step.  Updates hpad_scr (interior) and c_scr in place.

    xpad     : (H+2, W+2, Cin) f32 value (halo-padded layer input at time t)
    w_ref    : Ref (3, 3*(Cin+Ch), 4*Ch)   (mxu_dtype)
    b_ref    : Ref (1, 4*Ch)               (f32)
    hpad_scr : Ref (H+2, W+2, Ch) f32  -- zero halo, interior = h_{t-1}
    c_scr    : Ref (H*W, Ch)      f32  -- c_{t-1}
    Returns h_next as (H*W, Ch) f32.
    """
    Hp2, Wp2, Ch = hpad_scr.shape
    H, W = Hp2 - 2, Wp2 - 2
    Cin = xpad.shape[-1]

    hpad = hpad_scr[...]                                   # (H+2, W+2, Ch)
    acc = _conv3x3_accum([(xpad, Cin), (hpad, Ch)], w_ref, H, W, 4 * Ch,
                         mxu_dtype)
    acc = acc + b_ref[...]                                 # (H*W, 4Ch), f32

    # Lane-dense transcendentals over the full 4*Ch lanes, then per-gate select.
    lane = lax.broadcasted_iota(jnp.int32, acc.shape, 1)
    gates = jnp.where(lane < 3 * Ch, jax.nn.sigmoid(acc), jnp.tanh(acc))
    i = gates[:, 0 * Ch:1 * Ch]
    f = gates[:, 1 * Ch:2 * Ch]
    o = gates[:, 2 * Ch:3 * Ch]
    g = gates[:, 3 * Ch:4 * Ch]

    c_next = f * c_scr[...] + i * g
    h_next = o * jnp.tanh(c_next)

    c_scr[...] = c_next
    hpad_scr[1:H + 1, 1:W + 1, :] = h_next.reshape(H, W, Ch)
    return h_next


# ----------------------------------------------------------------------------
# Pallas kernels
# ----------------------------------------------------------------------------
def _convlstm_layer_kernel(xp_ref, w_ref, b_ref, h_out_ref,
                           hpad_scr, c_scr, *, mxu_dtype):
    """Fused-over-time ConvLSTM layer (not the last layer): emits the h stack."""
    t = pl.program_id(1)

    @pl.when(t == 0)
    def _():
        hpad_scr[...] = jnp.zeros_like(hpad_scr)
        c_scr[...] = jnp.zeros_like(c_scr)

    xpad = xp_ref[0, 0]                                    # (H+2, W+2, Cin)
    h_next = _cell_update(xpad, w_ref, b_ref, hpad_scr, c_scr, mxu_dtype)

    Hp2, Wp2, Ch = hpad_scr.shape
    H, W = Hp2 - 2, Wp2 - 2
    h_out_ref[0, 0] = h_next.reshape(H, W, Ch)


def _convlstm_last_layer_kernel(xp_ref, w_ref, b_ref, wo_ref, bo_ref, y_ref,
                                hpad_scr, c_scr, *, mxu_dtype):
    """Last ConvLSTM layer with the Conv3d(1,3,3)+ReLU head fused in."""
    t = pl.program_id(1)

    @pl.when(t == 0)
    def _():
        hpad_scr[...] = jnp.zeros_like(hpad_scr)
        c_scr[...] = jnp.zeros_like(c_scr)

    xpad = xp_ref[0, 0]
    _cell_update(xpad, w_ref, b_ref, hpad_scr, c_scr, mxu_dtype)

    Hp2, Wp2, Ch = hpad_scr.shape
    H, W = Hp2 - 2, Wp2 - 2
    Cpad = y_ref.shape[-1]

    # hpad_scr now holds h_t with a zero halo -> directly usable for the
    # per-timestep 3x3 output conv (Conv3d with kernel (1,3,3)).
    hpad_new = hpad_scr[...]
    acc = _conv3x3_accum([(hpad_new, Ch)], wo_ref, H, W, Cpad, mxu_dtype)
    acc = acc + bo_ref[...]
    y_ref[0, 0] = jnp.maximum(acc, 0.0).reshape(H, W, Cpad)


# ----------------------------------------------------------------------------
# Wrappers around pallas_call
# ----------------------------------------------------------------------------
def _cell_weight_for_kernel(w_hwio, cin, ch):
    """(3,3,cin+ch,4ch) HWIO -> (3, 3*cin + 3*ch, 4ch), per-ky kx-major K order."""
    wx = w_hwio[:, :, :cin, :].reshape(3, 3 * cin, 4 * ch)
    wh = w_hwio[:, :, cin:, :].reshape(3, 3 * ch, 4 * ch)
    return jnp.concatenate([wx, wh], axis=1)


def _run_convlstm_layer(xp, w_k, b, Ch, mxu_dtype):
    """xp: (B,T,H+2,W+2,Cin) f32, w_k: (3,3*(Cin+Ch),4Ch), b: (1,4Ch)."""
    B, T, Hp2, Wp2, Cin = xp.shape
    H, W = Hp2 - 2, Wp2 - 2
    kernel = functools.partial(_convlstm_layer_kernel, mxu_dtype=mxu_dtype)
    return pl.pallas_call(
        kernel,
        out_shape=jax.ShapeDtypeStruct((B, T, H, W, Ch), jnp.float32),
        grid=(B, T),
        in_specs=[
            pl.BlockSpec((1, 1, Hp2, Wp2, Cin), lambda b_, t_: (b_, t_, 0, 0, 0)),
            pl.BlockSpec((3, 3 * (Cin + Ch), 4 * Ch), lambda b_, t_: (0, 0, 0)),
            pl.BlockSpec((1, 4 * Ch), lambda b_, t_: (0, 0)),
        ],
        out_specs=pl.BlockSpec((1, 1, H, W, Ch),
                               lambda b_, t_: (b_, t_, 0, 0, 0)),
        scratch_shapes=[
            pltpu.VMEM((Hp2, Wp2, Ch), jnp.float32),   # haloed h state
            pltpu.VMEM((H * W, Ch), jnp.float32),      # c state
        ],
        compiler_params=pltpu.CompilerParams(
            dimension_semantics=("parallel", "arbitrary")),
    )(xp, w_k, b)


def _run_convlstm_last_layer(xp, w_k, b, wo_k, bo, Ch, Cpad, mxu_dtype):
    """Last layer + fused 3x3 output conv + ReLU.  Returns (B,T,H,W,Cpad)."""
    B, T, Hp2, Wp2, Cin = xp.shape
    H, W = Hp2 - 2, Wp2 - 2
    kernel = functools.partial(_convlstm_last_layer_kernel, mxu_dtype=mxu_dtype)
    return pl.pallas_call(
        kernel,
        out_shape=jax.ShapeDtypeStruct((B, T, H, W, Cpad), jnp.float32),
        grid=(B, T),
        in_specs=[
            pl.BlockSpec((1, 1, Hp2, Wp2, Cin), lambda b_, t_: (b_, t_, 0, 0, 0)),
            pl.BlockSpec((3, 3 * (Cin + Ch), 4 * Ch), lambda b_, t_: (0, 0, 0)),
            pl.BlockSpec((1, 4 * Ch), lambda b_, t_: (0, 0)),
            pl.BlockSpec((3, 3 * Ch, Cpad), lambda b_, t_: (0, 0, 0)),
            pl.BlockSpec((1, Cpad), lambda b_, t_: (0, 0)),
        ],
        out_specs=pl.BlockSpec((1, 1, H, W, Cpad),
                               lambda b_, t_: (b_, t_, 0, 0, 0)),
        scratch_shapes=[
            pltpu.VMEM((Hp2, Wp2, Ch), jnp.float32),
            pltpu.VMEM((H * W, Ch), jnp.float32),
        ],
        compiler_params=pltpu.CompilerParams(
            dimension_semantics=("parallel", "arbitrary")),
    )(xp, w_k, b, wo_k, bo)


def convlstm_forward(x_btchw, params, mxu_dtype=jnp.bfloat16):
    """ConvLSTM.forward (batch_first=True, return_all_layers=False) + Conv3d + ReLU.

    x_btchw: (B, T, Cin, H, W)  ->  (B, 1, T, H, W), matching PyTorch.
    """
    B, T, Cin, H, W = x_btchw.shape
    x = jnp.transpose(x_btchw, (0, 1, 3, 4, 2)).astype(jnp.float32)  # NHWC per t

    cells = params["cells"]
    num_layers = len(cells)
    w3, b3 = params["conv3d"]           # (3,3,Ch_last,Cpad), (1,Cpad)
    Cpad = w3.shape[-1]

    cur = x
    y = None
    for li, (w_cell, b_cell) in enumerate(cells):
        Ch = w_cell.shape[-1] // 4
        Cin_l = cur.shape[-1]
        # Halo-pad the whole sequence once (outside the time loop).
        xp = jnp.pad(cur, ((0, 0), (0, 0), (1, 1), (1, 1), (0, 0)))
        w_k = _cell_weight_for_kernel(w_cell, Cin_l, Ch).astype(mxu_dtype)
        if li < num_layers - 1:
            cur = _run_convlstm_layer(xp, w_k, b_cell, Ch, mxu_dtype)
        else:
            wo_k = w3.reshape(3, 3 * Ch, Cpad).astype(mxu_dtype)
            y = _run_convlstm_last_layer(xp, w_k, b_cell, wo_k, b3, Ch, Cpad,
                                         mxu_dtype)

    out = y[..., 0:1]                               # keep the true out channel
    out = jnp.transpose(out, (0, 4, 1, 2, 3))       # (B, 1, T, H, W)
    return out


# ----------------------------------------------------------------------------
# Pure-JAX reference (for correctness check only)
# ----------------------------------------------------------------------------
def _ref_cell(x, h, c, w, b):
    comb = jnp.concatenate([x, h], axis=-1)
    cc = lax.conv_general_dilated(
        comb, w, (1, 1), "SAME",
        dimension_numbers=("NHWC", "HWIO", "NHWC")) + b.reshape(1, 1, 1, -1)
    Ch = h.shape[-1]
    i = jax.nn.sigmoid(cc[..., :Ch])
    f = jax.nn.sigmoid(cc[..., Ch:2 * Ch])
    o = jax.nn.sigmoid(cc[..., 2 * Ch:3 * Ch])
    g = jnp.tanh(cc[..., 3 * Ch:])
    cn = f * c + i * g
    hn = o * jnp.tanh(cn)
    return hn, cn


def _ref_forward(x_btchw, params):
    B, T, Cin, H, W = x_btchw.shape
    x = jnp.transpose(x_btchw, (0, 1, 3, 4, 2)).astype(jnp.float32)
    cur = x
    for (w_cell, b_cell) in params["cells"]:
        Ch = w_cell.shape[-1] // 4
        h = jnp.zeros((B, H, W, Ch), jnp.float32)
        c = jnp.zeros((B, H, W, Ch), jnp.float32)
        outs = []
        for t in range(T):
            h, c = _ref_cell(cur[:, t], h, c, w_cell, b_cell)
            outs.append(h)
        cur = jnp.stack(outs, axis=1)
    w3, b3 = params["conv3d"]
    Ch = cur.shape[-1]
    xin = cur.reshape(B * T, H, W, Ch)
    y = lax.conv_general_dilated(
        xin, w3, (1, 1), "SAME",
        dimension_numbers=("NHWC", "HWIO", "NHWC")) + b3.reshape(1, 1, 1, -1)
    y = jnp.maximum(y, 0.0)
    y = y.reshape(B, T, H, W, -1)[..., 0:1]
    return jnp.transpose(y, (0, 4, 1, 2, 3))


# ----------------------------------------------------------------------------
# Parameter construction (deterministic, synthetic)
# ----------------------------------------------------------------------------
def make_params(key, input_dim, hidden_dims, cout_pad=8):
    params = {"cells": []}
    cur_in = input_dim
    for hd in hidden_dims:
        key, kw, kb = jax.random.split(key, 3)
        ctot = cur_in + hd
        w = jax.random.normal(kw, (3, 3, ctot, 4 * hd), jnp.float32) * 0.1
        b = jax.random.normal(kb, (1, 4 * hd), jnp.float32) * 0.1
        params["cells"].append((w, b))
        cur_in = hd
    # Conv3d(hidden_dims[-1] -> 1, kernel (1,3,3)): only out-channel 0 is real;
    # remaining lanes are zero padding for layout friendliness.
    key, kw, kb = jax.random.split(key, 3)
    w3_real = jax.random.normal(kw, (3, 3, hidden_dims[-1], 1), jnp.float32) * 0.1
    b3_real = jax.random.normal(kb, (1, 1), jnp.float32) * 0.1
    w3 = jnp.zeros((3, 3, hidden_dims[-1], cout_pad), jnp.float32)
    w3 = w3.at[..., 0:1].set(w3_real)
    b3 = jnp.zeros((1, cout_pad), jnp.float32).at[:, 0:1].set(b3_real)
    params["conv3d"] = (w3, b3)
    return params


# ----------------------------------------------------------------------------
if __name__ == "__main__":
    key = jax.random.PRNGKey(0)
    B, T, Cin, H, W = 2, 4, 4, 16, 16
    hidden_dims = [32, 32]          # num_layers = 2

    kx_, kp = jax.random.split(key)
    x = jax.random.normal(kx_, (B, T, Cin, H, W), jnp.float32)
    params = make_params(kp, Cin, hidden_dims)

    ref = jax.block_until_ready(_ref_forward(x, params))

    # 1) f32-MXU path: tight structural correctness check.
    fwd_f32 = jax.jit(functools.partial(convlstm_forward, mxu_dtype=jnp.float32))
    out_f32 = jax.block_until_ready(fwd_f32(x, params))
    assert out_f32.shape == (B, 1, T, H, W), out_f32.shape
    err32 = float(jnp.max(jnp.abs(out_f32 - ref)))
    if err32 > 5e-3:
        raise AssertionError(f"f32 kernel mismatch vs reference: max abs err = {err32}")

    # 2) bf16-MXU path (fast path on v6e/v7x): f32 accumulation/gating, so only
    #    small rounding error relative to the f32 reference is expected.
    fwd_bf16 = jax.jit(functools.partial(convlstm_forward, mxu_dtype=jnp.bfloat16))
    out_bf16 = jax.block_until_ready(fwd_bf16(x, params))
    assert out_bf16.shape == (B, 1, T, H, W), out_bf16.shape
    diff = jnp.abs(out_bf16 - ref)
    max_bf = float(jnp.max(diff))
    mean_bf = float(jnp.mean(diff))
    if max_bf > 0.3 or mean_bf > 2e-2:
        raise AssertionError(
            f"bf16 kernel mismatch vs reference: max={max_bf}, mean={mean_bf}")

    print("KERNEL_OK")
</pallas_src>

<mosaic_0001>
module attributes {stable_mosaic.version = 11 : i64} {
  func.func @_convlstm_layer_kernel(%arg0: i32, %arg1: i32, %arg2: memref<1x1x18x18x4xf32, #tpu.memory_space<vmem>>, %arg3: memref<3x108x128xf32, #tpu.memory_space<vmem>>, %arg4: memref<1x128xf32, #tpu.memory_space<vmem>>, %arg5: memref<1x1x16x16x32xf32, #tpu.memory_space<vmem>>, %arg6: memref<18x18x32xf32, #tpu.memory_space<vmem>>, %arg7: memref<256x32xf32, #tpu.memory_space<vmem>>) attributes {dimension_semantics = [#tpu.dimension_semantics<parallel>, #tpu.dimension_semantics<arbitrary>], iteration_bounds = array<i64: 2, 4>, scalar_prefetch = 0 : i64, scratch_operands = 2 : i64, tpu.core_type = #tpu.core_type<tc>, window_params = [{transform_indices = @transform_0, window_bounds = array<i64: 1, 1, 18, 18, 4>}, {pipeline_mode = #tpu.pipeline_mode<synchronous>, transform_indices = @transform_1, window_bounds = array<i64: 3, 108, 128>}, {pipeline_mode = #tpu.pipeline_mode<synchronous>, transform_indices = @transform_2, window_bounds = array<i64: 1, 128>}, {transform_indices = @transform_3, window_bounds = array<i64: 1, 1, 16, 16, 32>}]} {
    %c0_i32 = arith.constant 0 : i32
    %0 = arith.cmpi eq, %arg1, %c0_i32 : i32
    %1 = arith.extui %0 : i1 to i32
    %c0_i32_0 = arith.constant 0 : i32
    %2 = arith.cmpi ne, %1, %c0_i32_0 : i32
    scf.if %2 {
      %cst_33 = arith.constant 0.000000e+00 : f32
      %88 = vector.broadcast %cst_33 : f32 to vector<18x18x32xf32>
      %c0_34 = arith.constant 0 : index
      %c0_35 = arith.constant 0 : index
      %c0_36 = arith.constant 0 : index
      %89 = vector.load %arg6[%c0_34, %c0_35, %c0_36] : memref<18x18x32xf32, #tpu.memory_space<vmem>>, vector<18x18x32xf32>
      tpu.vector_store %arg6[%c0_34, %c0_35, %c0_36], %88 {strides = array<i32>} : memref<18x18x32xf32, #tpu.memory_space<vmem>>, vector<18x18x32xf32>,
      %cst_37 = arith.constant 0.000000e+00 : f32
      %90 = vector.broadcast %cst_37 : f32 to vector<256x32xf32>
      %c0_38 = arith.constant 0 : index
      %c0_39 = arith.constant 0 : index
      %91 = vector.load %arg7[%c0_38, %c0_39] : memref<256x32xf32, #tpu.memory_space<vmem>>, vector<256x32xf32>
      tpu.vector_store %arg7[%c0_38, %c0_39], %90 {strides = array<i32>} : memref<256x32xf32, #tpu.memory_space<vmem>>, vector<256x32xf32>,
    } else {
    }
    %c0 = arith.constant 0 : index
    %c0_1 = arith.constant 0 : index
    %c0_2 = arith.constant 0 : index
    %c0_3 = arith.constant 0 : index
    %c0_4 = arith.constant 0 : index
    %3 = vector.load %arg2[%c0, %c0_1, %c0_2, %c0_3, %c0_4] : memref<1x1x18x18x4xf32, #tpu.memory_space<vmem>>, vector<1x1x18x18x4xf32>
    %4 = vector.shape_cast %3 : vector<1x1x18x18x4xf32> to vector<18x18x4xf32>
    %c0_5 = arith.constant 0 : index
    %c0_6 = arith.constant 0 : index
    %c0_7 = arith.constant 0 : index
    %5 = vector.load %arg6[%c0_5, %c0_6, %c0_7] : memref<18x18x32xf32, #tpu.memory_space<vmem>>, vector<18x18x32xf32>
    %cst = arith.constant 0.000000e+00 : f32
    %6 = vector.broadcast %cst : f32 to vector<256x128xf32>
    %7 = vector.extract_strided_slice %4 {offsets = [0, 0, 0], sizes = [16, 16, 4], strides = [1, 1, 1]} : vector<18x18x4xf32> to vector<16x16x4xf32>
    %8 = vector.shape_cast %7 : vector<16x16x4xf32> to vector<256x4xf32>
    %9 = vector.extract_strided_slice %4 {offsets = [0, 1, 0], sizes = [16, 16, 4], strides = [1, 1, 1]} : vector<18x18x4xf32> to vector<16x16x4xf32>
    %10 = vector.shape_cast %9 : vector<16x16x4xf32> to vector<256x4xf32>
    %11 = vector.extract_strided_slice %4 {offsets = [0, 2, 0], sizes = [16, 16, 4], strides = [1, 1, 1]} : vector<18x18x4xf32> to vector<16x16x4xf32>
    %12 = vector.shape_cast %11 : vector<16x16x4xf32> to vector<256x4xf32>
    %13 = vector.extract_strided_slice %5 {offsets = [0, 0, 0], sizes = [16, 16, 32], strides = [1, 1, 1]} : vector<18x18x32xf32> to vector<16x16x32xf32>
    %14 = vector.shape_cast %13 : vector<16x16x32xf32> to vector<256x32xf32>
    %15 = vector.extract_strided_slice %5 {offsets = [0, 1, 0], sizes = [16, 16, 32], strides = [1, 1, 1]} : vector<18x18x32xf32> to vector<16x16x32xf32>
    %16 = vector.shape_cast %15 : vector<16x16x32xf32> to vector<256x32xf32>
    %17 = vector.extract_strided_slice %5 {offsets = [0, 2, 0], sizes = [16, 16, 32], strides = [1, 1, 1]} : vector<18x18x32xf32> to vector<16x16x32xf32>
    %18 = vector.shape_cast %17 : vector<16x16x32xf32> to vector<256x32xf32>
    %19 = tpu.concatenate %8, %10, %12, %14, %16, %18 in 1 : vector<256x4xf32>, vector<256x4xf32>, vector<256x4xf32>, vector<256x32xf32>, vector<256x32xf32>, vector<256x32xf32> -> vector<256x108xf32>
    %c0_8 = arith.constant 0 : index
    %c0_9 = arith.constant 0 : index
    %c0_10 = arith.constant 0 : index
    %20 = vector.load %arg3[%c0_8, %c0_9, %c0_10] : memref<3x108x128xf32, #tpu.memory_space<vmem>>, vector<1x108x128xf32>
    %21 = vector.shape_cast %20 : vector<1x108x128xf32> to vector<108x128xf32>
    %cst_11 = arith.constant dense<0.000000e+00> : vector<256x128xf32>
    %22 = tpu.matmul %19, %21, %cst_11 {dimension_numbers = #tpu.dot_dimension_numbers<[1], [0], [0], [1], [0, 0, 1, 1], [], []>} : vector<256x108xf32>, vector<108x128xf32>, vector<256x128xf32> -> vector<256x128xf32>
    %23 = arith.addf %6, %22 : vector<256x128xf32>
    %24 = vector.extract_strided_slice %4 {offsets = [1, 0, 0], sizes = [16, 16, 4], strides = [1, 1, 1]} : vector<18x18x4xf32> to vector<16x16x4xf32>
    %25 = vector.shape_cast %24 : vector<16x16x4xf32> to vector<256x4xf32>
    %26 = vector.extract_strided_slice %4 {offsets = [1, 1, 0], sizes = [16, 16, 4], strides = [1, 1, 1]} : vector<18x18x4xf32> to vector<16x16x4xf32>
    %27 = vector.shape_cast %26 : vector<16x16x4xf32> to vector<256x4xf32>
    %28 = vector.extract_strided_slice %4 {offsets = [1, 2, 0], sizes = [16, 16, 4], strides = [1, 1, 1]} : vector<18x18x4xf32> to vector<16x16x4xf32>
    %29 = vector.shape_cast %28 : vector<16x16x4xf32> to vector<256x4xf32>
    %30 = vector.extract_strided_slice %5 {offsets = [1, 0, 0], sizes = [16, 16, 32], strides = [1, 1, 1]} : vector<18x18x32xf32> to vector<16x16x32xf32>
    %31 = vector.shape_cast %30 : vector<16x16x32xf32> to vector<256x32xf32>
    %32 = vector.extract_strided_slice %5 {offsets = [1, 1, 0], sizes = [16, 16, 32], strides = [1, 1, 1]} : vector<18x18x32xf32> to vector<16x16x32xf32>
    %33 = vector.shape_cast %32 : vector<16x16x32xf32> to vector<256x32xf32>
    %34 = vector.extract_strided_slice %5 {offsets = [1, 2, 0], sizes = [16, 16, 32], strides = [1, 1, 1]} : vector<18x18x32xf32> to vector<16x16x32xf32>
    %35 = vector.shape_cast %34 : vector<16x16x32xf32> to vector<256x32xf32>
    %36 = tpu.concatenate %25, %27, %29, %31, %33, %35 in 1 : vector<256x4xf32>, vector<256x4xf32>, vector<256x4xf32>, vector<256x32xf32>, vector<256x32xf32>, vector<256x32xf32> -> vector<256x108xf32>
    %c1 = arith.constant 1 : index
    %c0_12 = arith.constant 0 : index
    %c0_13 = arith.constant 0 : index
    %37 = vector.load %arg3[%c1, %c0_12, %c0_13] : memref<3x108x128xf32, #tpu.memory_space<vmem>>, vector<1x108x128xf32>
    %38 = vector.shape_cast %37 : vector<1x108x128xf32> to vector<108x128xf32>
    %cst_14 = arith.constant dense<0.000000e+00> : vector<256x128xf32>
    %39 = tpu.matmul %36, %38, %cst_14 {dimension_numbers = #tpu.dot_dimension_numbers<[1], [0], [0], [1], [0, 0, 1, 1], [], []>} : vector<256x108xf32>, vector<108x128xf32>, vector<256x128xf32> -> vector<256x128xf32>
    %40 = arith.addf %23, %39 : vector<256x128xf32>
    %41 = vector.extract_strided_slice %4 {offsets = [2, 0, 0], sizes = [16, 16, 4], strides = [1, 1, 1]} : vector<18x18x4xf32> to vector<16x16x4xf32>
    %42 = vector.shape_cast %41 : vector<16x16x4xf32> to vector<256x4xf32>
    %43 = vector.extract_strided_slice %4 {offsets = [2, 1, 0], sizes = [16, 16, 4], strides = [1, 1, 1]} : vector<18x18x4xf32> to vector<16x16x4xf32>
    %44 = vector.shape_cast %43 : vector<16x16x4xf32> to vector<256x4xf32>
    %45 = vector.extract_strided_slice %4 {offsets = [2, 2, 0], sizes = [16, 16, 4], strides = [1, 1, 1]} : vector<18x18x4xf32> to vector<16x16x4xf32>
    %46 = vector.shape_cast %45 : vector<16x16x4xf32> to vector<256x4xf32>
    %47 = vector.extract_strided_slice %5 {offsets = [2, 0, 0], sizes = [16, 16, 32], strides = [1, 1, 1]} : vector<18x18x32xf32> to vector<16x16x32xf32>
    %48 = vector.shape_cast %47 : vector<16x16x32xf32> to vector<256x32xf32>
    %49 = vector.extract_strided_slice %5 {offsets = [2, 1, 0], sizes = [16, 16, 32], strides = [1, 1, 1]} : vector<18x18x32xf32> to vector<16x16x32xf32>
    %50 = vector.shape_cast %49 : vector<16x16x32xf32> to vector<256x32xf32>
    %51 = vector.extract_strided_slice %5 {offsets = [2, 2, 0], sizes = [16, 16, 32], strides = [1, 1, 1]} : vector<18x18x32xf32> to vector<16x16x32xf32>
    %52 = vector.shape_cast %51 : vector<16x16x32xf32> to vector<256x32xf32>
    %53 = tpu.concatenate %42, %44, %46, %48, %50, %52 in 1 : vector<256x4xf32>, vector<256x4xf32>, vector<256x4xf32>, vector<256x32xf32>, vector<256x32xf32>, vector<256x32xf32> -> vector<256x108xf32>
    %c2 = arith.constant 2 : index
    %c0_15 = arith.constant 0 : index
    %c0_16 = arith.constant 0 : index
    %54 = vector.load %arg3[%c2, %c0_15, %c0_16] : memref<3x108x128xf32, #tpu.memory_space<vmem>>, vector<1x108x128xf32>
    %55 = vector.shape_cast %54 : vector<1x108x128xf32> to vector<108x128xf32>
    %cst_17 = arith.constant dense<0.000000e+00> : vector<256x128xf32>
    %56 = tpu.matmul %53, %55, %cst_17 {dimension_numbers = #tpu.dot_dimension_numbers<[1], [0], [0], [1], [0, 0, 1, 1], [], []>} : vector<256x108xf32>, vector<108x128xf32>, vector<256x128xf32> -> vector<256x128xf32>
    %57 = arith.addf %40, %56 : vector<256x128xf32>
    %c0_18 = arith.constant 0 : index
    %c0_19 = arith.constant 0 : index
    %58 = vector.load %arg4[%c0_18, %c0_19] : memref<1x128xf32, #tpu.memory_space<vmem>>, vector<1x128xf32>
    %59 = vector.broadcast %58 : vector<1x128xf32> to vector<256x128xf32>
    %60 = arith.addf %57, %59 : vector<256x128xf32>
    %61 = tpu.iota {dimensions = array<i32: 1>} : vector<256x128xi32>
    %c96_i32 = arith.constant 96 : i32
    %62 = vector.broadcast %c96_i32 : i32 to vector<256x128xi32>
    %63 = arith.cmpi slt, %61, %62 : vector<256x128xi32>
    %64 = arith.negf %60 : vector<256x128xf32>
    %65 = math.exp %64 : vector<256x128xf32>
    %cst_20 = arith.constant 1.000000e+00 : f32
    %66 = vector.broadcast %cst_20 : f32 to vector<256x128xf32>
    %67 = arith.addf %66, %65 : vector<256x128xf32>
    %68 = arith.divf %66, %67 : vector<256x128xf32>
    %69 = math.tanh %60 : vector<256x128xf32>
    %70 = arith.select %63, %68, %69 : vector<256x128xi1>, vector<256x128xf32>
    %71 = vector.extract_strided_slice %70 {offsets = [0, 0], sizes = [256, 32], strides = [1, 1]} : vector<256x128xf32> to vector<256x32xf32>
    %72 = vector.extract_strided_slice %70 {offsets = [0, 32], sizes = [256, 32], strides = [1, 1]} : vector<256x128xf32> to vector<256x32xf32>
    %73 = vector.extract_strided_slice %70 {offsets = [0, 64], sizes = [256, 32], strides = [1, 1]} : vector<256x128xf32> to vector<256x32xf32>
    %74 = vector.extract_strided_slice %70 {offsets = [0, 96], sizes = [256, 32], strides = [1, 1]} : vector<256x128xf32> to vector<256x32xf32>
    %c0_21 = arith.constant 0 : index
    %c0_22 = arith.constant 0 : index
    %75 = vector.load %arg7[%c0_21, %c0_22] : memref<256x32xf32, #tpu.memory_space<vmem>>, vector<256x32xf32>
    %76 = arith.mulf %72, %75 : vector<256x32xf32>
    %77 = arith.mulf %71, %74 : vector<256x32xf32>
    %78 = arith.addf %76, %77 : vector<256x32xf32>
    %79 = math.tanh %78 : vector<256x32xf32>
    %80 = arith.mulf %73, %79 : vector<256x32xf32>
    %c0_23 = arith.constant 0 : index
    %c0_24 = arith.constant 0 : index
    %81 = vector.load %arg7[%c0_23, %c0_24] : memref<256x32xf32, #tpu.memory_space<vmem>>, vector<256x32xf32>
    tpu.vector_store %arg7[%c0_23, %c0_24], %78 {strides = array<i32>} : memref<256x32xf32, #tpu.memory_space<vmem>>, vector<256x32xf32>,
    %82 = vector.shape_cast %80 : vector<256x32xf32> to vector<16x16x32xf32>
    %c1_25 = arith.constant 1 : index
    %c1_26 = arith.constant 1 : index
    %c0_27 = arith.constant 0 : index
    %83 = vector.load %arg6[%c1_25, %c1_26, %c0_27] : memref<18x18x32xf32, #tpu.memory_space<vmem>>, vector<16x16x32xf32>
    tpu.vector_store %arg6[%c1_25, %c1_26, %c0_27], %82 {strides = array<i32>} : memref<18x18x32xf32, #tpu.memory_space<vmem>>, vector<16x16x32xf32>,
    %84 = vector.shape_cast %80 : vector<256x32xf32> to vector<16x16x32xf32>
    %c0_28 = arith.constant 0 : index
    %c0_29 = arith.constant 0 : index
    %c0_30 = arith.constant 0 : index
    %c0_31 = arith.constant 0 : index
    %c0_32 = arith.constant 0 : index
    %85 = vector.load %arg5[%c0_28, %c0_29, %c0_30, %c0_31, %c0_32] : memref<1x1x16x16x32xf32, #tpu.memory_space<vmem>>, vector<1x1x16x16x32xf32>
    %86 = vector.shape_cast %85 : vector<1x1x16x16x32xf32> to vector<16x16x32xf32>
    %87 = vector.shape_cast %84 : vector<16x16x32xf32> to vector<1x1x16x16x32xf32>
    tpu.vector_store %arg5[%c0_28, %c0_29, %c0_30, %c0_31, %c0_32], %87 {strides = array<i32>} : memref<1x1x16x16x32xf32, #tpu.memory_space<vmem>>, vector<1x1x16x16x32xf32>,
    return
  }
  func.func @transform_0(%arg0: i32, %arg1: i32) -> (i32, i32, i32, i32, i32) {
    %c0_i32 = arith.constant 0 : i32
    %c0_i32_0 = arith.constant 0 : i32
    %c0_i32_1 = arith.constant 0 : i32
    %c0_i32_2 = arith.constant 0 : i32
    return %arg0, %arg1, %c0_i32, %c0_i32_0, %c0_i32_1 : i32, i32, i32, i32, i32
  }
  func.func @transform_1(%arg0: i32, %arg1: i32) -> (i32, i32, i32) {
    %c0_i32 = arith.constant 0 : i32
    %c0_i32_0 = arith.constant 0 : i32
    %c0_i32_1 = arith.constant 0 : i32
    %c0_i32_2 = arith.constant 0 : i32
    return %c0_i32, %c0_i32_0, %c0_i32_1 : i32, i32, i32
  }
  func.func @transform_2(%arg0: i32, %arg1: i32) -> (i32, i32) {
    %c0_i32 = arith.constant 0 : i32
    %c0_i32_0 = arith.constant 0 : i32
    %c0_i32_1 = arith.constant 0 : i32
    return %c0_i32, %c0_i32_0 : i32, i32
  }
  func.func @transform_3(%arg0: i32, %arg1: i32) -> (i32, i32, i32, i32, i32) {
    %c0_i32 = arith.constant 0 : i32
    %c0_i32_0 = arith.constant 0 : i32
    %c0_i32_1 = arith.constant 0 : i32
    %c0_i32_2 = arith.constant 0 : i32
    return %arg0, %arg1, %c0_i32, %c0_i32_0, %c0_i32_1 : i32, i32, i32, i32, i32
  }
}

module attributes {stable_mosaic.version = 11 : i64} {
  func.func @_convlstm_last_layer_kernel(%arg0: i32, %arg1: i32, %arg2: memref<1x1x18x18x32xf32, #tpu.memory_space<vmem>>, %arg3: memref<3x192x128xf32, #tpu.memory_space<vmem>>, %arg4: memref<1x128xf32, #tpu.memory_space<vmem>>, %arg5: memref<3x96x8xf32, #tpu.memory_space<vmem>>, %arg6: memref<1x8xf32, #tpu.memory_space<vmem>>, %arg7: memref<1x1x16x16x8xf32, #tpu.memory_space<vmem>>, %arg8: memref<18x18x32xf32, #tpu.memory_space<vmem>>, %arg9: memref<256x32xf32, #tpu.memory_space<vmem>>) attributes {dimension_semantics = [#tpu.dimension_semantics<parallel>, #tpu.dimension_semantics<arbitrary>], iteration_bounds = array<i64: 2, 4>, scalar_prefetch = 0 : i64, scratch_operands = 2 : i64, tpu.core_type = #tpu.core_type<tc>, window_params = [{transform_indices = @transform_0, window_bounds = array<i64: 1, 1, 18, 18, 32>}, {pipeline_mode = #tpu.pipeline_mode<synchronous>, transform_indices = @transform_1, window_bounds = array<i64: 3, 192, 128>}, {pipeline_mode = #tpu.pipeline_mode<synchronous>, transform_indices = @transform_2, window_bounds = array<i64: 1, 128>}, {pipeline_mode = #tpu.pipeline_mode<synchronous>, transform_indices = @transform_3, window_bounds = array<i64: 3, 96, 8>}, {pipeline_mode = #tpu.pipeline_mode<synchronous>, transform_indices = @transform_4, window_bounds = array<i64: 1, 8>}, {transform_indices = @transform_5, window_bounds = array<i64: 1, 1, 16, 16, 8>}]} {
    %c0_i32 = arith.constant 0 : i32
    %0 = arith.cmpi eq, %arg1, %c0_i32 : i32
    %1 = arith.extui %0 : i1 to i32
    %c0_i32_0 = arith.constant 0 : i32
    %2 = arith.cmpi ne, %1, %c0_i32_0 : i32
    scf.if %2 {
      %cst_52 = arith.constant 0.000000e+00 : f32
      %128 = vector.broadcast %cst_52 : f32 to vector<18x18x32xf32>
      %c0_53 = arith.constant 0 : index
      %c0_54 = arith.constant 0 : index
      %c0_55 = arith.constant 0 : index
      %129 = vector.load %arg8[%c0_53, %c0_54, %c0_55] : memref<18x18x32xf32, #tpu.memory_space<vmem>>, vector<18x18x32xf32>
      tpu.vector_store %arg8[%c0_53, %c0_54, %c0_55], %128 {strides = array<i32>} : memref<18x18x32xf32, #tpu.memory_space<vmem>>, vector<18x18x32xf32>,
      %cst_56 = arith.constant 0.000000e+00 : f32
      %130 = vector.broadcast %cst_56 : f32 to vector<256x32xf32>
      %c0_57 = arith.constant 0 : index
      %c0_58 = arith.constant 0 : index
      %131 = vector.load %arg9[%c0_57, %c0_58] : memref<256x32xf32, #tpu.memory_space<vmem>>, vector<256x32xf32>
      tpu.vector_store %arg9[%c0_57, %c0_58], %130 {strides = array<i32>} : memref<256x32xf32, #tpu.memory_space<vmem>>, vector<256x32xf32>,
    } else {
    }
    %c0 = arith.constant 0 : index
    %c0_1 = arith.constant 0 : index
    %c0_2 = arith.constant 0 : index
    %c0_3 = arith.constant 0 : index
    %c0_4 = arith.constant 0 : index
    %3 = vector.load %arg2[%c0, %c0_1, %c0_2, %c0_3, %c0_4] : memref<1x1x18x18x32xf32, #tpu.memory_space<vmem>>, vector<1x1x18x18x32xf32>
    %4 = vector.shape_cast %3 : vector<1x1x18x18x32xf32> to vector<18x18x32xf32>
    %c0_5 = arith.constant 0 : index
    %c0_6 = arith.constant 0 : index
    %c0_7 = arith.constant 0 : index
    %5 = vector.load %arg8[%c0_5, %c0_6, %c0_7] : memref<18x18x32xf32, #tpu.memory_space<vmem>>, vector<18x18x32xf32>
    %cst = arith.constant 0.000000e+00 : f32
    %6 = vector.broadcast %cst : f32 to vector<256x128xf32>
    %7 = vector.extract_strided_slice %4 {offsets = [0, 0, 0], sizes = [16, 16, 32], strides = [1, 1, 1]} : vector<18x18x32xf32> to vector<16x16x32xf32>
    %8 = vector.shape_cast %7 : vector<16x16x32xf32> to vector<256x32xf32>
    %9 = vector.extract_strided_slice %4 {offsets = [0, 1, 0], sizes = [16, 16, 32], strides = [1, 1, 1]} : vector<18x18x32xf32> to vector<16x16x32xf32>
    %10 = vector.shape_cast %9 : vector<16x16x32xf32> to vector<256x32xf32>
    %11 = vector.extract_strided_slice %4 {offsets = [0, 2, 0], sizes = [16, 16, 32], strides = [1, 1, 1]} : vector<18x18x32xf32> to vector<16x16x32xf32>
    %12 = vector.shape_cast %11 : vector<16x16x32xf32> to vector<256x32xf32>
    %13 = vector.extract_strided_slice %5 {offsets = [0, 0, 0], sizes = [16, 16, 32], strides = [1, 1, 1]} : vector<18x18x32xf32> to vector<16x16x32xf32>
    %14 = vector.shape_cast %13 : vector<16x16x32xf32> to vector<256x32xf32>
    %15 = vector.extract_strided_slice %5 {offsets = [0, 1, 0], sizes = [16, 16, 32], strides = [1, 1, 1]} : vector<18x18x32xf32> to vector<16x16x32xf32>
    %16 = vector.shape_cast %15 : vector<16x16x32xf32> to vector<256x32xf32>
    %17 = vector.extract_strided_slice %5 {offsets = [0, 2, 0], sizes = [16, 16, 32], strides = [1, 1, 1]} : vector<18x18x32xf32> to vector<16x16x32xf32>
    %18 = vector.shape_cast %17 : vector<16x16x32xf32> to vector<256x32xf32>
    %19 = tpu.concatenate %8, %10, %12, %14, %16, %18 in 1 : vector<256x32xf32>, vector<256x32xf32>, vector<256x32xf32>, vector<256x32xf32>, vector<256x32xf32>, vector<256x32xf32> -> vector<256x192xf32>
    %c0_8 = arith.constant 0 : index
    %c0_9 = arith.constant 0 : index
    %c0_10 = arith.constant 0 : index
    %20 = vector.load %arg3[%c0_8, %c0_9, %c0_10] : memref<3x192x128xf32, #tpu.memory_space<vmem>>, vector<1x192x128xf32>
    %21 = vector.shape_cast %20 : vector<1x192x128xf32> to vector<192x128xf32>
    %cst_11 = arith.constant dense<0.000000e+00> : vector<256x128xf32>
    %22 = tpu.matmul %19, %21, %cst_11 {dimension_numbers = #tpu.dot_dimension_numbers<[1], [0], [0], [1], [0, 0, 1, 1], [], []>} : vector<256x192xf32>, vector<192x128xf32>, vector<256x128xf32> -> vector<256x128xf32>
    %23 = arith.addf %6, %22 : vector<256x128xf32>
    %24 = vector.extract_strided_slice %4 {offsets = [1, 0, 0], sizes = [16, 16, 32], strides = [1, 1, 1]} : vector<18x18x32xf32> to vector<16x16x32xf32>
    %25 = vector.shape_cast %24 : vector<16x16x32xf32> to vector<256x32xf32>
    %26 = vector.extract_strided_slice %4 {offsets = [1, 1, 0], sizes = [16, 16, 32], strides = [1, 1, 1]} : vector<18x18x32xf32> to vector<16x16x32xf32>
    %27 = vector.shape_cast %26 : vector<16x16x32xf32> to vector<256x32xf32>
    %28 = vector.extract_strided_slice %4 {offsets = [1, 2, 0], sizes = [16, 16, 32], strides = [1, 1, 1]} : vector<18x18x32xf32> to vector<16x16x32xf32>
    %29 = vector.shape_cast %28 : vector<16x16x32xf32> to vector<256x32xf32>
    %30 = vector.extract_strided_slice %5 {offsets = [1, 0, 0], sizes = [16, 16, 32], strides = [1, 1, 1]} : vector<18x18x32xf32> to vector<16x16x32xf32>
    %31 = vector.shape_cast %30 : vector<16x16x32xf32> to vector<256x32xf32>
    %32 = vector.extract_strided_slice %5 {offsets = [1, 1, 0], sizes = [16, 16, 32], strides = [1, 1, 1]} : vector<18x18x32xf32> to vector<16x16x32xf32>
    %33 = vector.shape_cast %32 : vector<16x16x32xf32> to vector<256x32xf32>
    %34 = vector.extract_strided_slice %5 {offsets = [1, 2, 0], sizes = [16, 16, 32], strides = [1, 1, 1]} : vector<18x18x32xf32> to vector<16x16x32xf32>
    %35 = vector.shape_cast %34 : vector<16x16x32xf32> to vector<256x32xf32>
    %36 = tpu.concatenate %25, %27, %29, %31, %33, %35 in 1 : vector<256x32xf32>, vector<256x32xf32>, vector<256x32xf32>, vector<256x32xf32>, vector<256x32xf32>, vector<256x32xf32> -> vector<256x192xf32>
    %c1 = arith.constant 1 : index
    %c0_12 = arith.constant 0 : index
    %c0_13 = arith.constant 0 : index
    %37 = vector.load %arg3[%c1, %c0_12, %c0_13] : memref<3x192x128xf32, #tpu.memory_space<vmem>>, vector<1x192x128xf32>
    %38 = vector.shape_cast %37 : vector<1x192x128xf32> to vector<192x128xf32>
    %cst_14 = arith.constant dense<0.000000e+00> : vector<256x128xf32>
    %39 = tpu.matmul %36, %38, %cst_14 {dimension_numbers = #tpu.dot_dimension_numbers<[1], [0], [0], [1], [0, 0, 1, 1], [], []>} : vector<256x192xf32>, vector<192x128xf32>, vector<256x128xf32> -> vector<256x128xf32>
    %40 = arith.addf %23, %39 : vector<256x128xf32>
    %41 = vector.extract_strided_slice %4 {offsets = [2, 0, 0], sizes = [16, 16, 32], strides = [1, 1, 1]} : vector<18x18x32xf32> to vector<16x16x32xf32>
    %42 = vector.shape_cast %41 : vector<16x16x32xf32> to vector<256x32xf32>
    %43 = vector.extract_strided_slice %4 {offsets = [2, 1, 0], sizes = [16, 16, 32], strides = [1, 1, 1]} : vector<18x18x32xf32> to vector<16x16x32xf32>
    %44 = vector.shape_cast %43 : vector<16x16x32xf32> to vector<256x32xf32>
    %45 = vector.extract_strided_slice %4 {offsets = [2, 2, 0], sizes = [16, 16, 32], strides = [1, 1, 1]} : vector<18x18x32xf32> to vector<16x16x32xf32>
    %46 = vector.shape_cast %45 : vector<16x16x32xf32> to vector<256x32xf32>
    %47 = vector.extract_strided_slice %5 {offsets = [2, 0, 0], sizes = [16, 16, 32], strides = [1, 1, 1]} : vector<18x18x32xf32> to vector<16x16x32xf32>
    %48 = vector.shape_cast %47 : vector<16x16x32xf32> to vector<256x32xf32>
    %49 = vector.extract_strided_slice %5 {offsets = [2, 1, 0], sizes = [16, 16, 32], strides = [1, 1, 1]} : vector<18x18x32xf32> to vector<16x16x32xf32>
    %50 = vector.shape_cast %49 : vector<16x16x32xf32> to vector<256x32xf32>
    %51 = vector.extract_strided_slice %5 {offsets = [2, 2, 0], sizes = [16, 16, 32], strides = [1, 1, 1]} : vector<18x18x32xf32> to vector<16x16x32xf32>
    %52 = vector.shape_cast %51 : vector<16x16x32xf32> to vector<256x32xf32>
    %53 = tpu.concatenate %42, %44, %46, %48, %50, %52 in 1 : vector<256x32xf32>, vector<256x32xf32>, vector<256x32xf32>, vector<256x32xf32>, vector<256x32xf32>, vector<256x32xf32> -> vector<256x192xf32>
    %c2 = arith.constant 2 : index
    %c0_15 = arith.constant 0 : index
    %c0_16 = arith.constant 0 : index
    %54 = vector.load %arg3[%c2, %c0_15, %c0_16] : memref<3x192x128xf32, #tpu.memory_space<vmem>>, vector<1x192x128xf32>
    %55 = vector.shape_cast %54 : vector<1x192x128xf32> to vector<192x128xf32>
    %cst_17 = arith.constant dense<0.000000e+00> : vector<256x128xf32>
    %56 = tpu.matmul %53, %55, %cst_17 {dimension_numbers = #tpu.dot_dimension_numbers<[1], [0], [0], [1], [0, 0, 1, 1], [], []>} : vector<256x192xf32>, vector<192x128xf32>, vector<256x128xf32> -> vector<256x128xf32>
    %57 = arith.addf %40, %56 : vector<256x128xf32>
    %c0_18 = arith.constant 0 : index
    %c0_19 = arith.constant 0 : index
    %58 = vector.load %arg4[%c0_18, %c0_19] : memref<1x128xf32, #tpu.memory_space<vmem>>, vector<1x128xf32>
    %59 = vector.broadcast %58 : vector<1x128xf32> to vector<256x128xf32>
    %60 = arith.addf %57, %59 : vector<256x128xf32>
    %61 = tpu.iota {dimensions = array<i32: 1>} : vector<256x128xi32>
    %c96_i32 = arith.constant 96 : i32
    %62 = vector.broadcast %c96_i32 : i32 to vector<256x128xi32>
    %63 = arith.cmpi slt, %61, %62 : vector<256x128xi32>
    %64 = arith.negf %60 : vector<256x128xf32>
    %65 = math.exp %64 : vector<256x128xf32>
    %cst_20 = arith.constant 1.000000e+00 : f32
    %66 = vector.broadcast %cst_20 : f32 to vector<256x128xf32>
    %67 = arith.addf %66, %65 : vector<256x128xf32>
    %68 = arith.divf %66, %67 : vector<256x128xf32>
    %69 = math.tanh %60 : vector<256x128xf32>
    %70 = arith.select %63, %68, %69 : vector<256x128xi1>, vector<256x128xf32>
    %71 = vector.extract_strided_slice %70 {offsets = [0, 0], sizes = [256, 32], strides = [1, 1]} : vector<256x128xf32> to vector<256x32xf32>
    %72 = vector.extract_strided_slice %70 {offsets = [0, 32], sizes = [256, 32], strides = [1, 1]} : vector<256x128xf32> to vector<256x32xf32>
    %73 = vector.extract_strided_slice %70 {offsets = [0, 64], sizes = [256, 32], strides = [1, 1]} : vector<256x128xf32> to vector<256x32xf32>
    %74 = vector.extract_strided_slice %70 {offsets = [0, 96], sizes = [256, 32], strides = [1, 1]} : vector<256x128xf32> to vector<256x32xf32>
    %c0_21 = arith.constant 0 : index
    %c0_22 = arith.constant 0 : index
    %75 = vector.load %arg9[%c0_21, %c0_22] : memref<256x32xf32, #tpu.memory_space<vmem>>, vector<256x32xf32>
    %76 = arith.mulf %72, %75 : vector<256x32xf32>
    %77 = arith.mulf %71, %74 : vector<256x32xf32>
    %78 = arith.addf %76, %77 : vector<256x32xf32>
    %79 = math.tanh %78 : vector<256x32xf32>
    %80 = arith.mulf %73, %79 : vector<256x32xf32>
    %c0_23 = arith.constant 0 : index
    %c0_24 = arith.constant 0 : index
    %81 = vector.load %arg9[%c0_23, %c0_24] : memref<256x32xf32, #tpu.memory_space<vmem>>, vector<256x32xf32>
    tpu.vector_store %arg9[%c0_23, %c0_24], %78 {strides = array<i32>} : memref<256x32xf32, #tpu.memory_space<vmem>>, vector<256x32xf32>,
    %82 = vector.shape_cast %80 : vector<256x32xf32> to vector<16x16x32xf32>
    %c1_25 = arith.constant 1 : index
    %c1_26 = arith.constant 1 : index
    %c0_27 = arith.constant 0 : index
    %83 = vector.load %arg8[%c1_25, %c1_26, %c0_27] : memref<18x18x32xf32, #tpu.memory_space<vmem>>, vector<16x16x32xf32>
    tpu.vector_store %arg8[%c1_25, %c1_26, %c0_27], %82 {strides = array<i32>} : memref<18x18x32xf32, #tpu.memory_space<vmem>>, vector<16x16x32xf32>,
    %c0_28 = arith.constant 0 : index
    %c0_29 = arith.constant 0 : index
    %c0_30 = arith.constant 0 : index
    %84 = vector.load %arg8[%c0_28, %c0_29, %c0_30] : memref<18x18x32xf32, #tpu.memory_space<vmem>>, vector<18x18x32xf32>
    %cst_31 = arith.constant 0.000000e+00 : f32
    %85 = vector.broadcast %cst_31 : f32 to vector<256x8xf32>
    %86 = vector.extract_strided_slice %84 {offsets = [0, 0, 0], sizes = [16, 16, 32], strides = [1, 1, 1]} : vector<18x18x32xf32> to vector<16x16x32xf32>
    %87 = vector.shape_cast %86 : vector<16x16x32xf32> to vector<256x32xf32>
    %88 = vector.extract_strided_slice %84 {offsets = [0, 1, 0], sizes = [16, 16, 32], strides = [1, 1, 1]} : vector<18x18x32xf32> to vector<16x16x32xf32>
    %89 = vector.shape_cast %88 : vector<16x16x32xf32> to vector<256x32xf32>
    %90 = vector.extract_strided_slice %84 {offsets = [0, 2, 0], sizes = [16, 16, 32], strides = [1, 1, 1]} : vector<18x18x32xf32> to vector<16x16x32xf32>
    %91 = vector.shape_cast %90 : vector<16x16x32xf32> to vector<256x32xf32>
    %92 = tpu.concatenate %87, %89, %91 in 1 : vector<256x32xf32>, vector<256x32xf32>, vector<256x32xf32> -> vector<256x96xf32>
    %c0_32 = arith.constant 0 : index
    %c0_33 = arith.constant 0 : index
    %c0_34 = arith.constant 0 : index
    %93 = vector.load %arg5[%c0_32, %c0_33, %c0_34] : memref<3x96x8xf32, #tpu.memory_space<vmem>>, vector<1x96x8xf32>
    %94 = vector.shape_cast %93 : vector<1x96x8xf32> to vector<96x8xf32>
    %cst_35 = arith.constant dense<0.000000e+00> : vector<256x8xf32>
    %95 = tpu.matmul %92, %94, %cst_35 {dimension_numbers = #tpu.dot_dimension_numbers<[1], [0], [0], [1], [0, 0, 1, 1], [], []>} : vector<256x96xf32>, vector<96x8xf32>, vector<256x8xf32> -> vector<256x8xf32>
    %96 = arith.addf %85, %95 : vector<256x8xf32>
    %97 = vector.extract_strided_slice %84 {offsets = [1, 0, 0], sizes = [16, 16, 32], strides = [1, 1, 1]} : vector<18x18x32xf32> to vector<16x16x32xf32>
    %98 = vector.shape_cast %97 : vector<16x16x32xf32> to vector<256x32xf32>
    %99 = vector.extract_strided_slice %84 {offsets = [1, 1, 0], sizes = [16, 16, 32], strides = [1, 1, 1]} : vector<18x18x32xf32> to vector<16x16x32xf32>
    %100 = vector.shape_cast %99 : vector<16x16x32xf32> to vector<256x32xf32>
    %101 = vector.extract_strided_slice %84 {offsets = [1, 2, 0], sizes = [16, 16, 32], strides = [1, 1, 1]} : vector<18x18x32xf32> to vector<16x16x32xf32>
    %102 = vector.shape_cast %101 : vector<16x16x32xf32> to vector<256x32xf32>
    %103 = tpu.concatenate %98, %100, %102 in 1 : vector<256x32xf32>, vector<256x32xf32>, vector<256x32xf32> -> vector<256x96xf32>
    %c1_36 = arith.constant 1 : index
    %c0_37 = arith.constant 0 : index
    %c0_38 = arith.constant 0 : index
    %104 = vector.load %arg5[%c1_36, %c0_37, %c0_38] : memref<3x96x8xf32, #tpu.memory_space<vmem>>, vector<1x96x8xf32>
    %105 = vector.shape_cast %104 : vector<1x96x8xf32> to vector<96x8xf32>
    %cst_39 = arith.constant dense<0.000000e+00> : vector<256x8xf32>
    %106 = tpu.matmul %103, %105, %cst_39 {dimension_numbers = #tpu.dot_dimension_numbers<[1], [0], [0], [1], [0, 0, 1, 1], [], []>} : vector<256x96xf32>, vector<96x8xf32>, vector<256x8xf32> -> vector<256x8xf32>
    %107 = arith.addf %96, %106 : vector<256x8xf32>
    %108 = vector.extract_strided_slice %84 {offsets = [2, 0, 0], sizes = [16, 16, 32], strides = [1, 1, 1]} : vector<18x18x32xf32> to vector<16x16x32xf32>
    %109 = vector.shape_cast %108 : vector<16x16x32xf32> to vector<256x32xf32>
    %110 = vector.extract_strided_slice %84 {offsets = [2, 1, 0], sizes = [16, 16, 32], strides = [1, 1, 1]} : vector<18x18x32xf32> to vector<16x16x32xf32>
    %111 = vector.shape_cast %110 : vector<16x16x32xf32> to vector<256x32xf32>
    %112 = vector.extract_strided_slice %84 {offsets = [2, 2, 0], sizes = [16, 16, 32], strides = [1, 1, 1]} : vector<18x18x32xf32> to vector<16x16x32xf32>
    %113 = vector.shape_cast %112 : vector<16x16x32xf32> to vector<256x32xf32>
    %114 = tpu.concatenate %109, %111, %113 in 1 : vector<256x32xf32>, vector<256x32xf32>, vector<256x32xf32> -> vector<256x96xf32>
    %c2_40 = arith.constant 2 : index
    %c0_41 = arith.constant 0 : index
    %c0_42 = arith.constant 0 : index
    %115 = vector.load %arg5[%c2_40, %c0_41, %c0_42] : memref<3x96x8xf32, #tpu.memory_space<vmem>>, vector<1x96x8xf32>
    %116 = vector.shape_cast %115 : vector<1x96x8xf32> to vector<96x8xf32>
    %cst_43 = arith.constant dense<0.000000e+00> : vector<256x8xf32>
    %117 = tpu.matmul %114, %116, %cst_43 {dimension_numbers = #tpu.dot_dimension_numbers<[1], [0], [0], [1], [0, 0, 1, 1], [], []>} : vector<256x96xf32>, vector<96x8xf32>, vector<256x8xf32> -> vector<256x8xf32>
    %118 = arith.addf %107, %117 : vector<256x8xf32>
    %c0_44 = arith.constant 0 : index
    %c0_45 = arith.constant 0 : index
    %119 = vector.load %arg6[%c0_44, %c0_45] : memref<1x8xf32, #tpu.memory_space<vmem>>, vector<1x8xf32>
    %120 = vector.broadcast %119 : vector<1x8xf32> to vector<256x8xf32>
    %121 = arith.addf %118, %120 : vector<256x8xf32>
    %cst_46 = arith.constant 0.000000e+00 : f32
    %122 = vector.broadcast %cst_46 : f32 to vector<256x8xf32>
    %123 = arith.maximumf %121, %122 : vector<256x8xf32>
    %124 = vector.shape_cast %123 : vector<256x8xf32> to vector<16x16x8xf32>
    %c0_47 = arith.constant 0 : index
    %c0_48 = arith.constant 0 : index
    %c0_49 = arith.constant 0 : index
    %c0_50 = arith.constant 0 : index
    %c0_51 = arith.constant 0 : index
    %125 = vector.load %arg7[%c0_47, %c0_48, %c0_49, %c0_50, %c0_51] : memref<1x1x16x16x8xf32, #tpu.memory_space<vmem>>, vector<1x1x16x16x8xf32>
    %126 = vector.shape_cast %125 : vector<1x1x16x16x8xf32> to vector<16x16x8xf32>
    %127 = vector.shape_cast %124 : vector<16x16x8xf32> to vector<1x1x16x16x8xf32>
    tpu.vector_store %arg7[%c0_47, %c0_48, %c0_49, %c0_50, %c0_51], %127 {strides = array<i32>} : memref<1x1x16x16x8xf32, #tpu.memory_space<vmem>>, vector<1x1x16x16x8xf32>,
    return
  }
  func.func @transform_0(%arg0: i32, %arg1: i32) -> (i32, i32, i32, i32, i32) {
    %c0_i32 = arith.constant 0 : i32
    %c0_i32_0 = arith.constant 0 : i32
    %c0_i32_1 = arith.constant 0 : i32
    %c0_i32_2 = arith.constant 0 : i32
    return %arg0, %arg1, %c0_i32, %c0_i32_0, %c0_i32_1 : i32, i32, i32, i32, i32
  }
  func.func @transform_1(%arg0: i32, %arg1: i32) -> (i32, i32, i32) {
    %c0_i32 = arith.constant 0 : i32
    %c0_i32_0 = arith.constant 0 : i32
    %c0_i32_1 = arith.constant 0 : i32
    %c0_i32_2 = arith.constant 0 : i32
    return %c0_i32, %c0_i32_0, %c0_i32_1 : i32, i32, i32
  }
  func.func @transform_2(%arg0: i32, %arg1: i32) -> (i32, i32) {
    %c0_i32 = arith.constant 0 : i32
    %c0_i32_0 = arith.constant 0 : i32
    %c0_i32_1 = arith.constant 0 : i32
    return %c0_i32, %c0_i32_0 : i32, i32
  }
  func.func @transform_3(%arg0: i32, %arg1: i32) -> (i32, i32, i32) {
    %c0_i32 = arith.constant 0 : i32
    %c0_i32_0 = arith.constant 0 : i32
    %c0_i32_1 = arith.constant 0 : i32
    %c0_i32_2 = arith.constant 0 : i32
    return %c0_i32, %c0_i32_0, %c0_i32_1 : i32, i32, i32
  }
  func.func @transform_4(%arg0: i32, %arg1: i32) -> (i32, i32) {
    %c0_i32 = arith.constant 0 : i32
    %c0_i32_0 = arith.constant 0 : i32
    %c0_i32_1 = arith.constant 0 : i32
    return %c0_i32, %c0_i32_0 : i32, i32
  }
  func.func @transform_5(%arg0: i32, %arg1: i32) -> (i32, i32, i32, i32, i32) {
    %c0_i32 = arith.constant 0 : i32
    %c0_i32_0 = arith.constant 0 : i32
    %c0_i32_1 = arith.constant 0 : i32
    %c0_i32_2 = arith.constant 0 : i32
    return %arg0, %arg1, %c0_i32, %c0_i32_0, %c0_i32_1 : i32, i32, i32, i32, i32
  }
}

</mosaic_0001>

<llo_original>
// kernel: convlstm_forward.2
$region0: #{convlstm_forward.2}
  #allocation0 [shape = 'u32[]', space=smem, size = 0x4, offset = 0x4, fixed_abs, tag = 'smem constant byte address 0x4 - core index']
  #allocation1 [shape = 'u32[72,128]{1,0:T(1,128)}', space=vmem, size = 0x9000, scoped, tag = 'internal scratch']
  #allocation2 [shape = 'f32[18,18,32]{2,1,0:T(8,128)}', space=vmem, size = 0x36000, scoped, tag = 'scratch operand']
  #allocation3 [shape = 'f32[256,32]{1,0:T(8,128)}', space=vmem, size = 0x20000, scoped, tag = 'scratch operand']
  %s0 = inlined_call_operand.vmem [shape: f32[2,4,18,18,4], index: 0, kind: input, shape index: {}]
  %s1 = inlined_call_operand.vmem [shape: f32[3,108,128], index: 1, kind: input, shape index: {}]
  %s2 = inlined_call_operand.vmem [shape: f32[1,128], index: 2, kind: input, shape index: {}]
  %s3 = inlined_call_operand.vmem [shape: f32[2,4,16,16,32], index: 3, kind: output, shape index: {}]
  %s4 = sld [smem:[#allocation0]]
  $region49: #{convlstm_forward.2} parent=0
    _
  %s6 = ssub.s32 1, %s4
  %s7 = scalar_select 0, %s6, %s4
  loop: start=0, step=1, limit=10
  $region2: #{convlstm_forward.2} parent=0 // loop_pre_header
    _
  $region3: #{convlstm_forward.2} parent=0 // loop_header
    %s9 = sphi 0, %s13
    %p10 = scmp.ge.s32.totalorder %s9, 10
    %s16 = sphi 0, %s28
    %s17 = sphi 0, %s24
    %s18 = sphi 0, %s16
    %s19 = sphi 0, %s17
    %s20 = sphi 0, %s18
    %s21 = sphi 0, %s19
    %s33 = sphi 0, %s35
    %s36 = sphi 0, %s33
    %s37 = sphi 0, %s36
    %s53 = sphi 0, %s37
    %s57 = sphi 0, %s57
    %s59 = sphi 0, %s57
    %s60 = sphi 0, %s59
    %s74 = sphi 0, %s60
    %s78 = sphi 0, %s78
    %s80 = sphi 0, %s78
    %s81 = sphi 0, %s80
    %s95 = sphi 0, %s81
    %s103 = sphi 0, %s105
    %s106 = sphi 0, %s103
    %s107 = sphi 0, %s106
    %s123 = sphi 0, %s107
  $region4: #{convlstm_forward.2} parent=0 // loop_header_branch
    %12 = sbr.rel (%p10) target = $region8
  $region5: #{convlstm_forward.2} parent=0 // loop_body
    %s14 = ssub.s32 %s9, 1
    %s15 = ssub.s32 %s9, 2
    %s22 = sadd.s32 1, %s17
    %p23 = scmp.ge.s32.totalorder %s22, 4
    %s24 = scalar_select %p23, 0, %s22
    %s25 = sadd.s32 1, %s16
    %s26 = scalar_select %p23, %s25, %s16
    %p27 = scmp.ge.s32.totalorder %s26, 2
    %s28 = scalar_select %p27, 0, %s26
    %s29 = ssub.s32 %s16, %s28
    %s30 = ssub.s32 %s17, %s24
    %s31 = sor.u32 %s29, %s30
    %p32 = scmp.eq.s32.totalorder %s31, 0
    %s34 = sadd.s32 %s33, 1
    %s35 = scalar_select %p32, %s33, %s34
    %p38 = pneg %p32
    %p39 = scmp.eq.s32.totalorder %s9, 7
    %p40 = por %p38, %p39
    %p41 = scmp.ne.s32.totalorder %s33, %s36
    %p42 = scmp.eq.s32.totalorder %s9, 0
    %p43 = por %p41, %p42
    %p44 = scmp.ne.s32.totalorder %s33, %s36
    %p45 = scmp.eq.s32.totalorder %s14, 7
    %p46 = por %p44, %p45
    %p47 = scmp.ne.s32.totalorder %s36, %s37
    %p48 = scmp.eq.s32.totalorder %s14, 0
    %p49 = por %p47, %p48
    %p50 = scmp.ne.s32.totalorder %s36, %s37
    %p51 = scmp.eq.s32.totalorder %s15, 7
    %p52 = por %p50, %p51
    %p54 = scmp.ne.s32.totalorder %s37, %s53
    %p55 = scmp.eq.s32.totalorder %s15, 0
    %p56 = por %p54, %p55
    %s58 = sadd.s32 %s57, 1
    %p61 = scmp.eq.s32.totalorder %s9, 7
    %p62 = scmp.ne.s32.totalorder %s57, %s59
    %p63 = scmp.eq.s32.totalorder %s9, 0
    %p64 = por %p62, %p63
    %p65 = scmp.ne.s32.totalorder %s57, %s59
    %p66 = scmp.eq.s32.totalorder %s14, 7
    %p67 = por %p65, %p66
    %p68 = scmp.ne.s32.totalorder %s59, %s60
    %p69 = scmp.eq.s32.totalorder %s14, 0
    %p70 = por %p68, %p69
    %p71 = scmp.ne.s32.totalorder %s59, %s60
    %p72 = scmp.eq.s32.totalorder %s15, 7
    %p73 = por %p71, %p72
    %p75 = scmp.ne.s32.totalorder %s60, %s74
    %p76 = scmp.eq.s32.totalorder %s15, 0
    %p77 = por %p75, %p76
    %s79 = sadd.s32 %s78, 1
    %p82 = scmp.eq.s32.totalorder %s9, 7
    %p83 = scmp.ne.s32.totalorder %s78, %s80
    %p84 = scmp.eq.s32.totalorder %s9, 0
    %p85 = por %p83, %p84
    %p86 = scmp.ne.s32.totalorder %s78, %s80
    %p87 = scmp.eq.s32.totalorder %s14, 7
    %p88 = por %p86, %p87
    %p89 = scmp.ne.s32.totalorder %s80, %s81
    %p90 = scmp.eq.s32.totalorder %s14, 0
    %p91 = por %p89, %p90
    %p92 = scmp.ne.s32.totalorder %s80, %s81
    %p93 = scmp.eq.s32.totalorder %s15, 7
    %p94 = por %p92, %p93
    %p96 = scmp.ne.s32.totalorder %s81, %s95
    %p97 = scmp.eq.s32.totalorder %s15, 0
    %p98 = por %p96, %p97
    %s99 = ssub.s32 %s16, %s28
    %s100 = ssub.s32 %s17, %s24
    %s101 = sor.u32 %s99, %s100
    %p102 = scmp.eq.s32.totalorder %s101, 0
    %s104 = sadd.s32 %s103, 1
    %s105 = scalar_select %p102, %s103, %s104
    %p108 = pneg %p102
    %p109 = scmp.eq.s32.totalorder %s9, 7
    %p110 = por %p108, %p109
    %p111 = scmp.ne.s32.totalorder %s103, %s106
    %p112 = scmp.eq.s32.totalorder %s9, 0
    %p113 = por %p111, %p112
    %p114 = scmp.ne.s32.totalorder %s103, %s106
    %p115 = scmp.eq.s32.totalorder %s14, 7
    %p116 = por %p114, %p115
    %p117 = scmp.ne.s32.totalorder %s106, %s107
    %p118 = scmp.eq.s32.totalorder %s14, 0
    %p119 = por %p117, %p118
    %p120 = scmp.ne.s32.totalorder %s106, %s107
    %p121 = scmp.eq.s32.totalorder %s15, 7
    %p122 = por %p120, %p121
    %p124 = scmp.ne.s32.totalorder %s107, %s123
    %p125 = scmp.eq.s32.totalorder %s15, 0
    %p126 = por %p124, %p125
    %p127 = scmp.le.s32.totalorder 1, %s9
    %p128 = scmp.lt.s32.totalorder %s9, 9
    %p129 = pnand %p127, %p128
    %p130 = pneg %p129
    // Predicated region
    $region9: #{convlstm_forward.2} parent=5 // pred_check
      _
    $region10: #{convlstm_forward.2} parent=5 // pred_check_branch
      %132 = sbr.rel (%p129) target = $region12
    $region11: #{convlstm_forward.2} parent=5 // pred_region
      %s133 = ssub.s32 %s9, 1
      // Predicated region
      $region13: #{convlstm_forward.2} parent=11 // pred_check
        %p134 = pneg %p70
      $region14: #{convlstm_forward.2} parent=11 // pred_check_branch
        %136 = sbr.rel (%p134) target = $region16
      $region15: #{convlstm_forward.2} parent=11 // pred_region
        _
      $region16: #{convlstm_forward.2} parent=11 // pred_fallthru
        _
      // Predicated region
      $region17: #{convlstm_forward.2} parent=11 // pred_check
        %p137 = pneg %p91
      $region18: #{convlstm_forward.2} parent=11 // pred_check_branch
        %139 = sbr.rel (%p137) target = $region20
      $region19: #{convlstm_forward.2} parent=11 // pred_region
        _
      $region20: #{convlstm_forward.2} parent=11 // pred_fallthru
        _
    $region12: #{convlstm_forward.2} parent=5 // pred_fallthru
      _
    %p140 = scmp.lt.s32.totalorder %s9, 8
    // Predicated region
    $region21: #{convlstm_forward.2} parent=5 // pred_check
      %p141 = pneg %p140
    $region22: #{convlstm_forward.2} parent=5 // pred_check_branch
      %143 = sbr.rel (%p141) target = $region24
    $region23: #{convlstm_forward.2} parent=5 // pred_region
      // Predicated region
      $region25: #{convlstm_forward.2} parent=23 // pred_check
        %p144 = pneg %p43
      $region26: #{convlstm_forward.2} parent=23 // pred_check_branch
        %146 = sbr.rel (%p144) target = $region28
      $region27: #{convlstm_forward.2} parent=23 // pred_region
        %p147 = scmp.lt.s32.totalorder %s16, 1
        %s148 = scalar_select %p147, %s16, 1
        %p149 = scmp.lt.s32.totalorder %s17, 3
        %s150 = scalar_select %p149, %s17, 3
        %s151 = smul.addr %s150, 54
        %s152 = smul.addr %s148, 216
        %s153 = sadd.s32 %s151, %s152
        %s154 = smul.addr %s153, 8
        %s155 = scalar_lea.vmem %s0, %s154
      $region28: #{convlstm_forward.2} parent=23 // pred_fallthru
        _
    $region24: #{convlstm_forward.2} parent=5 // pred_fallthru
      _
    %p156 = scmp.le.s32.totalorder 1, %s9
    %p157 = scmp.lt.s32.totalorder %s9, 9
    %p158 = pnand %p156, %p157
    %p159 = pneg %p158
    // Predicated region
    $region29: #{convlstm_forward.2} parent=5 // pred_check
      _
    $region30: #{convlstm_forward.2} parent=5 // pred_check_branch
      %161 = sbr.rel (%p158) target = $region32
    $region31: #{convlstm_forward.2} parent=5 // pred_region
      %s162 = ssub.s32 %s9, 1
      %p163 = scmp.lt.s32.totalorder %s18, 1
      %s164 = scalar_select %p163, %s18, 1
      %p165 = scmp.lt.s32.totalorder %s19, 3
      %s166 = scalar_select %p165, %s19, 3
      %s167 = smul.addr %s166, 54
      %s168 = smul.addr %s164, 216
      %s169 = sadd.s32 %s167, %s168
      %s170 = smul.addr %s169, 8
      %s171 = scalar_lea.vmem %s0, %s170
      %p172 = pneg %p49
      %p173 = pneg %p46
      %p174 = pneg %p70
      %p175 = pneg %p67
      %p176 = pneg %p91
      %p177 = pneg %p88
      %p178 = pneg %p119
      %p179 = pneg %p116
      %p180 = scmp.lt.s32.totalorder %s18, 1
      %s181 = scalar_select %p180, %s18, 1
      %p182 = scmp.lt.s32.totalorder %s19, 3
      %s183 = scalar_select %p182, %s19, 3
      %s184 = smul.addr %s183, 32
      %s185 = smul.addr %s181, 128
      %s186 = sadd.s32 %s184, %s185
      %s187 = smul.addr %s186, 8
      %s188 = scalar_lea.vmem %s3, %s187
      %p189 = scmp.lt.s32.totalorder %s18, 1
      %s190 = scalar_select %p189, %s18, 1
      %p191 = scmp.lt.s32.totalorder %s19, 3
      %s192 = scalar_select %p191, %s19, 3
      %s193 = smul.addr %s192, 54
      %s194 = smul.addr %s190, 216
      %s195 = sadd.s32 %s193, %s194
      %s196 = smul.addr %s195, 8
      %s197 = scalar_lea.vmem %s0, %s196
      %p198 = scmp.lt.s32.totalorder %s18, 1
      %s199 = scalar_select %p198, %s18, 1
      %p200 = scmp.lt.s32.totalorder %s19, 3
      %s201 = scalar_select %p200, %s19, 3
      %s202 = smul.addr %s201, 32
      %s203 = smul.addr %s199, 128
      %s204 = sadd.s32 %s202, %s203
      %s205 = smul.addr %s204, 8
      %s206 = scalar_lea.vmem %s3, %s205
      %p207 = scmp.eq.s32.totalorder %s19, 0
      // Predicated region
      $region33: #{convlstm_forward.2} parent=31 // pred_check
        %p208 = pneg %p207
      $region34: #{convlstm_forward.2} parent=31 // pred_check_branch
        %210 = sbr.rel (%p208) target = $region36
      $region35: #{convlstm_forward.2} parent=31 // pred_region
        %vm211 = vcmask 261120
        %212 = vst.msk [vmem:[#allocation2] sm:$0xff] %vm211, 0.0
        %213 = vst.msk [vmem:[#allocation2 + $0x8] sm:$0xff] %vm211, 0.0
        %vm214 = vcmask 254976
        %215 = vst.msk [vmem:[#allocation2 + $0x10] sm:$0x3] %vm214, 0.0
        %216 = vst.msk [vmem:[#allocation2 + $0x18] sm:$0xff] %vm211, 0.0
        %217 = vst.msk [vmem:[#allocation2 + $0x20] sm:$0xff] %vm211, 0.0
        %218 = vst.msk [vmem:[#allocation2 + $0x28] sm:$0x3] %vm214, 0.0
        %219 = vst.msk [vmem:[#allocation2 + $0x30] sm:$0xff] %vm211, 0.0
        %220 = vst.msk [vmem:[#allocation2 + $0x38] sm:$0xff] %vm211, 0.0
        %221 = vst.msk [vmem:[#allocation2 + $0x40] sm:$0x3] %vm214, 0.0
        %222 = vst.msk [vmem:[#allocation2 + $0x48] sm:$0xff] %vm211, 0.0
        %223 = vst.msk [vmem:[#allocation2 + $0x50] sm:$0xff] %vm211, 0.0
        %224 = vst.msk [vmem:[#allocation2 + $0x58] sm:$0x3] %vm214, 0.0
        %225 = vst.msk [vmem:[#allocation2 + $0x60] sm:$0xff] %vm211, 0.0
        %226 = vst.msk [vmem:[#allocation2 + $0x68] sm:$0xff] %vm211, 0.0
        %227 = vst.msk [vmem:[#allocation2 + $0x70] sm:$0x3] %vm214, 0.0
        %228 = vst.msk [vmem:[#allocation2 + $0x78] sm:$0xff] %vm211, 0.0
        %229 = vst.msk [vmem:[#allocation2 + $0x80] sm:$0xff] %vm211, 0.0
        %230 = vst.msk [vmem:[#allocation2 + $0x88] sm:$0x3] %vm214, 0.0
        %231 = vst.msk [vmem:[#allocation2 + $0x90] sm:$0xff] %vm211, 0.0
        %232 = vst.msk [vmem:[#allocation2 + $0x98] sm:$0xff] %vm211, 0.0
        %233 = vst.msk [vmem:[#allocation2 + $0xa0] sm:$0x3] %vm214, 0.0
        %234 = vst.msk [vmem:[#allocation2 + $0xa8] sm:$0xff] %vm211, 0.0
        %235 = vst.msk [vmem:[#allocation2 + $0xb0] sm:$0xff] %vm211, 0.0
        %236 = vst.msk [vmem:[#allocation2 + $0xb8] sm:$0x3] %vm214, 0.0
        %237 = vst.msk [vmem:[#allocation2 + $0xc0] sm:$0xff] %vm211, 0.0
        %238 = vst.msk [vmem:[#allocation2 + $0xc8] sm:$0xff] %vm211, 0.0
        %239 = vst.msk [vmem:[#allocation2 + $0xd0] sm:$0x3] %vm214, 0.0
        %240 = vst.msk [vmem:[#allocation2 + $0xd8] sm:$0xff] %vm211, 0.0
        %241 = vst.msk [vmem:[#allocation2 + $0xe0] sm:$0xff] %vm211, 0.0
        %242 = vst.msk [vmem:[#allocation2 + $0xe8] sm:$0x3] %vm214, 0.0
        %243 = vst.msk [vmem:[#allocation2 + $0xf0] sm:$0xff] %vm211, 0.0
        %244 = vst.msk [vmem:[#allocation2 + $0xf8] sm:$0xff] %vm211, 0.0
        %245 = vst.msk [vmem:[#allocation2 + $0x100] sm:$0x3] %vm214, 0.0
        %246 = vst.msk [vmem:[#allocation2 + $0x108] sm:$0xff] %vm211, 0.0
        %247 = vst.msk [vmem:[#allocation2 + $0x110] sm:$0xff] %vm211, 0.0
        %248 = vst.msk [vmem:[#allocation2 + $0x118] sm:$0x3] %vm214, 0.0
        %249 = vst.msk [vmem:[#allocation2 + $0x120] sm:$0xff] %vm211, 0.0
        %250 = vst.msk [vmem:[#allocation2 + $0x128] sm:$0xff] %vm211, 0.0
        %251 = vst.msk [vmem:[#allocation2 + $0x130] sm:$0x3] %vm214, 0.0
        %252 = vst.msk [vmem:[#allocation2 + $0x138] sm:$0xff] %vm211, 0.0
        %253 = vst.msk [vmem:[#allocation2 + $0x140] sm:$0xff] %vm211, 0.0
        %254 = vst.msk [vmem:[#allocation2 + $0x148] sm:$0x3] %vm214, 0.0
        %255 = vst.msk [vmem:[#allocation2 + $0x150] sm:$0xff] %vm211, 0.0
        %256 = vst.msk [vmem:[#allocation2 + $0x158] sm:$0xff] %vm211, 0.0
        %257 = vst.msk [vmem:[#allocation2 + $0x160] sm:$0x3] %vm214, 0.0
        %258 = vst.msk [vmem:[#allocation2 + $0x168] sm:$0xff] %vm211, 0.0
        %259 = vst.msk [vmem:[#allocation2 + $0x170] sm:$0xff] %vm211, 0.0
        %260 = vst.msk [vmem:[#allocation2 + $0x178] sm:$0x3] %vm214, 0.0
        %261 = vst.msk [vmem:[#allocation2 + $0x180] sm:$0xff] %vm211, 0.0
        %262 = vst.msk [vmem:[#allocation2 + $0x188] sm:$0xff] %vm211, 0.0
        %263 = vst.msk [vmem:[#allocation2 + $0x190] sm:$0x3] %vm214, 0.0
        %264 = vst.msk [vmem:[#allocation2 + $0x198] sm:$0xff] %vm211, 0.0
        %265 = vst.msk [vmem:[#allocation2 + $0x1a0] sm:$0xff] %vm211, 0.0
        %266 = vst.msk [vmem:[#allocation2 + $0x1a8] sm:$0x3] %vm214, 0.0
        %267 = vst.msk [vmem:[#allocation3] sm:$0xff] %vm211, 0.0
        %268 = vst.msk [vmem:[#allocation3 + $0x8] sm:$0xff] %vm211, 0.0
        %269 = vst.msk [vmem:[#allocation3 + $0x10] sm:$0xff] %vm211, 0.0
        %270 = vst.msk [vmem:[#allocation3 + $0x18] sm:$0xff] %vm211, 0.0
        %271 = vst.msk [vmem:[#allocation3 + $0x20] sm:$0xff] %vm211, 0.0
        %272 = vst.msk [vmem:[#allocation3 + $0x28] sm:$0xff] %vm211, 0.0
        %273 = vst.msk [vmem:[#allocation3 + $0x30] sm:$0xff] %vm211, 0.0
        %274 = vst.msk [vmem:[#allocation3 + $0x38] sm:$0xff] %vm211, 0.0
        %275 = vst.msk [vmem:[#allocation3 + $0x40] sm:$0xff] %vm211, 0.0
        %276 = vst.msk [vmem:[#allocation3 + $0x48] sm:$0xff] %vm211, 0.0
        %277 = vst.msk [vmem:[#allocation3 + $0x50] sm:$0xff] %vm211, 0.0
        %278 = vst.msk [vmem:[#allocation3 + $0x58] sm:$0xff] %vm211, 0.0
        %279 = vst.msk [vmem:[#allocation3 + $0x60] sm:$0xff] %vm211, 0.0
        %280 = vst.msk [vmem:[#allocation3 + $0x68] sm:$0xff] %vm211, 0.0
        %281 = vst.msk [vmem:[#allocation3 + $0x70] sm:$0xff] %vm211, 0.0
        %282 = vst.msk [vmem:[#allocation3 + $0x78] sm:$0xff] %vm211, 0.0
        %283 = vst.msk [vmem:[#allocation3 + $0x80] sm:$0xff] %vm211, 0.0
        %284 = vst.msk [vmem:[#allocation3 + $0x88] sm:$0xff] %vm211, 0.0
        %285 = vst.msk [vmem:[#allocation3 + $0x90] sm:$0xff] %vm211, 0.0
        %286 = vst.msk [vmem:[#allocation3 + $0x98] sm:$0xff] %vm211, 0.0
        %287 = vst.msk [vmem:[#allocation3 + $0xa0] sm:$0xff] %vm211, 0.0
        %288 = vst.msk [vmem:[#allocation3 + $0xa8] sm:$0xff] %vm211, 0.0
        %289 = vst.msk [vmem:[#allocation3 + $0xb0] sm:$0xff] %vm211, 0.0
        %290 = vst.msk [vmem:[#allocation3 + $0xb8] sm:$0xff] %vm211, 0.0
        %291 = vst.msk [vmem:[#allocation3 + $0xc0] sm:$0xff] %vm211, 0.0
        %292 = vst.msk [vmem:[#allocation3 + $0xc8] sm:$0xff] %vm211, 0.0
        %293 = vst.msk [vmem:[#allocation3 + $0xd0] sm:$0xff] %vm211, 0.0
        %294 = vst.msk [vmem:[#allocation3 + $0xd8] sm:$0xff] %vm211, 0.0
        %295 = vst.msk [vmem:[#allocation3 + $0xe0] sm:$0xff] %vm211, 0.0
        %296 = vst.msk [vmem:[#allocation3 + $0xe8] sm:$0xff] %vm211, 0.0
        %297 = vst.msk [vmem:[#allocation3 + $0xf0] sm:$0xff] %vm211, 0.0
        %298 = vst.msk [vmem:[#allocation3 + $0xf8] sm:$0xff] %vm211, 0.0
      $region36: #{convlstm_forward.2} parent=31 // pred_fallthru
        _
      %v299 = vld [vmem:[%s197] sm:$0xff]
      %v300 = vld [vmem:[%s197 + $0x8] sm:$0xff]
      %v301 = vld [vmem:[%s197 + $0x10] sm:$0x3]
      %v302 = vld [vmem:[%s197 + $0x18] sm:$0xff]
      %v303 = vld [vmem:[%s197 + $0x20] sm:$0xff]
      %v304 = vld [vmem:[%s197 + $0x28] sm:$0x3]
      %v305 = vld [vmem:[%s197 + $0x30] sm:$0xff]
      %v306 = vld [vmem:[%s197 + $0x38] sm:$0xff]
      %v307 = vld [vmem:[%s197 + $0x40] sm:$0x3]
      %v308 = vld [vmem:[%s197 + $0x48] sm:$0xff]
      %v309 = vld [vmem:[%s197 + $0x50] sm:$0xff]
      %v310 = vld [vmem:[%s197 + $0x58] sm:$0x3]
      %v311 = vld [vmem:[%s197 + $0x60] sm:$0xff]
      %v312 = vld [vmem:[%s197 + $0x68] sm:$0xff]
      %v313 = vld [vmem:[%s197 + $0x70] sm:$0x3]
      %v314 = vld [vmem:[%s197 + $0x78] sm:$0xff]
      %v315 = vld [vmem:[%s197 + $0x80] sm:$0xff]
      %v316 = vld [vmem:[%s197 + $0x88] sm:$0x3]
      %v317 = vld [vmem:[%s197 + $0x90] sm:$0xff]
      %v318 = vld [vmem:[%s197 + $0x98] sm:$0xff]
      %v319 = vld [vmem:[%s197 + $0xa0] sm:$0x3]
      %v320 = vld [vmem:[%s197 + $0xa8] sm:$0xff]
      %v321 = vld [vmem:[%s197 + $0xb0] sm:$0xff]
      %v322 = vld [vmem:[%s197 + $0xb8] sm:$0x3]
      %v323 = vld [vmem:[%s197 + $0xc0] sm:$0xff]
      %v324 = vld [vmem:[%s197 + $0xc8] sm:$0xff]
      %v325 = vld [vmem:[%s197 + $0xd0] sm:$0x3]
      %v326 = vld [vmem:[%s197 + $0xd8] sm:$0xff]
      %v327 = vld [vmem:[%s197 + $0xe0] sm:$0xff]
      %v328 = vld [vmem:[%s197 + $0xe8] sm:$0x3]
      %v329 = vld [vmem:[%s197 + $0xf0] sm:$0xff]
      %v330 = vld [vmem:[%s197 + $0xf8] sm:$0xff]
      %v331 = vld [vmem:[%s197 + $0x100] sm:$0x3]
      %v332 = vld [vmem:[%s197 + $0x108] sm:$0xff]
      %v333 = vld [vmem:[%s197 + $0x110] sm:$0xff]
      %v334 = vld [vmem:[%s197 + $0x118] sm:$0x3]
      %v335 = vld [vmem:[%s197 + $0x120] sm:$0xff]
      %v336 = vld [vmem:[%s197 + $0x128] sm:$0xff]
      %v337 = vld [vmem:[%s197 + $0x130] sm:$0x3]
      %v338 = vld [vmem:[%s197 + $0x138] sm:$0xff]
      %v339 = vld [vmem:[%s197 + $0x140] sm:$0xff]
      %v340 = vld [vmem:[%s197 + $0x148] sm:$0x3]
      %v341 = vld [vmem:[%s197 + $0x150] sm:$0xff]
      %v342 = vld [vmem:[%s197 + $0x158] sm:$0xff]
      %v343 = vld [vmem:[%s197 + $0x160] sm:$0x3]
      %v344 = vld [vmem:[%s197 + $0x168] sm:$0xff]
      %v345 = vld [vmem:[%s197 + $0x170] sm:$0xff]
      %v346 = vld [vmem:[%s197 + $0x178] sm:$0x3]
      %v347 = vld [vmem:[%s197 + $0x180] sm:$0xff]
      %v348 = vld [vmem:[%s197 + $0x188] sm:$0xff]
      %v349 = vld [vmem:[%s197 + $0x190] sm:$0x3]
      %v350 = vld [vmem:[%s197 + $0x198] sm:$0xff]
      %v351 = vld [vmem:[%s197 + $0x1a0] sm:$0xff]
      %v352 = vld [vmem:[%s197 + $0x1a8] sm:$0x3]
      %v353 = vld [vmem:[#allocation2] sm:$0xff]
      %v354 = vld [vmem:[#allocation2 + $0x8] sm:$0xff]
      %v355 = vld [vmem:[#allocation2 + $0x10] sm:$0x3]
      %v356 = vld [vmem:[#allocation2 + $0x18] sm:$0xff]
      %v357 = vld [vmem:[#allocation2 + $0x20] sm:$0xff]
      %v358 = vld [vmem:[#allocation2 + $0x28] sm:$0x3]
      %v359 = vld [vmem:[#allocation2 + $0x30] sm:$0xff]
      %v360 = vld [vmem:[#allocation2 + $0x38] sm:$0xff]
      %v361 = vld [vmem:[#allocation2 + $0x40] sm:$0x3]
      %v362 = vld [vmem:[#allocation2 + $0x48] sm:$0xff]
      %v363 = vld [vmem:[#allocation2 + $0x50] sm:$0xff]
      %v364 = vld [vmem:[#allocation2 + $0x58] sm:$0x3]
      %v365 = vld [vmem:[#allocation2 + $0x60] sm:$0xff]
      %v366 = vld [vmem:[#allocation2 + $0x68] sm:$0xff]
      %v367 = vld [vmem:[#allocation2 + $0x70] sm:$0x3]
      %v368 = vld [vmem:[#allocation2 + $0x78] sm:$0xff]
      %v369 = vld [vmem:[#allocation2 + $0x80] sm:$0xff]
      %v370 = vld [vmem:[#allocation2 + $0x88] sm:$0x3]
      %v371 = vld [vmem:[#allocation2 + $0x90] sm:$0xff]
      %v372 = vld [vmem:[#allocation2 + $0x98] sm:$0xff]
      %v373 = vld [vmem:[#allocation2 + $0xa0] sm:$0x3]
      %v374 = vld [vmem:[#allocation2 + $0xa8] sm:$0xff]
      %v375 = vld [vmem:[#allocation2 + $0xb0] sm:$0xff]
      %v376 = vld [vmem:[#allocation2 + $0xb8] sm:$0x3]
      %v377 = vld [vmem:[#allocation2 + $0xc0] sm:$0xff]
      %v378 = vld [vmem:[#allocation2 + $0xc8] sm:$0xff]
      %v379 = vld [vmem:[#allocation2 + $0xd0] sm:$0x3]
      %v380 = vld [vmem:[#allocation2 + $0xd8] sm:$0xff]
      %v381 = vld [vmem:[#allocation2 + $0xe0] sm:$0xff]
      %v382 = vld [vmem:[#allocation2 + $0xe8] sm:$0x3]
      %v383 = vld [vmem:[#allocation2 + $0xf0] sm:$0xff]
      %v384 = vld [vmem:[#allocation2 + $0xf8] sm:$0xff]
      %v385 = vld [vmem:[#allocation2 + $0x100] sm:$0x3]
      %v386 = vld [vmem:[#allocation2 + $0x108] sm:$0xff]
      %v387 = vld [vmem:[#allocation2 + $0x110] sm:$0xff]
      %v388 = vld [vmem:[#allocation2 + $0x118] sm:$0x3]
      %v389 = vld [vmem:[#allocation2 + $0x120] sm:$0xff]
      %v390 = vld [vmem:[#allocation2 + $0x128] sm:$0xff]
      %v391 = vld [vmem:[#allocation2 + $0x130] sm:$0x3]
      %v392 = vld [vmem:[#allocation2 + $0x138] sm:$0xff]
      %v393 = vld [vmem:[#allocation2 + $0x140] sm:$0xff]
      %v394 = vld [vmem:[#allocation2 + $0x148] sm:$0x3]
      %v395 = vld [vmem:[#allocation2 + $0x150] sm:$0xff]
      %v396 = vld [vmem:[#allocation2 + $0x158] sm:$0xff]
      %v397 = vld [vmem:[#allocation2 + $0x160] sm:$0x3]
      %v398 = vld [vmem:[#allocation2 + $0x168] sm:$0xff]
      %v399 = vld [vmem:[#allocation2 + $0x170] sm:$0xff]
      %v400 = vld [vmem:[#allocation2 + $0x178] sm:$0x3]
      %v401 = vld [vmem:[#allocation2 + $0x180] sm:$0xff]
      %v402 = vld [vmem:[#allocation2 + $0x188] sm:$0xff]
      %v403 = vld [vmem:[#allocation2 + $0x190] sm:$0x3]
      %v404 = vld [vmem:[#allocation2 + $0x198] sm:$0xff]
      %v405 = vld [vmem:[#allocation2 + $0x1a0] sm:$0xff]
      %v406 = vld [vmem:[#allocation2 + $0x1a8] sm:$0x3]
      %vm455 = vcmask 1046528
      %v456 = vrot.slane %v299, 1
      %v457 = vrot.slane %v300, 1
      %v458 = vsel %vm455, %v456, %v457
      %v459 = vrot.slane %v301, 1
      %v460 = vsel %vm455, %v457, %v459
      %v461 = vrot.slane %v302, 1
      %v462 = vrot.slane %v303, 1
      %v463 = vsel %vm455, %v461, %v462
      %v464 = vrot.slane %v304, 1
      %v465 = vsel %vm455, %v462, %v464
      %v466 = vrot.slane %v305, 1
      %v467 = vrot.slane %v306, 1
      %v468 = vsel %vm455, %v466, %v467
      %v469 = vrot.slane %v307, 1
      %v470 = vsel %vm455, %v467, %v469
      %v471 = vrot.slane %v308, 1
      %v472 = vrot.slane %v309, 1
      %v473 = vsel %vm455, %v471, %v472
      %v474 = vrot.slane %v310, 1
      %v475 = vsel %vm455, %v472, %v474
      %v476 = vrot.slane %v311, 1
      %v477 = vrot.slane %v312, 1
      %v478 = vsel %vm455, %v476, %v477
      %v479 = vrot.slane %v313, 1
      %v480 = vsel %vm455, %v477, %v479
      %v481 = vrot.slane %v314, 1
      %v482 = vrot.slane %v315, 1
      %v483 = vsel %vm455, %v481, %v482
      %v484 = vrot.slane %v316, 1
      %v485 = vsel %vm455, %v482, %v484
      %v486 = vrot.slane %v317, 1
      %v487 = vrot.slane %v318, 1
      %v488 = vsel %vm455, %v486, %v487
      %v489 = vrot.slane %v319, 1
      %v490 = vsel %vm455, %v487, %v489
      %v491 = vrot.slane %v320, 1
      %v492 = vrot.slane %v321, 1
      %v493 = vsel %vm455, %v491, %v492
      %v494 = vrot.slane %v322, 1
      %v495 = vsel %vm455, %v492, %v494
      %v496 = vrot.slane %v323, 1
      %v497 = vrot.slane %v324, 1
      %v498 = vsel %vm455, %v496, %v497
      %v499 = vrot.slane %v325, 1
      %v500 = vsel %vm455, %v497, %v499
      %v501 = vrot.slane %v326, 1
      %v502 = vrot.slane %v327, 1
      %v503 = vsel %vm455, %v501, %v502
      %v504 = vrot.slane %v328, 1
      %v505 = vsel %vm455, %v502, %v504
      %v506 = vrot.slane %v329, 1
      %v507 = vrot.slane %v330, 1
      %v508 = vsel %vm455, %v506, %v507
      %v509 = vrot.slane %v331, 1
      %v510 = vsel %vm455, %v507, %v509
      %v511 = vrot.slane %v332, 1
      %v512 = vrot.slane %v333, 1
      %v513 = vsel %vm455, %v511, %v512
      %v514 = vrot.slane %v334, 1
      %v515 = vsel %vm455, %v512, %v514
      %v516 = vrot.slane %v335, 1
      %v517 = vrot.slane %v336, 1
      %v518 = vsel %vm455, %v516, %v517
      %v519 = vrot.slane %v337, 1
      %v520 = vsel %vm455, %v517, %v519
      %v521 = vrot.slane %v338, 1
      %v522 = vrot.slane %v339, 1
      %v523 = vsel %vm455, %v521, %v522
      %v524 = vrot.slane %v340, 1
      %v525 = vsel %vm455, %v522, %v524
      %v526 = vrot.slane %v341, 1
      %v527 = vrot.slane %v342, 1
      %v528 = vsel %vm455, %v526, %v527
      %v529 = vrot.slane %v343, 1
      %v530 = vsel %vm455, %v527, %v529
      %v531 = vrot.slane %v344, 1
      %v532 = vrot.slane %v345, 1
      %v533 = vsel %vm455, %v531, %v532
      %v534 = vrot.slane %v346, 1
      %v535 = vsel %vm455, %v532, %v534
      %vm536 = vcmask 1045504
      %v537 = vrot.slane %v299, 2
      %v538 = vrot.slane %v300, 2
      %v539 = vsel %vm536, %v537, %v538
      %v540 = vrot.slane %v301, 2
      %v541 = vsel %vm536, %v538, %v540
      %v542 = vrot.slane %v302, 2
      %v543 = vrot.slane %v303, 2
      %v544 = vsel %vm536, %v542, %v543
      %v545 = vrot.slane %v304, 2
      %v546 = vsel %vm536, %v543, %v545
      %v547 = vrot.slane %v305, 2
      %v548 = vrot.slane %v306, 2
      %v549 = vsel %vm536, %v547, %v548
      %v550 = vrot.slane %v307, 2
      %v551 = vsel %vm536, %v548, %v550
      %v552 = vrot.slane %v308, 2
      %v553 = vrot.slane %v309, 2
      %v554 = vsel %vm536, %v552, %v553
      %v555 = vrot.slane %v310, 2
      %v556 = vsel %vm536, %v553, %v555
      %v557 = vrot.slane %v311, 2
      %v558 = vrot.slane %v312, 2
      %v559 = vsel %vm536, %v557, %v558
      %v560 = vrot.slane %v313, 2
      %v561 = vsel %vm536, %v558, %v560
      %v562 = vrot.slane %v314, 2
      %v563 = vrot.slane %v315, 2
      %v564 = vsel %vm536, %v562, %v563
      %v565 = vrot.slane %v316, 2
      %v566 = vsel %vm536, %v563, %v565
      %v567 = vrot.slane %v317, 2
      %v568 = vrot.slane %v318, 2
      %v569 = vsel %vm536, %v567, %v568
      %v570 = vrot.slane %v319, 2
      %v571 = vsel %vm536, %v568, %v570
      %v572 = vrot.slane %v320, 2
      %v573 = vrot.slane %v321, 2
      %v574 = vsel %vm536, %v572, %v573
      %v575 = vrot.slane %v322, 2
      %v576 = vsel %vm536, %v573, %v575
      %v577 = vrot.slane %v323, 2
      %v578 = vrot.slane %v324, 2
      %v579 = vsel %vm536, %v577, %v578
      %v580 = vrot.slane %v325, 2
      %v581 = vsel %vm536, %v578, %v580
      %v582 = vrot.slane %v326, 2
      %v583 = vrot.slane %v327, 2
      %v584 = vsel %vm536, %v582, %v583
      %v585 = vrot.slane %v328, 2
      %v586 = vsel %vm536, %v583, %v585
      %v587 = vrot.slane %v329, 2
      %v588 = vrot.slane %v330, 2
      %v589 = vsel %vm536, %v587, %v588
      %v590 = vrot.slane %v331, 2
      %v591 = vsel %vm536, %v588, %v590
      %v592 = vrot.slane %v332, 2
      %v593 = vrot.slane %v333, 2
      %v594 = vsel %vm536, %v592, %v593
      %v595 = vrot.slane %v334, 2
      %v596 = vsel %vm536, %v593, %v595
      %v597 = vrot.slane %v335, 2
      %v598 = vrot.slane %v336, 2
      %v599 = vsel %vm536, %v597, %v598
      %v600 = vrot.slane %v337, 2
      %v601 = vsel %vm536, %v598, %v600
      %v602 = vrot.slane %v338, 2
      %v603 = vrot.slane %v339, 2
      %v604 = vsel %vm536, %v602, %v603
      %v605 = vrot.slane %v340, 2
      %v606 = vsel %vm536, %v603, %v605
      %v607 = vrot.slane %v341, 2
      %v608 = vrot.slane %v342, 2
      %v609 = vsel %vm536, %v607, %v608
      %v610 = vrot.slane %v343, 2
      %v611 = vsel %vm536, %v608, %v610
      %v612 = vrot.slane %v344, 2
      %v613 = vrot.slane %v345, 2
      %v614 = vsel %vm536, %v612, %v613
      %v615 = vrot.slane %v346, 2
      %v616 = vsel %vm536, %v613, %v615
      %v665 = vrot.slane %v353, 1
      %v666 = vrot.slane %v354, 1
      %v667 = vsel %vm455, %v665, %v666
      %v668 = vrot.slane %v355, 1
      %v669 = vsel %vm455, %v666, %v668
      %v670 = vrot.slane %v356, 1
      %v671 = vrot.slane %v357, 1
      %v672 = vsel %vm455, %v670, %v671
      %v673 = vrot.slane %v358, 1
      %v674 = vsel %vm455, %v671, %v673
      %v675 = vrot.slane %v359, 1
      %v676 = vrot.slane %v360, 1
      %v677 = vsel %vm455, %v675, %v676
      %v678 = vrot.slane %v361, 1
      %v679 = vsel %vm455, %v676, %v678
      %v680 = vrot.slane %v362, 1
      %v681 = vrot.slane %v363, 1
      %v682 = vsel %vm455, %v680, %v681
      %v683 = vrot.slane %v364, 1
      %v684 = vsel %vm455, %v681, %v683
      %v685 = vrot.slane %v365, 1
      %v686 = vrot.slane %v366, 1
      %v687 = vsel %vm455, %v685, %v686
      %v688 = vrot.slane %v367, 1
      %v689 = vsel %vm455, %v686, %v688
      %v690 = vrot.slane %v368, 1
      %v691 = vrot.slane %v369, 1
      %v692 = vsel %vm455, %v690, %v691
      %v693 = vrot.slane %v370, 1
      %v694 = vsel %vm455, %v691, %v693
      %v695 = vrot.slane %v371, 1
      %v696 = vrot.slane %v372, 1
      %v697 = vsel %vm455, %v695, %v696
      %v698 = vrot.slane %v373, 1
      %v699 = vsel %vm455, %v696, %v698
      %v700 = vrot.slane %v374, 1
      %v701 = vrot.slane %v375, 1
      %v702 = vsel %vm455, %v700, %v701
      %v703 = vrot.slane %v376, 1
      %v704 = vsel %vm455, %v701, %v703
      %v705 = vrot.slane %v377, 1
      %v706 = vrot.slane %v378, 1
      %v707 = vsel %vm455, %v705, %v706
      %v708 = vrot.slane %v379, 1
      %v709 = vsel %vm455, %v706, %v708
      %v710 = vrot.slane %v380, 1
      %v711 = vrot.slane %v381, 1
      %v712 = vsel %vm455, %v710, %v711
      %v713 = vrot.slane %v382, 1
      %v714 = vsel %vm455, %v711, %v713
      %v715 = vrot.slane %v383, 1
      %v716 = vrot.slane %v384, 1
      %v717 = vsel %vm455, %v715, %v716
      %v718 = vrot.slane %v385, 1
      %v719 = vsel %vm455, %v716, %v718
      %v720 = vrot.slane %v386, 1
      %v721 = vrot.slane %v387, 1
      %v722 = vsel %vm455, %v720, %v721
      %v723 = vrot.slane %v388, 1
      %v724 = vsel %vm455, %v721, %v723
      %v725 = vrot.slane %v389, 1
      %v726 = vrot.slane %v390, 1
      %v727 = vsel %vm455, %v725, %v726
      %v728 = vrot.slane %v391, 1
      %v729 = vsel %vm455, %v726, %v728
      %v730 = vrot.slane %v392, 1
      %v731 = vrot.slane %v393, 1
      %v732 = vsel %vm455, %v730, %v731
      %v733 = vrot.slane %v394, 1
      %v734 = vsel %vm455, %v731, %v733
      %v735 = vrot.slane %v395, 1
      %v736 = vrot.slane %v396, 1
      %v737 = vsel %vm455, %v735, %v736
      %v738 = vrot.slane %v397, 1
      %v739 = vsel %vm455, %v736, %v738
      %v740 = vrot.slane %v398, 1
      %v741 = vrot.slane %v399, 1
      %v742 = vsel %vm455, %v740, %v741
      %v743 = vrot.slane %v400, 1
      %v744 = vsel %vm455, %v741, %v743
      %v745 = vrot.slane %v353, 2
      %v746 = vrot.slane %v354, 2
      %v747 = vsel %vm536, %v745, %v746
      %v748 = vrot.slane %v355, 2
      %v749 = vsel %vm536, %v746, %v748
      %v750 = vrot.slane %v356, 2
      %v751 = vrot.slane %v357, 2
      %v752 = vsel %vm536, %v750, %v751
      %v753 = vrot.slane %v358, 2
      %v754 = vsel %vm536, %v751, %v753
      %v755 = vrot.slane %v359, 2
      %v756 = vrot.slane %v360, 2
      %v757 = vsel %vm536, %v755, %v756
      %v758 = vrot.slane %v361, 2
      %v759 = vsel %vm536, %v756, %v758
      %v760 = vrot.slane %v362, 2
      %v761 = vrot.slane %v363, 2
      %v762 = vsel %vm536, %v760, %v761
      %v763 = vrot.slane %v364, 2
      %v764 = vsel %vm536, %v761, %v763
      %v765 = vrot.slane %v365, 2
      %v766 = vrot.slane %v366, 2
      %v767 = vsel %vm536, %v765, %v766
      %v768 = vrot.slane %v367, 2
      %v769 = vsel %vm536, %v766, %v768
      %v770 = vrot.slane %v368, 2
      %v771 = vrot.slane %v369, 2
      %v772 = vsel %vm536, %v770, %v771
      %v773 = vrot.slane %v370, 2
      %v774 = vsel %vm536, %v771, %v773
      %v775 = vrot.slane %v371, 2
      %v776 = vrot.slane %v372, 2
      %v777 = vsel %vm536, %v775, %v776
      %v778 = vrot.slane %v373, 2
      %v779 = vsel %vm536, %v776, %v778
      %v780 = vrot.slane %v374, 2
      %v781 = vrot.slane %v375, 2
      %v782 = vsel %vm536, %v780, %v781
      %v783 = vrot.slane %v376, 2
      %v784 = vsel %vm536, %v781, %v783
      %v785 = vrot.slane %v377, 2
      %v786 = vrot.slane %v378, 2
      %v787 = vsel %vm536, %v785, %v786
      %v788 = vrot.slane %v379, 2
      %v789 = vsel %vm536, %v786, %v788
      %v790 = vrot.slane %v380, 2
      %v791 = vrot.slane %v381, 2
      %v792 = vsel %vm536, %v790, %v791
      %v793 = vrot.slane %v382, 2
      %v794 = vsel %vm536, %v791, %v793
      %v795 = vrot.slane %v383, 2
      %v796 = vrot.slane %v384, 2
      %v797 = vsel %vm536, %v795, %v796
      %v798 = vrot.slane %v385, 2
      %v799 = vsel %vm536, %v796, %v798
      %v800 = vrot.slane %v386, 2
      %v801 = vrot.slane %v387, 2
      %v802 = vsel %vm536, %v800, %v801
      %v803 = vrot.slane %v388, 2
      %v804 = vsel %vm536, %v801, %v803
      %v805 = vrot.slane %v389, 2
      %v806 = vrot.slane %v390, 2
      %v807 = vsel %vm536, %v805, %v806
      %v808 = vrot.slane %v391, 2
      %v809 = vsel %vm536, %v806, %v808
      %v810 = vrot.slane %v392, 2
      %v811 = vrot.slane %v393, 2
      %v812 = vsel %vm536, %v810, %v811
      %v813 = vrot.slane %v394, 2
      %v814 = vsel %vm536, %v811, %v813
      %v815 = vrot.slane %v395, 2
      %v816 = vrot.slane %v396, 2
      %v817 = vsel %vm536, %v815, %v816
      %v818 = vrot.slane %v397, 2
      %v819 = vsel %vm536, %v816, %v818
      %v820 = vrot.slane %v398, 2
      %v821 = vrot.slane %v399, 2
      %v822 = vsel %vm536, %v820, %v821
      %v823 = vrot.slane %v400, 2
      %v824 = vsel %vm536, %v821, %v823
      %825 = vrot.lane.b32.xlu0 %v458, 4
      %v826 = vpop.permute.xlu0 %825
      %827 = vrot.lane.b32.xlu0 %v460, 4
      %v828 = vpop.permute.xlu0 %827
      %829 = vrot.lane.b32.xlu0 %v463, 4
      %v830 = vpop.permute.xlu0 %829
      %831 = vrot.lane.b32.xlu0 %v465, 4
      %v832 = vpop.permute.xlu0 %831
      %833 = vrot.lane.b32.xlu0 %v468, 4
      %v834 = vpop.permute.xlu0 %833
      %835 = vrot.lane.b32.xlu0 %v470, 4
      %v836 = vpop.permute.xlu0 %835
      %837 = vrot.lane.b32.xlu0 %v473, 4
      %v838 = vpop.permute.xlu0 %837
      %839 = vrot.lane.b32.xlu0 %v475, 4
      %v840 = vpop.permute.xlu0 %839
      %841 = vrot.lane.b32.xlu0 %v478, 4
      %v842 = vpop.permute.xlu0 %841
      %843 = vrot.lane.b32.xlu0 %v480, 4
      %v844 = vpop.permute.xlu0 %843
      %845 = vrot.lane.b32.xlu0 %v483, 4
      %v846 = vpop.permute.xlu0 %845
      %847 = vrot.lane.b32.xlu0 %v485, 4
      %v848 = vpop.permute.xlu0 %847
      %849 = vrot.lane.b32.xlu0 %v488, 4
      %v850 = vpop.permute.xlu0 %849
      %851 = vrot.lane.b32.xlu0 %v490, 4
      %v852 = vpop.permute.xlu0 %851
      %853 = vrot.lane.b32.xlu0 %v493, 4
      %v854 = vpop.permute.xlu0 %853
      %855 = vrot.lane.b32.xlu0 %v495, 4
      %v856 = vpop.permute.xlu0 %855
      %857 = vrot.lane.b32.xlu0 %v498, 4
      %v858 = vpop.permute.xlu0 %857
      %859 = vrot.lane.b32.xlu0 %v500, 4
      %v860 = vpop.permute.xlu0 %859
      %861 = vrot.lane.b32.xlu0 %v503, 4
      %v862 = vpop.permute.xlu0 %861
      %863 = vrot.lane.b32.xlu0 %v505, 4
      %v864 = vpop.permute.xlu0 %863
      %865 = vrot.lane.b32.xlu0 %v508, 4
      %v866 = vpop.permute.xlu0 %865
      %867 = vrot.lane.b32.xlu0 %v510, 4
      %v868 = vpop.permute.xlu0 %867
      %869 = vrot.lane.b32.xlu0 %v513, 4
      %v870 = vpop.permute.xlu0 %869
      %871 = vrot.lane.b32.xlu0 %v515, 4
      %v872 = vpop.permute.xlu0 %871
      %873 = vrot.lane.b32.xlu0 %v518, 4
      %v874 = vpop.permute.xlu0 %873
      %875 = vrot.lane.b32.xlu0 %v520, 4
      %v876 = vpop.permute.xlu0 %875
      %877 = vrot.lane.b32.xlu0 %v523, 4
      %v878 = vpop.permute.xlu0 %877
      %879 = vrot.lane.b32.xlu0 %v525, 4
      %v880 = vpop.permute.xlu0 %879
      %881 = vrot.lane.b32.xlu0 %v528, 4
      %v882 = vpop.permute.xlu0 %881
      %883 = vrot.lane.b32.xlu0 %v530, 4
      %v884 = vpop.permute.xlu0 %883
      %885 = vrot.lane.b32.xlu0 %v533, 4
      %v886 = vpop.permute.xlu0 %885
      %887 = vrot.lane.b32.xlu0 %v535, 4
      %v888 = vpop.permute.xlu0 %887
      %921 = vrot.lane.b32.xlu0 %v539, 8
      %v922 = vpop.permute.xlu0 %921
      %923 = vrot.lane.b32.xlu0 %v541, 8
      %v924 = vpop.permute.xlu0 %923
      %925 = vrot.lane.b32.xlu0 %v544, 8
      %v926 = vpop.permute.xlu0 %925
      %927 = vrot.lane.b32.xlu0 %v546, 8
      %v928 = vpop.permute.xlu0 %927
      %929 = vrot.lane.b32.xlu0 %v549, 8
      %v930 = vpop.permute.xlu0 %929
      %931 = vrot.lane.b32.xlu0 %v551, 8
      %v932 = vpop.permute.xlu0 %931
      %933 = vrot.lane.b32.xlu0 %v554, 8
      %v934 = vpop.permute.xlu0 %933
      %935 = vrot.lane.b32.xlu0 %v556, 8
      %v936 = vpop.permute.xlu0 %935
      %937 = vrot.lane.b32.xlu0 %v559, 8
      %v938 = vpop.permute.xlu0 %937
      %939 = vrot.lane.b32.xlu0 %v561, 8
      %v940 = vpop.permute.xlu0 %939
      %941 = vrot.lane.b32.xlu0 %v564, 8
      %v942 = vpop.permute.xlu0 %941
      %943 = vrot.lane.b32.xlu0 %v566, 8
      %v944 = vpop.permute.xlu0 %943
      %945 = vrot.lane.b32.xlu0 %v569, 8
      %v946 = vpop.permute.xlu0 %945
      %947 = vrot.lane.b32.xlu0 %v571, 8
      %v948 = vpop.permute.xlu0 %947
      %949 = vrot.lane.b32.xlu0 %v574, 8
      %v950 = vpop.permute.xlu0 %949
      %951 = vrot.lane.b32.xlu0 %v576, 8
      %v952 = vpop.permute.xlu0 %951
      %953 = vrot.lane.b32.xlu0 %v579, 8
      %v954 = vpop.permute.xlu0 %953
      %955 = vrot.lane.b32.xlu0 %v581, 8
      %v956 = vpop.permute.xlu0 %955
      %957 = vrot.lane.b32.xlu0 %v584, 8
      %v958 = vpop.permute.xlu0 %957
      %959 = vrot.lane.b32.xlu0 %v586, 8
      %v960 = vpop.permute.xlu0 %959
      %961 = vrot.lane.b32.xlu0 %v589, 8
      %v962 = vpop.permute.xlu0 %961
      %963 = vrot.lane.b32.xlu0 %v591, 8
      %v964 = vpop.permute.xlu0 %963
      %965 = vrot.lane.b32.xlu0 %v594, 8
      %v966 = vpop.permute.xlu0 %965
      %967 = vrot.lane.b32.xlu0 %v596, 8
      %v968 = vpop.permute.xlu0 %967
      %969 = vrot.lane.b32.xlu0 %v599, 8
      %v970 = vpop.permute.xlu0 %969
      %971 = vrot.lane.b32.xlu0 %v601, 8
      %v972 = vpop.permute.xlu0 %971
      %973 = vrot.lane.b32.xlu0 %v604, 8
      %v974 = vpop.permute.xlu0 %973
      %975 = vrot.lane.b32.xlu0 %v606, 8
      %v976 = vpop.permute.xlu0 %975
      %977 = vrot.lane.b32.xlu0 %v609, 8
      %v978 = vpop.permute.xlu0 %977
      %979 = vrot.lane.b32.xlu0 %v611, 8
      %v980 = vpop.permute.xlu0 %979
      %981 = vrot.lane.b32.xlu0 %v614, 8
      %v982 = vpop.permute.xlu0 %981
      %983 = vrot.lane.b32.xlu0 %v616, 8
      %v984 = vpop.permute.xlu0 %983
      %1017 = vrot.lane.b32.xlu0 %v353, 12
      %v1018 = vpop.permute.xlu0 %1017
      %1019 = vrot.lane.b32.xlu0 %v354, 12
      %v1020 = vpop.permute.xlu0 %1019
      %1021 = vrot.lane.b32.xlu0 %v356, 12
      %v1022 = vpop.permute.xlu0 %1021
      %1023 = vrot.lane.b32.xlu0 %v357, 12
      %v1024 = vpop.permute.xlu0 %1023
      %1025 = vrot.lane.b32.xlu0 %v359, 12
      %v1026 = vpop.permute.xlu0 %1025
      %1027 = vrot.lane.b32.xlu0 %v360, 12
      %v1028 = vpop.permute.xlu0 %1027
      %1029 = vrot.lane.b32.xlu0 %v362, 12
      %v1030 = vpop.permute.xlu0 %1029
      %1031 = vrot.lane.b32.xlu0 %v363, 12
      %v1032 = vpop.permute.xlu0 %1031
      %1033 = vrot.lane.b32.xlu0 %v365, 12
      %v1034 = vpop.permute.xlu0 %1033
      %1035 = vrot.lane.b32.xlu0 %v366, 12
      %v1036 = vpop.permute.xlu0 %1035
      %1037 = vrot.lane.b32.xlu0 %v368, 12
      %v1038 = vpop.permute.xlu0 %1037
      %1039 = vrot.lane.b32.xlu0 %v369, 12
      %v1040 = vpop.permute.xlu0 %1039
      %1041 = vrot.lane.b32.xlu0 %v371, 12
      %v1042 = vpop.permute.xlu0 %1041
      %1043 = vrot.lane.b32.xlu0 %v372, 12
      %v1044 = vpop.permute.xlu0 %1043
      %1045 = vrot.lane.b32.xlu0 %v374, 12
      %v1046 = vpop.permute.xlu0 %1045
      %1047 = vrot.lane.b32.xlu0 %v375, 12
      %v1048 = vpop.permute.xlu0 %1047
      %1049 = vrot.lane.b32.xlu0 %v377, 12
      %v1050 = vpop.permute.xlu0 %1049
      %1051 = vrot.lane.b32.xlu0 %v378, 12
      %v1052 = vpop.permute.xlu0 %1051
      %1053 = vrot.lane.b32.xlu0 %v380, 12
      %v1054 = vpop.permute.xlu0 %1053
      %1055 = vrot.lane.b32.xlu0 %v381, 12
      %v1056 = vpop.permute.xlu0 %1055
      %1057 = vrot.lane.b32.xlu0 %v383, 12
      %v1058 = vpop.permute.xlu0 %1057
      %1059 = vrot.lane.b32.xlu0 %v384, 12
      %v1060 = vpop.permute.xlu0 %1059
      %1061 = vrot.lane.b32.xlu0 %v386, 12
      %v1062 = vpop.permute.xlu0 %1061
      %1063 = vrot.lane.b32.xlu0 %v387, 12
      %v1064 = vpop.permute.xlu0 %1063
      %1065 = vrot.lane.b32.xlu0 %v389, 12
      %v1066 = vpop.permute.xlu0 %1065
      %1067 = vrot.lane.b32.xlu0 %v390, 12
      %v1068 = vpop.permute.xlu0 %1067
      %1069 = vrot.lane.b32.xlu0 %v392, 12
      %v1070 = vpop.permute.xlu0 %1069
      %1071 = vrot.lane.b32.xlu0 %v393, 12
      %v1072 = vpop.permute.xlu0 %1071
      %1073 = vrot.lane.b32.xlu0 %v395, 12
      %v1074 = vpop.permute.xlu0 %1073
      %1075 = vrot.lane.b32.xlu0 %v396, 12
      %v1076 = vpop.permute.xlu0 %1075
      %1077 = vrot.lane.b32.xlu0 %v398, 12
      %v1078 = vpop.permute.xlu0 %1077
      %1079 = vrot.lane.b32.xlu0 %v399, 12
      %v1080 = vpop.permute.xlu0 %1079
      %1113 = vrot.lane.b32.xlu0 %v667, 44
      %v1114 = vpop.permute.xlu0 %1113
      %1115 = vrot.lane.b32.xlu0 %v669, 44
      %v1116 = vpop.permute.xlu0 %1115
      %1117 = vrot.lane.b32.xlu0 %v672, 44
      %v1118 = vpop.permute.xlu0 %1117
      %1119 = vrot.lane.b32.xlu0 %v674, 44
      %v1120 = vpop.permute.xlu0 %1119
      %1121 = vrot.lane.b32.xlu0 %v677, 44
      %v1122 = vpop.permute.xlu0 %1121
      %1123 = vrot.lane.b32.xlu0 %v679, 44
      %v1124 = vpop.permute.xlu0 %1123
      %1125 = vrot.lane.b32.xlu0 %v682, 44
      %v1126 = vpop.permute.xlu0 %1125
      %1127 = vrot.lane.b32.xlu0 %v684, 44
      %v1128 = vpop.permute.xlu0 %1127
      %1129 = vrot.lane.b32.xlu0 %v687, 44
      %v1130 = vpop.permute.xlu0 %1129
      %1131 = vrot.lane.b32.xlu0 %v689, 44
      %v1132 = vpop.permute.xlu0 %1131
      %1133 = vrot.lane.b32.xlu0 %v692, 44
      %v1134 = vpop.permute.xlu0 %1133
      %1135 = vrot.lane.b32.xlu0 %v694, 44
      %v1136 = vpop.permute.xlu0 %1135
      %1137 = vrot.lane.b32.xlu0 %v697, 44
      %v1138 = vpop.permute.xlu0 %1137
      %1139 = vrot.lane.b32.xlu0 %v699, 44
      %v1140 = vpop.permute.xlu0 %1139
      %1141 = vrot.lane.b32.xlu0 %v702, 44
      %v1142 = vpop.permute.xlu0 %1141
      %1143 = vrot.lane.b32.xlu0 %v704, 44
      %v1144 = vpop.permute.xlu0 %1143
      %1145 = vrot.lane.b32.xlu0 %v707, 44
      %v1146 = vpop.permute.xlu0 %1145
      %1147 = vrot.lane.b32.xlu0 %v709, 44
      %v1148 = vpop.permute.xlu0 %1147
      %1149 = vrot.lane.b32.xlu0 %v712, 44
      %v1150 = vpop.permute.xlu0 %1149
      %1151 = vrot.lane.b32.xlu0 %v714, 44
      %v1152 = vpop.permute.xlu0 %1151
      %1153 = vrot.lane.b32.xlu0 %v717, 44
      %v1154 = vpop.permute.xlu0 %1153
      %1155 = vrot.lane.b32.xlu0 %v719, 44
      %v1156 = vpop.permute.xlu0 %1155
      %1157 = vrot.lane.b32.xlu0 %v722, 44
      %v1158 = vpop.permute.xlu0 %1157
      %1159 = vrot.lane.b32.xlu0 %v724, 44
      %v1160 = vpop.permute.xlu0 %1159
      %1161 = vrot.lane.b32.xlu0 %v727, 44
      %v1162 = vpop.permute.xlu0 %1161
      %1163 = vrot.lane.b32.xlu0 %v729, 44
      %v1164 = vpop.permute.xlu0 %1163
      %1165 = vrot.lane.b32.xlu0 %v732, 44
      %v1166 = vpop.permute.xlu0 %1165
      %1167 = vrot.lane.b32.xlu0 %v734, 44
      %v1168 = vpop.permute.xlu0 %1167
      %1169 = vrot.lane.b32.xlu0 %v737, 44
      %v1170 = vpop.permute.xlu0 %1169
      %1171 = vrot.lane.b32.xlu0 %v739, 44
      %v1172 = vpop.permute.xlu0 %1171
      %1173 = vrot.lane.b32.xlu0 %v742, 44
      %v1174 = vpop.permute.xlu0 %1173
      %1175 = vrot.lane.b32.xlu0 %v744, 44
      %v1176 = vpop.permute.xlu0 %1175
      %1209 = vrot.lane.b32.xlu0 %v747, 76
      %v1210 = vpop.permute.xlu0 %1209
      %1211 = vrot.lane.b32.xlu0 %v749, 76
      %v1212 = vpop.permute.xlu0 %1211
      %1213 = vrot.lane.b32.xlu0 %v752, 76
      %v1214 = vpop.permute.xlu0 %1213
      %1215 = vrot.lane.b32.xlu0 %v754, 76
      %v1216 = vpop.permute.xlu0 %1215
      %1217 = vrot.lane.b32.xlu0 %v757, 76
      %v1218 = vpop.permute.xlu0 %1217
      %1219 = vrot.lane.b32.xlu0 %v759, 76
      %v1220 = vpop.permute.xlu0 %1219
      %1221 = vrot.lane.b32.xlu0 %v762, 76
      %v1222 = vpop.permute.xlu0 %1221
      %1223 = vrot.lane.b32.xlu0 %v764, 76
      %v1224 = vpop.permute.xlu0 %1223
      %1225 = vrot.lane.b32.xlu0 %v767, 76
      %v1226 = vpop.permute.xlu0 %1225
      %1227 = vrot.lane.b32.xlu0 %v769, 76
      %v1228 = vpop.permute.xlu0 %1227
      %1229 = vrot.lane.b32.xlu0 %v772, 76
      %v1230 = vpop.permute.xlu0 %1229
      %1231 = vrot.lane.b32.xlu0 %v774, 76
      %v1232 = vpop.permute.xlu0 %1231
      %1233 = vrot.lane.b32.xlu0 %v777, 76
      %v1234 = vpop.permute.xlu0 %1233
      %1235 = vrot.lane.b32.xlu0 %v779, 76
      %v1236 = vpop.permute.xlu0 %1235
      %1237 = vrot.lane.b32.xlu0 %v782, 76
      %v1238 = vpop.permute.xlu0 %1237
      %1239 = vrot.lane.b32.xlu0 %v784, 76
      %v1240 = vpop.permute.xlu0 %1239
      %1241 = vrot.lane.b32.xlu0 %v787, 76
      %v1242 = vpop.permute.xlu0 %1241
      %1243 = vrot.lane.b32.xlu0 %v789, 76
      %v1244 = vpop.permute.xlu0 %1243
      %1245 = vrot.lane.b32.xlu0 %v792, 76
      %v1246 = vpop.permute.xlu0 %1245
      %1247 = vrot.lane.b32.xlu0 %v794, 76
      %v1248 = vpop.permute.xlu0 %1247
      %1249 = vrot.lane.b32.xlu0 %v797, 76
      %v1250 = vpop.permute.xlu0 %1249
      %1251 = vrot.lane.b32.xlu0 %v799, 76
      %v1252 = vpop.permute.xlu0 %1251
      %1253 = vrot.lane.b32.xlu0 %v802, 76
      %v1254 = vpop.permute.xlu0 %1253
      %1255 = vrot.lane.b32.xlu0 %v804, 76
      %v1256 = vpop.permute.xlu0 %1255
      %1257 = vrot.lane.b32.xlu0 %v807, 76
      %v1258 = vpop.permute.xlu0 %1257
      %1259 = vrot.lane.b32.xlu0 %v809, 76
      %v1260 = vpop.permute.xlu0 %1259
      %1261 = vrot.lane.b32.xlu0 %v812, 76
      %v1262 = vpop.permute.xlu0 %1261
      %1263 = vrot.lane.b32.xlu0 %v814, 76
      %v1264 = vpop.permute.xlu0 %1263
      %1265 = vrot.lane.b32.xlu0 %v817, 76
      %v1266 = vpop.permute.xlu0 %1265
      %1267 = vrot.lane.b32.xlu0 %v819, 76
      %v1268 = vpop.permute.xlu0 %1267
      %1269 = vrot.lane.b32.xlu0 %v822, 76
      %v1270 = vpop.permute.xlu0 %1269
      %1271 = vrot.lane.b32.xlu0 %v824, 76
      %v1272 = vpop.permute.xlu0 %1271
      %vm1305 = vcmask 31744
      %v1306 = vsel %vm1305, %v299, %v826
      %v1307 = vsel %vm1305, %v300, %v828
      %v1308 = vsel %vm1305, %v302, %v830
      %v1309 = vsel %vm1305, %v303, %v832
      %v1310 = vsel %vm1305, %v305, %v834
      %v1311 = vsel %vm1305, %v306, %v836
      %v1312 = vsel %vm1305, %v308, %v838
      %v1313 = vsel %vm1305, %v309, %v840
      %v1314 = vsel %vm1305, %v311, %v842
      %v1315 = vsel %vm1305, %v312, %v844
      %v1316 = vsel %vm1305, %v314, %v846
      %v1317 = vsel %vm1305, %v315, %v848
      %v1318 = vsel %vm1305, %v317, %v850
      %v1319 = vsel %vm1305, %v318, %v852
      %v1320 = vsel %vm1305, %v320, %v854
      %v1321 = vsel %vm1305, %v321, %v856
      %v1322 = vsel %vm1305, %v323, %v858
      %v1323 = vsel %vm1305, %v324, %v860
      %v1324 = vsel %vm1305, %v326, %v862
      %v1325 = vsel %vm1305, %v327, %v864
      %v1326 = vsel %vm1305, %v329, %v866
      %v1327 = vsel %vm1305, %v330, %v868
      %v1328 = vsel %vm1305, %v332, %v870
      %v1329 = vsel %vm1305, %v333, %v872
      %v1330 = vsel %vm1305, %v335, %v874
      %v1331 = vsel %vm1305, %v336, %v876
      %v1332 = vsel %vm1305, %v338, %v878
      %v1333 = vsel %vm1305, %v339, %v880
      %v1334 = vsel %vm1305, %v341, %v882
      %v1335 = vsel %vm1305, %v342, %v884
      %v1336 = vsel %vm1305, %v344, %v886
      %v1337 = vsel %vm1305, %v345, %v888
      %vm1338 = vcmask 64512
      %v1339 = vsel %vm1338, %v1306, %v922
      %v1340 = vsel %vm1338, %v1307, %v924
      %v1341 = vsel %vm1338, %v1308, %v926
      %v1342 = vsel %vm1338, %v1309, %v928
      %v1343 = vsel %vm1338, %v1310, %v930
      %v1344 = vsel %vm1338, %v1311, %v932
      %v1345 = vsel %vm1338, %v1312, %v934
      %v1346 = vsel %vm1338, %v1313, %v936
      %v1347 = vsel %vm1338, %v1314, %v938
      %v1348 = vsel %vm1338, %v1315, %v940
      %v1349 = vsel %vm1338, %v1316, %v942
      %v1350 = vsel %vm1338, %v1317, %v944
      %v1351 = vsel %vm1338, %v1318, %v946
      %v1352 = vsel %vm1338, %v1319, %v948
      %v1353 = vsel %vm1338, %v1320, %v950
      %v1354 = vsel %vm1338, %v1321, %v952
      %v1355 = vsel %vm1338, %v1322, %v954
      %v1356 = vsel %vm1338, %v1323, %v956
      %v1357 = vsel %vm1338, %v1324, %v958
      %v1358 = vsel %vm1338, %v1325, %v960
      %v1359 = vsel %vm1338, %v1326, %v962
      %v1360 = vsel %vm1338, %v1327, %v964
      %v1361 = vsel %vm1338, %v1328, %v966
      %v1362 = vsel %vm1338, %v1329, %v968
      %v1363 = vsel %vm1338, %v1330, %v970
      %v1364 = vsel %vm1338, %v1331, %v972
      %v1365 = vsel %vm1338, %v1332, %v974
      %v1366 = vsel %vm1338, %v1333, %v976
      %v1367 = vsel %vm1338, %v1334, %v978
      %v1368 = vsel %vm1338, %v1335, %v980
      %v1369 = vsel %vm1338, %v1336, %v982
      %v1370 = vsel %vm1338, %v1337, %v984
      %vm1371 = vcmask 97280
      %v1372 = vsel %vm1371, %v1339, %v1018
      %v1373 = vsel %vm1371, %v1340, %v1020
      %v1374 = vsel %vm1371, %v1341, %v1022
      %v1375 = vsel %vm1371, %v1342, %v1024
      %v1376 = vsel %vm1371, %v1343, %v1026
      %v1377 = vsel %vm1371, %v1344, %v1028
      %v1378 = vsel %vm1371, %v1345, %v1030
      %v1379 = vsel %vm1371, %v1346, %v1032
      %v1380 = vsel %vm1371, %v1347, %v1034
      %v1381 = vsel %vm1371, %v1348, %v1036
      %v1382 = vsel %vm1371, %v1349, %v1038
      %v1383 = vsel %vm1371, %v1350, %v1040
      %v1384 = vsel %vm1371, %v1351, %v1042
      %v1385 = vsel %vm1371, %v1352, %v1044
      %v1386 = vsel %vm1371, %v1353, %v1046
      %v1387 = vsel %vm1371, %v1354, %v1048
      %v1388 = vsel %vm1371, %v1355, %v1050
      %v1389 = vsel %vm1371, %v1356, %v1052
      %v1390 = vsel %vm1371, %v1357, %v1054
      %v1391 = vsel %vm1371, %v1358, %v1056
      %v1392 = vsel %vm1371, %v1359, %v1058
      %v1393 = vsel %vm1371, %v1360, %v1060
      %v1394 = vsel %vm1371, %v1361, %v1062
      %v1395 = vsel %vm1371, %v1362, %v1064
      %v1396 = vsel %vm1371, %v1363, %v1066
      %v1397 = vsel %vm1371, %v1364, %v1068
      %v1398 = vsel %vm1371, %v1365, %v1070
      %v1399 = vsel %vm1371, %v1366, %v1072
      %v1400 = vsel %vm1371, %v1367, %v1074
      %v1401 = vsel %vm1371, %v1368, %v1076
      %v1402 = vsel %vm1371, %v1369, %v1078
      %v1403 = vsel %vm1371, %v1370, %v1080
      %vm1404 = vcmask 359424
      %v1405 = vsel %vm1404, %v1372, %v1114
      %v1406 = vsel %vm1404, %v1373, %v1116
      %v1407 = vsel %vm1404, %v1374, %v1118
      %v1408 = vsel %vm1404, %v1375, %v1120
      %v1409 = vsel %vm1404, %v1376, %v1122
      %v1410 = vsel %vm1404, %v1377, %v1124
      %v1411 = vsel %vm1404, %v1378, %v1126
      %v1412 = vsel %vm1404, %v1379, %v1128
      %v1413 = vsel %vm1404, %v1380, %v1130
      %v1414 = vsel %vm1404, %v1381, %v1132
      %v1415 = vsel %vm1404, %v1382, %v1134
      %v1416 = vsel %vm1404, %v1383, %v1136
      %v1417 = vsel %vm1404, %v1384, %v1138
      %v1418 = vsel %vm1404, %v1385, %v1140
      %v1419 = vsel %vm1404, %v1386, %v1142
      %v1420 = vsel %vm1404, %v1387, %v1144
      %v1421 = vsel %vm1404, %v1388, %v1146
      %v1422 = vsel %vm1404, %v1389, %v1148
      %v1423 = vsel %vm1404, %v1390, %v1150
      %v1424 = vsel %vm1404, %v1391, %v1152
      %v1425 = vsel %vm1404, %v1392, %v1154
      %v1426 = vsel %vm1404, %v1393, %v1156
      %v1427 = vsel %vm1404, %v1394, %v1158
      %v1428 = vsel %vm1404, %v1395, %v1160
      %v1429 = vsel %vm1404, %v1396, %v1162
      %v1430 = vsel %vm1404, %v1397, %v1164
      %v1431 = vsel %vm1404, %v1398, %v1166
      %v1432 = vsel %vm1404, %v1399, %v1168
      %v1433 = vsel %vm1404, %v1400, %v1170
      %v1434 = vsel %vm1404, %v1401, %v1172
      %v1435 = vsel %vm1404, %v1402, %v1174
      %v1436 = vsel %vm1404, %v1403, %v1176
      %vm1437 = vcmask 621568
      %v1438 = vsel %vm1437, %v1405, %v1210
      %v1439 = vsel %vm1437, %v1406, %v1212
      %v1440 = vsel %vm1437, %v1407, %v1214
      %v1441 = vsel %vm1437, %v1408, %v1216
      %v1442 = vsel %vm1437, %v1409, %v1218
      %v1443 = vsel %vm1437, %v1410, %v1220
      %v1444 = vsel %vm1437, %v1411, %v1222
      %v1445 = vsel %vm1437, %v1412, %v1224
      %v1446 = vsel %vm1437, %v1413, %v1226
      %v1447 = vsel %vm1437, %v1414, %v1228
      %v1448 = vsel %vm1437, %v1415, %v1230
      %v1449 = vsel %vm1437, %v1416, %v1232
      %v1450 = vsel %vm1437, %v1417, %v1234
      %v1451 = vsel %vm1437, %v1418, %v1236
      %v1452 = vsel %vm1437, %v1419, %v1238
      %v1453 = vsel %vm1437, %v1420, %v1240
      %v1454 = vsel %vm1437, %v1421, %v1242
      %v1455 = vsel %vm1437, %v1422, %v1244
      %v1456 = vsel %vm1437, %v1423, %v1246
      %v1457 = vsel %vm1437, %v1424, %v1248
      %v1458 = vsel %vm1437, %v1425, %v1250
      %v1459 = vsel %vm1437, %v1426, %v1252
      %v1460 = vsel %vm1437, %v1427, %v1254
      %v1461 = vsel %vm1437, %v1428, %v1256
      %v1462 = vsel %vm1437, %v1429, %v1258
      %v1463 = vsel %vm1437, %v1430, %v1260
      %v1464 = vsel %vm1437, %v1431, %v1262
      %v1465 = vsel %vm1437, %v1432, %v1264
      %v1466 = vsel %vm1437, %v1433, %v1266
      %v1467 = vsel %vm1437, %v1434, %v1268
      %v1468 = vsel %vm1437, %v1435, %v1270
      %v1469 = vsel %vm1437, %v1436, %v1272
      %v1470 = vld [vmem:[%s1] sm:$0xff]
      %v1471 = vld [vmem:[%s1 + $0x8] sm:$0xff]
      %v1472 = vld [vmem:[%s1 + $0x10] sm:$0xff]
      %v1473 = vld [vmem:[%s1 + $0x18] sm:$0xff]
      %v1474 = vld [vmem:[%s1 + $0x20] sm:$0xff]
      %v1475 = vld [vmem:[%s1 + $0x28] sm:$0xff]
      %v1476 = vld [vmem:[%s1 + $0x30] sm:$0xff]
      %v1477 = vld [vmem:[%s1 + $0x38] sm:$0xff]
      %v1478 = vld [vmem:[%s1 + $0x40] sm:$0xff]
      %v1479 = vld [vmem:[%s1 + $0x48] sm:$0xff]
      %v1480 = vld [vmem:[%s1 + $0x50] sm:$0xff]
      %v1481 = vld [vmem:[%s1 + $0x58] sm:$0xff]
      %v1482 = vld [vmem:[%s1 + $0x60] sm:$0xff]
      %v1483 = vld [vmem:[%s1 + $0x68] sm:$0xf]
      %v1487 = vrot.slane %v347, 1
      %v1488 = vrot.slane %v348, 1
      %v1489 = vsel %vm455, %v1487, %v1488
      %v1490 = vrot.slane %v349, 1
      %v1491 = vsel %vm455, %v1488, %v1490
      %v1492 = vrot.slane %v347, 2
      %v1493 = vrot.slane %v348, 2
      %v1494 = vsel %vm536, %v1492, %v1493
      %v1495 = vrot.slane %v349, 2
      %v1496 = vsel %vm536, %v1493, %v1495
      %v1500 = vrot.slane %v401, 1
      %v1501 = vrot.slane %v402, 1
      %v1502 = vsel %vm455, %v1500, %v1501
      %v1503 = vrot.slane %v403, 1
      %v1504 = vsel %vm455, %v1501, %v1503
      %v1505 = vrot.slane %v401, 2
      %v1506 = vrot.slane %v402, 2
      %v1507 = vsel %vm536, %v1505, %v1506
      %v1508 = vrot.slane %v403, 2
      %v1509 = vsel %vm536, %v1506, %v1508
      %1510 = vrot.lane.b32.xlu0 %v1489, 4
      %v1511 = vpop.permute.xlu0 %1510
      %1512 = vrot.lane.b32.xlu0 %v1491, 4
      %v1513 = vpop.permute.xlu0 %1512
      %1516 = vrot.lane.b32.xlu0 %v1494, 8
      %v1517 = vpop.permute.xlu0 %1516
      %1518 = vrot.lane.b32.xlu0 %v1496, 8
      %v1519 = vpop.permute.xlu0 %1518
      %1522 = vrot.lane.b32.xlu0 %v401, 12
      %v1523 = vpop.permute.xlu0 %1522
      %1524 = vrot.lane.b32.xlu0 %v402, 12
      %v1525 = vpop.permute.xlu0 %1524
      %1528 = vrot.lane.b32.xlu0 %v1502, 44
      %v1529 = vpop.permute.xlu0 %1528
      %1530 = vrot.lane.b32.xlu0 %v1504, 44
      %v1531 = vpop.permute.xlu0 %1530
      %1534 = vrot.lane.b32.xlu0 %v1507, 76
      %v1535 = vpop.permute.xlu0 %1534
      %1536 = vrot.lane.b32.xlu0 %v1509, 76
      %v1537 = vpop.permute.xlu0 %1536
      %v1540 = vsel %vm1305, %v347, %v1511
      %v1541 = vsel %vm1305, %v348, %v1513
      %v1542 = vsel %vm1338, %v1540, %v1517
      %v1543 = vsel %vm1338, %v1541, %v1519
      %v1544 = vsel %vm1371, %v1542, %v1523
      %v1545 = vsel %vm1371, %v1543, %v1525
      %v1546 = vsel %vm1404, %v1544, %v1529
      %v1547 = vsel %vm1404, %v1545, %v1531
      %v1548 = vsel %vm1437, %v1546, %v1535
      %v1549 = vsel %vm1437, %v1547, %v1537
      %s1550 = scalar_lea.vmem %s1, 112
      %v1551 = vld [vmem:[%s1550] sm:$0xff]
      %v1552 = vld [vmem:[%s1550 + $0x8] sm:$0xff]
      %v1553 = vld [vmem:[%s1550 + $0x10] sm:$0xff]
      %v1554 = vld [vmem:[%s1550 + $0x18] sm:$0xff]
      %v1555 = vld [vmem:[%s1550 + $0x20] sm:$0xff]
      %v1556 = vld [vmem:[%s1550 + $0x28] sm:$0xff]
      %v1557 = vld [vmem:[%s1550 + $0x30] sm:$0xff]
      %v1558 = vld [vmem:[%s1550 + $0x38] sm:$0xff]
      %v1559 = vld [vmem:[%s1550 + $0x40] sm:$0xff]
      %v1560 = vld [vmem:[%s1550 + $0x48] sm:$0xff]
      %v1561 = vld [vmem:[%s1550 + $0x50] sm:$0xff]
      %v1562 = vld [vmem:[%s1550 + $0x58] sm:$0xff]
      %v1563 = vld [vmem:[%s1550 + $0x60] sm:$0xff]
      %v1564 = vld [vmem:[%s1550 + $0x68] sm:$0xf]
      %vm1565 = vcmask 883712
      %v1567 = vsel %vm1565, %v1440, 0
      %v1570 = vsel %vm1565, %v1441, 0
      %v1573 = vsel %vm1565, %v1442, 0
      %v1576 = vsel %vm1565, %v1443, 0
      %v1579 = vsel %vm1565, %v1444, 0
      %v1582 = vsel %vm1565, %v1445, 0
      %v1585 = vsel %vm1565, %v1446, 0
      %v1588 = vsel %vm1565, %v1447, 0
      %v1591 = vsel %vm1565, %v1448, 0
      %v1594 = vsel %vm1565, %v1449, 0
      %v1597 = vsel %vm1565, %v1450, 0
      %v1600 = vsel %vm1565, %v1451, 0
      %v1603 = vsel %vm1565, %v1452, 0
      %v1606 = vsel %vm1565, %v1453, 0
      %v1609 = vsel %vm1565, %v1454, 0
      %v1612 = vsel %vm1565, %v1455, 0
      %v1615 = vsel %vm1565, %v1456, 0
      %v1618 = vsel %vm1565, %v1457, 0
      %v1621 = vsel %vm1565, %v1458, 0
      %v1624 = vsel %vm1565, %v1459, 0
      %v1627 = vsel %vm1565, %v1460, 0
      %v1630 = vsel %vm1565, %v1461, 0
      %v1633 = vsel %vm1565, %v1462, 0
      %v1636 = vsel %vm1565, %v1463, 0
      %v1639 = vsel %vm1565, %v1464, 0
      %v1642 = vsel %vm1565, %v1465, 0
      %v1645 = vsel %vm1565, %v1466, 0
      %v1648 = vsel %vm1565, %v1467, 0
      %v1651 = vsel %vm1565, %v1468, 0
      %v1654 = vsel %vm1565, %v1469, 0
      %v1657 = vsel %vm1565, %v1548, 0
      %v1660 = vsel %vm1565, %v1549, 0
      %vm1662 = vcmask 1043456
      %v1664 = vsel %vm1662, %v1564, 0
      %1666 = vmatpush.msra.mxu0 0.0
      %1667 = vmatpush.msra.mxu0 0.0
      %1668 = vmatpush.msra.mxu0 %v1664
      %1669 = vmatpush.msra.mxu0 %v1563
      %1670 = vmatpush.msra.mxu0 %v1562
      %1671 = vmatpush.msra.mxu0 %v1561
      %1672 = vmatpush.msra.mxu0 %v1560
      %1673 = vmatpush.msra.mxu0 %v1559
      %1674 = vmatpush.msra.mxu0 %v1558
      %1675 = vmatpush.msra.mxu0 %v1557
      %1676 = vmatpush.msra.mxu0 %v1556
      %1677 = vmatpush.msra.mxu0 %v1555
      %1678 = vmatpush.msra.mxu0 %v1554
      %1679 = vmatpush.msra.mxu0 %v1553
      %1680 = vmatpush.msra.mxu0 %v1552
      %1681 = vmatpush.msra.mxu0 %v1551
      %1682 = vmatmul.f32.gmra.mxu0 %v1567
      %v1683 = vpop.f32.mrf.mxu0
      %v1684 = vadd.f32 0.0, %v1683
      %1685 = vmatmul.f32.gmra.mxu0 %v1570
      %v1686 = vpop.f32.mrf.mxu0
      %v1687 = vadd.f32 0.0, %v1686
      %1688 = vmatmul.f32.gmra.mxu0 %v1573
      %v1689 = vpop.f32.mrf.mxu0
      %v1690 = vadd.f32 0.0, %v1689
      %1691 = vmatmul.f32.gmra.mxu0 %v1576
      %v1692 = vpop.f32.mrf.mxu0
      %v1693 = vadd.f32 0.0, %v1692
      %1694 = vmatmul.f32.gmra.mxu0 %v1579
      %v1695 = vpop.f32.mrf.mxu0
      %v1696 = vadd.f32 0.0, %v1695
      %1697 = vmatmul.f32.gmra.mxu0 %v1582
      %v1698 = vpop.f32.mrf.mxu0
      %v1699 = vadd.f32 0.0, %v1698
      %1700 = vmatmul.f32.gmra.mxu0 %v1585
      %v1701 = vpop.f32.mrf.mxu0
      %v1702 = vadd.f32 0.0, %v1701
      %1703 = vmatmul.f32.gmra.mxu0 %v1588
      %v1704 = vpop.f32.mrf.mxu0
      %v1705 = vadd.f32 0.0, %v1704
      %1706 = vmatmul.f32.gmra.mxu0 %v1591
      %v1707 = vpop.f32.mrf.mxu0
      %v1708 = vadd.f32 0.0, %v1707
      %1709 = vmatmul.f32.gmra.mxu0 %v1594
      %v1710 = vpop.f32.mrf.mxu0
      %v1711 = vadd.f32 0.0, %v1710
      %1712 = vmatmul.f32.gmra.mxu0 %v1597
      %v1713 = vpop.f32.mrf.mxu0
      %v1714 = vadd.f32 0.0, %v1713
      %1715 = vmatmul.f32.gmra.mxu0 %v1600
      %v1716 = vpop.f32.mrf.mxu0
      %v1717 = vadd.f32 0.0, %v1716
      %1718 = vmatmul.f32.gmra.mxu0 %v1603
      %v1719 = vpop.f32.mrf.mxu0
      %v1720 = vadd.f32 0.0, %v1719
      %1721 = vmatmul.f32.gmra.mxu0 %v1606
      %v1722 = vpop.f32.mrf.mxu0
      %v1723 = vadd.f32 0.0, %v1722
      %1724 = vmatmul.f32.gmra.mxu0 %v1609
      %v1725 = vpop.f32.mrf.mxu0
      %v1726 = vadd.f32 0.0, %v1725
      %1727 = vmatmul.f32.gmra.mxu0 %v1612
      %v1728 = vpop.f32.mrf.mxu0
      %v1729 = vadd.f32 0.0, %v1728
      %1730 = vmatmul.f32.gmra.mxu0 %v1615
      %v1731 = vpop.f32.mrf.mxu0
      %v1732 = vadd.f32 0.0, %v1731
      %1733 = vmatmul.f32.gmra.mxu0 %v1618
      %v1734 = vpop.f32.mrf.mxu0
      %v1735 = vadd.f32 0.0, %v1734
      %1736 = vmatmul.f32.gmra.mxu0 %v1621
      %v1737 = vpop.f32.mrf.mxu0
      %v1738 = vadd.f32 0.0, %v1737
      %1739 = vmatmul.f32.gmra.mxu0 %v1624
      %v1740 = vpop.f32.mrf.mxu0
      %v1741 = vadd.f32 0.0, %v1740
      %1742 = vmatmul.f32.gmra.mxu0 %v1627
      %v1743 = vpop.f32.mrf.mxu0
      %v1744 = vadd.f32 0.0, %v1743
      %1745 = vmatmul.f32.gmra.mxu0 %v1630
      %v1746 = vpop.f32.mrf.mxu0
      %v1747 = vadd.f32 0.0, %v1746
      %1748 = vmatmul.f32.gmra.mxu0 %v1633
      %v1749 = vpop.f32.mrf.mxu0
      %v1750 = vadd.f32 0.0, %v1749
      %1751 = vmatmul.f32.gmra.mxu0 %v1636
      %v1752 = vpop.f32.mrf.mxu0
      %v1753 = vadd.f32 0.0, %v1752
      %1754 = vmatmul.f32.gmra.mxu0 %v1639
      %v1755 = vpop.f32.mrf.mxu0
      %v1756 = vadd.f32 0.0, %v1755
      %1757 = vmatmul.f32.gmra.mxu0 %v1642
      %v1758 = vpop.f32.mrf.mxu0
      %v1759 = vadd.f32 0.0, %v1758
      %1760 = vmatmul.f32.gmra.mxu0 %v1645
      %v1761 = vpop.f32.mrf.mxu0
      %v1762 = vadd.f32 0.0, %v1761
      %1763 = vmatmul.f32.gmra.mxu0 %v1648
      %v1764 = vpop.f32.mrf.mxu0
      %v1765 = vadd.f32 0.0, %v1764
      %1766 = vmatmul.f32.gmra.mxu0 %v1651
      %v1767 = vpop.f32.mrf.mxu0
      %v1768 = vadd.f32 0.0, %v1767
      %1769 = vmatmul.f32.gmra.mxu0 %v1654
      %v1770 = vpop.f32.mrf.mxu0
      %v1771 = vadd.f32 0.0, %v1770
      %1772 = vmatmul.f32.gmra.mxu0 %v1657
      %v1773 = vpop.f32.mrf.mxu0
      %v1774 = vadd.f32 0.0, %v1773
      %1775 = vmatmul.f32.gmra.mxu0 %v1660
      %v1776 = vpop.f32.mrf.mxu0
      %v1777 = vadd.f32 0.0, %v1776
      %1778 = vdwg.mxu0
      %v1780 = vsel %vm1565, %v1438, 0
      %v1783 = vsel %vm1565, %v1439, 0
      %v1786 = vsel %vm1662, %v1483, 0
      %1788 = vmatpush.msra.mxu0 0.0
      %1789 = vmatpush.msra.mxu0 0.0
      %1790 = vmatpush.msra.mxu0 %v1786
      %1791 = vmatpush.msra.mxu0 %v1482
      %1792 = vmatpush.msra.mxu0 %v1481
      %1793 = vmatpush.msra.mxu0 %v1480
      %1794 = vmatpush.msra.mxu0 %v1479
      %1795 = vmatpush.msra.mxu0 %v1478
      %1796 = vmatpush.msra.mxu0 %v1477
      %1797 = vmatpush.msra.mxu0 %v1476
      %1798 = vmatpush.msra.mxu0 %v1475
      %1799 = vmatpush.msra.mxu0 %v1474
      %1800 = vmatpush.msra.mxu0 %v1473
      %1801 = vmatpush.msra.mxu0 %v1472
      %1802 = vmatpush.msra.mxu0 %v1471
      %1803 = vmatpush.msra.mxu0 %v1470
      %1804 = vmatmul.f32.gmra.mxu0 %v1780
      %v1805 = vpop.f32.mrf.mxu0
      %v1806 = vadd.f32 %v1684, %v1805
      %1807 = vmatmul.f32.gmra.mxu0 %v1783
      %v1808 = vpop.f32.mrf.mxu0
      %v1809 = vadd.f32 %v1687, %v1808
      %1810 = vmatmul.f32.gmra.mxu0 %v1567
      %v1811 = vpop.f32.mrf.mxu0
      %v1812 = vadd.f32 %v1690, %v1811
      %1813 = vmatmul.f32.gmra.mxu0 %v1570
      %v1814 = vpop.f32.mrf.mxu0
      %v1815 = vadd.f32 %v1693, %v1814
      %1816 = vmatmul.f32.gmra.mxu0 %v1573
      %v1817 = vpop.f32.mrf.mxu0
      %v1818 = vadd.f32 %v1696, %v1817
      %1819 = vmatmul.f32.gmra.mxu0 %v1576
      %v1820 = vpop.f32.mrf.mxu0
      %v1821 = vadd.f32 %v1699, %v1820
      %1822 = vmatmul.f32.gmra.mxu0 %v1579
      %v1823 = vpop.f32.mrf.mxu0
      %v1824 = vadd.f32 %v1702, %v1823
      %1825 = vmatmul.f32.gmra.mxu0 %v1582
      %v1826 = vpop.f32.mrf.mxu0
      %v1827 = vadd.f32 %v1705, %v1826
      %1828 = vmatmul.f32.gmra.mxu0 %v1585
      %v1829 = vpop.f32.mrf.mxu0
      %v1830 = vadd.f32 %v1708, %v1829
      %1831 = vmatmul.f32.gmra.mxu0 %v1588
      %v1832 = vpop.f32.mrf.mxu0
      %v1833 = vadd.f32 %v1711, %v1832
      %1834 = vmatmul.f32.gmra.mxu0 %v1591
      %v1835 = vpop.f32.mrf.mxu0
      %v1836 = vadd.f32 %v1714, %v1835
      %1837 = vmatmul.f32.gmra.mxu0 %v1594
      %v1838 = vpop.f32.mrf.mxu0
      %v1839 = vadd.f32 %v1717, %v1838
      %1840 = vmatmul.f32.gmra.mxu0 %v1597
      %v1841 = vpop.f32.mrf.mxu0
      %v1842 = vadd.f32 %v1720, %v1841
      %1843 = vmatmul.f32.gmra.mxu0 %v1600
      %v1844 = vpop.f32.mrf.mxu0
      %v1845 = vadd.f32 %v1723, %v1844
      %1846 = vmatmul.f32.gmra.mxu0 %v1603
      %v1847 = vpop.f32.mrf.mxu0
      %v1848 = vadd.f32 %v1726, %v1847
      %1849 = vmatmul.f32.gmra.mxu0 %v1606
      %v1850 = vpop.f32.mrf.mxu0
      %v1851 = vadd.f32 %v1729, %v1850
      %1852 = vmatmul.f32.gmra.mxu0 %v1609
      %v1853 = vpop.f32.mrf.mxu0
      %v1854 = vadd.f32 %v1732, %v1853
      %1855 = vmatmul.f32.gmra.mxu0 %v1612
      %v1856 = vpop.f32.mrf.mxu0
      %v1857 = vadd.f32 %v1735, %v1856
      %1858 = vmatmul.f32.gmra.mxu0 %v1615
      %v1859 = vpop.f32.mrf.mxu0
      %v1860 = vadd.f32 %v1738, %v1859
      %1861 = vmatmul.f32.gmra.mxu0 %v1618
      %v1862 = vpop.f32.mrf.mxu0
      %v1863 = vadd.f32 %v1741, %v1862
      %1864 = vmatmul.f32.gmra.mxu0 %v1621
      %v1865 = vpop.f32.mrf.mxu0
      %v1866 = vadd.f32 %v1744, %v1865
      %1867 = vmatmul.f32.gmra.mxu0 %v1624
      %v1868 = vpop.f32.mrf.mxu0
      %v1869 = vadd.f32 %v1747, %v1868
      %1870 = vmatmul.f32.gmra.mxu0 %v1627
      %v1871 = vpop.f32.mrf.mxu0
      %v1872 = vadd.f32 %v1750, %v1871
      %1873 = vmatmul.f32.gmra.mxu0 %v1630
      %v1874 = vpop.f32.mrf.mxu0
      %v1875 = vadd.f32 %v1753, %v1874
      %1876 = vmatmul.f32.gmra.mxu0 %v1633
      %v1877 = vpop.f32.mrf.mxu0
      %v1878 = vadd.f32 %v1756, %v1877
      %1879 = vmatmul.f32.gmra.mxu0 %v1636
      %v1880 = vpop.f32.mrf.mxu0
      %v1881 = vadd.f32 %v1759, %v1880
      %1882 = vmatmul.f32.gmra.mxu0 %v1639
      %v1883 = vpop.f32.mrf.mxu0
      %v1884 = vadd.f32 %v1762, %v1883
      %1885 = vmatmul.f32.gmra.mxu0 %v1642
      %v1886 = vpop.f32.mrf.mxu0
      %v1887 = vadd.f32 %v1765, %v1886
      %1888 = vmatmul.f32.gmra.mxu0 %v1645
      %v1889 = vpop.f32.mrf.mxu0
      %v1890 = vadd.f32 %v1768, %v1889
      %1891 = vmatmul.f32.gmra.mxu0 %v1648
      %v1892 = vpop.f32.mrf.mxu0
      %v1893 = vadd.f32 %v1771, %v1892
      %1894 = vmatmul.f32.gmra.mxu0 %v1651
      %v1895 = vpop.f32.mrf.mxu0
      %v1896 = vadd.f32 %v1774, %v1895
      %1897 = vmatmul.f32.gmra.mxu0 %v1654
      %v1898 = vpop.f32.mrf.mxu0
      %v1899 = vadd.f32 %v1777, %v1898
      %1900 = vdwg.mxu0
      %v1904 = vrot.slane %v350, 1
      %v1905 = vrot.slane %v351, 1
      %v1906 = vsel %vm455, %v1904, %v1905
      %v1907 = vrot.slane %v352, 1
      %v1908 = vsel %vm455, %v1905, %v1907
      %v1909 = vrot.slane %v350, 2
      %v1910 = vrot.slane %v351, 2
      %v1911 = vsel %vm536, %v1909, %v1910
      %v1912 = vrot.slane %v352, 2
      %v1913 = vsel %vm536, %v1910, %v1912
      %v1917 = vrot.slane %v404, 1
      %v1918 = vrot.slane %v405, 1
      %v1919 = vsel %vm455, %v1917, %v1918
      %v1920 = vrot.slane %v406, 1
      %v1921 = vsel %vm455, %v1918, %v1920
      %v1922 = vrot.slane %v404, 2
      %v1923 = vrot.slane %v405, 2
      %v1924 = vsel %vm536, %v1922, %v1923
      %v1925 = vrot.slane %v406, 2
      %v1926 = vsel %vm536, %v1923, %v1925
      %1927 = vrot.lane.b32.xlu0 %v1906, 4
      %v1928 = vpop.permute.xlu0 %1927
      %1929 = vrot.lane.b32.xlu0 %v1908, 4
      %v1930 = vpop.permute.xlu0 %1929
      %1933 = vrot.lane.b32.xlu0 %v1911, 8
      %v1934 = vpop.permute.xlu0 %1933
      %1935 = vrot.lane.b32.xlu0 %v1913, 8
      %v1936 = vpop.permute.xlu0 %1935
      %1939 = vrot.lane.b32.xlu0 %v404, 12
      %v1940 = vpop.permute.xlu0 %1939
      %1941 = vrot.lane.b32.xlu0 %v405, 12
      %v1942 = vpop.permute.xlu0 %1941
      %1945 = vrot.lane.b32.xlu0 %v1919, 44
      %v1946 = vpop.permute.xlu0 %1945
      %1947 = vrot.lane.b32.xlu0 %v1921, 44
      %v1948 = vpop.permute.xlu0 %1947
      %1951 = vrot.lane.b32.xlu0 %v1924, 76
      %v1952 = vpop.permute.xlu0 %1951
      %1953 = vrot.lane.b32.xlu0 %v1926, 76
      %v1954 = vpop.permute.xlu0 %1953
      %v1957 = vsel %vm1305, %v350, %v1928
      %v1958 = vsel %vm1305, %v351, %v1930
      %v1959 = vsel %vm1338, %v1957, %v1934
      %v1960 = vsel %vm1338, %v1958, %v1936
      %v1961 = vsel %vm1371, %v1959, %v1940
      %v1962 = vsel %vm1371, %v1960, %v1942
      %v1963 = vsel %vm1404, %v1961, %v1946
      %v1964 = vsel %vm1404, %v1962, %v1948
      %v1965 = vsel %vm1437, %v1963, %v1952
      %v1966 = vsel %vm1437, %v1964, %v1954
      %s1967 = scalar_lea.vmem %s1, 224
      %v1968 = vld [vmem:[%s1967] sm:$0xff]
      %v1969 = vld [vmem:[%s1967 + $0x8] sm:$0xff]
      %v1970 = vld [vmem:[%s1967 + $0x10] sm:$0xff]
      %v1971 = vld [vmem:[%s1967 + $0x18] sm:$0xff]
      %v1972 = vld [vmem:[%s1967 + $0x20] sm:$0xff]
      %v1973 = vld [vmem:[%s1967 + $0x28] sm:$0xff]
      %v1974 = vld [vmem:[%s1967 + $0x30] sm:$0xff]
      %v1975 = vld [vmem:[%s1967 + $0x38] sm:$0xff]
      %v1976 = vld [vmem:[%s1967 + $0x40] sm:$0xff]
      %v1977 = vld [vmem:[%s1967 + $0x48] sm:$0xff]
      %v1978 = vld [vmem:[%s1967 + $0x50] sm:$0xff]
      %v1979 = vld [vmem:[%s1967 + $0x58] sm:$0xff]
      %v1980 = vld [vmem:[%s1967 + $0x60] sm:$0xff]
      %v1981 = vld [vmem:[%s1967 + $0x68] sm:$0xf]
      %v1983 = vsel %vm1565, %v1965, 0
      %v1986 = vsel %vm1565, %v1966, 0
      %v1989 = vsel %vm1662, %v1981, 0
      %1991 = vmatpush.msra.mxu0 0.0
      %1992 = vmatpush.msra.mxu0 0.0
      %1993 = vmatpush.msra.mxu0 %v1989
      %1994 = vmatpush.msra.mxu0 %v1980
      %1995 = vmatpush.msra.mxu0 %v1979
      %1996 = vmatpush.msra.mxu0 %v1978
      %1997 = vmatpush.msra.mxu0 %v1977
      %1998 = vmatpush.msra.mxu0 %v1976
      %1999 = vmatpush.msra.mxu0 %v1975
      %2000 = vmatpush.msra.mxu0 %v1974
      %2001 = vmatpush.msra.mxu0 %v1973
      %2002 = vmatpush.msra.mxu0 %v1972
      %2003 = vmatpush.msra.mxu0 %v1971
      %2004 = vmatpush.msra.mxu0 %v1970
      %2005 = vmatpush.msra.mxu0 %v1969
      %2006 = vmatpush.msra.mxu0 %v1968
      %2007 = vmatmul.f32.gmra.mxu0 %v1573
      %v2008 = vpop.f32.mrf.mxu0
      %v2009 = vadd.f32 0.0, %v2008
      %2010 = vmatmul.f32.gmra.mxu0 %v1576
      %v2011 = vpop.f32.mrf.mxu0
      %v2012 = vadd.f32 0.0, %v2011
      %2013 = vmatmul.f32.gmra.mxu0 %v1579
      %v2014 = vpop.f32.mrf.mxu0
      %v2015 = vadd.f32 0.0, %v2014
      %2016 = vmatmul.f32.gmra.mxu0 %v1582
      %v2017 = vpop.f32.mrf.mxu0
      %v2018 = vadd.f32 0.0, %v2017
      %2019 = vmatmul.f32.gmra.mxu0 %v1585
      %v2020 = vpop.f32.mrf.mxu0
      %v2021 = vadd.f32 0.0, %v2020
      %2022 = vmatmul.f32.gmra.mxu0 %v1588
      %v2023 = vpop.f32.mrf.mxu0
      %v2024 = vadd.f32 0.0, %v2023
      %2025 = vmatmul.f32.gmra.mxu0 %v1591
      %v2026 = vpop.f32.mrf.mxu0
      %v2027 = vadd.f32 0.0, %v2026
      %2028 = vmatmul.f32.gmra.mxu0 %v1594
      %v2029 = vpop.f32.mrf.mxu0
      %v2030 = vadd.f32 0.0, %v2029
      %2031 = vmatmul.f32.gmra.mxu0 %v1597
      %v2032 = vpop.f32.mrf.mxu0
      %v2033 = vadd.f32 0.0, %v2032
      %2034 = vmatmul.f32.gmra.mxu0 %v1600
      %v2035 = vpop.f32.mrf.mxu0
      %v2036 = vadd.f32 0.0, %v2035
      %2037 = vmatmul.f32.gmra.mxu0 %v1603
      %v2038 = vpop.f32.mrf.mxu0
      %v2039 = vadd.f32 0.0, %v2038
      %2040 = vmatmul.f32.gmra.mxu0 %v1606
      %v2041 = vpop.f32.mrf.mxu0
      %v2042 = vadd.f32 0.0, %v2041
      %2043 = vmatmul.f32.gmra.mxu0 %v1609
      %v2044 = vpop.f32.mrf.mxu0
      %v2045 = vadd.f32 0.0, %v2044
      %2046 = vmatmul.f32.gmra.mxu0 %v1612
      %v2047 = vpop.f32.mrf.mxu0
      %v2048 = vadd.f32 0.0, %v2047
      %2049 = vmatmul.f32.gmra.mxu0 %v1615
      %v2050 = vpop.f32.mrf.mxu0
      %v2051 = vadd.f32 0.0, %v2050
      %2052 = vmatmul.f32.gmra.mxu0 %v1618
      %v2053 = vpop.f32.mrf.mxu0
      %v2054 = vadd.f32 0.0, %v2053
      %2055 = vmatmul.f32.gmra.mxu0 %v1621
      %v2056 = vpop.f32.mrf.mxu0
      %v2057 = vadd.f32 0.0, %v2056
      %2058 = vmatmul.f32.gmra.mxu0 %v1624
      %v2059 = vpop.f32.mrf.mxu0
      %v2060 = vadd.f32 0.0, %v2059
      %2061 = vmatmul.f32.gmra.mxu0 %v1627
      %v2062 = vpop.f32.mrf.mxu0
      %v2063 = vadd.f32 0.0, %v2062
      %2064 = vmatmul.f32.gmra.mxu0 %v1630
      %v2065 = vpop.f32.mrf.mxu0
      %v2066 = vadd.f32 0.0, %v2065
      %2067 = vmatmul.f32.gmra.mxu0 %v1633
      %v2068 = vpop.f32.mrf.mxu0
      %v2069 = vadd.f32 0.0, %v2068
      %2070 = vmatmul.f32.gmra.mxu0 %v1636
      %v2071 = vpop.f32.mrf.mxu0
      %v2072 = vadd.f32 0.0, %v2071
      %2073 = vmatmul.f32.gmra.mxu0 %v1639
      %v2074 = vpop.f32.mrf.mxu0
      %v2075 = vadd.f32 0.0, %v2074
      %2076 = vmatmul.f32.gmra.mxu0 %v1642
      %v2077 = vpop.f32.mrf.mxu0
      %v2078 = vadd.f32 0.0, %v2077
      %2079 = vmatmul.f32.gmra.mxu0 %v1645
      %v2080 = vpop.f32.mrf.mxu0
      %v2081 = vadd.f32 0.0, %v2080
      %2082 = vmatmul.f32.gmra.mxu0 %v1648
      %v2083 = vpop.f32.mrf.mxu0
      %v2084 = vadd.f32 0.0, %v2083
      %2085 = vmatmul.f32.gmra.mxu0 %v1651
      %v2086 = vpop.f32.mrf.mxu0
      %v2087 = vadd.f32 0.0, %v2086
      %2088 = vmatmul.f32.gmra.mxu0 %v1654
      %v2089 = vpop.f32.mrf.mxu0
      %v2090 = vadd.f32 0.0, %v2089
      %2091 = vmatmul.f32.gmra.mxu0 %v1657
      %v2092 = vpop.f32.mrf.mxu0
      %v2093 = vadd.f32 0.0, %v2092
      %2094 = vmatmul.f32.gmra.mxu0 %v1660
      %v2095 = vpop.f32.mrf.mxu0
      %v2096 = vadd.f32 0.0, %v2095
      %2097 = vmatmul.f32.gmra.mxu0 %v1983
      %v2098 = vpop.f32.mrf.mxu0
      %v2099 = vadd.f32 0.0, %v2098
      %2100 = vmatmul.f32.gmra.mxu0 %v1986
      %v2101 = vpop.f32.mrf.mxu0
      %v2102 = vadd.f32 0.0, %v2101
      %2103 = vdwg.mxu0
      %v2104 = vadd.f32 %v1806, %v2009
      %v2105 = vadd.f32 %v1809, %v2012
      %v2106 = vadd.f32 %v1812, %v2015
      %v2107 = vadd.f32 %v1815, %v2018
      %v2108 = vadd.f32 %v1818, %v2021
      %v2109 = vadd.f32 %v1821, %v2024
      %v2110 = vadd.f32 %v1824, %v2027
      %v2111 = vadd.f32 %v1827, %v2030
      %v2112 = vadd.f32 %v1830, %v2033
      %v2113 = vadd.f32 %v1833, %v2036
      %v2114 = vadd.f32 %v1836, %v2039
      %v2115 = vadd.f32 %v1839, %v2042
      %v2116 = vadd.f32 %v1842, %v2045
      %v2117 = vadd.f32 %v1845, %v2048
      %v2118 = vadd.f32 %v1848, %v2051
      %v2119 = vadd.f32 %v1851, %v2054
      %v2120 = vadd.f32 %v1854, %v2057
      %v2121 = vadd.f32 %v1857, %v2060
      %v2122 = vadd.f32 %v1860, %v2063
      %v2123 = vadd.f32 %v1863, %v2066
      %v2124 = vadd.f32 %v1866, %v2069
      %v2125 = vadd.f32 %v1869, %v2072
      %v2126 = vadd.f32 %v1872, %v2075
      %v2127 = vadd.f32 %v1875, %v2078
      %v2128 = vadd.f32 %v1878, %v2081
      %v2129 = vadd.f32 %v1881, %v2084
      %v2130 = vadd.f32 %v1884, %v2087
      %v2131 = vadd.f32 %v1887, %v2090
      %v2132 = vadd.f32 %v1890, %v2093
      %v2133 = vadd.f32 %v1893, %v2096
      %v2134 = vadd.f32 %v1896, %v2099
      %v2135 = vadd.f32 %v1899, %v2102
      %v2136 = vld [vmem:[%s2] sm:$0x1]
      %v2138 = vperm.slane %v2136, 0
      %v2140 = vadd.f32 %v2104, %v2138
      %v2141 = vadd.f32 %v2105, %v2138
      %v2142 = vadd.f32 %v2106, %v2138
      %v2143 = vadd.f32 %v2107, %v2138
      %v2144 = vadd.f32 %v2108, %v2138
      %v2145 = vadd.f32 %v2109, %v2138
      %v2146 = vadd.f32 %v2110, %v2138
      %v2147 = vadd.f32 %v2111, %v2138
      %v2148 = vadd.f32 %v2112, %v2138
      %v2149 = vadd.f32 %v2113, %v2138
      %v2150 = vadd.f32 %v2114, %v2138
      %v2151 = vadd.f32 %v2115, %v2138
      %v2152 = vadd.f32 %v2116, %v2138
      %v2153 = vadd.f32 %v2117, %v2138
      %v2154 = vadd.f32 %v2118, %v2138
      %v2155 = vadd.f32 %v2119, %v2138
      %v2156 = vadd.f32 %v2120, %v2138
      %v2157 = vadd.f32 %v2121, %v2138
      %v2158 = vadd.f32 %v2122, %v2138
      %v2159 = vadd.f32 %v2123, %v2138
      %v2160 = vadd.f32 %v2124, %v2138
      %v2161 = vadd.f32 %v2125, %v2138
      %v2162 = vadd.f32 %v2126, %v2138
      %v2163 = vadd.f32 %v2127, %v2138
      %v2164 = vadd.f32 %v2128, %v2138
      %v2165 = vadd.f32 %v2129, %v2138
      %v2166 = vadd.f32 %v2130, %v2138
      %v2167 = vadd.f32 %v2131, %v2138
      %v2168 = vadd.f32 %v2132, %v2138
      %v2169 = vadd.f32 %v2133, %v2138
      %v2170 = vadd.f32 %v2134, %v2138
      %v2171 = vadd.f32 %v2135, %v2138
      %v2172 = vlaneseq
      %v2173 = vand.u32 %v2172, 127
      %vm2174 = vcmp.lt.s32.totalorder %v2173, 96
      %v2175 = vxor.u32 %v2140, 2147483648
      %v2176 = vxor.u32 %v2141, 2147483648
      %v2177 = vxor.u32 %v2142, 2147483648
      %v2178 = vxor.u32 %v2143, 2147483648
      %v2179 = vxor.u32 %v2144, 2147483648
      %v2180 = vxor.u32 %v2145, 2147483648
      %v2181 = vxor.u32 %v2146, 2147483648
      %v2182 = vxor.u32 %v2147, 2147483648
      %v2183 = vxor.u32 %v2148, 2147483648
      %v2184 = vxor.u32 %v2149, 2147483648
      %v2185 = vxor.u32 %v2150, 2147483648
      %v2186 = vxor.u32 %v2151, 2147483648
      %v2187 = vxor.u32 %v2152, 2147483648
      %v2188 = vxor.u32 %v2153, 2147483648
      %v2189 = vxor.u32 %v2154, 2147483648
      %v2190 = vxor.u32 %v2155, 2147483648
      %v2191 = vxor.u32 %v2156, 2147483648
      %v2192 = vxor.u32 %v2157, 2147483648
      %v2193 = vxor.u32 %v2158, 2147483648
      %v2194 = vxor.u32 %v2159, 2147483648
      %v2195 = vxor.u32 %v2160, 2147483648
      %v2196 = vxor.u32 %v2161, 2147483648
      %v2197 = vxor.u32 %v2162, 2147483648
      %v2198 = vxor.u32 %v2163, 2147483648
      %v2199 = vxor.u32 %v2164, 2147483648
      %v2200 = vxor.u32 %v2165, 2147483648
      %v2201 = vxor.u32 %v2166, 2147483648
      %v2202 = vxor.u32 %v2167, 2147483648
      %v2203 = vxor.u32 %v2168, 2147483648
      %v2204 = vxor.u32 %v2169, 2147483648
      %v2205 = vxor.u32 %v2170, 2147483648
      %v2206 = vxor.u32 %v2171, 2147483648
      %v2207 = vmul.f32 %v2175, 1.442695
      %v2208 = vpow.pop %v2207
      %v2209 = vmul.f32 %v2176, 1.442695
      %v2210 = vpow.pop %v2209
      %v2211 = vmul.f32 %v2177, 1.442695
      %v2212 = vpow.pop %v2211
      %v2213 = vmul.f32 %v2178, 1.442695
      %v2214 = vpow.pop %v2213
      %v2215 = vmul.f32 %v2179, 1.442695
      %v2216 = vpow.pop %v2215
      %v2217 = vmul.f32 %v2180, 1.442695
      %v2218 = vpow.pop %v2217
      %v2219 = vmul.f32 %v2181, 1.442695
      %v2220 = vpow.pop %v2219
      %v2221 = vmul.f32 %v2182, 1.442695
      %v2222 = vpow.pop %v2221
      %v2223 = vmul.f32 %v2183, 1.442695
      %v2224 = vpow.pop %v2223
      %v2225 = vmul.f32 %v2184, 1.442695
      %v2226 = vpow.pop %v2225
      %v2227 = vmul.f32 %v2185, 1.442695
      %v2228 = vpow.pop %v2227
      %v2229 = vmul.f32 %v2186, 1.442695
      %v2230 = vpow.pop %v2229
      %v2231 = vmul.f32 %v2187, 1.442695
      %v2232 = vpow.pop %v2231
      %v2233 = vmul.f32 %v2188, 1.442695
      %v2234 = vpow.pop %v2233
      %v2235 = vmul.f32 %v2189, 1.442695
      %v2236 = vpow.pop %v2235
      %v2237 = vmul.f32 %v2190, 1.442695
      %v2238 = vpow.pop %v2237
      %v2239 = vmul.f32 %v2191, 1.442695
      %v2240 = vpow.pop %v2239
      %v2241 = vmul.f32 %v2192, 1.442695
      %v2242 = vpow.pop %v2241
      %v2243 = vmul.f32 %v2193, 1.442695
      %v2244 = vpow.pop %v2243
      %v2245 = vmul.f32 %v2194, 1.442695
      %v2246 = vpow.pop %v2245
      %v2247 = vmul.f32 %v2195, 1.442695
      %v2248 = vpow.pop %v2247
      %v2249 = vmul.f32 %v2196, 1.442695
      %v2250 = vpow.pop %v2249
      %v2251 = vmul.f32 %v2197, 1.442695
      %v2252 = vpow.pop %v2251
      %v2253 = vmul.f32 %v2198, 1.442695
      %v2254 = vpow.pop %v2253
      %v2255 = vmul.f32 %v2199, 1.442695
      %v2256 = vpow.pop %v2255
      %v2257 = vmul.f32 %v2200, 1.442695
      %v2258 = vpow.pop %v2257
      %v2259 = vmul.f32 %v2201, 1.442695
      %v2260 = vpow.pop %v2259
      %v2261 = vmul.f32 %v2202, 1.442695
      %v2262 = vpow.pop %v2261
      %v2263 = vmul.f32 %v2203, 1.442695
      %v2264 = vpow.pop %v2263
      %v2265 = vmul.f32 %v2204, 1.442695
      %v2266 = vpow.pop %v2265
      %v2267 = vmul.f32 %v2205, 1.442695
      %v2268 = vpow.pop %v2267
      %v2269 = vmul.f32 %v2206, 1.442695
      %v2270 = vpow.pop %v2269
      %v2271 = vadd.f32 %v2208, 1.0
      %v2272 = vadd.f32 %v2210, 1.0
      %v2273 = vadd.f32 %v2212, 1.0
      %v2274 = vadd.f32 %v2214, 1.0
      %v2275 = vadd.f32 %v2216, 1.0
      %v2276 = vadd.f32 %v2218, 1.0
      %v2277 = vadd.f32 %v2220, 1.0
      %v2278 = vadd.f32 %v2222, 1.0
      %v2279 = vadd.f32 %v2224, 1.0
      %v2280 = vadd.f32 %v2226, 1.0
      %v2281 = vadd.f32 %v2228, 1.0
      %v2282 = vadd.f32 %v2230, 1.0
      %v2283 = vadd.f32 %v2232, 1.0
      %v2284 = vadd.f32 %v2234, 1.0
      %v2285 = vadd.f32 %v2236, 1.0
      %v2286 = vadd.f32 %v2238, 1.0
      %v2287 = vadd.f32 %v2240, 1.0
      %v2288 = vadd.f32 %v2242, 1.0
      %v2289 = vadd.f32 %v2244, 1.0
      %v2290 = vadd.f32 %v2246, 1.0
      %v2291 = vadd.f32 %v2248, 1.0
      %v2292 = vadd.f32 %v2250, 1.0
      %v2293 = vadd.f32 %v2252, 1.0
      %v2294 = vadd.f32 %v2254, 1.0
      %v2295 = vadd.f32 %v2256, 1.0
      %v2296 = vadd.f32 %v2258, 1.0
      %v2297 = vadd.f32 %v2260, 1.0
      %v2298 = vadd.f32 %v2262, 1.0
      %v2299 = vadd.f32 %v2264, 1.0
      %v2300 = vadd.f32 %v2266, 1.0
      %v2301 = vadd.f32 %v2268, 1.0
      %v2302 = vadd.f32 %v2270, 1.0
      %v2303 = vrcp.pop %v2271
      %v2304 = vmul.f32 %v2271, %v2303
      %v2305 = vsub.f32 1.0, %v2304
      %v2306 = vmul.f32 %v2303, %v2305
      %v2307 = vadd.f32 %v2303, %v2306
      %vm2308 = vweird.f32 %v2271
      %vm2309 = vweird.f32 %v2303
      %vm2310 = vmor %vm2308, %vm2309
      %v2311 = vsel %vm2310, %v2303, %v2307
      %v2312 = vand.u32 2147483647, %v2271
      %vm2313 = vcmp.eq.f32.partialorder %v2312, 8.507059e+37
      %v2314 = vand.u32 %v2271, 2147483648
      %v2315 = vor.u32 1.1754944e-38, %v2314
      %v2316 = vsel %vm2313, %v2315, %v2311
      %v2317 = vmul.f32 1.0, %v2316
      %v2318 = vrcp.pop %v2272
      %v2319 = vmul.f32 %v2272, %v2318
      %v2320 = vsub.f32 1.0, %v2319
      %v2321 = vmul.f32 %v2318, %v2320
      %v2322 = vadd.f32 %v2318, %v2321
      %vm2323 = vweird.f32 %v2272
      %vm2324 = vweird.f32 %v2318
      %vm2325 = vmor %vm2323, %vm2324
      %v2326 = vsel %vm2325, %v2318, %v2322
      %v2327 = vand.u32 2147483647, %v2272
      %vm2328 = vcmp.eq.f32.partialorder %v2327, 8.507059e+37
      %v2329 = vand.u32 %v2272, 2147483648
      %v2330 = vor.u32 1.1754944e-38, %v2329
      %v2331 = vsel %vm2328, %v2330, %v2326
      %v2332 = vmul.f32 1.0, %v2331
      %v2333 = vrcp.pop %v2273
      %v2334 = vmul.f32 %v2273, %v2333
      %v2335 = vsub.f32 1.0, %v2334
      %v2336 = vmul.f32 %v2333, %v2335
      %v2337 = vadd.f32 %v2333, %v2336
      %vm2338 = vweird.f32 %v2273
      %vm2339 = vweird.f32 %v2333
      %vm2340 = vmor %vm2338, %vm2339
      %v2341 = vsel %vm2340, %v2333, %v2337
      %v2342 = vand.u32 2147483647, %v2273
      %vm2343 = vcmp.eq.f32.partialorder %v2342, 8.507059e+37
      %v2344 = vand.u32 %v2273, 2147483648
      %v2345 = vor.u32 1.1754944e-38, %v2344
      %v2346 = vsel %vm2343, %v2345, %v2341
      %v2347 = vmul.f32 1.0, %v2346
      %v2348 = vrcp.pop %v2274
      %v2349 = vmul.f32 %v2274, %v2348
      %v2350 = vsub.f32 1.0, %v2349
      %v2351 = vmul.f32 %v2348, %v2350
      %v2352 = vadd.f32 %v2348, %v2351
      %vm2353 = vweird.f32 %v2274
      %vm2354 = vweird.f32 %v2348
      %vm2355 = vmor %vm2353, %vm2354
      %v2356 = vsel %vm2355, %v2348, %v2352
      %v2357 = vand.u32 2147483647, %v2274
      %vm2358 = vcmp.eq.f32.partialorder %v2357, 8.507059e+37
      %v2359 = vand.u32 %v2274, 2147483648
      %v2360 = vor.u32 1.1754944e-38, %v2359
      %v2361 = vsel %vm2358, %v2360, %v2356
      %v2362 = vmul.f32 1.0, %v2361
      %v2363 = vrcp.pop %v2275
      %v2364 = vmul.f32 %v2275, %v2363
      %v2365 = vsub.f32 1.0, %v2364
      %v2366 = vmul.f32 %v2363, %v2365
      %v2367 = vadd.f32 %v2363, %v2366
      %vm2368 = vweird.f32 %v2275
      %vm2369 = vweird.f32 %v2363
      %vm2370 = vmor %vm2368, %vm2369
      %v2371 = vsel %vm2370, %v2363, %v2367
      %v2372 = vand.u32 2147483647, %v2275
      %vm2373 = vcmp.eq.f32.partialorder %v2372, 8.507059e+37
      %v2374 = vand.u32 %v2275, 2147483648
      %v2375 = vor.u32 1.1754944e-38, %v2374
      %v2376 = vsel %vm2373, %v2375, %v2371
      %v2377 = vmul.f32 1.0, %v2376
      %v2378 = vrcp.pop %v2276
      %v2379 = vmul.f32 %v2276, %v2378
      %v2380 = vsub.f32 1.0, %v2379
      %v2381 = vmul.f32 %v2378, %v2380
      %v2382 = vadd.f32 %v2378, %v2381
      %vm2383 = vweird.f32 %v2276
      %vm2384 = vweird.f32 %v2378
      %vm2385 = vmor %vm2383, %vm2384
      %v2386 = vsel %vm2385, %v2378, %v2382
      %v2387 = vand.u32 2147483647, %v2276
      %vm2388 = vcmp.eq.f32.partialorder %v2387, 8.507059e+37
      %v2389 = vand.u32 %v2276, 2147483648
      %v2390 = vor.u32 1.1754944e-38, %v2389
      %v2391 = vsel %vm2388, %v2390, %v2386
      %v2392 = vmul.f32 1.0, %v2391
      %v2393 = vrcp.pop %v2277
      %v2394 = vmul.f32 %v2277, %v2393
      %v2395 = vsub.f32 1.0, %v2394
      %v2396 = vmul.f32 %v2393, %v2395
      %v2397 = vadd.f32 %v2393, %v2396
      %vm2398 = vweird.f32 %v2277
      %vm2399 = vweird.f32 %v2393
      %vm2400 = vmor %vm2398, %vm2399
      %v2401 = vsel %vm2400, %v2393, %v2397
      %v2402 = vand.u32 2147483647, %v2277
      %vm2403 = vcmp.eq.f32.partialorder %v2402, 8.507059e+37
      %v2404 = vand.u32 %v2277, 2147483648
      %v2405 = vor.u32 1.1754944e-38, %v2404
      %v2406 = vsel %vm2403, %v2405, %v2401
      %v2407 = vmul.f32 1.0, %v2406
      %v2408 = vrcp.pop %v2278
      %v2409 = vmul.f32 %v2278, %v2408
      %v2410 = vsub.f32 1.0, %v2409
      %v2411 = vmul.f32 %v2408, %v2410
      %v2412 = vadd.f32 %v2408, %v2411
      %vm2413 = vweird.f32 %v2278
      %vm2414 = vweird.f32 %v2408
      %vm2415 = vmor %vm2413, %vm2414
      %v2416 = vsel %vm2415, %v2408, %v2412
      %v2417 = vand.u32 2147483647, %v2278
      %vm2418 = vcmp.eq.f32.partialorder %v2417, 8.507059e+37
      %v2419 = vand.u32 %v2278, 2147483648
      %v2420 = vor.u32 1.1754944e-38, %v2419
      %v2421 = vsel %vm2418, %v2420, %v2416
      %v2422 = vmul.f32 1.0, %v2421
      %v2423 = vrcp.pop %v2279
      %v2424 = vmul.f32 %v2279, %v2423
      %v2425 = vsub.f32 1.0, %v2424
      %v2426 = vmul.f32 %v2423, %v2425
      %v2427 = vadd.f32 %v2423, %v2426
      %vm2428 = vweird.f32 %v2279
      %vm2429 = vweird.f32 %v2423
      %vm2430 = vmor %vm2428, %vm2429
      %v2431 = vsel %vm2430, %v2423, %v2427
      %v2432 = vand.u32 2147483647, %v2279
      %vm2433 = vcmp.eq.f32.partialorder %v2432, 8.507059e+37
      %v2434 = vand.u32 %v2279, 2147483648
      %v2435 = vor.u32 1.1754944e-38, %v2434
      %v2436 = vsel %vm2433, %v2435, %v2431
      %v2437 = vmul.f32 1.0, %v2436
      %v2438 = vrcp.pop %v2280
      %v2439 = vmul.f32 %v2280, %v2438
      %v2440 = vsub.f32 1.0, %v2439
      %v2441 = vmul.f32 %v2438, %v2440
      %v2442 = vadd.f32 %v2438, %v2441
      %vm2443 = vweird.f32 %v2280
      %vm2444 = vweird.f32 %v2438
      %vm2445 = vmor %vm2443, %vm2444
      %v2446 = vsel %vm2445, %v2438, %v2442
      %v2447 = vand.u32 2147483647, %v2280
      %vm2448 = vcmp.eq.f32.partialorder %v2447, 8.507059e+37
      %v2449 = vand.u32 %v2280, 2147483648
      %v2450 = vor.u32 1.1754944e-38, %v2449
      %v2451 = vsel %vm2448, %v2450, %v2446
      %v2452 = vmul.f32 1.0, %v2451
      %v2453 = vrcp.pop %v2281
      %v2454 = vmul.f32 %v2281, %v2453
      %v2455 = vsub.f32 1.0, %v2454
      %v2456 = vmul.f32 %v2453, %v2455
      %v2457 = vadd.f32 %v2453, %v2456
      %vm2458 = vweird.f32 %v2281
      %vm2459 = vweird.f32 %v2453
      %vm2460 = vmor %vm2458, %vm2459
      %v2461 = vsel %vm2460, %v2453, %v2457
      %v2462 = vand.u32 2147483647, %v2281
      %vm2463 = vcmp.eq.f32.partialorder %v2462, 8.507059e+37
      %v2464 = vand.u32 %v2281, 2147483648
      %v2465 = vor.u32 1.1754944e-38, %v2464
      %v2466 = vsel %vm2463, %v2465, %v2461
      %v2467 = vmul.f32 1.0, %v2466
      %v2468 = vrcp.pop %v2282
      %v2469 = vmul.f32 %v2282, %v2468
      %v2470 = vsub.f32 1.0, %v2469
      %v2471 = vmul.f32 %v2468, %v2470
      %v2472 = vadd.f32 %v2468, %v2471
      %vm2473 = vweird.f32 %v2282
      %vm2474 = vweird.f32 %v2468
      %vm2475 = vmor %vm2473, %vm2474
      %v2476 = vsel %vm2475, %v2468, %v2472
      %v2477 = vand.u32 2147483647, %v2282
      %vm2478 = vcmp.eq.f32.partialorder %v2477, 8.507059e+37
      %v2479 = vand.u32 %v2282, 2147483648
      %v2480 = vor.u32 1.1754944e-38, %v2479
      %v2481 = vsel %vm2478, %v2480, %v2476
      %v2482 = vmul.f32 1.0, %v2481
      %v2483 = vrcp.pop %v2283
      %v2484 = vmul.f32 %v2283, %v2483
      %v2485 = vsub.f32 1.0, %v2484
      %v2486 = vmul.f32 %v2483, %v2485
      %v2487 = vadd.f32 %v2483, %v2486
      %vm2488 = vweird.f32 %v2283
      %vm2489 = vweird.f32 %v2483
      %vm2490 = vmor %vm2488, %vm2489
      %v2491 = vsel %vm2490, %v2483, %v2487
      %v2492 = vand.u32 2147483647, %v2283
      %vm2493 = vcmp.eq.f32.partialorder %v2492, 8.507059e+37
      %v2494 = vand.u32 %v2283, 2147483648
      %v2495 = vor.u32 1.1754944e-38, %v2494
      %v2496 = vsel %vm2493, %v2495, %v2491
      %v2497 = vmul.f32 1.0, %v2496
      %v2498 = vrcp.pop %v2284
      %v2499 = vmul.f32 %v2284, %v2498
      %v2500 = vsub.f32 1.0, %v2499
      %v2501 = vmul.f32 %v2498, %v2500
      %v2502 = vadd.f32 %v2498, %v2501
      %vm2503 = vweird.f32 %v2284
      %vm2504 = vweird.f32 %v2498
      %vm2505 = vmor %vm2503, %vm2504
      %v2506 = vsel %vm2505, %v2498, %v2502
      %v2507 = vand.u32 2147483647, %v2284
      %vm2508 = vcmp.eq.f32.partialorder %v2507, 8.507059e+37
      %v2509 = vand.u32 %v2284, 2147483648
      %v2510 = vor.u32 1.1754944e-38, %v2509
      %v2511 = vsel %vm2508, %v2510, %v2506
      %v2512 = vmul.f32 1.0, %v2511
      %v2513 = vrcp.pop %v2285
      %v2514 = vmul.f32 %v2285, %v2513
      %v2515 = vsub.f32 1.0, %v2514
      %v2516 = vmul.f32 %v2513, %v2515
      %v2517 = vadd.f32 %v2513, %v2516
      %vm2518 = vweird.f32 %v2285
      %vm2519 = vweird.f32 %v2513
      %vm2520 = vmor %vm2518, %vm2519
      %v2521 = vsel %vm2520, %v2513, %v2517
      %v2522 = vand.u32 2147483647, %v2285
      %vm2523 = vcmp.eq.f32.partialorder %v2522, 8.507059e+37
      %v2524 = vand.u32 %v2285, 2147483648
      %v2525 = vor.u32 1.1754944e-38, %v2524
      %v2526 = vsel %vm2523, %v2525, %v2521
      %v2527 = vmul.f32 1.0, %v2526
      %v2528 = vrcp.pop %v2286
      %v2529 = vmul.f32 %v2286, %v2528
      %v2530 = vsub.f32 1.0, %v2529
      %v2531 = vmul.f32 %v2528, %v2530
      %v2532 = vadd.f32 %v2528, %v2531
      %vm2533 = vweird.f32 %v2286
      %vm2534 = vweird.f32 %v2528
      %vm2535 = vmor %vm2533, %vm2534
      %v2536 = vsel %vm2535, %v2528, %v2532
      %v2537 = vand.u32 2147483647, %v2286
      %vm2538 = vcmp.eq.f32.partialorder %v2537, 8.507059e+37
      %v2539 = vand.u32 %v2286, 2147483648
      %v2540 = vor.u32 1.1754944e-38, %v2539
      %v2541 = vsel %vm2538, %v2540, %v2536
      %v2542 = vmul.f32 1.0, %v2541
      %v2543 = vrcp.pop %v2287
      %v2544 = vmul.f32 %v2287, %v2543
      %v2545 = vsub.f32 1.0, %v2544
      %v2546 = vmul.f32 %v2543, %v2545
      %v2547 = vadd.f32 %v2543, %v2546
      %vm2548 = vweird.f32 %v2287
      %vm2549 = vweird.f32 %v2543
      %vm2550 = vmor %vm2548, %vm2549
      %v2551 = vsel %vm2550, %v2543, %v2547
      %v2552 = vand.u32 2147483647, %v2287
      %vm2553 = vcmp.eq.f32.partialorder %v2552, 8.507059e+37
      %v2554 = vand.u32 %v2287, 2147483648
      %v2555 = vor.u32 1.1754944e-38, %v2554
      %v2556 = vsel %vm2553, %v2555, %v2551
      %v2557 = vmul.f32 1.0, %v2556
      %v2558 = vrcp.pop %v2288
      %v2559 = vmul.f32 %v2288, %v2558
      %v2560 = vsub.f32 1.0, %v2559
      %v2561 = vmul.f32 %v2558, %v2560
      %v2562 = vadd.f32 %v2558, %v2561
      %vm2563 = vweird.f32 %v2288
      %vm2564 = vweird.f32 %v2558
      %vm2565 = vmor %vm2563, %vm2564
      %v2566 = vsel %vm2565, %v2558, %v2562
      %v2567 = vand.u32 2147483647, %v2288
      %vm2568 = vcmp.eq.f32.partialorder %v2567, 8.507059e+37
      %v2569 = vand.u32 %v2288, 2147483648
      %v2570 = vor.u32 1.1754944e-38, %v2569
      %v2571 = vsel %vm2568, %v2570, %v2566
      %v2572 = vmul.f32 1.0, %v2571
      %v2573 = vrcp.pop %v2289
      %v2574 = vmul.f32 %v2289, %v2573
      %v2575 = vsub.f32 1.0, %v2574
      %v2576 = vmul.f32 %v2573, %v2575
      %v2577 = vadd.f32 %v2573, %v2576
      %vm2578 = vweird.f32 %v2289
      %vm2579 = vweird.f32 %v2573
      %vm2580 = vmor %vm2578, %vm2579
      %v2581 = vsel %vm2580, %v2573, %v2577
      %v2582 = vand.u32 2147483647, %v2289
      %vm2583 = vcmp.eq.f32.partialorder %v2582, 8.507059e+37
      %v2584 = vand.u32 %v2289, 2147483648
      %v2585 = vor.u32 1.1754944e-38, %v2584
      %v2586 = vsel %vm2583, %v2585, %v2581
      %v2587 = vmul.f32 1.0, %v2586
      %v2588 = vrcp.pop %v2290
      %v2589 = vmul.f32 %v2290, %v2588
      %v2590 = vsub.f32 1.0, %v2589
      %v2591 = vmul.f32 %v2588, %v2590
      %v2592 = vadd.f32 %v2588, %v2591
      %vm2593 = vweird.f32 %v2290
      %vm2594 = vweird.f32 %v2588
      %vm2595 = vmor %vm2593, %vm2594
      %v2596 = vsel %vm2595, %v2588, %v2592
      %v2597 = vand.u32 2147483647, %v2290
      %vm2598 = vcmp.eq.f32.partialorder %v2597, 8.507059e+37
      %v2599 = vand.u32 %v2290, 2147483648
      %v2600 = vor.u32 1.1754944e-38, %v2599
      %v2601 = vsel %vm2598, %v2600, %v2596
      %v2602 = vmul.f32 1.0, %v2601
      %v2603 = vrcp.pop %v2291
      %v2604 = vmul.f32 %v2291, %v2603
      %v2605 = vsub.f32 1.0, %v2604
      %v2606 = vmul.f32 %v2603, %v2605
      %v2607 = vadd.f32 %v2603, %v2606
      %vm2608 = vweird.f32 %v2291
      %vm2609 = vweird.f32 %v2603
      %vm2610 = vmor %vm2608, %vm2609
      %v2611 = vsel %vm2610, %v2603, %v2607
      %v2612 = vand.u32 2147483647, %v2291
      %vm2613 = vcmp.eq.f32.partialorder %v2612, 8.507059e+37
      %v2614 = vand.u32 %v2291, 2147483648
      %v2615 = vor.u32 1.1754944e-38, %v2614
      %v2616 = vsel %vm2613, %v2615, %v2611
      %v2617 = vmul.f32 1.0, %v2616
      %v2618 = vrcp.pop %v2292
      %v2619 = vmul.f32 %v2292, %v2618
      %v2620 = vsub.f32 1.0, %v2619
      %v2621 = vmul.f32 %v2618, %v2620
      %v2622 = vadd.f32 %v2618, %v2621
      %vm2623 = vweird.f32 %v2292
      %vm2624 = vweird.f32 %v2618
      %vm2625 = vmor %vm2623, %vm2624
      %v2626 = vsel %vm2625, %v2618, %v2622
      %v2627 = vand.u32 2147483647, %v2292
      %vm2628 = vcmp.eq.f32.partialorder %v2627, 8.507059e+37
      %v2629 = vand.u32 %v2292, 2147483648
      %v2630 = vor.u32 1.1754944e-38, %v2629
      %v2631 = vsel %vm2628, %v2630, %v2626
      %v2632 = vmul.f32 1.0, %v2631
      %v2633 = vrcp.pop %v2293
      %v2634 = vmul.f32 %v2293, %v2633
      %v2635 = vsub.f32 1.0, %v2634
      %v2636 = vmul.f32 %v2633, %v2635
      %v2637 = vadd.f32 %v2633, %v2636
      %vm2638 = vweird.f32 %v2293
      %vm2639 = vweird.f32 %v2633
      %vm2640 = vmor %vm2638, %vm2639
      %v2641 = vsel %vm2640, %v2633, %v2637
      %v2642 = vand.u32 2147483647, %v2293
      %vm2643 = vcmp.eq.f32.partialorder %v2642, 8.507059e+37
      %v2644 = vand.u32 %v2293, 2147483648
      %v2645 = vor.u32 1.1754944e-38, %v2644
      %v2646 = vsel %vm2643, %v2645, %v2641
      %v2647 = vmul.f32 1.0, %v2646
      %v2648 = vrcp.pop %v2294
      %v2649 = vmul.f32 %v2294, %v2648
      %v2650 = vsub.f32 1.0, %v2649
      %v2651 = vmul.f32 %v2648, %v2650
      %v2652 = vadd.f32 %v2648, %v2651
      %vm2653 = vweird.f32 %v2294
      %vm2654 = vweird.f32 %v2648
      %vm2655 = vmor %vm2653, %vm2654
      %v2656 = vsel %vm2655, %v2648, %v2652
      %v2657 = vand.u32 2147483647, %v2294
      %vm2658 = vcmp.eq.f32.partialorder %v2657, 8.507059e+37
      %v2659 = vand.u32 %v2294, 2147483648
      %v2660 = vor.u32 1.1754944e-38, %v2659
      %v2661 = vsel %vm2658, %v2660, %v2656
      %v2662 = vmul.f32 1.0, %v2661
      %v2663 = vrcp.pop %v2295
      %v2664 = vmul.f32 %v2295, %v2663
      %v2665 = vsub.f32 1.0, %v2664
      %v2666 = vmul.f32 %v2663, %v2665
      %v2667 = vadd.f32 %v2663, %v2666
      %vm2668 = vweird.f32 %v2295
      %vm2669 = vweird.f32 %v2663
      %vm2670 = vmor %vm2668, %vm2669
      %v2671 = vsel %vm2670, %v2663, %v2667
      %v2672 = vand.u32 2147483647, %v2295
      %vm2673 = vcmp.eq.f32.partialorder %v2672, 8.507059e+37
      %v2674 = vand.u32 %v2295, 2147483648
      %v2675 = vor.u32 1.1754944e-38, %v2674
      %v2676 = vsel %vm2673, %v2675, %v2671
      %v2677 = vmul.f32 1.0, %v2676
      %v2678 = vrcp.pop %v2296
      %v2679 = vmul.f32 %v2296, %v2678
      %v2680 = vsub.f32 1.0, %v2679
      %v2681 = vmul.f32 %v2678, %v2680
      %v2682 = vadd.f32 %v2678, %v2681
      %vm2683 = vweird.f32 %v2296
      %vm2684 = vweird.f32 %v2678
      %vm2685 = vmor %vm2683, %vm2684
      %v2686 = vsel %vm2685, %v2678, %v2682
      %v2687 = vand.u32 2147483647, %v2296
      %vm2688 = vcmp.eq.f32.partialorder %v2687, 8.507059e+37
      %v2689 = vand.u32 %v2296, 2147483648
      %v2690 = vor.u32 1.1754944e-38, %v2689
      %v2691 = vsel %vm2688, %v2690, %v2686
      %v2692 = vmul.f32 1.0, %v2691
      %v2693 = vrcp.pop %v2297
      %v2694 = vmul.f32 %v2297, %v2693
      %v2695 = vsub.f32 1.0, %v2694
      %v2696 = vmul.f32 %v2693, %v2695
      %v2697 = vadd.f32 %v2693, %v2696
      %vm2698 = vweird.f32 %v2297
      %vm2699 = vweird.f32 %v2693
      %vm2700 = vmor %vm2698, %vm2699
      %v2701 = vsel %vm2700, %v2693, %v2697
      %v2702 = vand.u32 2147483647, %v2297
      %vm2703 = vcmp.eq.f32.partialorder %v2702, 8.507059e+37
      %v2704 = vand.u32 %v2297, 2147483648
      %v2705 = vor.u32 1.1754944e-38, %v2704
      %v2706 = vsel %vm2703, %v2705, %v2701
      %v2707 = vmul.f32 1.0, %v2706
      %v2708 = vrcp.pop %v2298
      %v2709 = vmul.f32 %v2298, %v2708
      %v2710 = vsub.f32 1.0, %v2709
      %v2711 = vmul.f32 %v2708, %v2710
      %v2712 = vadd.f32 %v2708, %v2711
      %vm2713 = vweird.f32 %v2298
      %vm2714 = vweird.f32 %v2708
      %vm2715 = vmor %vm2713, %vm2714
      %v2716 = vsel %vm2715, %v2708, %v2712
      %v2717 = vand.u32 2147483647, %v2298
      %vm2718 = vcmp.eq.f32.partialorder %v2717, 8.507059e+37
      %v2719 = vand.u32 %v2298, 2147483648
      %v2720 = vor.u32 1.1754944e-38, %v2719
      %v2721 = vsel %vm2718, %v2720, %v2716
      %v2722 = vmul.f32 1.0, %v2721
      %v2723 = vrcp.pop %v2299
      %v2724 = vmul.f32 %v2299, %v2723
      %v2725 = vsub.f32 1.0, %v2724
      %v2726 = vmul.f32 %v2723, %v2725
      %v2727 = vadd.f32 %v2723, %v2726
      %vm2728 = vweird.f32 %v2299
      %vm2729 = vweird.f32 %v2723
      %vm2730 = vmor %vm2728, %vm2729
      %v2731 = vsel %vm2730, %v2723, %v2727
      %v2732 = vand.u32 2147483647, %v2299
      %vm2733 = vcmp.eq.f32.partialorder %v2732, 8.507059e+37
      %v2734 = vand.u32 %v2299, 2147483648
      %v2735 = vor.u32 1.1754944e-38, %v2734
      %v2736 = vsel %vm2733, %v2735, %v2731
      %v2737 = vmul.f32 1.0, %v2736
      %v2738 = vrcp.pop %v2300
      %v2739 = vmul.f32 %v2300, %v2738
      %v2740 = vsub.f32 1.0, %v2739
      %v2741 = vmul.f32 %v2738, %v2740
      %v2742 = vadd.f32 %v2738, %v2741
      %vm2743 = vweird.f32 %v2300
      %vm2744 = vweird.f32 %v2738
      %vm2745 = vmor %vm2743, %vm2744
      %v2746 = vsel %vm2745, %v2738, %v2742
      %v2747 = vand.u32 2147483647, %v2300
      %vm2748 = vcmp.eq.f32.partialorder %v2747, 8.507059e+37
      %v2749 = vand.u32 %v2300, 2147483648
      %v2750 = vor.u32 1.1754944e-38, %v2749
      %v2751 = vsel %vm2748, %v2750, %v2746
      %v2752 = vmul.f32 1.0, %v2751
      %v2753 = vrcp.pop %v2301
      %v2754 = vmul.f32 %v2301, %v2753
      %v2755 = vsub.f32 1.0, %v2754
      %v2756 = vmul.f32 %v2753, %v2755
      %v2757 = vadd.f32 %v2753, %v2756
      %vm2758 = vweird.f32 %v2301
      %vm2759 = vweird.f32 %v2753
      %vm2760 = vmor %vm2758, %vm2759
      %v2761 = vsel %vm2760, %v2753, %v2757
      %v2762 = vand.u32 2147483647, %v2301
      %vm2763 = vcmp.eq.f32.partialorder %v2762, 8.507059e+37
      %v2764 = vand.u32 %v2301, 2147483648
      %v2765 = vor.u32 1.1754944e-38, %v2764
      %v2766 = vsel %vm2763, %v2765, %v2761
      %v2767 = vmul.f32 1.0, %v2766
      %v2768 = vrcp.pop %v2302
      %v2769 = vmul.f32 %v2302, %v2768
      %v2770 = vsub.f32 1.0, %v2769
      %v2771 = vmul.f32 %v2768, %v2770
      %v2772 = vadd.f32 %v2768, %v2771
      %vm2773 = vweird.f32 %v2302
      %vm2774 = vweird.f32 %v2768
      %vm2775 = vmor %vm2773, %vm2774
      %v2776 = vsel %vm2775, %v2768, %v2772
      %v2777 = vand.u32 2147483647, %v2302
      %vm2778 = vcmp.eq.f32.partialorder %v2777, 8.507059e+37
      %v2779 = vand.u32 %v2302, 2147483648
      %v2780 = vor.u32 1.1754944e-38, %v2779
      %v2781 = vsel %vm2778, %v2780, %v2776
      %v2782 = vmul.f32 1.0, %v2781
      %v2783 = vtanh.pop %v2140
      %v2784 = vtanh.pop %v2141
      %v2785 = vtanh.pop %v2142
      %v2786 = vtanh.pop %v2143
      %v2787 = vtanh.pop %v2144
      %v2788 = vtanh.pop %v2145
      %v2789 = vtanh.pop %v2146
      %v2790 = vtanh.pop %v2147
      %v2791 = vtanh.pop %v2148
      %v2792 = vtanh.pop %v2149
      %v2793 = vtanh.pop %v2150
      %v2794 = vtanh.pop %v2151
      %v2795 = vtanh.pop %v2152
      %v2796 = vtanh.pop %v2153
      %v2797 = vtanh.pop %v2154
      %v2798 = vtanh.pop %v2155
      %v2799 = vtanh.pop %v2156
      %v2800 = vtanh.pop %v2157
      %v2801 = vtanh.pop %v2158
      %v2802 = vtanh.pop %v2159
      %v2803 = vtanh.pop %v2160
      %v2804 = vtanh.pop %v2161
      %v2805 = vtanh.pop %v2162
      %v2806 = vtanh.pop %v2163
      %v2807 = vtanh.pop %v2164
      %v2808 = vtanh.pop %v2165
      %v2809 = vtanh.pop %v2166
      %v2810 = vtanh.pop %v2167
      %v2811 = vtanh.pop %v2168
      %v2812 = vtanh.pop %v2169
      %v2813 = vtanh.pop %v2170
      %v2814 = vtanh.pop %v2171
      %v2815 = vsel %vm2174, %v2317, %v2783
      %v2816 = vsel %vm2174, %v2332, %v2784
      %v2817 = vsel %vm2174, %v2347, %v2785
      %v2818 = vsel %vm2174, %v2362, %v2786
      %v2819 = vsel %vm2174, %v2377, %v2787
      %v2820 = vsel %vm2174, %v2392, %v2788
      %v2821 = vsel %vm2174, %v2407, %v2789
      %v2822 = vsel %vm2174, %v2422, %v2790
      %v2823 = vsel %vm2174, %v2437, %v2791
      %v2824 = vsel %vm2174, %v2452, %v2792
      %v2825 = vsel %vm2174, %v2467, %v2793
      %v2826 = vsel %vm2174, %v2482, %v2794
      %v2827 = vsel %vm2174, %v2497, %v2795
      %v2828 = vsel %vm2174, %v2512, %v2796
      %v2829 = vsel %vm2174, %v2527, %v2797
      %v2830 = vsel %vm2174, %v2542, %v2798
      %v2831 = vsel %vm2174, %v2557, %v2799
      %v2832 = vsel %vm2174, %v2572, %v2800
      %v2833 = vsel %vm2174, %v2587, %v2801
      %v2834 = vsel %vm2174, %v2602, %v2802
      %v2835 = vsel %vm2174, %v2617, %v2803
      %v2836 = vsel %vm2174, %v2632, %v2804
      %v2837 = vsel %vm2174, %v2647, %v2805
      %v2838 = vsel %vm2174, %v2662, %v2806
      %v2839 = vsel %vm2174, %v2677, %v2807
      %v2840 = vsel %vm2174, %v2692, %v2808
      %v2841 = vsel %vm2174, %v2707, %v2809
      %v2842 = vsel %vm2174, %v2722, %v2810
      %v2843 = vsel %vm2174, %v2737, %v2811
      %v2844 = vsel %vm2174, %v2752, %v2812
      %v2845 = vsel %vm2174, %v2767, %v2813
      %v2846 = vsel %vm2174, %v2782, %v2814
      %v2847 = vld [vmem:[#allocation3] sm:$0xff]
      %v2848 = vld [vmem:[#allocation3 + $0x8] sm:$0xff]
      %v2849 = vld [vmem:[#allocation3 + $0x10] sm:$0xff]
      %v2850 = vld [vmem:[#allocation3 + $0x18] sm:$0xff]
      %v2851 = vld [vmem:[#allocation3 + $0x20] sm:$0xff]
      %v2852 = vld [vmem:[#allocation3 + $0x28] sm:$0xff]
      %v2853 = vld [vmem:[#allocation3 + $0x30] sm:$0xff]
      %v2854 = vld [vmem:[#allocation3 + $0x38] sm:$0xff]
      %v2855 = vld [vmem:[#allocation3 + $0x40] sm:$0xff]
      %v2856 = vld [vmem:[#allocation3 + $0x48] sm:$0xff]
      %v2857 = vld [vmem:[#allocation3 + $0x50] sm:$0xff]
      %v2858 = vld [vmem:[#allocation3 + $0x58] sm:$0xff]
      %v2859 = vld [vmem:[#allocation3 + $0x60] sm:$0xff]
      %v2860 = vld [vmem:[#allocation3 + $0x68] sm:$0xff]
      %v2861 = vld [vmem:[#allocation3 + $0x70] sm:$0xff]
      %v2862 = vld [vmem:[#allocation3 + $0x78] sm:$0xff]
      %v2863 = vld [vmem:[#allocation3 + $0x80] sm:$0xff]
      %v2864 = vld [vmem:[#allocation3 + $0x88] sm:$0xff]
      %v2865 = vld [vmem:[#allocation3 + $0x90] sm:$0xff]
      %v2866 = vld [vmem:[#allocation3 + $0x98] sm:$0xff]
      %v2867 = vld [vmem:[#allocation3 + $0xa0] sm:$0xff]
      %v2868 = vld [vmem:[#allocation3 + $0xa8] sm:$0xff]
      %v2869 = vld [vmem:[#allocation3 + $0xb0] sm:$0xff]
      %v2870 = vld [vmem:[#allocation3 + $0xb8] sm:$0xff]
      %v2871 = vld [vmem:[#allocation3 + $0xc0] sm:$0xff]
      %v2872 = vld [vmem:[#allocation3 + $0xc8] sm:$0xff]
      %v2873 = vld [vmem:[#allocation3 + $0xd0] sm:$0xff]
      %v2874 = vld [vmem:[#allocation3 + $0xd8] sm:$0xff]
      %v2875 = vld [vmem:[#allocation3 + $0xe0] sm:$0xff]
      %v2876 = vld [vmem:[#allocation3 + $0xe8] sm:$0xff]
      %v2877 = vld [vmem:[#allocation3 + $0xf0] sm:$0xff]
      %v2878 = vld [vmem:[#allocation3 + $0xf8] sm:$0xff]
      %2911 = vrot.lane.b32.xlu0 %v2847, 32
      %v2912 = vpop.permute.xlu0 %2911
      %2913 = vrot.lane.b32.xlu0 %v2848, 32
      %v2914 = vpop.permute.xlu0 %2913
      %2915 = vrot.lane.b32.xlu0 %v2849, 32
      %v2916 = vpop.permute.xlu0 %2915
      %2917 = vrot.lane.b32.xlu0 %v2850, 32
      %v2918 = vpop.permute.xlu0 %2917
      %2919 = vrot.lane.b32.xlu0 %v2851, 32
      %v2920 = vpop.permute.xlu0 %2919
      %2921 = vrot.lane.b32.xlu0 %v2852, 32
      %v2922 = vpop.permute.xlu0 %2921
      %2923 = vrot.lane.b32.xlu0 %v2853, 32
      %v2924 = vpop.permute.xlu0 %2923
      %2925 = vrot.lane.b32.xlu0 %v2854, 32
      %v2926 = vpop.permute.xlu0 %2925
      %2927 = vrot.lane.b32.xlu0 %v2855, 32
      %v2928 = vpop.permute.xlu0 %2927
      %2929 = vrot.lane.b32.xlu0 %v2856, 32
      %v2930 = vpop.permute.xlu0 %2929
      %2931 = vrot.lane.b32.xlu0 %v2857, 32
      %v2932 = vpop.permute.xlu0 %2931
      %2933 = vrot.lane.b32.xlu0 %v2858, 32
      %v2934 = vpop.permute.xlu0 %2933
      %2935 = vrot.lane.b32.xlu0 %v2859, 32
      %v2936 = vpop.permute.xlu0 %2935
      %2937 = vrot.lane.b32.xlu0 %v2860, 32
      %v2938 = vpop.permute.xlu0 %2937
      %2939 = vrot.lane.b32.xlu0 %v2861, 32
      %v2940 = vpop.permute.xlu0 %2939
      %2941 = vrot.lane.b32.xlu0 %v2862, 32
      %v2942 = vpop.permute.xlu0 %2941
      %2943 = vrot.lane.b32.xlu0 %v2863, 32
      %v2944 = vpop.permute.xlu0 %2943
      %2945 = vrot.lane.b32.xlu0 %v2864, 32
      %v2946 = vpop.permute.xlu0 %2945
      %2947 = vrot.lane.b32.xlu0 %v2865, 32
      %v2948 = vpop.permute.xlu0 %2947
      %2949 = vrot.lane.b32.xlu0 %v2866, 32
      %v2950 = vpop.permute.xlu0 %2949
      %2951 = vrot.lane.b32.xlu0 %v2867, 32
      %v2952 = vpop.permute.xlu0 %2951
      %2953 = vrot.lane.b32.xlu0 %v2868, 32
      %v2954 = vpop.permute.xlu0 %2953
      %2955 = vrot.lane.b32.xlu0 %v2869, 32
      %v2956 = vpop.permute.xlu0 %2955
      %2957 = vrot.lane.b32.xlu0 %v2870, 32
      %v2958 = vpop.permute.xlu0 %2957
      %2959 = vrot.lane.b32.xlu0 %v2871, 32
      %v2960 = vpop.permute.xlu0 %2959
      %2961 = vrot.lane.b32.xlu0 %v2872, 32
      %v2962 = vpop.permute.xlu0 %2961
      %2963 = vrot.lane.b32.xlu0 %v2873, 32
      %v2964 = vpop.permute.xlu0 %2963
      %2965 = vrot.lane.b32.xlu0 %v2874, 32
      %v2966 = vpop.permute.xlu0 %2965
      %2967 = vrot.lane.b32.xlu0 %v2875, 32
      %v2968 = vpop.permute.xlu0 %2967
      %2969 = vrot.lane.b32.xlu0 %v2876, 32
      %v2970 = vpop.permute.xlu0 %2969
      %2971 = vrot.lane.b32.xlu0 %v2877, 32
      %v2972 = vpop.permute.xlu0 %2971
      %2973 = vrot.lane.b32.xlu0 %v2878, 32
      %v2974 = vpop.permute.xlu0 %2973
      %v3007 = vmul.f32 %v2815, %v2912
      %v3008 = vmul.f32 %v2816, %v2914
      %v3009 = vmul.f32 %v2817, %v2916
      %v3010 = vmul.f32 %v2818, %v2918
      %v3011 = vmul.f32 %v2819, %v2920
      %v3012 = vmul.f32 %v2820, %v2922
      %v3013 = vmul.f32 %v2821, %v2924
      %v3014 = vmul.f32 %v2822, %v2926
      %v3015 = vmul.f32 %v2823, %v2928
      %v3016 = vmul.f32 %v2824, %v2930
      %v3017 = vmul.f32 %v2825, %v2932
      %v3018 = vmul.f32 %v2826, %v2934
      %v3019 = vmul.f32 %v2827, %v2936
      %v3020 = vmul.f32 %v2828, %v2938
      %v3021 = vmul.f32 %v2829, %v2940
      %v3022 = vmul.f32 %v2830, %v2942
      %v3023 = vmul.f32 %v2831, %v2944
      %v3024 = vmul.f32 %v2832, %v2946
      %v3025 = vmul.f32 %v2833, %v2948
      %v3026 = vmul.f32 %v2834, %v2950
      %v3027 = vmul.f32 %v2835, %v2952
      %v3028 = vmul.f32 %v2836, %v2954
      %v3029 = vmul.f32 %v2837, %v2956
      %v3030 = vmul.f32 %v2838, %v2958
      %v3031 = vmul.f32 %v2839, %v2960
      %v3032 = vmul.f32 %v2840, %v2962
      %v3033 = vmul.f32 %v2841, %v2964
      %v3034 = vmul.f32 %v2842, %v2966
      %v3035 = vmul.f32 %v2843, %v2968
      %v3036 = vmul.f32 %v2844, %v2970
      %v3037 = vmul.f32 %v2845, %v2972
      %v3038 = vmul.f32 %v2846, %v2974
      %3071 = vrot.lane.b32.xlu0 %v2815, 32
      %v3072 = vpop.permute.xlu0 %3071
      %3073 = vrot.lane.b32.xlu0 %v2816, 32
      %v3074 = vpop.permute.xlu0 %3073
      %3075 = vrot.lane.b32.xlu0 %v2817, 32
      %v3076 = vpop.permute.xlu0 %3075
      %3077 = vrot.lane.b32.xlu0 %v2818, 32
      %v3078 = vpop.permute.xlu0 %3077
      %3079 = vrot.lane.b32.xlu0 %v2819, 32
      %v3080 = vpop.permute.xlu0 %3079
      %3081 = vrot.lane.b32.xlu0 %v2820, 32
      %v3082 = vpop.permute.xlu0 %3081
      %3083 = vrot.lane.b32.xlu0 %v2821, 32
      %v3084 = vpop.permute.xlu0 %3083
      %3085 = vrot.lane.b32.xlu0 %v2822, 32
      %v3086 = vpop.permute.xlu0 %3085
      %3087 = vrot.lane.b32.xlu0 %v2823, 32
      %v3088 = vpop.permute.xlu0 %3087
      %3089 = vrot.lane.b32.xlu0 %v2824, 32
      %v3090 = vpop.permute.xlu0 %3089
      %3091 = vrot.lane.b32.xlu0 %v2825, 32
      %v3092 = vpop.permute.xlu0 %3091
      %3093 = vrot.lane.b32.xlu0 %v2826, 32
      %v3094 = vpop.permute.xlu0 %3093
      %3095 = vrot.lane.b32.xlu0 %v2827, 32
      %v3096 = vpop.permute.xlu0 %3095
      %3097 = vrot.lane.b32.xlu0 %v2828, 32
      %v3098 = vpop.permute.xlu0 %3097
      %3099 = vrot.lane.b32.xlu0 %v2829, 32
      %v3100 = vpop.permute.xlu0 %3099
      %3101 = vrot.lane.b32.xlu0 %v2830, 32
      %v3102 = vpop.permute.xlu0 %3101
      %3103 = vrot.lane.b32.xlu0 %v2831, 32
      %v3104 = vpop.permute.xlu0 %3103
      %3105 = vrot.lane.b32.xlu0 %v2832, 32
      %v3106 = vpop.permute.xlu0 %3105
      %3107 = vrot.lane.b32.xlu0 %v2833, 32
      %v3108 = vpop.permute.xlu0 %3107
      %3109 = vrot.lane.b32.xlu0 %v2834, 32
      %v3110 = vpop.permute.xlu0 %3109
      %3111 = vrot.lane.b32.xlu0 %v2835, 32
      %v3112 = vpop.permute.xlu0 %3111
      %3113 = vrot.lane.b32.xlu0 %v2836, 32
      %v3114 = vpop.permute.xlu0 %3113
      %3115 = vrot.lane.b32.xlu0 %v2837, 32
      %v3116 = vpop.permute.xlu0 %3115
      %3117 = vrot.lane.b32.xlu0 %v2838, 32
      %v3118 = vpop.permute.xlu0 %3117
      %3119 = vrot.lane.b32.xlu0 %v2839, 32
      %v3120 = vpop.permute.xlu0 %3119
      %3121 = vrot.lane.b32.xlu0 %v2840, 32
      %v3122 = vpop.permute.xlu0 %3121
      %3123 = vrot.lane.b32.xlu0 %v2841, 32
      %v3124 = vpop.permute.xlu0 %3123
      %3125 = vrot.lane.b32.xlu0 %v2842, 32
      %v3126 = vpop.permute.xlu0 %3125
      %3127 = vrot.lane.b32.xlu0 %v2843, 32
      %v3128 = vpop.permute.xlu0 %3127
      %3129 = vrot.lane.b32.xlu0 %v2844, 32
      %v3130 = vpop.permute.xlu0 %3129
      %3131 = vrot.lane.b32.xlu0 %v2845, 32
      %v3132 = vpop.permute.xlu0 %3131
      %3133 = vrot.lane.b32.xlu0 %v2846, 32
      %v3134 = vpop.permute.xlu0 %3133
      %v3167 = vmul.f32 %v2815, %v3072
      %v3168 = vmul.f32 %v2816, %v3074
      %v3169 = vmul.f32 %v2817, %v3076
      %v3170 = vmul.f32 %v2818, %v3078
      %v3171 = vmul.f32 %v2819, %v3080
      %v3172 = vmul.f32 %v2820, %v3082
      %v3173 = vmul.f32 %v2821, %v3084
      %v3174 = vmul.f32 %v2822, %v3086
      %v3175 = vmul.f32 %v2823, %v3088
      %v3176 = vmul.f32 %v2824, %v3090
      %v3177 = vmul.f32 %v2825, %v3092
      %v3178 = vmul.f32 %v2826, %v3094
      %v3179 = vmul.f32 %v2827, %v3096
      %v3180 = vmul.f32 %v2828, %v3098
      %v3181 = vmul.f32 %v2829, %v3100
      %v3182 = vmul.f32 %v2830, %v3102
      %v3183 = vmul.f32 %v2831, %v3104
      %v3184 = vmul.f32 %v2832, %v3106
      %v3185 = vmul.f32 %v2833, %v3108
      %v3186 = vmul.f32 %v2834, %v3110
      %v3187 = vmul.f32 %v2835, %v3112
      %v3188 = vmul.f32 %v2836, %v3114
      %v3189 = vmul.f32 %v2837, %v3116
      %v3190 = vmul.f32 %v2838, %v3118
      %v3191 = vmul.f32 %v2839, %v3120
      %v3192 = vmul.f32 %v2840, %v3122
      %v3193 = vmul.f32 %v2841, %v3124
      %v3194 = vmul.f32 %v2842, %v3126
      %v3195 = vmul.f32 %v2843, %v3128
      %v3196 = vmul.f32 %v2844, %v3130
      %v3197 = vmul.f32 %v2845, %v3132
      %v3198 = vmul.f32 %v2846, %v3134
      %3231 = vrot.lane.b32.xlu0 %v3167, 32
      %v3232 = vpop.permute.xlu0 %3231
      %3233 = vrot.lane.b32.xlu0 %v3168, 32
      %v3234 = vpop.permute.xlu0 %3233
      %3235 = vrot.lane.b32.xlu0 %v3169, 32
      %v3236 = vpop.permute.xlu0 %3235
      %3237 = vrot.lane.b32.xlu0 %v3170, 32
      %v3238 = vpop.permute.xlu0 %3237
      %3239 = vrot.lane.b32.xlu0 %v3171, 32
      %v3240 = vpop.permute.xlu0 %3239
      %3241 = vrot.lane.b32.xlu0 %v3172, 32
      %v3242 = vpop.permute.xlu0 %3241
      %3243 = vrot.lane.b32.xlu0 %v3173, 32
      %v3244 = vpop.permute.xlu0 %3243
      %3245 = vrot.lane.b32.xlu0 %v3174, 32
      %v3246 = vpop.permute.xlu0 %3245
      %3247 = vrot.lane.b32.xlu0 %v3175, 32
      %v3248 = vpop.permute.xlu0 %3247
      %3249 = vrot.lane.b32.xlu0 %v3176, 32
      %v3250 = vpop.permute.xlu0 %3249
      %3251 = vrot.lane.b32.xlu0 %v3177, 32
      %v3252 = vpop.permute.xlu0 %3251
      %3253 = vrot.lane.b32.xlu0 %v3178, 32
      %v3254 = vpop.permute.xlu0 %3253
      %3255 = vrot.lane.b32.xlu0 %v3179, 32
      %v3256 = vpop.permute.xlu0 %3255
      %3257 = vrot.lane.b32.xlu0 %v3180, 32
      %v3258 = vpop.permute.xlu0 %3257
      %3259 = vrot.lane.b32.xlu0 %v3181, 32
      %v3260 = vpop.permute.xlu0 %3259
      %3261 = vrot.lane.b32.xlu0 %v3182, 32
      %v3262 = vpop.permute.xlu0 %3261
      %3263 = vrot.lane.b32.xlu0 %v3183, 32
      %v3264 = vpop.permute.xlu0 %3263
      %3265 = vrot.lane.b32.xlu0 %v3184, 32
      %v3266 = vpop.permute.xlu0 %3265
      %3267 = vrot.lane.b32.xlu0 %v3185, 32
      %v3268 = vpop.permute.xlu0 %3267
      %3269 = vrot.lane.b32.xlu0 %v3186, 32
      %v3270 = vpop.permute.xlu0 %3269
      %3271 = vrot.lane.b32.xlu0 %v3187, 32
      %v3272 = vpop.permute.xlu0 %3271
      %3273 = vrot.lane.b32.xlu0 %v3188, 32
      %v3274 = vpop.permute.xlu0 %3273
      %3275 = vrot.lane.b32.xlu0 %v3189, 32
      %v3276 = vpop.permute.xlu0 %3275
      %3277 = vrot.lane.b32.xlu0 %v3190, 32
      %v3278 = vpop.permute.xlu0 %3277
      %3279 = vrot.lane.b32.xlu0 %v3191, 32
      %v3280 = vpop.permute.xlu0 %3279
      %3281 = vrot.lane.b32.xlu0 %v3192, 32
      %v3282 = vpop.permute.xlu0 %3281
      %3283 = vrot.lane.b32.xlu0 %v3193, 32
      %v3284 = vpop.permute.xlu0 %3283
      %3285 = vrot.lane.b32.xlu0 %v3194, 32
      %v3286 = vpop.permute.xlu0 %3285
      %3287 = vrot.lane.b32.xlu0 %v3195, 32
      %v3288 = vpop.permute.xlu0 %3287
      %3289 = vrot.lane.b32.xlu0 %v3196, 32
      %v3290 = vpop.permute.xlu0 %3289
      %3291 = vrot.lane.b32.xlu0 %v3197, 32
      %v3292 = vpop.permute.xlu0 %3291
      %3293 = vrot.lane.b32.xlu0 %v3198, 32
      %v3294 = vpop.permute.xlu0 %3293
      %v3327 = vadd.f32 %v3007, %v3232
      %v3328 = vadd.f32 %v3008, %v3234
      %v3329 = vadd.f32 %v3009, %v3236
      %v3330 = vadd.f32 %v3010, %v3238
      %v3331 = vadd.f32 %v3011, %v3240
      %v3332 = vadd.f32 %v3012, %v3242
      %v3333 = vadd.f32 %v3013, %v3244
      %v3334 = vadd.f32 %v3014, %v3246
      %v3335 = vadd.f32 %v3015, %v3248
      %v3336 = vadd.f32 %v3016, %v3250
      %v3337 = vadd.f32 %v3017, %v3252
      %v3338 = vadd.f32 %v3018, %v3254
      %v3339 = vadd.f32 %v3019, %v3256
      %v3340 = vadd.f32 %v3020, %v3258
      %v3341 = vadd.f32 %v3021, %v3260
      %v3342 = vadd.f32 %v3022, %v3262
      %v3343 = vadd.f32 %v3023, %v3264
      %v3344 = vadd.f32 %v3024, %v3266
      %v3345 = vadd.f32 %v3025, %v3268
      %v3346 = vadd.f32 %v3026, %v3270
      %v3347 = vadd.f32 %v3027, %v3272
      %v3348 = vadd.f32 %v3028, %v3274
      %v3349 = vadd.f32 %v3029, %v3276
      %v3350 = vadd.f32 %v3030, %v3278
      %v3351 = vadd.f32 %v3031, %v3280
      %v3352 = vadd.f32 %v3032, %v3282
      %v3353 = vadd.f32 %v3033, %v3284
      %v3354 = vadd.f32 %v3034, %v3286
      %v3355 = vadd.f32 %v3035, %v3288
      %v3356 = vadd.f32 %v3036, %v3290
      %v3357 = vadd.f32 %v3037, %v3292
      %v3358 = vadd.f32 %v3038, %v3294
      %v3359 = vtanh.pop %v3327
      %v3360 = vtanh.pop %v3328
      %v3361 = vtanh.pop %v3329
      %v3362 = vtanh.pop %v3330
      %v3363 = vtanh.pop %v3331
      %v3364 = vtanh.pop %v3332
      %v3365 = vtanh.pop %v3333
      %v3366 = vtanh.pop %v3334
      %v3367 = vtanh.pop %v3335
      %v3368 = vtanh.pop %v3336
      %v3369 = vtanh.pop %v3337
      %v3370 = vtanh.pop %v3338
      %v3371 = vtanh.pop %v3339
      %v3372 = vtanh.pop %v3340
      %v3373 = vtanh.pop %v3341
      %v3374 = vtanh.pop %v3342
      %v3375 = vtanh.pop %v3343
      %v3376 = vtanh.pop %v3344
      %v3377 = vtanh.pop %v3345
      %v3378 = vtanh.pop %v3346
      %v3379 = vtanh.pop %v3347
      %v3380 = vtanh.pop %v3348
      %v3381 = vtanh.pop %v3349
      %v3382 = vtanh.pop %v3350
      %v3383 = vtanh.pop %v3351
      %v3384 = vtanh.pop %v3352
      %v3385 = vtanh.pop %v3353
      %v3386 = vtanh.pop %v3354
      %v3387 = vtanh.pop %v3355
      %v3388 = vtanh.pop %v3356
      %v3389 = vtanh.pop %v3357
      %v3390 = vtanh.pop %v3358
      %3423 = vrot.lane.b32.xlu0 %v3359, 32
      %v3424 = vpop.permute.xlu0 %3423
      %3425 = vrot.lane.b32.xlu0 %v3360, 32
      %v3426 = vpop.permute.xlu0 %3425
      %3427 = vrot.lane.b32.xlu0 %v3361, 32
      %v3428 = vpop.permute.xlu0 %3427
      %3429 = vrot.lane.b32.xlu0 %v3362, 32
      %v3430 = vpop.permute.xlu0 %3429
      %3431 = vrot.lane.b32.xlu0 %v3363, 32
      %v3432 = vpop.permute.xlu0 %3431
      %3433 = vrot.lane.b32.xlu0 %v3364, 32
      %v3434 = vpop.permute.xlu0 %3433
      %3435 = vrot.lane.b32.xlu0 %v3365, 32
      %v3436 = vpop.permute.xlu0 %3435
      %3437 = vrot.lane.b32.xlu0 %v3366, 32
      %v3438 = vpop.permute.xlu0 %3437
      %3439 = vrot.lane.b32.xlu0 %v3367, 32
      %v3440 = vpop.permute.xlu0 %3439
      %3441 = vrot.lane.b32.xlu0 %v3368, 32
      %v3442 = vpop.permute.xlu0 %3441
      %3443 = vrot.lane.b32.xlu0 %v3369, 32
      %v3444 = vpop.permute.xlu0 %3443
      %3445 = vrot.lane.b32.xlu0 %v3370, 32
      %v3446 = vpop.permute.xlu0 %3445
      %3447 = vrot.lane.b32.xlu0 %v3371, 32
      %v3448 = vpop.permute.xlu0 %3447
      %3449 = vrot.lane.b32.xlu0 %v3372, 32
      %v3450 = vpop.permute.xlu0 %3449
      %3451 = vrot.lane.b32.xlu0 %v3373, 32
      %v3452 = vpop.permute.xlu0 %3451
      %3453 = vrot.lane.b32.xlu0 %v3374, 32
      %v3454 = vpop.permute.xlu0 %3453
      %3455 = vrot.lane.b32.xlu0 %v3375, 32
      %v3456 = vpop.permute.xlu0 %3455
      %3457 = vrot.lane.b32.xlu0 %v3376, 32
      %v3458 = vpop.permute.xlu0 %3457
      %3459 = vrot.lane.b32.xlu0 %v3377, 32
      %v3460 = vpop.permute.xlu0 %3459
      %3461 = vrot.lane.b32.xlu0 %v3378, 32
      %v3462 = vpop.permute.xlu0 %3461
      %3463 = vrot.lane.b32.xlu0 %v3379, 32
      %v3464 = vpop.permute.xlu0 %3463
      %3465 = vrot.lane.b32.xlu0 %v3380, 32
      %v3466 = vpop.permute.xlu0 %3465
      %3467 = vrot.lane.b32.xlu0 %v3381, 32
      %v3468 = vpop.permute.xlu0 %3467
      %3469 = vrot.lane.b32.xlu0 %v3382, 32
      %v3470 = vpop.permute.xlu0 %3469
      %3471 = vrot.lane.b32.xlu0 %v3383, 32
      %v3472 = vpop.permute.xlu0 %3471
      %3473 = vrot.lane.b32.xlu0 %v3384, 32
      %v3474 = vpop.permute.xlu0 %3473
      %3475 = vrot.lane.b32.xlu0 %v3385, 32
      %v3476 = vpop.permute.xlu0 %3475
      %3477 = vrot.lane.b32.xlu0 %v3386, 32
      %v3478 = vpop.permute.xlu0 %3477
      %3479 = vrot.lane.b32.xlu0 %v3387, 32
      %v3480 = vpop.permute.xlu0 %3479
      %3481 = vrot.lane.b32.xlu0 %v3388, 32
      %v3482 = vpop.permute.xlu0 %3481
      %3483 = vrot.lane.b32.xlu0 %v3389, 32
      %v3484 = vpop.permute.xlu0 %3483
      %3485 = vrot.lane.b32.xlu0 %v3390, 32
      %v3486 = vpop.permute.xlu0 %3485
      %v3519 = vmul.f32 %v2815, %v3424
      %v3520 = vmul.f32 %v2816, %v3426
      %v3521 = vmul.f32 %v2817, %v3428
      %v3522 = vmul.f32 %v2818, %v3430
      %v3523 = vmul.f32 %v2819, %v3432
      %v3524 = vmul.f32 %v2820, %v3434
      %v3525 = vmul.f32 %v2821, %v3436
      %v3526 = vmul.f32 %v2822, %v3438
      %v3527 = vmul.f32 %v2823, %v3440
      %v3528 = vmul.f32 %v2824, %v3442
      %v3529 = vmul.f32 %v2825, %v3444
      %v3530 = vmul.f32 %v2826, %v3446
      %v3531 = vmul.f32 %v2827, %v3448
      %v3532 = vmul.f32 %v2828, %v3450
      %v3533 = vmul.f32 %v2829, %v3452
      %v3534 = vmul.f32 %v2830, %v3454
      %v3535 = vmul.f32 %v2831, %v3456
      %v3536 = vmul.f32 %v2832, %v3458
      %v3537 = vmul.f32 %v2833, %v3460
      %v3538 = vmul.f32 %v2834, %v3462
      %v3539 = vmul.f32 %v2835, %v3464
      %v3540 = vmul.f32 %v2836, %v3466
      %v3541 = vmul.f32 %v2837, %v3468
      %v3542 = vmul.f32 %v2838, %v3470
      %v3543 = vmul.f32 %v2839, %v3472
      %v3544 = vmul.f32 %v2840, %v3474
      %v3545 = vmul.f32 %v2841, %v3476
      %v3546 = vmul.f32 %v2842, %v3478
      %v3547 = vmul.f32 %v2843, %v3480
      %v3548 = vmul.f32 %v2844, %v3482
      %v3549 = vmul.f32 %v2845, %v3484
      %v3550 = vmul.f32 %v2846, %v3486
      %3583 = vrot.lane.b32.xlu0 %v3327, 96
      %v3584 = vpop.permute.xlu0 %3583
      %3585 = vrot.lane.b32.xlu0 %v3328, 96
      %v3586 = vpop.permute.xlu0 %3585
      %3587 = vrot.lane.b32.xlu0 %v3329, 96
      %v3588 = vpop.permute.xlu0 %3587
      %3589 = vrot.lane.b32.xlu0 %v3330, 96
      %v3590 = vpop.permute.xlu0 %3589
      %3591 = vrot.lane.b32.xlu0 %v3331, 96
      %v3592 = vpop.permute.xlu0 %3591
      %3593 = vrot.lane.b32.xlu0 %v3332, 96
      %v3594 = vpop.permute.xlu0 %3593
      %3595 = vrot.lane.b32.xlu0 %v3333, 96
      %v3596 = vpop.permute.xlu0 %3595
      %3597 = vrot.lane.b32.xlu0 %v3334, 96
      %v3598 = vpop.permute.xlu0 %3597
      %3599 = vrot.lane.b32.xlu0 %v3335, 96
      %v3600 = vpop.permute.xlu0 %3599
      %3601 = vrot.lane.b32.xlu0 %v3336, 96
      %v3602 = vpop.permute.xlu0 %3601
      %3603 = vrot.lane.b32.xlu0 %v3337, 96
      %v3604 = vpop.permute.xlu0 %3603
      %3605 = vrot.lane.b32.xlu0 %v3338, 96
      %v3606 = vpop.permute.xlu0 %3605
      %3607 = vrot.lane.b32.xlu0 %v3339, 96
      %v3608 = vpop.permute.xlu0 %3607
      %3609 = vrot.lane.b32.xlu0 %v3340, 96
      %v3610 = vpop.permute.xlu0 %3609
      %3611 = vrot.lane.b32.xlu0 %v3341, 96
      %v3612 = vpop.permute.xlu0 %3611
      %3613 = vrot.lane.b32.xlu0 %v3342, 96
      %v3614 = vpop.permute.xlu0 %3613
      %3615 = vrot.lane.b32.xlu0 %v3343, 96
      %v3616 = vpop.permute.xlu0 %3615
      %3617 = vrot.lane.b32.xlu0 %v3344, 96
      %v3618 = vpop.permute.xlu0 %3617
      %3619 = vrot.lane.b32.xlu0 %v3345, 96
      %v3620 = vpop.permute.xlu0 %3619
      %3621 = vrot.lane.b32.xlu0 %v3346, 96
      %v3622 = vpop.permute.xlu0 %3621
      %3623 = vrot.lane.b32.xlu0 %v3347, 96
      %v3624 = vpop.permute.xlu0 %3623
      %3625 = vrot.lane.b32.xlu0 %v3348, 96
      %v3626 = vpop.permute.xlu0 %3625
      %3627 = vrot.lane.b32.xlu0 %v3349, 96
      %v3628 = vpop.permute.xlu0 %3627
      %3629 = vrot.lane.b32.xlu0 %v3350, 96
      %v3630 = vpop.permute.xlu0 %3629
      %3631 = vrot.lane.b32.xlu0 %v3351, 96
      %v3632 = vpop.permute.xlu0 %3631
      %3633 = vrot.lane.b32.xlu0 %v3352, 96
      %v3634 = vpop.permute.xlu0 %3633
      %3635 = vrot.lane.b32.xlu0 %v3353, 96
      %v3636 = vpop.permute.xlu0 %3635
      %3637 = vrot.lane.b32.xlu0 %v3354, 96
      %v3638 = vpop.permute.xlu0 %3637
      %3639 = vrot.lane.b32.xlu0 %v3355, 96
      %v3640 = vpop.permute.xlu0 %3639
      %3641 = vrot.lane.b32.xlu0 %v3356, 96
      %v3642 = vpop.permute.xlu0 %3641
      %3643 = vrot.lane.b32.xlu0 %v3357, 96
      %v3644 = vpop.permute.xlu0 %3643
      %3645 = vrot.lane.b32.xlu0 %v3358, 96
      %v3646 = vpop.permute.xlu0 %3645
      %vm3679 = vcmask 261120
      %3680 = vst.msk [vmem:[#allocation3] sm:$0xff] %vm3679, %v3584
      %3681 = vst.msk [vmem:[#allocation3 + $0x8] sm:$0xff] %vm3679, %v3586
      %3682 = vst.msk [vmem:[#allocation3 + $0x10] sm:$0xff] %vm3679, %v3588
      %3683 = vst.msk [vmem:[#allocation3 + $0x18] sm:$0xff] %vm3679, %v3590
      %3684 = vst.msk [vmem:[#allocation3 + $0x20] sm:$0xff] %vm3679, %v3592
      %3685 = vst.msk [vmem:[#allocation3 + $0x28] sm:$0xff] %vm3679, %v3594
      %3686 = vst.msk [vmem:[#allocation3 + $0x30] sm:$0xff] %vm3679, %v3596
      %3687 = vst.msk [vmem:[#allocation3 + $0x38] sm:$0xff] %vm3679, %v3598
      %3688 = vst.msk [vmem:[#allocation3 + $0x40] sm:$0xff] %vm3679, %v3600
      %3689 = vst.msk [vmem:[#allocation3 + $0x48] sm:$0xff] %vm3679, %v3602
      %3690 = vst.msk [vmem:[#allocation3 + $0x50] sm:$0xff] %vm3679, %v3604
      %3691 = vst.msk [vmem:[#allocation3 + $0x58] sm:$0xff] %vm3679, %v3606
      %3692 = vst.msk [vmem:[#allocation3 + $0x60] sm:$0xff] %vm3679, %v3608
      %3693 = vst.msk [vmem:[#allocation3 + $0x68] sm:$0xff] %vm3679, %v3610
      %3694 = vst.msk [vmem:[#allocation3 + $0x70] sm:$0xff] %vm3679, %v3612
      %3695 = vst.msk [vmem:[#allocation3 + $0x78] sm:$0xff] %vm3679, %v3614
      %3696 = vst.msk [vmem:[#allocation3 + $0x80] sm:$0xff] %vm3679, %v3616
      %3697 = vst.msk [vmem:[#allocation3 + $0x88] sm:$0xff] %vm3679, %v3618
      %3698 = vst.msk [vmem:[#allocation3 + $0x90] sm:$0xff] %vm3679, %v3620
      %3699 = vst.msk [vmem:[#allocation3 + $0x98] sm:$0xff] %vm3679, %v3622
      %3700 = vst.msk [vmem:[#allocation3 + $0xa0] sm:$0xff] %vm3679, %v3624
      %3701 = vst.msk [vmem:[#allocation3 + $0xa8] sm:$0xff] %vm3679, %v3626
      %3702 = vst.msk [vmem:[#allocation3 + $0xb0] sm:$0xff] %vm3679, %v3628
      %3703 = vst.msk [vmem:[#allocation3 + $0xb8] sm:$0xff] %vm3679, %v3630
      %3704 = vst.msk [vmem:[#allocation3 + $0xc0] sm:$0xff] %vm3679, %v3632
      %3705 = vst.msk [vmem:[#allocation3 + $0xc8] sm:$0xff] %vm3679, %v3634
      %3706 = vst.msk [vmem:[#allocation3 + $0xd0] sm:$0xff] %vm3679, %v3636
      %3707 = vst.msk [vmem:[#allocation3 + $0xd8] sm:$0xff] %vm3679, %v3638
      %3708 = vst.msk [vmem:[#allocation3 + $0xe0] sm:$0xff] %vm3679, %v3640
      %3709 = vst.msk [vmem:[#allocation3 + $0xe8] sm:$0xff] %vm3679, %v3642
      %3710 = vst.msk [vmem:[#allocation3 + $0xf0] sm:$0xff] %vm3679, %v3644
      %3711 = vst.msk [vmem:[#allocation3 + $0xf8] sm:$0xff] %vm3679, %v3646
      %3744 = vrot.lane.b32.xlu0 %v3519, 64
      %v3745 = vpop.permute.xlu0 %3744
      %3746 = vrot.lane.b32.xlu0 %v3520, 64
      %v3747 = vpop.permute.xlu0 %3746
      %3748 = vrot.lane.b32.xlu0 %v3521, 64
      %v3749 = vpop.permute.xlu0 %3748
      %3750 = vrot.lane.b32.xlu0 %v3522, 64
      %v3751 = vpop.permute.xlu0 %3750
      %3752 = vrot.lane.b32.xlu0 %v3523, 64
      %v3753 = vpop.permute.xlu0 %3752
      %3754 = vrot.lane.b32.xlu0 %v3524, 64
      %v3755 = vpop.permute.xlu0 %3754
      %3756 = vrot.lane.b32.xlu0 %v3525, 64
      %v3757 = vpop.permute.xlu0 %3756
      %3758 = vrot.lane.b32.xlu0 %v3526, 64
      %v3759 = vpop.permute.xlu0 %3758
      %3760 = vrot.lane.b32.xlu0 %v3527, 64
      %v3761 = vpop.permute.xlu0 %3760
      %3762 = vrot.lane.b32.xlu0 %v3528, 64
      %v3763 = vpop.permute.xlu0 %3762
      %3764 = vrot.lane.b32.xlu0 %v3529, 64
      %v3765 = vpop.permute.xlu0 %3764
      %3766 = vrot.lane.b32.xlu0 %v3530, 64
      %v3767 = vpop.permute.xlu0 %3766
      %3768 = vrot.lane.b32.xlu0 %v3531, 64
      %v3769 = vpop.permute.xlu0 %3768
      %3770 = vrot.lane.b32.xlu0 %v3532, 64
      %v3771 = vpop.permute.xlu0 %3770
      %3772 = vrot.lane.b32.xlu0 %v3533, 64
      %v3773 = vpop.permute.xlu0 %3772
      %3774 = vrot.lane.b32.xlu0 %v3534, 64
      %v3775 = vpop.permute.xlu0 %3774
      %3776 = vrot.lane.b32.xlu0 %v3535, 64
      %v3777 = vpop.permute.xlu0 %3776
      %3778 = vrot.lane.b32.xlu0 %v3536, 64
      %v3779 = vpop.permute.xlu0 %3778
      %3780 = vrot.lane.b32.xlu0 %v3537, 64
      %v3781 = vpop.permute.xlu0 %3780
      %3782 = vrot.lane.b32.xlu0 %v3538, 64
      %v3783 = vpop.permute.xlu0 %3782
      %3784 = vrot.lane.b32.xlu0 %v3539, 64
      %v3785 = vpop.permute.xlu0 %3784
      %3786 = vrot.lane.b32.xlu0 %v3540, 64
      %v3787 = vpop.permute.xlu0 %3786
      %3788 = vrot.lane.b32.xlu0 %v3541, 64
      %v3789 = vpop.permute.xlu0 %3788
      %3790 = vrot.lane.b32.xlu0 %v3542, 64
      %v3791 = vpop.permute.xlu0 %3790
      %3792 = vrot.lane.b32.xlu0 %v3543, 64
      %v3793 = vpop.permute.xlu0 %3792
      %3794 = vrot.lane.b32.xlu0 %v3544, 64
      %v3795 = vpop.permute.xlu0 %3794
      %3796 = vrot.lane.b32.xlu0 %v3545, 64
      %v3797 = vpop.permute.xlu0 %3796
      %3798 = vrot.lane.b32.xlu0 %v3546, 64
      %v3799 = vpop.permute.xlu0 %3798
      %3800 = vrot.lane.b32.xlu0 %v3547, 64
      %v3801 = vpop.permute.xlu0 %3800
      %3802 = vrot.lane.b32.xlu0 %v3548, 64
      %v3803 = vpop.permute.xlu0 %3802
      %3804 = vrot.lane.b32.xlu0 %v3549, 64
      %v3805 = vpop.permute.xlu0 %3804
      %3806 = vrot.lane.b32.xlu0 %v3550, 64
      %v3807 = vpop.permute.xlu0 %3806
      %s3840 = scalar_lea.vmem [#allocation2], 24
      %3841 = vst.msk [vmem:[%s3840 + $0x1] sm:$0xff] %vm3679, %v3745
      %3842 = vst.msk [vmem:[%s3840 + $0x9] sm:$0xff] %vm3679, %v3747
      %3843 = vst.msk [vmem:[%s3840 + $0x19] sm:$0xff] %vm3679, %v3749
      %3844 = vst.msk [vmem:[%s3840 + $0x21] sm:$0xff] %vm3679, %v3751
      %3845 = vst.msk [vmem:[%s3840 + $0x31] sm:$0xff] %vm3679, %v3753
      %3846 = vst.msk [vmem:[%s3840 + $0x39] sm:$0xff] %vm3679, %v3755
      %3847 = vst.msk [vmem:[%s3840 + $0x49] sm:$0xff] %vm3679, %v3757
      %3848 = vst.msk [vmem:[%s3840 + $0x51] sm:$0xff] %vm3679, %v3759
      %3849 = vst.msk [vmem:[%s3840 + $0x61] sm:$0xff] %vm3679, %v3761
      %3850 = vst.msk [vmem:[%s3840 + $0x69] sm:$0xff] %vm3679, %v3763
      %3851 = vst.msk [vmem:[%s3840 + $0x79] sm:$0xff] %vm3679, %v3765
      %3852 = vst.msk [vmem:[%s3840 + $0x81] sm:$0xff] %vm3679, %v3767
      %3853 = vst.msk [vmem:[%s3840 + $0x91] sm:$0xff] %vm3679, %v3769
      %3854 = vst.msk [vmem:[%s3840 + $0x99] sm:$0xff] %vm3679, %v3771
      %3855 = vst.msk [vmem:[%s3840 + $0xa9] sm:$0xff] %vm3679, %v3773
      %3856 = vst.msk [vmem:[%s3840 + $0xb1] sm:$0xff] %vm3679, %v3775
      %3857 = vst.msk [vmem:[%s3840 + $0xc1] sm:$0xff] %vm3679, %v3777
      %3858 = vst.msk [vmem:[%s3840 + $0xc9] sm:$0xff] %vm3679, %v3779
      %3859 = vst.msk [vmem:[%s3840 + $0xd9] sm:$0xff] %vm3679, %v3781
      %3860 = vst.msk [vmem:[%s3840 + $0xe1] sm:$0xff] %vm3679, %v3783
      %3861 = vst.msk [vmem:[%s3840 + $0xf1] sm:$0xff] %vm3679, %v3785
      %3862 = vst.msk [vmem:[%s3840 + $0xf9] sm:$0xff] %vm3679, %v3787
      %3863 = vst.msk [vmem:[%s3840 + $0x109] sm:$0xff] %vm3679, %v3789
      %3864 = vst.msk [vmem:[%s3840 + $0x111] sm:$0xff] %vm3679, %v3791
      %3865 = vst.msk [vmem:[%s3840 + $0x121] sm:$0xff] %vm3679, %v3793
      %3866 = vst.msk [vmem:[%s3840 + $0x129] sm:$0xff] %vm3679, %v3795
      %3867 = vst.msk [vmem:[%s3840 + $0x139] sm:$0xff] %vm3679, %v3797
      %3868 = vst.msk [vmem:[%s3840 + $0x141] sm:$0xff] %vm3679, %v3799
      %3869 = vst.msk [vmem:[%s3840 + $0x151] sm:$0xff] %vm3679, %v3801
      %3870 = vst.msk [vmem:[%s3840 + $0x159] sm:$0xff] %vm3679, %v3803
      %3871 = vst.msk [vmem:[%s3840 + $0x169] sm:$0xff] %vm3679, %v3805
      %3872 = vst.msk [vmem:[%s3840 + $0x171] sm:$0xff] %vm3679, %v3807
      %3873 = vst.msk [vmem:[%s206] sm:$0xff] %vm3679, %v3745
      %3874 = vst.msk [vmem:[%s206 + $0x8] sm:$0xff] %vm3679, %v3747
      %3875 = vst.msk [vmem:[%s206 + $0x10] sm:$0xff] %vm3679, %v3749
      %3876 = vst.msk [vmem:[%s206 + $0x18] sm:$0xff] %vm3679, %v3751
      %3877 = vst.msk [vmem:[%s206 + $0x20] sm:$0xff] %vm3679, %v3753
      %3878 = vst.msk [vmem:[%s206 + $0x28] sm:$0xff] %vm3679, %v3755
      %3879 = vst.msk [vmem:[%s206 + $0x30] sm:$0xff] %vm3679, %v3757
      %3880 = vst.msk [vmem:[%s206 + $0x38] sm:$0xff] %vm3679, %v3759
      %3881 = vst.msk [vmem:[%s206 + $0x40] sm:$0xff] %vm3679, %v3761
      %3882 = vst.msk [vmem:[%s206 + $0x48] sm:$0xff] %vm3679, %v3763
      %3883 = vst.msk [vmem:[%s206 + $0x50] sm:$0xff] %vm3679, %v3765
      %3884 = vst.msk [vmem:[%s206 + $0x58] sm:$0xff] %vm3679, %v3767
      %3885 = vst.msk [vmem:[%s206 + $0x60] sm:$0xff] %vm3679, %v3769
      %3886 = vst.msk [vmem:[%s206 + $0x68] sm:$0xff] %vm3679, %v3771
      %3887 = vst.msk [vmem:[%s206 + $0x70] sm:$0xff] %vm3679, %v3773
      %3888 = vst.msk [vmem:[%s206 + $0x78] sm:$0xff] %vm3679, %v3775
      %3889 = vst.msk [vmem:[%s206 + $0x80] sm:$0xff] %vm3679, %v3777
      %3890 = vst.msk [vmem:[%s206 + $0x88] sm:$0xff] %vm3679, %v3779
      %3891 = vst.msk [vmem:[%s206 + $0x90] sm:$0xff] %vm3679, %v3781
      %3892 = vst.msk [vmem:[%s206 + $0x98] sm:$0xff] %vm3679, %v3783
      %3893 = vst.msk [vmem:[%s206 + $0xa0] sm:$0xff] %vm3679, %v3785
      %3894 = vst.msk [vmem:[%s206 + $0xa8] sm:$0xff] %vm3679, %v3787
      %3895 = vst.msk [vmem:[%s206 + $0xb0] sm:$0xff] %vm3679, %v3789
      %3896 = vst.msk [vmem:[%s206 + $0xb8] sm:$0xff] %vm3679, %v3791
      %3897 = vst.msk [vmem:[%s206 + $0xc0] sm:$0xff] %vm3679, %v3793
      %3898 = vst.msk [vmem:[%s206 + $0xc8] sm:$0xff] %vm3679, %v3795
      %3899 = vst.msk [vmem:[%s206 + $0xd0] sm:$0xff] %vm3679, %v3797
      %3900 = vst.msk [vmem:[%s206 + $0xd8] sm:$0xff] %vm3679, %v3799
      %3901 = vst.msk [vmem:[%s206 + $0xe0] sm:$0xff] %vm3679, %v3801
      %3902 = vst.msk [vmem:[%s206 + $0xe8] sm:$0xff] %vm3679, %v3803
      %3903 = vst.msk [vmem:[%s206 + $0xf0] sm:$0xff] %vm3679, %v3805
      %3904 = vst.msk [vmem:[%s206 + $0xf8] sm:$0xff] %vm3679, %v3807
      %p3905 = scmp.lt.s32.totalorder %s18, 1
      %s3906 = scalar_select %p3905, %s18, 1
      %p3907 = scmp.lt.s32.totalorder %s19, 3
      %s3908 = scalar_select %p3907, %s19, 3
      %s3909 = smul.addr %s3908, 32
      %s3910 = smul.addr %s3906, 128
      %s3911 = sadd.s32 %s3909, %s3910
      %s3912 = smul.addr %s3911, 8
      %s3913 = scalar_lea.vmem %s3, %s3912
      // Predicated region
      $region37: #{convlstm_forward.2} parent=31 // pred_check
        %p3914 = pneg %p116
      $region38: #{convlstm_forward.2} parent=31 // pred_check_branch
        %3916 = sbr.rel (%p3914) target = $region40
      $region39: #{convlstm_forward.2} parent=31 // pred_region
        _
      $region40: #{convlstm_forward.2} parent=31 // pred_fallthru
        _
    $region32: #{convlstm_forward.2} parent=5 // pred_fallthru
      _
    %p3917 = scmp.le.s32.totalorder 2, %s9
    // Predicated region
    $region41: #{convlstm_forward.2} parent=5 // pred_check
      %p3918 = pneg %p3917
    $region42: #{convlstm_forward.2} parent=5 // pred_check_branch
      %3920 = sbr.rel (%p3918) target = $region44
    $region43: #{convlstm_forward.2} parent=5 // pred_region
      %s3921 = ssub.s32 %s9, 2
      // Predicated region
      $region45: #{convlstm_forward.2} parent=43 // pred_check
        %p3922 = pneg %p122
      $region46: #{convlstm_forward.2} parent=43 // pred_check_branch
        %3924 = sbr.rel (%p3922) target = $region48
      $region47: #{convlstm_forward.2} parent=43 // pred_region
        %p3925 = scmp.lt.s32.totalorder %s20, 1
        %s3926 = scalar_select %p3925, %s20, 1
        %p3927 = scmp.lt.s32.totalorder %s21, 3
        %s3928 = scalar_select %p3927, %s21, 3
        %s3929 = smul.addr %s3928, 32
        %s3930 = smul.addr %s3926, 128
        %s3931 = sadd.s32 %s3929, %s3930
        %s3932 = smul.addr %s3931, 8
        %s3933 = scalar_lea.vmem %s3, %s3932
      $region48: #{convlstm_forward.2} parent=43 // pred_fallthru
        _
    $region44: #{convlstm_forward.2} parent=5 // pred_fallthru
      _
  $region6: #{convlstm_forward.2} parent=0 // loop_footer
    %s13 = sadd.s32 1, %s9
  $region7: #{convlstm_forward.2} parent=0 // loop_footer_branch
    %8 = sbr.rel target = $region3
  $region8: #{convlstm_forward.2} parent=0 // loop_exit
    _

// kernel: convlstm_forward.3
$region0: #{convlstm_forward.3}
  #allocation0 [shape = 'u32[]', space=smem, size = 0x4, offset = 0x4, fixed_abs, tag = 'smem constant byte address 0x4 - core index']
  #allocation1 [shape = 'u32[72,128]{1,0:T(1,128)}', space=vmem, size = 0x9000, scoped, tag = 'internal scratch']
  #allocation2 [shape = 'f32[18,18,32]{2,1,0:T(8,128)}', space=vmem, size = 0x36000, scoped, tag = 'scratch operand']
  #allocation3 [shape = 'f32[256,32]{1,0:T(8,128)}', space=vmem, size = 0x20000, scoped, tag = 'scratch operand']
  %s0 = inlined_call_operand.vmem [shape: f32[2,4,18,18,32], index: 0, kind: input, shape index: {}]
  %s1 = inlined_call_operand.vmem [shape: f32[3,192,128], index: 1, kind: input, shape index: {}]
  %s2 = inlined_call_operand.vmem [shape: f32[1,128], index: 2, kind: input, shape index: {}]
  %s3 = inlined_call_operand.vmem [shape: f32[3,96,8], index: 3, kind: input, shape index: {}]
  %s4 = inlined_call_operand.vmem [shape: f32[1,8], index: 4, kind: input, shape index: {}]
  %s5 = inlined_call_operand.vmem [shape: f32[2,4,16,16,8], index: 5, kind: output, shape index: {}]
  %s6 = sld [smem:[#allocation0]]
  $region57: #{convlstm_forward.3} parent=0
    _
  %s8 = ssub.s32 1, %s6
  %s9 = scalar_select 0, %s8, %s6
  loop: start=0, step=1, limit=10
  $region2: #{convlstm_forward.3} parent=0 // loop_pre_header
    _
  $region3: #{convlstm_forward.3} parent=0 // loop_header
    %s11 = sphi 0, %s15
    %p12 = scmp.ge.s32.totalorder %s11, 10
    %s18 = sphi 0, %s30
    %s19 = sphi 0, %s26
    %s20 = sphi 0, %s18
    %s21 = sphi 0, %s19
    %s22 = sphi 0, %s20
    %s23 = sphi 0, %s21
    %s35 = sphi 0, %s37
    %s38 = sphi 0, %s35
    %s39 = sphi 0, %s38
    %s55 = sphi 0, %s39
    %s59 = sphi 0, %s59
    %s61 = sphi 0, %s59
    %s62 = sphi 0, %s61
    %s76 = sphi 0, %s62
    %s80 = sphi 0, %s80
    %s82 = sphi 0, %s80
    %s83 = sphi 0, %s82
    %s97 = sphi 0, %s83
    %s101 = sphi 0, %s101
    %s103 = sphi 0, %s101
    %s104 = sphi 0, %s103
    %s118 = sphi 0, %s104
    %s122 = sphi 0, %s122
    %s124 = sphi 0, %s122
    %s125 = sphi 0, %s124
    %s139 = sphi 0, %s125
    %s147 = sphi 0, %s149
    %s150 = sphi 0, %s147
    %s151 = sphi 0, %s150
    %s167 = sphi 0, %s151
  $region4: #{convlstm_forward.3} parent=0 // loop_header_branch
    %14 = sbr.rel (%p12) target = $region8
  $region5: #{convlstm_forward.3} parent=0 // loop_body
    %s16 = ssub.s32 %s11, 1
    %s17 = ssub.s32 %s11, 2
    %s24 = sadd.s32 1, %s19
    %p25 = scmp.ge.s32.totalorder %s24, 4
    %s26 = scalar_select %p25, 0, %s24
    %s27 = sadd.s32 1, %s18
    %s28 = scalar_select %p25, %s27, %s18
    %p29 = scmp.ge.s32.totalorder %s28, 2
    %s30 = scalar_select %p29, 0, %s28
    %s31 = ssub.s32 %s18, %s30
    %s32 = ssub.s32 %s19, %s26
    %s33 = sor.u32 %s31, %s32
    %p34 = scmp.eq.s32.totalorder %s33, 0
    %s36 = sadd.s32 %s35, 1
    %s37 = scalar_select %p34, %s35, %s36
    %p40 = pneg %p34
    %p41 = scmp.eq.s32.totalorder %s11, 7
    %p42 = por %p40, %p41
    %p43 = scmp.ne.s32.totalorder %s35, %s38
    %p44 = scmp.eq.s32.totalorder %s11, 0
    %p45 = por %p43, %p44
    %p46 = scmp.ne.s32.totalorder %s35, %s38
    %p47 = scmp.eq.s32.totalorder %s16, 7
    %p48 = por %p46, %p47
    %p49 = scmp.ne.s32.totalorder %s38, %s39
    %p50 = scmp.eq.s32.totalorder %s16, 0
    %p51 = por %p49, %p50
    %p52 = scmp.ne.s32.totalorder %s38, %s39
    %p53 = scmp.eq.s32.totalorder %s17, 7
    %p54 = por %p52, %p53
    %p56 = scmp.ne.s32.totalorder %s39, %s55
    %p57 = scmp.eq.s32.totalorder %s17, 0
    %p58 = por %p56, %p57
    %s60 = sadd.s32 %s59, 1
    %p63 = scmp.eq.s32.totalorder %s11, 7
    %p64 = scmp.ne.s32.totalorder %s59, %s61
    %p65 = scmp.eq.s32.totalorder %s11, 0
    %p66 = por %p64, %p65
    %p67 = scmp.ne.s32.totalorder %s59, %s61
    %p68 = scmp.eq.s32.totalorder %s16, 7
    %p69 = por %p67, %p68
    %p70 = scmp.ne.s32.totalorder %s61, %s62
    %p71 = scmp.eq.s32.totalorder %s16, 0
    %p72 = por %p70, %p71
    %p73 = scmp.ne.s32.totalorder %s61, %s62
    %p74 = scmp.eq.s32.totalorder %s17, 7
    %p75 = por %p73, %p74
    %p77 = scmp.ne.s32.totalorder %s62, %s76
    %p78 = scmp.eq.s32.totalorder %s17, 0
    %p79 = por %p77, %p78
    %s81 = sadd.s32 %s80, 1
    %p84 = scmp.eq.s32.totalorder %s11, 7
    %p85 = scmp.ne.s32.totalorder %s80, %s82
    %p86 = scmp.eq.s32.totalorder %s11, 0
    %p87 = por %p85, %p86
    %p88 = scmp.ne.s32.totalorder %s80, %s82
    %p89 = scmp.eq.s32.totalorder %s16, 7
    %p90 = por %p88, %p89
    %p91 = scmp.ne.s32.totalorder %s82, %s83
    %p92 = scmp.eq.s32.totalorder %s16, 0
    %p93 = por %p91, %p92
    %p94 = scmp.ne.s32.totalorder %s82, %s83
    %p95 = scmp.eq.s32.totalorder %s17, 7
    %p96 = por %p94, %p95
    %p98 = scmp.ne.s32.totalorder %s83, %s97
    %p99 = scmp.eq.s32.totalorder %s17, 0
    %p100 = por %p98, %p99
    %s102 = sadd.s32 %s101, 1
    %p105 = scmp.eq.s32.totalorder %s11, 7
    %p106 = scmp.ne.s32.totalorder %s101, %s103
    %p107 = scmp.eq.s32.totalorder %s11, 0
    %p108 = por %p106, %p107
    %p109 = scmp.ne.s32.totalorder %s101, %s103
    %p110 = scmp.eq.s32.totalorder %s16, 7
    %p111 = por %p109, %p110
    %p112 = scmp.ne.s32.totalorder %s103, %s104
    %p113 = scmp.eq.s32.totalorder %s16, 0
    %p114 = por %p112, %p113
    %p115 = scmp.ne.s32.totalorder %s103, %s104
    %p116 = scmp.eq.s32.totalorder %s17, 7
    %p117 = por %p115, %p116
    %p119 = scmp.ne.s32.totalorder %s104, %s118
    %p120 = scmp.eq.s32.totalorder %s17, 0
    %p121 = por %p119, %p120
    %s123 = sadd.s32 %s122, 1
    %p126 = scmp.eq.s32.totalorder %s11, 7
    %p127 = scmp.ne.s32.totalorder %s122, %s124
    %p128 = scmp.eq.s32.totalorder %s11, 0
    %p129 = por %p127, %p128
    %p130 = scmp.ne.s32.totalorder %s122, %s124
    %p131 = scmp.eq.s32.totalorder %s16, 7
    %p132 = por %p130, %p131
    %p133 = scmp.ne.s32.totalorder %s124, %s125
    %p134 = scmp.eq.s32.totalorder %s16, 0
    %p135 = por %p133, %p134
    %p136 = scmp.ne.s32.totalorder %s124, %s125
    %p137 = scmp.eq.s32.totalorder %s17, 7
    %p138 = por %p136, %p137
    %p140 = scmp.ne.s32.totalorder %s125, %s139
    %p141 = scmp.eq.s32.totalorder %s17, 0
    %p142 = por %p140, %p141
    %s143 = ssub.s32 %s18, %s30
    %s144 = ssub.s32 %s19, %s26
    %s145 = sor.u32 %s143, %s144
    %p146 = scmp.eq.s32.totalorder %s145, 0
    %s148 = sadd.s32 %s147, 1
    %s149 = scalar_select %p146, %s147, %s148
    %p152 = pneg %p146
    %p153 = scmp.eq.s32.totalorder %s11, 7
    %p154 = por %p152, %p153
    %p155 = scmp.ne.s32.totalorder %s147, %s150
    %p156 = scmp.eq.s32.totalorder %s11, 0
    %p157 = por %p155, %p156
    %p158 = scmp.ne.s32.totalorder %s147, %s150
    %p159 = scmp.eq.s32.totalorder %s16, 7
    %p160 = por %p158, %p159
    %p161 = scmp.ne.s32.totalorder %s150, %s151
    %p162 = scmp.eq.s32.totalorder %s16, 0
    %p163 = por %p161, %p162
    %p164 = scmp.ne.s32.totalorder %s150, %s151
    %p165 = scmp.eq.s32.totalorder %s17, 7
    %p166 = por %p164, %p165
    %p168 = scmp.ne.s32.totalorder %s151, %s167
    %p169 = scmp.eq.s32.totalorder %s17, 0
    %p170 = por %p168, %p169
    %p171 = scmp.le.s32.totalorder 1, %s11
    %p172 = scmp.lt.s32.totalorder %s11, 9
    %p173 = pnand %p171, %p172
    %p174 = pneg %p173
    // Predicated region
    $region9: #{convlstm_forward.3} parent=5 // pred_check
      _
    $region10: #{convlstm_forward.3} parent=5 // pred_check_branch
      %176 = sbr.rel (%p173) target = $region12
    $region11: #{convlstm_forward.3} parent=5 // pred_region
      %s177 = ssub.s32 %s11, 1
      // Predicated region
      $region13: #{convlstm_forward.3} parent=11 // pred_check
        %p178 = pneg %p72
      $region14: #{convlstm_forward.3} parent=11 // pred_check_branch
        %180 = sbr.rel (%p178) target = $region16
      $region15: #{convlstm_forward.3} parent=11 // pred_region
        _
      $region16: #{convlstm_forward.3} parent=11 // pred_fallthru
        _
      // Predicated region
      $region17: #{convlstm_forward.3} parent=11 // pred_check
        %p181 = pneg %p93
      $region18: #{convlstm_forward.3} parent=11 // pred_check_branch
        %183 = sbr.rel (%p181) target = $region20
      $region19: #{convlstm_forward.3} parent=11 // pred_region
        _
      $region20: #{convlstm_forward.3} parent=11 // pred_fallthru
        _
      // Predicated region
      $region21: #{convlstm_forward.3} parent=11 // pred_check
        %p184 = pneg %p114
      $region22: #{convlstm_forward.3} parent=11 // pred_check_branch
        %186 = sbr.rel (%p184) target = $region24
      $region23: #{convlstm_forward.3} parent=11 // pred_region
        _
      $region24: #{convlstm_forward.3} parent=11 // pred_fallthru
        _
      // Predicated region
      $region25: #{convlstm_forward.3} parent=11 // pred_check
        %p187 = pneg %p135
      $region26: #{convlstm_forward.3} parent=11 // pred_check_branch
        %189 = sbr.rel (%p187) target = $region28
      $region27: #{convlstm_forward.3} parent=11 // pred_region
        _
      $region28: #{convlstm_forward.3} parent=11 // pred_fallthru
        _
    $region12: #{convlstm_forward.3} parent=5 // pred_fallthru
      _
    %p190 = scmp.lt.s32.totalorder %s11, 8
    // Predicated region
    $region29: #{convlstm_forward.3} parent=5 // pred_check
      %p191 = pneg %p190
    $region30: #{convlstm_forward.3} parent=5 // pred_check_branch
      %193 = sbr.rel (%p191) target = $region32
    $region31: #{convlstm_forward.3} parent=5 // pred_region
      // Predicated region
      $region33: #{convlstm_forward.3} parent=31 // pred_check
        %p194 = pneg %p45
      $region34: #{convlstm_forward.3} parent=31 // pred_check_branch
        %196 = sbr.rel (%p194) target = $region36
      $region35: #{convlstm_forward.3} parent=31 // pred_region
        %p197 = scmp.lt.s32.totalorder %s18, 1
        %s198 = scalar_select %p197, %s18, 1
        %p199 = scmp.lt.s32.totalorder %s19, 3
        %s200 = scalar_select %p199, %s19, 3
        %s201 = smul.addr %s200, 54
        %s202 = smul.addr %s198, 216
        %s203 = sadd.s32 %s201, %s202
        %s204 = smul.addr %s203, 8
        %s205 = scalar_lea.vmem %s0, %s204
      $region36: #{convlstm_forward.3} parent=31 // pred_fallthru
        _
    $region32: #{convlstm_forward.3} parent=5 // pred_fallthru
      _
    %p206 = scmp.le.s32.totalorder 1, %s11
    %p207 = scmp.lt.s32.totalorder %s11, 9
    %p208 = pnand %p206, %p207
    %p209 = pneg %p208
    // Predicated region
    $region37: #{convlstm_forward.3} parent=5 // pred_check
      _
    $region38: #{convlstm_forward.3} parent=5 // pred_check_branch
      %211 = sbr.rel (%p208) target = $region40
    $region39: #{convlstm_forward.3} parent=5 // pred_region
      %s212 = ssub.s32 %s11, 1
      %p213 = scmp.lt.s32.totalorder %s20, 1
      %s214 = scalar_select %p213, %s20, 1
      %p215 = scmp.lt.s32.totalorder %s21, 3
      %s216 = scalar_select %p215, %s21, 3
      %s217 = smul.addr %s216, 54
      %s218 = smul.addr %s214, 216
      %s219 = sadd.s32 %s217, %s218
      %s220 = smul.addr %s219, 8
      %s221 = scalar_lea.vmem %s0, %s220
      %p222 = pneg %p51
      %p223 = pneg %p48
      %p224 = pneg %p72
      %p225 = pneg %p69
      %p226 = pneg %p93
      %p227 = pneg %p90
      %p228 = pneg %p114
      %p229 = pneg %p111
      %p230 = pneg %p135
      %p231 = pneg %p132
      %p232 = pneg %p163
      %p233 = pneg %p160
      %p234 = scmp.lt.s32.totalorder %s20, 1
      %s235 = scalar_select %p234, %s20, 1
      %p236 = scmp.lt.s32.totalorder %s21, 3
      %s237 = scalar_select %p236, %s21, 3
      %s238 = smul.addr %s237, 32
      %s239 = smul.addr %s235, 128
      %s240 = sadd.s32 %s238, %s239
      %s241 = smul.addr %s240, 8
      %s242 = scalar_lea.vmem %s5, %s241
      %p243 = scmp.lt.s32.totalorder %s20, 1
      %s244 = scalar_select %p243, %s20, 1
      %p245 = scmp.lt.s32.totalorder %s21, 3
      %s246 = scalar_select %p245, %s21, 3
      %s247 = smul.addr %s246, 54
      %s248 = smul.addr %s244, 216
      %s249 = sadd.s32 %s247, %s248
      %s250 = smul.addr %s249, 8
      %s251 = scalar_lea.vmem %s0, %s250
      %p252 = scmp.lt.s32.totalorder %s20, 1
      %s253 = scalar_select %p252, %s20, 1
      %p254 = scmp.lt.s32.totalorder %s21, 3
      %s255 = scalar_select %p254, %s21, 3
      %s256 = smul.addr %s255, 32
      %s257 = smul.addr %s253, 128
      %s258 = sadd.s32 %s256, %s257
      %s259 = smul.addr %s258, 8
      %s260 = scalar_lea.vmem %s5, %s259
      %p261 = scmp.eq.s32.totalorder %s21, 0
      // Predicated region
      $region41: #{convlstm_forward.3} parent=39 // pred_check
        %p262 = pneg %p261
      $region42: #{convlstm_forward.3} parent=39 // pred_check_branch
        %264 = sbr.rel (%p262) target = $region44
      $region43: #{convlstm_forward.3} parent=39 // pred_region
        %vm265 = vcmask 261120
        %266 = vst.msk [vmem:[#allocation2] sm:$0xff] %vm265, 0.0
        %267 = vst.msk [vmem:[#allocation2 + $0x8] sm:$0xff] %vm265, 0.0
        %vm268 = vcmask 254976
        %269 = vst.msk [vmem:[#allocation2 + $0x10] sm:$0x3] %vm268, 0.0
        %270 = vst.msk [vmem:[#allocation2 + $0x18] sm:$0xff] %vm265, 0.0
        %271 = vst.msk [vmem:[#allocation2 + $0x20] sm:$0xff] %vm265, 0.0
        %272 = vst.msk [vmem:[#allocation2 + $0x28] sm:$0x3] %vm268, 0.0
        %273 = vst.msk [vmem:[#allocation2 + $0x30] sm:$0xff] %vm265, 0.0
        %274 = vst.msk [vmem:[#allocation2 + $0x38] sm:$0xff] %vm265, 0.0
        %275 = vst.msk [vmem:[#allocation2 + $0x40] sm:$0x3] %vm268, 0.0
        %276 = vst.msk [vmem:[#allocation2 + $0x48] sm:$0xff] %vm265, 0.0
        %277 = vst.msk [vmem:[#allocation2 + $0x50] sm:$0xff] %vm265, 0.0
        %278 = vst.msk [vmem:[#allocation2 + $0x58] sm:$0x3] %vm268, 0.0
        %279 = vst.msk [vmem:[#allocation2 + $0x60] sm:$0xff] %vm265, 0.0
        %280 = vst.msk [vmem:[#allocation2 + $0x68] sm:$0xff] %vm265, 0.0
        %281 = vst.msk [vmem:[#allocation2 + $0x70] sm:$0x3] %vm268, 0.0
        %282 = vst.msk [vmem:[#allocation2 + $0x78] sm:$0xff] %vm265, 0.0
        %283 = vst.msk [vmem:[#allocation2 + $0x80] sm:$0xff] %vm265, 0.0
        %284 = vst.msk [vmem:[#allocation2 + $0x88] sm:$0x3] %vm268, 0.0
        %285 = vst.msk [vmem:[#allocation2 + $0x90] sm:$0xff] %vm265, 0.0
        %286 = vst.msk [vmem:[#allocation2 + $0x98] sm:$0xff] %vm265, 0.0
        %287 = vst.msk [vmem:[#allocation2 + $0xa0] sm:$0x3] %vm268, 0.0
        %288 = vst.msk [vmem:[#allocation2 + $0xa8] sm:$0xff] %vm265, 0.0
        %289 = vst.msk [vmem:[#allocation2 + $0xb0] sm:$0xff] %vm265, 0.0
        %290 = vst.msk [vmem:[#allocation2 + $0xb8] sm:$0x3] %vm268, 0.0
        %291 = vst.msk [vmem:[#allocation2 + $0xc0] sm:$0xff] %vm265, 0.0
        %292 = vst.msk [vmem:[#allocation2 + $0xc8] sm:$0xff] %vm265, 0.0
        %293 = vst.msk [vmem:[#allocation2 + $0xd0] sm:$0x3] %vm268, 0.0
        %294 = vst.msk [vmem:[#allocation2 + $0xd8] sm:$0xff] %vm265, 0.0
        %295 = vst.msk [vmem:[#allocation2 + $0xe0] sm:$0xff] %vm265, 0.0
        %296 = vst.msk [vmem:[#allocation2 + $0xe8] sm:$0x3] %vm268, 0.0
        %297 = vst.msk [vmem:[#allocation2 + $0xf0] sm:$0xff] %vm265, 0.0
        %298 = vst.msk [vmem:[#allocation2 + $0xf8] sm:$0xff] %vm265, 0.0
        %299 = vst.msk [vmem:[#allocation2 + $0x100] sm:$0x3] %vm268, 0.0
        %300 = vst.msk [vmem:[#allocation2 + $0x108] sm:$0xff] %vm265, 0.0
        %301 = vst.msk [vmem:[#allocation2 + $0x110] sm:$0xff] %vm265, 0.0
        %302 = vst.msk [vmem:[#allocation2 + $0x118] sm:$0x3] %vm268, 0.0
        %303 = vst.msk [vmem:[#allocation2 + $0x120] sm:$0xff] %vm265, 0.0
        %304 = vst.msk [vmem:[#allocation2 + $0x128] sm:$0xff] %vm265, 0.0
        %305 = vst.msk [vmem:[#allocation2 + $0x130] sm:$0x3] %vm268, 0.0
        %306 = vst.msk [vmem:[#allocation2 + $0x138] sm:$0xff] %vm265, 0.0
        %307 = vst.msk [vmem:[#allocation2 + $0x140] sm:$0xff] %vm265, 0.0
        %308 = vst.msk [vmem:[#allocation2 + $0x148] sm:$0x3] %vm268, 0.0
        %309 = vst.msk [vmem:[#allocation2 + $0x150] sm:$0xff] %vm265, 0.0
        %310 = vst.msk [vmem:[#allocation2 + $0x158] sm:$0xff] %vm265, 0.0
        %311 = vst.msk [vmem:[#allocation2 + $0x160] sm:$0x3] %vm268, 0.0
        %312 = vst.msk [vmem:[#allocation2 + $0x168] sm:$0xff] %vm265, 0.0
        %313 = vst.msk [vmem:[#allocation2 + $0x170] sm:$0xff] %vm265, 0.0
        %314 = vst.msk [vmem:[#allocation2 + $0x178] sm:$0x3] %vm268, 0.0
        %315 = vst.msk [vmem:[#allocation2 + $0x180] sm:$0xff] %vm265, 0.0
        %316 = vst.msk [vmem:[#allocation2 + $0x188] sm:$0xff] %vm265, 0.0
        %317 = vst.msk [vmem:[#allocation2 + $0x190] sm:$0x3] %vm268, 0.0
        %318 = vst.msk [vmem:[#allocation2 + $0x198] sm:$0xff] %vm265, 0.0
        %319 = vst.msk [vmem:[#allocation2 + $0x1a0] sm:$0xff] %vm265, 0.0
        %320 = vst.msk [vmem:[#allocation2 + $0x1a8] sm:$0x3] %vm268, 0.0
        %321 = vst.msk [vmem:[#allocation3] sm:$0xff] %vm265, 0.0
        %322 = vst.msk [vmem:[#allocation3 + $0x8] sm:$0xff] %vm265, 0.0
        %323 = vst.msk [vmem:[#allocation3 + $0x10] sm:$0xff] %vm265, 0.0
        %324 = vst.msk [vmem:[#allocation3 + $0x18] sm:$0xff] %vm265, 0.0
        %325 = vst.msk [vmem:[#allocation3 + $0x20] sm:$0xff] %vm265, 0.0
        %326 = vst.msk [vmem:[#allocation3 + $0x28] sm:$0xff] %vm265, 0.0
        %327 = vst.msk [vmem:[#allocation3 + $0x30] sm:$0xff] %vm265, 0.0
        %328 = vst.msk [vmem:[#allocation3 + $0x38] sm:$0xff] %vm265, 0.0
        %329 = vst.msk [vmem:[#allocation3 + $0x40] sm:$0xff] %vm265, 0.0
        %330 = vst.msk [vmem:[#allocation3 + $0x48] sm:$0xff] %vm265, 0.0
        %331 = vst.msk [vmem:[#allocation3 + $0x50] sm:$0xff] %vm265, 0.0
        %332 = vst.msk [vmem:[#allocation3 + $0x58] sm:$0xff] %vm265, 0.0
        %333 = vst.msk [vmem:[#allocation3 + $0x60] sm:$0xff] %vm265, 0.0
        %334 = vst.msk [vmem:[#allocation3 + $0x68] sm:$0xff] %vm265, 0.0
        %335 = vst.msk [vmem:[#allocation3 + $0x70] sm:$0xff] %vm265, 0.0
        %336 = vst.msk [vmem:[#allocation3 + $0x78] sm:$0xff] %vm265, 0.0
        %337 = vst.msk [vmem:[#allocation3 + $0x80] sm:$0xff] %vm265, 0.0
        %338 = vst.msk [vmem:[#allocation3 + $0x88] sm:$0xff] %vm265, 0.0
        %339 = vst.msk [vmem:[#allocation3 + $0x90] sm:$0xff] %vm265, 0.0
        %340 = vst.msk [vmem:[#allocation3 + $0x98] sm:$0xff] %vm265, 0.0
        %341 = vst.msk [vmem:[#allocation3 + $0xa0] sm:$0xff] %vm265, 0.0
        %342 = vst.msk [vmem:[#allocation3 + $0xa8] sm:$0xff] %vm265, 0.0
        %343 = vst.msk [vmem:[#allocation3 + $0xb0] sm:$0xff] %vm265, 0.0
        %344 = vst.msk [vmem:[#allocation3 + $0xb8] sm:$0xff] %vm265, 0.0
        %345 = vst.msk [vmem:[#allocation3 + $0xc0] sm:$0xff] %vm265, 0.0
        %346 = vst.msk [vmem:[#allocation3 + $0xc8] sm:$0xff] %vm265, 0.0
        %347 = vst.msk [vmem:[#allocation3 + $0xd0] sm:$0xff] %vm265, 0.0
        %348 = vst.msk [vmem:[#allocation3 + $0xd8] sm:$0xff] %vm265, 0.0
        %349 = vst.msk [vmem:[#allocation3 + $0xe0] sm:$0xff] %vm265, 0.0
        %350 = vst.msk [vmem:[#allocation3 + $0xe8] sm:$0xff] %vm265, 0.0
        %351 = vst.msk [vmem:[#allocation3 + $0xf0] sm:$0xff] %vm265, 0.0
        %352 = vst.msk [vmem:[#allocation3 + $0xf8] sm:$0xff] %vm265, 0.0
      $region44: #{convlstm_forward.3} parent=39 // pred_fallthru
        _
      %v353 = vld [vmem:[%s251] sm:$0xff]
      %v354 = vld [vmem:[%s251 + $0x8] sm:$0xff]
      %v355 = vld [vmem:[%s251 + $0x10] sm:$0x3]
      %v356 = vld [vmem:[%s251 + $0x18] sm:$0xff]
      %v357 = vld [vmem:[%s251 + $0x20] sm:$0xff]
      %v358 = vld [vmem:[%s251 + $0x28] sm:$0x3]
      %v359 = vld [vmem:[%s251 + $0x30] sm:$0xff]
      %v360 = vld [vmem:[%s251 + $0x38] sm:$0xff]
      %v361 = vld [vmem:[%s251 + $0x40] sm:$0x3]
      %v362 = vld [vmem:[%s251 + $0x48] sm:$0xff]
      %v363 = vld [vmem:[%s251 + $0x50] sm:$0xff]
      %v364 = vld [vmem:[%s251 + $0x58] sm:$0x3]
      %v365 = vld [vmem:[%s251 + $0x60] sm:$0xff]
      %v366 = vld [vmem:[%s251 + $0x68] sm:$0xff]
      %v367 = vld [vmem:[%s251 + $0x70] sm:$0x3]
      %v368 = vld [vmem:[%s251 + $0x78] sm:$0xff]
      %v369 = vld [vmem:[%s251 + $0x80] sm:$0xff]
      %v370 = vld [vmem:[%s251 + $0x88] sm:$0x3]
      %v371 = vld [vmem:[%s251 + $0x90] sm:$0xff]
      %v372 = vld [vmem:[%s251 + $0x98] sm:$0xff]
      %v373 = vld [vmem:[%s251 + $0xa0] sm:$0x3]
      %v374 = vld [vmem:[%s251 + $0xa8] sm:$0xff]
      %v375 = vld [vmem:[%s251 + $0xb0] sm:$0xff]
      %v376 = vld [vmem:[%s251 + $0xb8] sm:$0x3]
      %v377 = vld [vmem:[%s251 + $0xc0] sm:$0xff]
      %v378 = vld [vmem:[%s251 + $0xc8] sm:$0xff]
      %v379 = vld [vmem:[%s251 + $0xd0] sm:$0x3]
      %v380 = vld [vmem:[%s251 + $0xd8] sm:$0xff]
      %v381 = vld [vmem:[%s251 + $0xe0] sm:$0xff]
      %v382 = vld [vmem:[%s251 + $0xe8] sm:$0x3]
      %v383 = vld [vmem:[%s251 + $0xf0] sm:$0xff]
      %v384 = vld [vmem:[%s251 + $0xf8] sm:$0xff]
      %v385 = vld [vmem:[%s251 + $0x100] sm:$0x3]
      %v386 = vld [vmem:[%s251 + $0x108] sm:$0xff]
      %v387 = vld [vmem:[%s251 + $0x110] sm:$0xff]
      %v388 = vld [vmem:[%s251 + $0x118] sm:$0x3]
      %v389 = vld [vmem:[%s251 + $0x120] sm:$0xff]
      %v390 = vld [vmem:[%s251 + $0x128] sm:$0xff]
      %v391 = vld [vmem:[%s251 + $0x130] sm:$0x3]
      %v392 = vld [vmem:[%s251 + $0x138] sm:$0xff]
      %v393 = vld [vmem:[%s251 + $0x140] sm:$0xff]
      %v394 = vld [vmem:[%s251 + $0x148] sm:$0x3]
      %v395 = vld [vmem:[%s251 + $0x150] sm:$0xff]
      %v396 = vld [vmem:[%s251 + $0x158] sm:$0xff]
      %v397 = vld [vmem:[%s251 + $0x160] sm:$0x3]
      %v398 = vld [vmem:[%s251 + $0x168] sm:$0xff]
      %v399 = vld [vmem:[%s251 + $0x170] sm:$0xff]
      %v400 = vld [vmem:[%s251 + $0x178] sm:$0x3]
      %v401 = vld [vmem:[%s251 + $0x180] sm:$0xff]
      %v402 = vld [vmem:[%s251 + $0x188] sm:$0xff]
      %v403 = vld [vmem:[%s251 + $0x190] sm:$0x3]
      %v404 = vld [vmem:[%s251 + $0x198] sm:$0xff]
      %v405 = vld [vmem:[%s251 + $0x1a0] sm:$0xff]
      %v406 = vld [vmem:[%s251 + $0x1a8] sm:$0x3]
      %v407 = vld [vmem:[#allocation2] sm:$0xff]
      %v408 = vld [vmem:[#allocation2 + $0x8] sm:$0xff]
      %v409 = vld [vmem:[#allocation2 + $0x10] sm:$0x3]
      %v410 = vld [vmem:[#allocation2 + $0x18] sm:$0xff]
      %v411 = vld [vmem:[#allocation2 + $0x20] sm:$0xff]
      %v412 = vld [vmem:[#allocation2 + $0x28] sm:$0x3]
      %v413 = vld [vmem:[#allocation2 + $0x30] sm:$0xff]
      %v414 = vld [vmem:[#allocation2 + $0x38] sm:$0xff]
      %v415 = vld [vmem:[#allocation2 + $0x40] sm:$0x3]
      %v416 = vld [vmem:[#allocation2 + $0x48] sm:$0xff]
      %v417 = vld [vmem:[#allocation2 + $0x50] sm:$0xff]
      %v418 = vld [vmem:[#allocation2 + $0x58] sm:$0x3]
      %v419 = vld [vmem:[#allocation2 + $0x60] sm:$0xff]
      %v420 = vld [vmem:[#allocation2 + $0x68] sm:$0xff]
      %v421 = vld [vmem:[#allocation2 + $0x70] sm:$0x3]
      %v422 = vld [vmem:[#allocation2 + $0x78] sm:$0xff]
      %v423 = vld [vmem:[#allocation2 + $0x80] sm:$0xff]
      %v424 = vld [vmem:[#allocation2 + $0x88] sm:$0x3]
      %v425 = vld [vmem:[#allocation2 + $0x90] sm:$0xff]
      %v426 = vld [vmem:[#allocation2 + $0x98] sm:$0xff]
      %v427 = vld [vmem:[#allocation2 + $0xa0] sm:$0x3]
      %v428 = vld [vmem:[#allocation2 + $0xa8] sm:$0xff]
      %v429 = vld [vmem:[#allocation2 + $0xb0] sm:$0xff]
      %v430 = vld [vmem:[#allocation2 + $0xb8] sm:$0x3]
      %v431 = vld [vmem:[#allocation2 + $0xc0] sm:$0xff]
      %v432 = vld [vmem:[#allocation2 + $0xc8] sm:$0xff]
      %v433 = vld [vmem:[#allocation2 + $0xd0] sm:$0x3]
      %v434 = vld [vmem:[#allocation2 + $0xd8] sm:$0xff]
      %v435 = vld [vmem:[#allocation2 + $0xe0] sm:$0xff]
      %v436 = vld [vmem:[#allocation2 + $0xe8] sm:$0x3]
      %v437 = vld [vmem:[#allocation2 + $0xf0] sm:$0xff]
      %v438 = vld [vmem:[#allocation2 + $0xf8] sm:$0xff]
      %v439 = vld [vmem:[#allocation2 + $0x100] sm:$0x3]
      %v440 = vld [vmem:[#allocation2 + $0x108] sm:$0xff]
      %v441 = vld [vmem:[#allocation2 + $0x110] sm:$0xff]
      %v442 = vld [vmem:[#allocation2 + $0x118] sm:$0x3]
      %v443 = vld [vmem:[#allocation2 + $0x120] sm:$0xff]
      %v444 = vld [vmem:[#allocation2 + $0x128] sm:$0xff]
      %v445 = vld [vmem:[#allocation2 + $0x130] sm:$0x3]
      %v446 = vld [vmem:[#allocation2 + $0x138] sm:$0xff]
      %v447 = vld [vmem:[#allocation2 + $0x140] sm:$0xff]
      %v448 = vld [vmem:[#allocation2 + $0x148] sm:$0x3]
      %v449 = vld [vmem:[#allocation2 + $0x150] sm:$0xff]
      %v450 = vld [vmem:[#allocation2 + $0x158] sm:$0xff]
      %v451 = vld [vmem:[#allocation2 + $0x160] sm:$0x3]
      %v452 = vld [vmem:[#allocation2 + $0x168] sm:$0xff]
      %v453 = vld [vmem:[#allocation2 + $0x170] sm:$0xff]
      %v454 = vld [vmem:[#allocation2 + $0x178] sm:$0x3]
      %v455 = vld [vmem:[#allocation2 + $0x180] sm:$0xff]
      %v456 = vld [vmem:[#allocation2 + $0x188] sm:$0xff]
      %v457 = vld [vmem:[#allocation2 + $0x190] sm:$0x3]
      %v458 = vld [vmem:[#allocation2 + $0x198] sm:$0xff]
      %v459 = vld [vmem:[#allocation2 + $0x1a0] sm:$0xff]
      %v460 = vld [vmem:[#allocation2 + $0x1a8] sm:$0x3]
      %vm509 = vcmask 1046528
      %v510 = vrot.slane %v353, 1
      %v511 = vrot.slane %v354, 1
      %v512 = vsel %vm509, %v510, %v511
      %v513 = vrot.slane %v355, 1
      %v514 = vsel %vm509, %v511, %v513
      %v515 = vrot.slane %v356, 1
      %v516 = vrot.slane %v357, 1
      %v517 = vsel %vm509, %v515, %v516
      %v518 = vrot.slane %v358, 1
      %v519 = vsel %vm509, %v516, %v518
      %v520 = vrot.slane %v359, 1
      %v521 = vrot.slane %v360, 1
      %v522 = vsel %vm509, %v520, %v521
      %v523 = vrot.slane %v361, 1
      %v524 = vsel %vm509, %v521, %v523
      %v525 = vrot.slane %v362, 1
      %v526 = vrot.slane %v363, 1
      %v527 = vsel %vm509, %v525, %v526
      %v528 = vrot.slane %v364, 1
      %v529 = vsel %vm509, %v526, %v528
      %v530 = vrot.slane %v365, 1
      %v531 = vrot.slane %v366, 1
      %v532 = vsel %vm509, %v530, %v531
      %v533 = vrot.slane %v367, 1
      %v534 = vsel %vm509, %v531, %v533
      %v535 = vrot.slane %v368, 1
      %v536 = vrot.slane %v369, 1
      %v537 = vsel %vm509, %v535, %v536
      %v538 = vrot.slane %v370, 1
      %v539 = vsel %vm509, %v536, %v538
      %v540 = vrot.slane %v371, 1
      %v541 = vrot.slane %v372, 1
      %v542 = vsel %vm509, %v540, %v541
      %v543 = vrot.slane %v373, 1
      %v544 = vsel %vm509, %v541, %v543
      %v545 = vrot.slane %v374, 1
      %v546 = vrot.slane %v375, 1
      %v547 = vsel %vm509, %v545, %v546
      %v548 = vrot.slane %v376, 1
      %v549 = vsel %vm509, %v546, %v548
      %v550 = vrot.slane %v377, 1
      %v551 = vrot.slane %v378, 1
      %v552 = vsel %vm509, %v550, %v551
      %v553 = vrot.slane %v379, 1
      %v554 = vsel %vm509, %v551, %v553
      %v555 = vrot.slane %v380, 1
      %v556 = vrot.slane %v381, 1
      %v557 = vsel %vm509, %v555, %v556
      %v558 = vrot.slane %v382, 1
      %v559 = vsel %vm509, %v556, %v558
      %v560 = vrot.slane %v383, 1
      %v561 = vrot.slane %v384, 1
      %v562 = vsel %vm509, %v560, %v561
      %v563 = vrot.slane %v385, 1
      %v564 = vsel %vm509, %v561, %v563
      %v565 = vrot.slane %v386, 1
      %v566 = vrot.slane %v387, 1
      %v567 = vsel %vm509, %v565, %v566
      %v568 = vrot.slane %v388, 1
      %v569 = vsel %vm509, %v566, %v568
      %v570 = vrot.slane %v389, 1
      %v571 = vrot.slane %v390, 1
      %v572 = vsel %vm509, %v570, %v571
      %v573 = vrot.slane %v391, 1
      %v574 = vsel %vm509, %v571, %v573
      %v575 = vrot.slane %v392, 1
      %v576 = vrot.slane %v393, 1
      %v577 = vsel %vm509, %v575, %v576
      %v578 = vrot.slane %v394, 1
      %v579 = vsel %vm509, %v576, %v578
      %v580 = vrot.slane %v395, 1
      %v581 = vrot.slane %v396, 1
      %v582 = vsel %vm509, %v580, %v581
      %v583 = vrot.slane %v397, 1
      %v584 = vsel %vm509, %v581, %v583
      %v585 = vrot.slane %v398, 1
      %v586 = vrot.slane %v399, 1
      %v587 = vsel %vm509, %v585, %v586
      %v588 = vrot.slane %v400, 1
      %v589 = vsel %vm509, %v586, %v588
      %vm590 = vcmask 1045504
      %v591 = vrot.slane %v353, 2
      %v592 = vrot.slane %v354, 2
      %v593 = vsel %vm590, %v591, %v592
      %v594 = vrot.slane %v355, 2
      %v595 = vsel %vm590, %v592, %v594
      %v596 = vrot.slane %v356, 2
      %v597 = vrot.slane %v357, 2
      %v598 = vsel %vm590, %v596, %v597
      %v599 = vrot.slane %v358, 2
      %v600 = vsel %vm590, %v597, %v599
      %v601 = vrot.slane %v359, 2
      %v602 = vrot.slane %v360, 2
      %v603 = vsel %vm590, %v601, %v602
      %v604 = vrot.slane %v361, 2
      %v605 = vsel %vm590, %v602, %v604
      %v606 = vrot.slane %v362, 2
      %v607 = vrot.slane %v363, 2
      %v608 = vsel %vm590, %v606, %v607
      %v609 = vrot.slane %v364, 2
      %v610 = vsel %vm590, %v607, %v609
      %v611 = vrot.slane %v365, 2
      %v612 = vrot.slane %v366, 2
      %v613 = vsel %vm590, %v611, %v612
      %v614 = vrot.slane %v367, 2
      %v615 = vsel %vm590, %v612, %v614
      %v616 = vrot.slane %v368, 2
      %v617 = vrot.slane %v369, 2
      %v618 = vsel %vm590, %v616, %v617
      %v619 = vrot.slane %v370, 2
      %v620 = vsel %vm590, %v617, %v619
      %v621 = vrot.slane %v371, 2
      %v622 = vrot.slane %v372, 2
      %v623 = vsel %vm590, %v621, %v622
      %v624 = vrot.slane %v373, 2
      %v625 = vsel %vm590, %v622, %v624
      %v626 = vrot.slane %v374, 2
      %v627 = vrot.slane %v375, 2
      %v628 = vsel %vm590, %v626, %v627
      %v629 = vrot.slane %v376, 2
      %v630 = vsel %vm590, %v627, %v629
      %v631 = vrot.slane %v377, 2
      %v632 = vrot.slane %v378, 2
      %v633 = vsel %vm590, %v631, %v632
      %v634 = vrot.slane %v379, 2
      %v635 = vsel %vm590, %v632, %v634
      %v636 = vrot.slane %v380, 2
      %v637 = vrot.slane %v381, 2
      %v638 = vsel %vm590, %v636, %v637
      %v639 = vrot.slane %v382, 2
      %v640 = vsel %vm590, %v637, %v639
      %v641 = vrot.slane %v383, 2
      %v642 = vrot.slane %v384, 2
      %v643 = vsel %vm590, %v641, %v642
      %v644 = vrot.slane %v385, 2
      %v645 = vsel %vm590, %v642, %v644
      %v646 = vrot.slane %v386, 2
      %v647 = vrot.slane %v387, 2
      %v648 = vsel %vm590, %v646, %v647
      %v649 = vrot.slane %v388, 2
      %v650 = vsel %vm590, %v647, %v649
      %v651 = vrot.slane %v389, 2
      %v652 = vrot.slane %v390, 2
      %v653 = vsel %vm590, %v651, %v652
      %v654 = vrot.slane %v391, 2
      %v655 = vsel %vm590, %v652, %v654
      %v656 = vrot.slane %v392, 2
      %v657 = vrot.slane %v393, 2
      %v658 = vsel %vm590, %v656, %v657
      %v659 = vrot.slane %v394, 2
      %v660 = vsel %vm590, %v657, %v659
      %v661 = vrot.slane %v395, 2
      %v662 = vrot.slane %v396, 2
      %v663 = vsel %vm590, %v661, %v662
      %v664 = vrot.slane %v397, 2
      %v665 = vsel %vm590, %v662, %v664
      %v666 = vrot.slane %v398, 2
      %v667 = vrot.slane %v399, 2
      %v668 = vsel %vm590, %v666, %v667
      %v669 = vrot.slane %v400, 2
      %v670 = vsel %vm590, %v667, %v669
      %v719 = vrot.slane %v407, 1
      %v720 = vrot.slane %v408, 1
      %v721 = vsel %vm509, %v719, %v720
      %v722 = vrot.slane %v409, 1
      %v723 = vsel %vm509, %v720, %v722
      %v724 = vrot.slane %v410, 1
      %v725 = vrot.slane %v411, 1
      %v726 = vsel %vm509, %v724, %v725
      %v727 = vrot.slane %v412, 1
      %v728 = vsel %vm509, %v725, %v727
      %v729 = vrot.slane %v413, 1
      %v730 = vrot.slane %v414, 1
      %v731 = vsel %vm509, %v729, %v730
      %v732 = vrot.slane %v415, 1
      %v733 = vsel %vm509, %v730, %v732
      %v734 = vrot.slane %v416, 1
      %v735 = vrot.slane %v417, 1
      %v736 = vsel %vm509, %v734, %v735
      %v737 = vrot.slane %v418, 1
      %v738 = vsel %vm509, %v735, %v737
      %v739 = vrot.slane %v419, 1
      %v740 = vrot.slane %v420, 1
      %v741 = vsel %vm509, %v739, %v740
      %v742 = vrot.slane %v421, 1
      %v743 = vsel %vm509, %v740, %v742
      %v744 = vrot.slane %v422, 1
      %v745 = vrot.slane %v423, 1
      %v746 = vsel %vm509, %v744, %v745
      %v747 = vrot.slane %v424, 1
      %v748 = vsel %vm509, %v745, %v747
      %v749 = vrot.slane %v425, 1
      %v750 = vrot.slane %v426, 1
      %v751 = vsel %vm509, %v749, %v750
      %v752 = vrot.slane %v427, 1
      %v753 = vsel %vm509, %v750, %v752
      %v754 = vrot.slane %v428, 1
      %v755 = vrot.slane %v429, 1
      %v756 = vsel %vm509, %v754, %v755
      %v757 = vrot.slane %v430, 1
      %v758 = vsel %vm509, %v755, %v757
      %v759 = vrot.slane %v431, 1
      %v760 = vrot.slane %v432, 1
      %v761 = vsel %vm509, %v759, %v760
      %v762 = vrot.slane %v433, 1
      %v763 = vsel %vm509, %v760, %v762
      %v764 = vrot.slane %v434, 1
      %v765 = vrot.slane %v435, 1
      %v766 = vsel %vm509, %v764, %v765
      %v767 = vrot.slane %v436, 1
      %v768 = vsel %vm509, %v765, %v767
      %v769 = vrot.slane %v437, 1
      %v770 = vrot.slane %v438, 1
      %v771 = vsel %vm509, %v769, %v770
      %v772 = vrot.slane %v439, 1
      %v773 = vsel %vm509, %v770, %v772
      %v774 = vrot.slane %v440, 1
      %v775 = vrot.slane %v441, 1
      %v776 = vsel %vm509, %v774, %v775
      %v777 = vrot.slane %v442, 1
      %v778 = vsel %vm509, %v775, %v777
      %v779 = vrot.slane %v443, 1
      %v780 = vrot.slane %v444, 1
      %v781 = vsel %vm509, %v779, %v780
      %v782 = vrot.slane %v445, 1
      %v783 = vsel %vm509, %v780, %v782
      %v784 = vrot.slane %v446, 1
      %v785 = vrot.slane %v447, 1
      %v786 = vsel %vm509, %v784, %v785
      %v787 = vrot.slane %v448, 1
      %v788 = vsel %vm509, %v785, %v787
      %v789 = vrot.slane %v449, 1
      %v790 = vrot.slane %v450, 1
      %v791 = vsel %vm509, %v789, %v790
      %v792 = vrot.slane %v451, 1
      %v793 = vsel %vm509, %v790, %v792
      %v794 = vrot.slane %v452, 1
      %v795 = vrot.slane %v453, 1
      %v796 = vsel %vm509, %v794, %v795
      %v797 = vrot.slane %v454, 1
      %v798 = vsel %vm509, %v795, %v797
      %v831 = vrot.slane %v407, 2
      %v832 = vrot.slane %v408, 2
      %v833 = vsel %vm590, %v831, %v832
      %v834 = vrot.slane %v409, 2
      %v835 = vsel %vm590, %v832, %v834
      %v836 = vrot.slane %v410, 2
      %v837 = vrot.slane %v411, 2
      %v838 = vsel %vm590, %v836, %v837
      %v839 = vrot.slane %v412, 2
      %v840 = vsel %vm590, %v837, %v839
      %v841 = vrot.slane %v413, 2
      %v842 = vrot.slane %v414, 2
      %v843 = vsel %vm590, %v841, %v842
      %v844 = vrot.slane %v415, 2
      %v845 = vsel %vm590, %v842, %v844
      %v846 = vrot.slane %v416, 2
      %v847 = vrot.slane %v417, 2
      %v848 = vsel %vm590, %v846, %v847
      %v849 = vrot.slane %v418, 2
      %v850 = vsel %vm590, %v847, %v849
      %v851 = vrot.slane %v419, 2
      %v852 = vrot.slane %v420, 2
      %v853 = vsel %vm590, %v851, %v852
      %v854 = vrot.slane %v421, 2
      %v855 = vsel %vm590, %v852, %v854
      %v856 = vrot.slane %v422, 2
      %v857 = vrot.slane %v423, 2
      %v858 = vsel %vm590, %v856, %v857
      %v859 = vrot.slane %v424, 2
      %v860 = vsel %vm590, %v857, %v859
      %v861 = vrot.slane %v425, 2
      %v862 = vrot.slane %v426, 2
      %v863 = vsel %vm590, %v861, %v862
      %v864 = vrot.slane %v427, 2
      %v865 = vsel %vm590, %v862, %v864
      %v866 = vrot.slane %v428, 2
      %v867 = vrot.slane %v429, 2
      %v868 = vsel %vm590, %v866, %v867
      %v869 = vrot.slane %v430, 2
      %v870 = vsel %vm590, %v867, %v869
      %v871 = vrot.slane %v431, 2
      %v872 = vrot.slane %v432, 2
      %v873 = vsel %vm590, %v871, %v872
      %v874 = vrot.slane %v433, 2
      %v875 = vsel %vm590, %v872, %v874
      %v876 = vrot.slane %v434, 2
      %v877 = vrot.slane %v435, 2
      %v878 = vsel %vm590, %v876, %v877
      %v879 = vrot.slane %v436, 2
      %v880 = vsel %vm590, %v877, %v879
      %v881 = vrot.slane %v437, 2
      %v882 = vrot.slane %v438, 2
      %v883 = vsel %vm590, %v881, %v882
      %v884 = vrot.slane %v439, 2
      %v885 = vsel %vm590, %v882, %v884
      %v886 = vrot.slane %v440, 2
      %v887 = vrot.slane %v441, 2
      %v888 = vsel %vm590, %v886, %v887
      %v889 = vrot.slane %v442, 2
      %v890 = vsel %vm590, %v887, %v889
      %v891 = vrot.slane %v443, 2
      %v892 = vrot.slane %v444, 2
      %v893 = vsel %vm590, %v891, %v892
      %v894 = vrot.slane %v445, 2
      %v895 = vsel %vm590, %v892, %v894
      %v896 = vrot.slane %v446, 2
      %v897 = vrot.slane %v447, 2
      %v898 = vsel %vm590, %v896, %v897
      %v899 = vrot.slane %v448, 2
      %v900 = vsel %vm590, %v897, %v899
      %v901 = vrot.slane %v449, 2
      %v902 = vrot.slane %v450, 2
      %v903 = vsel %vm590, %v901, %v902
      %v904 = vrot.slane %v451, 2
      %v905 = vsel %vm590, %v902, %v904
      %v906 = vrot.slane %v452, 2
      %v907 = vrot.slane %v453, 2
      %v908 = vsel %vm590, %v906, %v907
      %v909 = vrot.slane %v454, 2
      %v910 = vsel %vm590, %v907, %v909
      %911 = vrot.lane.b32.xlu0 %v512, 32
      %v912 = vpop.permute.xlu0 %911
      %913 = vrot.lane.b32.xlu0 %v514, 32
      %v914 = vpop.permute.xlu0 %913
      %915 = vrot.lane.b32.xlu0 %v517, 32
      %v916 = vpop.permute.xlu0 %915
      %917 = vrot.lane.b32.xlu0 %v519, 32
      %v918 = vpop.permute.xlu0 %917
      %919 = vrot.lane.b32.xlu0 %v522, 32
      %v920 = vpop.permute.xlu0 %919
      %921 = vrot.lane.b32.xlu0 %v524, 32
      %v922 = vpop.permute.xlu0 %921
      %923 = vrot.lane.b32.xlu0 %v527, 32
      %v924 = vpop.permute.xlu0 %923
      %925 = vrot.lane.b32.xlu0 %v529, 32
      %v926 = vpop.permute.xlu0 %925
      %927 = vrot.lane.b32.xlu0 %v532, 32
      %v928 = vpop.permute.xlu0 %927
      %929 = vrot.lane.b32.xlu0 %v534, 32
      %v930 = vpop.permute.xlu0 %929
      %931 = vrot.lane.b32.xlu0 %v537, 32
      %v932 = vpop.permute.xlu0 %931
      %933 = vrot.lane.b32.xlu0 %v539, 32
      %v934 = vpop.permute.xlu0 %933
      %935 = vrot.lane.b32.xlu0 %v542, 32
      %v936 = vpop.permute.xlu0 %935
      %937 = vrot.lane.b32.xlu0 %v544, 32
      %v938 = vpop.permute.xlu0 %937
      %939 = vrot.lane.b32.xlu0 %v547, 32
      %v940 = vpop.permute.xlu0 %939
      %941 = vrot.lane.b32.xlu0 %v549, 32
      %v942 = vpop.permute.xlu0 %941
      %943 = vrot.lane.b32.xlu0 %v552, 32
      %v944 = vpop.permute.xlu0 %943
      %945 = vrot.lane.b32.xlu0 %v554, 32
      %v946 = vpop.permute.xlu0 %945
      %947 = vrot.lane.b32.xlu0 %v557, 32
      %v948 = vpop.permute.xlu0 %947
      %949 = vrot.lane.b32.xlu0 %v559, 32
      %v950 = vpop.permute.xlu0 %949
      %951 = vrot.lane.b32.xlu0 %v562, 32
      %v952 = vpop.permute.xlu0 %951
      %953 = vrot.lane.b32.xlu0 %v564, 32
      %v954 = vpop.permute.xlu0 %953
      %955 = vrot.lane.b32.xlu0 %v567, 32
      %v956 = vpop.permute.xlu0 %955
      %957 = vrot.lane.b32.xlu0 %v569, 32
      %v958 = vpop.permute.xlu0 %957
      %959 = vrot.lane.b32.xlu0 %v572, 32
      %v960 = vpop.permute.xlu0 %959
      %961 = vrot.lane.b32.xlu0 %v574, 32
      %v962 = vpop.permute.xlu0 %961
      %963 = vrot.lane.b32.xlu0 %v577, 32
      %v964 = vpop.permute.xlu0 %963
      %965 = vrot.lane.b32.xlu0 %v579, 32
      %v966 = vpop.permute.xlu0 %965
      %967 = vrot.lane.b32.xlu0 %v582, 32
      %v968 = vpop.permute.xlu0 %967
      %969 = vrot.lane.b32.xlu0 %v584, 32
      %v970 = vpop.permute.xlu0 %969
      %971 = vrot.lane.b32.xlu0 %v587, 32
      %v972 = vpop.permute.xlu0 %971
      %973 = vrot.lane.b32.xlu0 %v589, 32
      %v974 = vpop.permute.xlu0 %973
      %1007 = vrot.lane.b32.xlu0 %v593, 64
      %v1008 = vpop.permute.xlu0 %1007
      %1009 = vrot.lane.b32.xlu0 %v595, 64
      %v1010 = vpop.permute.xlu0 %1009
      %1011 = vrot.lane.b32.xlu0 %v598, 64
      %v1012 = vpop.permute.xlu0 %1011
      %1013 = vrot.lane.b32.xlu0 %v600, 64
      %v1014 = vpop.permute.xlu0 %1013
      %1015 = vrot.lane.b32.xlu0 %v603, 64
      %v1016 = vpop.permute.xlu0 %1015
      %1017 = vrot.lane.b32.xlu0 %v605, 64
      %v1018 = vpop.permute.xlu0 %1017
      %1019 = vrot.lane.b32.xlu0 %v608, 64
      %v1020 = vpop.permute.xlu0 %1019
      %1021 = vrot.lane.b32.xlu0 %v610, 64
      %v1022 = vpop.permute.xlu0 %1021
      %1023 = vrot.lane.b32.xlu0 %v613, 64
      %v1024 = vpop.permute.xlu0 %1023
      %1025 = vrot.lane.b32.xlu0 %v615, 64
      %v1026 = vpop.permute.xlu0 %1025
      %1027 = vrot.lane.b32.xlu0 %v618, 64
      %v1028 = vpop.permute.xlu0 %1027
      %1029 = vrot.lane.b32.xlu0 %v620, 64
      %v1030 = vpop.permute.xlu0 %1029
      %1031 = vrot.lane.b32.xlu0 %v623, 64
      %v1032 = vpop.permute.xlu0 %1031
      %1033 = vrot.lane.b32.xlu0 %v625, 64
      %v1034 = vpop.permute.xlu0 %1033
      %1035 = vrot.lane.b32.xlu0 %v628, 64
      %v1036 = vpop.permute.xlu0 %1035
      %1037 = vrot.lane.b32.xlu0 %v630, 64
      %v1038 = vpop.permute.xlu0 %1037
      %1039 = vrot.lane.b32.xlu0 %v633, 64
      %v1040 = vpop.permute.xlu0 %1039
      %1041 = vrot.lane.b32.xlu0 %v635, 64
      %v1042 = vpop.permute.xlu0 %1041
      %1043 = vrot.lane.b32.xlu0 %v638, 64
      %v1044 = vpop.permute.xlu0 %1043
      %1045 = vrot.lane.b32.xlu0 %v640, 64
      %v1046 = vpop.permute.xlu0 %1045
      %1047 = vrot.lane.b32.xlu0 %v643, 64
      %v1048 = vpop.permute.xlu0 %1047
      %1049 = vrot.lane.b32.xlu0 %v645, 64
      %v1050 = vpop.permute.xlu0 %1049
      %1051 = vrot.lane.b32.xlu0 %v648, 64
      %v1052 = vpop.permute.xlu0 %1051
      %1053 = vrot.lane.b32.xlu0 %v650, 64
      %v1054 = vpop.permute.xlu0 %1053
      %1055 = vrot.lane.b32.xlu0 %v653, 64
      %v1056 = vpop.permute.xlu0 %1055
      %1057 = vrot.lane.b32.xlu0 %v655, 64
      %v1058 = vpop.permute.xlu0 %1057
      %1059 = vrot.lane.b32.xlu0 %v658, 64
      %v1060 = vpop.permute.xlu0 %1059
      %1061 = vrot.lane.b32.xlu0 %v660, 64
      %v1062 = vpop.permute.xlu0 %1061
      %1063 = vrot.lane.b32.xlu0 %v663, 64
      %v1064 = vpop.permute.xlu0 %1063
      %1065 = vrot.lane.b32.xlu0 %v665, 64
      %v1066 = vpop.permute.xlu0 %1065
      %1067 = vrot.lane.b32.xlu0 %v668, 64
      %v1068 = vpop.permute.xlu0 %1067
      %1069 = vrot.lane.b32.xlu0 %v670, 64
      %v1070 = vpop.permute.xlu0 %1069
      %1103 = vrot.lane.b32.xlu0 %v407, 96
      %v1104 = vpop.permute.xlu0 %1103
      %1105 = vrot.lane.b32.xlu0 %v408, 96
      %v1106 = vpop.permute.xlu0 %1105
      %1107 = vrot.lane.b32.xlu0 %v410, 96
      %v1108 = vpop.permute.xlu0 %1107
      %1109 = vrot.lane.b32.xlu0 %v411, 96
      %v1110 = vpop.permute.xlu0 %1109
      %1111 = vrot.lane.b32.xlu0 %v413, 96
      %v1112 = vpop.permute.xlu0 %1111
      %1113 = vrot.lane.b32.xlu0 %v414, 96
      %v1114 = vpop.permute.xlu0 %1113
      %1115 = vrot.lane.b32.xlu0 %v416, 96
      %v1116 = vpop.permute.xlu0 %1115
      %1117 = vrot.lane.b32.xlu0 %v417, 96
      %v1118 = vpop.permute.xlu0 %1117
      %1119 = vrot.lane.b32.xlu0 %v419, 96
      %v1120 = vpop.permute.xlu0 %1119
      %1121 = vrot.lane.b32.xlu0 %v420, 96
      %v1122 = vpop.permute.xlu0 %1121
      %1123 = vrot.lane.b32.xlu0 %v422, 96
      %v1124 = vpop.permute.xlu0 %1123
      %1125 = vrot.lane.b32.xlu0 %v423, 96
      %v1126 = vpop.permute.xlu0 %1125
      %1127 = vrot.lane.b32.xlu0 %v425, 96
      %v1128 = vpop.permute.xlu0 %1127
      %1129 = vrot.lane.b32.xlu0 %v426, 96
      %v1130 = vpop.permute.xlu0 %1129
      %1131 = vrot.lane.b32.xlu0 %v428, 96
      %v1132 = vpop.permute.xlu0 %1131
      %1133 = vrot.lane.b32.xlu0 %v429, 96
      %v1134 = vpop.permute.xlu0 %1133
      %1135 = vrot.lane.b32.xlu0 %v431, 96
      %v1136 = vpop.permute.xlu0 %1135
      %1137 = vrot.lane.b32.xlu0 %v432, 96
      %v1138 = vpop.permute.xlu0 %1137
      %1139 = vrot.lane.b32.xlu0 %v434, 96
      %v1140 = vpop.permute.xlu0 %1139
      %1141 = vrot.lane.b32.xlu0 %v435, 96
      %v1142 = vpop.permute.xlu0 %1141
      %1143 = vrot.lane.b32.xlu0 %v437, 96
      %v1144 = vpop.permute.xlu0 %1143
      %1145 = vrot.lane.b32.xlu0 %v438, 96
      %v1146 = vpop.permute.xlu0 %1145
      %1147 = vrot.lane.b32.xlu0 %v440, 96
      %v1148 = vpop.permute.xlu0 %1147
      %1149 = vrot.lane.b32.xlu0 %v441, 96
      %v1150 = vpop.permute.xlu0 %1149
      %1151 = vrot.lane.b32.xlu0 %v443, 96
      %v1152 = vpop.permute.xlu0 %1151
      %1153 = vrot.lane.b32.xlu0 %v444, 96
      %v1154 = vpop.permute.xlu0 %1153
      %1155 = vrot.lane.b32.xlu0 %v446, 96
      %v1156 = vpop.permute.xlu0 %1155
      %1157 = vrot.lane.b32.xlu0 %v447, 96
      %v1158 = vpop.permute.xlu0 %1157
      %1159 = vrot.lane.b32.xlu0 %v449, 96
      %v1160 = vpop.permute.xlu0 %1159
      %1161 = vrot.lane.b32.xlu0 %v450, 96
      %v1162 = vpop.permute.xlu0 %1161
      %1163 = vrot.lane.b32.xlu0 %v452, 96
      %v1164 = vpop.permute.xlu0 %1163
      %1165 = vrot.lane.b32.xlu0 %v453, 96
      %v1166 = vpop.permute.xlu0 %1165
      %1199 = vrot.lane.b32.xlu0 %v833, 32
      %v1200 = vpop.permute.xlu0 %1199
      %1201 = vrot.lane.b32.xlu0 %v835, 32
      %v1202 = vpop.permute.xlu0 %1201
      %1203 = vrot.lane.b32.xlu0 %v838, 32
      %v1204 = vpop.permute.xlu0 %1203
      %1205 = vrot.lane.b32.xlu0 %v840, 32
      %v1206 = vpop.permute.xlu0 %1205
      %1207 = vrot.lane.b32.xlu0 %v843, 32
      %v1208 = vpop.permute.xlu0 %1207
      %1209 = vrot.lane.b32.xlu0 %v845, 32
      %v1210 = vpop.permute.xlu0 %1209
      %1211 = vrot.lane.b32.xlu0 %v848, 32
      %v1212 = vpop.permute.xlu0 %1211
      %1213 = vrot.lane.b32.xlu0 %v850, 32
      %v1214 = vpop.permute.xlu0 %1213
      %1215 = vrot.lane.b32.xlu0 %v853, 32
      %v1216 = vpop.permute.xlu0 %1215
      %1217 = vrot.lane.b32.xlu0 %v855, 32
      %v1218 = vpop.permute.xlu0 %1217
      %1219 = vrot.lane.b32.xlu0 %v858, 32
      %v1220 = vpop.permute.xlu0 %1219
      %1221 = vrot.lane.b32.xlu0 %v860, 32
      %v1222 = vpop.permute.xlu0 %1221
      %1223 = vrot.lane.b32.xlu0 %v863, 32
      %v1224 = vpop.permute.xlu0 %1223
      %1225 = vrot.lane.b32.xlu0 %v865, 32
      %v1226 = vpop.permute.xlu0 %1225
      %1227 = vrot.lane.b32.xlu0 %v868, 32
      %v1228 = vpop.permute.xlu0 %1227
      %1229 = vrot.lane.b32.xlu0 %v870, 32
      %v1230 = vpop.permute.xlu0 %1229
      %1231 = vrot.lane.b32.xlu0 %v873, 32
      %v1232 = vpop.permute.xlu0 %1231
      %1233 = vrot.lane.b32.xlu0 %v875, 32
      %v1234 = vpop.permute.xlu0 %1233
      %1235 = vrot.lane.b32.xlu0 %v878, 32
      %v1236 = vpop.permute.xlu0 %1235
      %1237 = vrot.lane.b32.xlu0 %v880, 32
      %v1238 = vpop.permute.xlu0 %1237
      %1239 = vrot.lane.b32.xlu0 %v883, 32
      %v1240 = vpop.permute.xlu0 %1239
      %1241 = vrot.lane.b32.xlu0 %v885, 32
      %v1242 = vpop.permute.xlu0 %1241
      %1243 = vrot.lane.b32.xlu0 %v888, 32
      %v1244 = vpop.permute.xlu0 %1243
      %1245 = vrot.lane.b32.xlu0 %v890, 32
      %v1246 = vpop.permute.xlu0 %1245
      %1247 = vrot.lane.b32.xlu0 %v893, 32
      %v1248 = vpop.permute.xlu0 %1247
      %1249 = vrot.lane.b32.xlu0 %v895, 32
      %v1250 = vpop.permute.xlu0 %1249
      %1251 = vrot.lane.b32.xlu0 %v898, 32
      %v1252 = vpop.permute.xlu0 %1251
      %1253 = vrot.lane.b32.xlu0 %v900, 32
      %v1254 = vpop.permute.xlu0 %1253
      %1255 = vrot.lane.b32.xlu0 %v903, 32
      %v1256 = vpop.permute.xlu0 %1255
      %1257 = vrot.lane.b32.xlu0 %v905, 32
      %v1258 = vpop.permute.xlu0 %1257
      %1259 = vrot.lane.b32.xlu0 %v908, 32
      %v1260 = vpop.permute.xlu0 %1259
      %1261 = vrot.lane.b32.xlu0 %v910, 32
      %v1262 = vpop.permute.xlu0 %1261
      %vm1295 = vcmask 261120
      %v1296 = vsel %vm1295, %v353, %v912
      %v1297 = vsel %vm1295, %v354, %v914
      %v1298 = vsel %vm1295, %v356, %v916
      %v1299 = vsel %vm1295, %v357, %v918
      %v1300 = vsel %vm1295, %v359, %v920
      %v1301 = vsel %vm1295, %v360, %v922
      %v1302 = vsel %vm1295, %v362, %v924
      %v1303 = vsel %vm1295, %v363, %v926
      %v1304 = vsel %vm1295, %v365, %v928
      %v1305 = vsel %vm1295, %v366, %v930
      %v1306 = vsel %vm1295, %v368, %v932
      %v1307 = vsel %vm1295, %v369, %v934
      %v1308 = vsel %vm1295, %v371, %v936
      %v1309 = vsel %vm1295, %v372, %v938
      %v1310 = vsel %vm1295, %v374, %v940
      %v1311 = vsel %vm1295, %v375, %v942
      %v1312 = vsel %vm1295, %v377, %v944
      %v1313 = vsel %vm1295, %v378, %v946
      %v1314 = vsel %vm1295, %v380, %v948
      %v1315 = vsel %vm1295, %v381, %v950
      %v1316 = vsel %vm1295, %v383, %v952
      %v1317 = vsel %vm1295, %v384, %v954
      %v1318 = vsel %vm1295, %v386, %v956
      %v1319 = vsel %vm1295, %v387, %v958
      %v1320 = vsel %vm1295, %v389, %v960
      %v1321 = vsel %vm1295, %v390, %v962
      %v1322 = vsel %vm1295, %v392, %v964
      %v1323 = vsel %vm1295, %v393, %v966
      %v1324 = vsel %vm1295, %v395, %v968
      %v1325 = vsel %vm1295, %v396, %v970
      %v1326 = vsel %vm1295, %v398, %v972
      %v1327 = vsel %vm1295, %v399, %v974
      %vm1328 = vcmask 523264
      %v1329 = vsel %vm1328, %v1296, %v1008
      %v1330 = vsel %vm1328, %v1297, %v1010
      %v1331 = vsel %vm1328, %v1298, %v1012
      %v1332 = vsel %vm1328, %v1299, %v1014
      %v1333 = vsel %vm1328, %v1300, %v1016
      %v1334 = vsel %vm1328, %v1301, %v1018
      %v1335 = vsel %vm1328, %v1302, %v1020
      %v1336 = vsel %vm1328, %v1303, %v1022
      %v1337 = vsel %vm1328, %v1304, %v1024
      %v1338 = vsel %vm1328, %v1305, %v1026
      %v1339 = vsel %vm1328, %v1306, %v1028
      %v1340 = vsel %vm1328, %v1307, %v1030
      %v1341 = vsel %vm1328, %v1308, %v1032
      %v1342 = vsel %vm1328, %v1309, %v1034
      %v1343 = vsel %vm1328, %v1310, %v1036
      %v1344 = vsel %vm1328, %v1311, %v1038
      %v1345 = vsel %vm1328, %v1312, %v1040
      %v1346 = vsel %vm1328, %v1313, %v1042
      %v1347 = vsel %vm1328, %v1314, %v1044
      %v1348 = vsel %vm1328, %v1315, %v1046
      %v1349 = vsel %vm1328, %v1316, %v1048
      %v1350 = vsel %vm1328, %v1317, %v1050
      %v1351 = vsel %vm1328, %v1318, %v1052
      %v1352 = vsel %vm1328, %v1319, %v1054
      %v1353 = vsel %vm1328, %v1320, %v1056
      %v1354 = vsel %vm1328, %v1321, %v1058
      %v1355 = vsel %vm1328, %v1322, %v1060
      %v1356 = vsel %vm1328, %v1323, %v1062
      %v1357 = vsel %vm1328, %v1324, %v1064
      %v1358 = vsel %vm1328, %v1325, %v1066
      %v1359 = vsel %vm1328, %v1326, %v1068
      %v1360 = vsel %vm1328, %v1327, %v1070
      %vm1361 = vcmask 785408
      %v1362 = vsel %vm1361, %v1329, %v1104
      %v1363 = vsel %vm1361, %v1330, %v1106
      %v1364 = vsel %vm1361, %v1331, %v1108
      %v1365 = vsel %vm1361, %v1332, %v1110
      %v1366 = vsel %vm1361, %v1333, %v1112
      %v1367 = vsel %vm1361, %v1334, %v1114
      %v1368 = vsel %vm1361, %v1335, %v1116
      %v1369 = vsel %vm1361, %v1336, %v1118
      %v1370 = vsel %vm1361, %v1337, %v1120
      %v1371 = vsel %vm1361, %v1338, %v1122
      %v1372 = vsel %vm1361, %v1339, %v1124
      %v1373 = vsel %vm1361, %v1340, %v1126
      %v1374 = vsel %vm1361, %v1341, %v1128
      %v1375 = vsel %vm1361, %v1342, %v1130
      %v1376 = vsel %vm1361, %v1343, %v1132
      %v1377 = vsel %vm1361, %v1344, %v1134
      %v1378 = vsel %vm1361, %v1345, %v1136
      %v1379 = vsel %vm1361, %v1346, %v1138
      %v1380 = vsel %vm1361, %v1347, %v1140
      %v1381 = vsel %vm1361, %v1348, %v1142
      %v1382 = vsel %vm1361, %v1349, %v1144
      %v1383 = vsel %vm1361, %v1350, %v1146
      %v1384 = vsel %vm1361, %v1351, %v1148
      %v1385 = vsel %vm1361, %v1352, %v1150
      %v1386 = vsel %vm1361, %v1353, %v1152
      %v1387 = vsel %vm1361, %v1354, %v1154
      %v1388 = vsel %vm1361, %v1355, %v1156
      %v1389 = vsel %vm1361, %v1356, %v1158
      %v1390 = vsel %vm1361, %v1357, %v1160
      %v1391 = vsel %vm1361, %v1358, %v1162
      %v1392 = vsel %vm1361, %v1359, %v1164
      %v1393 = vsel %vm1361, %v1360, %v1166
      %v1394 = vsel %vm1295, %v721, %v1200
      %v1395 = vsel %vm1295, %v723, %v1202
      %v1396 = vsel %vm1295, %v726, %v1204
      %v1397 = vsel %vm1295, %v728, %v1206
      %v1398 = vsel %vm1295, %v731, %v1208
      %v1399 = vsel %vm1295, %v733, %v1210
      %v1400 = vsel %vm1295, %v736, %v1212
      %v1401 = vsel %vm1295, %v738, %v1214
      %v1402 = vsel %vm1295, %v741, %v1216
      %v1403 = vsel %vm1295, %v743, %v1218
      %v1404 = vsel %vm1295, %v746, %v1220
      %v1405 = vsel %vm1295, %v748, %v1222
      %v1406 = vsel %vm1295, %v751, %v1224
      %v1407 = vsel %vm1295, %v753, %v1226
      %v1408 = vsel %vm1295, %v756, %v1228
      %v1409 = vsel %vm1295, %v758, %v1230
      %v1410 = vsel %vm1295, %v761, %v1232
      %v1411 = vsel %vm1295, %v763, %v1234
      %v1412 = vsel %vm1295, %v766, %v1236
      %v1413 = vsel %vm1295, %v768, %v1238
      %v1414 = vsel %vm1295, %v771, %v1240
      %v1415 = vsel %vm1295, %v773, %v1242
      %v1416 = vsel %vm1295, %v776, %v1244
      %v1417 = vsel %vm1295, %v778, %v1246
      %v1418 = vsel %vm1295, %v781, %v1248
      %v1419 = vsel %vm1295, %v783, %v1250
      %v1420 = vsel %vm1295, %v786, %v1252
      %v1421 = vsel %vm1295, %v788, %v1254
      %v1422 = vsel %vm1295, %v791, %v1256
      %v1423 = vsel %vm1295, %v793, %v1258
      %v1424 = vsel %vm1295, %v796, %v1260
      %v1425 = vsel %vm1295, %v798, %v1262
      %v1426 = vld [vmem:[%s1] sm:$0xff]
      %v1427 = vld [vmem:[%s1 + $0x8] sm:$0xff]
      %v1428 = vld [vmem:[%s1 + $0x10] sm:$0xff]
      %v1429 = vld [vmem:[%s1 + $0x18] sm:$0xff]
      %v1430 = vld [vmem:[%s1 + $0x20] sm:$0xff]
      %v1431 = vld [vmem:[%s1 + $0x28] sm:$0xff]
      %v1432 = vld [vmem:[%s1 + $0x30] sm:$0xff]
      %v1433 = vld [vmem:[%s1 + $0x38] sm:$0xff]
      %v1434 = vld [vmem:[%s1 + $0x40] sm:$0xff]
      %v1435 = vld [vmem:[%s1 + $0x48] sm:$0xff]
      %v1436 = vld [vmem:[%s1 + $0x50] sm:$0xff]
      %v1437 = vld [vmem:[%s1 + $0x58] sm:$0xff]
      %v1438 = vld [vmem:[%s1 + $0x60] sm:$0xff]
      %v1439 = vld [vmem:[%s1 + $0x68] sm:$0xff]
      %v1440 = vld [vmem:[%s1 + $0x70] sm:$0xff]
      %v1441 = vld [vmem:[%s1 + $0x78] sm:$0xff]
      %v1442 = vld [vmem:[%s1 + $0x80] sm:$0xff]
      %v1443 = vld [vmem:[%s1 + $0x88] sm:$0xff]
      %v1444 = vld [vmem:[%s1 + $0x90] sm:$0xff]
      %v1445 = vld [vmem:[%s1 + $0x98] sm:$0xff]
      %v1446 = vld [vmem:[%s1 + $0xa0] sm:$0xff]
      %v1447 = vld [vmem:[%s1 + $0xa8] sm:$0xff]
      %v1448 = vld [vmem:[%s1 + $0xb0] sm:$0xff]
      %v1449 = vld [vmem:[%s1 + $0xb8] sm:$0xff]
      %v1453 = vrot.slane %v401, 1
      %v1454 = vrot.slane %v402, 1
      %v1455 = vsel %vm509, %v1453, %v1454
      %v1456 = vrot.slane %v403, 1
      %v1457 = vsel %vm509, %v1454, %v1456
      %v1458 = vrot.slane %v401, 2
      %v1459 = vrot.slane %v402, 2
      %v1460 = vsel %vm590, %v1458, %v1459
      %v1461 = vrot.slane %v403, 2
      %v1462 = vsel %vm590, %v1459, %v1461
      %v1466 = vrot.slane %v455, 1
      %v1467 = vrot.slane %v456, 1
      %v1468 = vsel %vm509, %v1466, %v1467
      %v1469 = vrot.slane %v457, 1
      %v1470 = vsel %vm509, %v1467, %v1469
      %v1473 = vrot.slane %v455, 2
      %v1474 = vrot.slane %v456, 2
      %v1475 = vsel %vm590, %v1473, %v1474
      %v1476 = vrot.slane %v457, 2
      %v1477 = vsel %vm590, %v1474, %v1476
      %1478 = vrot.lane.b32.xlu0 %v1455, 32
      %v1479 = vpop.permute.xlu0 %1478
      %1480 = vrot.lane.b32.xlu0 %v1457, 32
      %v1481 = vpop.permute.xlu0 %1480
      %1484 = vrot.lane.b32.xlu0 %v1460, 64
      %v1485 = vpop.permute.xlu0 %1484
      %1486 = vrot.lane.b32.xlu0 %v1462, 64
      %v1487 = vpop.permute.xlu0 %1486
      %1490 = vrot.lane.b32.xlu0 %v455, 96
      %v1491 = vpop.permute.xlu0 %1490
      %1492 = vrot.lane.b32.xlu0 %v456, 96
      %v1493 = vpop.permute.xlu0 %1492
      %1496 = vrot.lane.b32.xlu0 %v1475, 32
      %v1497 = vpop.permute.xlu0 %1496
      %1498 = vrot.lane.b32.xlu0 %v1477, 32
      %v1499 = vpop.permute.xlu0 %1498
      %v1502 = vsel %vm1295, %v401, %v1479
      %v1503 = vsel %vm1295, %v402, %v1481
      %v1504 = vsel %vm1328, %v1502, %v1485
      %v1505 = vsel %vm1328, %v1503, %v1487
      %v1506 = vsel %vm1361, %v1504, %v1491
      %v1507 = vsel %vm1361, %v1505, %v1493
      %v1508 = vsel %vm1295, %v1468, %v1497
      %v1509 = vsel %vm1295, %v1470, %v1499
      %s1510 = scalar_lea.vmem %s1, 192
      %v1511 = vld [vmem:[%s1510] sm:$0xff]
      %v1512 = vld [vmem:[%s1510 + $0x8] sm:$0xff]
      %v1513 = vld [vmem:[%s1510 + $0x10] sm:$0xff]
      %v1514 = vld [vmem:[%s1510 + $0x18] sm:$0xff]
      %v1515 = vld [vmem:[%s1510 + $0x20] sm:$0xff]
      %v1516 = vld [vmem:[%s1510 + $0x28] sm:$0xff]
      %v1517 = vld [vmem:[%s1510 + $0x30] sm:$0xff]
      %v1518 = vld [vmem:[%s1510 + $0x38] sm:$0xff]
      %v1519 = vld [vmem:[%s1510 + $0x40] sm:$0xff]
      %v1520 = vld [vmem:[%s1510 + $0x48] sm:$0xff]
      %v1521 = vld [vmem:[%s1510 + $0x50] sm:$0xff]
      %v1522 = vld [vmem:[%s1510 + $0x58] sm:$0xff]
      %v1523 = vld [vmem:[%s1510 + $0x60] sm:$0xff]
      %v1524 = vld [vmem:[%s1510 + $0x68] sm:$0xff]
      %v1525 = vld [vmem:[%s1510 + $0x70] sm:$0xff]
      %v1526 = vld [vmem:[%s1510 + $0x78] sm:$0xff]
      %v1527 = vld [vmem:[%s1510 + $0x80] sm:$0xff]
      %v1528 = vld [vmem:[%s1510 + $0x88] sm:$0xff]
      %v1529 = vld [vmem:[%s1510 + $0x90] sm:$0xff]
      %v1530 = vld [vmem:[%s1510 + $0x98] sm:$0xff]
      %v1531 = vld [vmem:[%s1510 + $0xa0] sm:$0xff]
      %v1532 = vld [vmem:[%s1510 + $0xa8] sm:$0xff]
      %v1533 = vld [vmem:[%s1510 + $0xb0] sm:$0xff]
      %v1534 = vld [vmem:[%s1510 + $0xb8] sm:$0xff]
      %v1536 = vsel %vm1328, %v1396, 0
      %v1539 = vsel %vm1328, %v1397, 0
      %v1542 = vsel %vm1328, %v1398, 0
      %v1545 = vsel %vm1328, %v1399, 0
      %v1548 = vsel %vm1328, %v1400, 0
      %v1551 = vsel %vm1328, %v1401, 0
      %v1554 = vsel %vm1328, %v1402, 0
      %v1557 = vsel %vm1328, %v1403, 0
      %v1560 = vsel %vm1328, %v1404, 0
      %v1563 = vsel %vm1328, %v1405, 0
      %v1566 = vsel %vm1328, %v1406, 0
      %v1569 = vsel %vm1328, %v1407, 0
      %v1572 = vsel %vm1328, %v1408, 0
      %v1575 = vsel %vm1328, %v1409, 0
      %v1578 = vsel %vm1328, %v1410, 0
      %v1581 = vsel %vm1328, %v1411, 0
      %v1584 = vsel %vm1328, %v1412, 0
      %v1587 = vsel %vm1328, %v1413, 0
      %v1590 = vsel %vm1328, %v1414, 0
      %v1593 = vsel %vm1328, %v1415, 0
      %v1596 = vsel %vm1328, %v1416, 0
      %v1599 = vsel %vm1328, %v1417, 0
      %v1602 = vsel %vm1328, %v1418, 0
      %v1605 = vsel %vm1328, %v1419, 0
      %v1608 = vsel %vm1328, %v1420, 0
      %v1611 = vsel %vm1328, %v1421, 0
      %v1614 = vsel %vm1328, %v1422, 0
      %v1617 = vsel %vm1328, %v1423, 0
      %v1620 = vsel %vm1328, %v1424, 0
      %v1623 = vsel %vm1328, %v1425, 0
      %v1626 = vsel %vm1328, %v1508, 0
      %v1629 = vsel %vm1328, %v1509, 0
      %1631 = vmatpush.msra.mxu0 %v1526
      %1632 = vmatpush.msra.mxu0 %v1525
      %1633 = vmatpush.msra.mxu0 %v1524
      %1634 = vmatpush.msra.mxu0 %v1523
      %1635 = vmatpush.msra.mxu0 %v1522
      %1636 = vmatpush.msra.mxu0 %v1521
      %1637 = vmatpush.msra.mxu0 %v1520
      %1638 = vmatpush.msra.mxu0 %v1519
      %1639 = vmatpush.msra.mxu0 %v1518
      %1640 = vmatpush.msra.mxu0 %v1517
      %1641 = vmatpush.msra.mxu0 %v1516
      %1642 = vmatpush.msra.mxu0 %v1515
      %1643 = vmatpush.msra.mxu0 %v1514
      %1644 = vmatpush.msra.mxu0 %v1513
      %1645 = vmatpush.msra.mxu0 %v1512
      %1646 = vmatpush.msra.mxu0 %v1511
      %1647 = vmatmul.f32.gmra.mxu0 %v1364
      %v1648 = vpop.f32.mrf.mxu0
      %v1649 = vadd.f32 0.0, %v1648
      %1650 = vmatmul.f32.gmra.mxu0 %v1365
      %v1651 = vpop.f32.mrf.mxu0
      %v1652 = vadd.f32 0.0, %v1651
      %1653 = vmatmul.f32.gmra.mxu0 %v1366
      %v1654 = vpop.f32.mrf.mxu0
      %v1655 = vadd.f32 0.0, %v1654
      %1656 = vmatmul.f32.gmra.mxu0 %v1367
      %v1657 = vpop.f32.mrf.mxu0
      %v1658 = vadd.f32 0.0, %v1657
      %1659 = vmatmul.f32.gmra.mxu0 %v1368
      %v1660 = vpop.f32.mrf.mxu0
      %v1661 = vadd.f32 0.0, %v1660
      %1662 = vmatmul.f32.gmra.mxu0 %v1369
      %v1663 = vpop.f32.mrf.mxu0
      %v1664 = vadd.f32 0.0, %v1663
      %1665 = vmatmul.f32.gmra.mxu0 %v1370
      %v1666 = vpop.f32.mrf.mxu0
      %v1667 = vadd.f32 0.0, %v1666
      %1668 = vmatmul.f32.gmra.mxu0 %v1371
      %v1669 = vpop.f32.mrf.mxu0
      %v1670 = vadd.f32 0.0, %v1669
      %1671 = vmatmul.f32.gmra.mxu0 %v1372
      %v1672 = vpop.f32.mrf.mxu0
      %v1673 = vadd.f32 0.0, %v1672
      %1674 = vmatmul.f32.gmra.mxu0 %v1373
      %v1675 = vpop.f32.mrf.mxu0
      %v1676 = vadd.f32 0.0, %v1675
      %1677 = vmatmul.f32.gmra.mxu0 %v1374
      %v1678 = vpop.f32.mrf.mxu0
      %v1679 = vadd.f32 0.0, %v1678
      %1680 = vmatmul.f32.gmra.mxu0 %v1375
      %v1681 = vpop.f32.mrf.mxu0
      %v1682 = vadd.f32 0.0, %v1681
      %1683 = vmatmul.f32.gmra.mxu0 %v1376
      %v1684 = vpop.f32.mrf.mxu0
      %v1685 = vadd.f32 0.0, %v1684
      %1686 = vmatmul.f32.gmra.mxu0 %v1377
      %v1687 = vpop.f32.mrf.mxu0
      %v1688 = vadd.f32 0.0, %v1687
      %1689 = vmatmul.f32.gmra.mxu0 %v1378
      %v1690 = vpop.f32.mrf.mxu0
      %v1691 = vadd.f32 0.0, %v1690
      %1692 = vmatmul.f32.gmra.mxu0 %v1379
      %v1693 = vpop.f32.mrf.mxu0
      %v1694 = vadd.f32 0.0, %v1693
      %1695 = vmatmul.f32.gmra.mxu0 %v1380
      %v1696 = vpop.f32.mrf.mxu0
      %v1697 = vadd.f32 0.0, %v1696
      %1698 = vmatmul.f32.gmra.mxu0 %v1381
      %v1699 = vpop.f32.mrf.mxu0
      %v1700 = vadd.f32 0.0, %v1699
      %1701 = vmatmul.f32.gmra.mxu0 %v1382
      %v1702 = vpop.f32.mrf.mxu0
      %v1703 = vadd.f32 0.0, %v1702
      %1704 = vmatmul.f32.gmra.mxu0 %v1383
      %v1705 = vpop.f32.mrf.mxu0
      %v1706 = vadd.f32 0.0, %v1705
      %1707 = vmatmul.f32.gmra.mxu0 %v1384
      %v1708 = vpop.f32.mrf.mxu0
      %v1709 = vadd.f32 0.0, %v1708
      %1710 = vmatmul.f32.gmra.mxu0 %v1385
      %v1711 = vpop.f32.mrf.mxu0
      %v1712 = vadd.f32 0.0, %v1711
      %1713 = vmatmul.f32.gmra.mxu0 %v1386
      %v1714 = vpop.f32.mrf.mxu0
      %v1715 = vadd.f32 0.0, %v1714
      %1716 = vmatmul.f32.gmra.mxu0 %v1387
      %v1717 = vpop.f32.mrf.mxu0
      %v1718 = vadd.f32 0.0, %v1717
      %1719 = vmatmul.f32.gmra.mxu0 %v1388
      %v1720 = vpop.f32.mrf.mxu0
      %v1721 = vadd.f32 0.0, %v1720
      %1722 = vmatmul.f32.gmra.mxu0 %v1389
      %v1723 = vpop.f32.mrf.mxu0
      %v1724 = vadd.f32 0.0, %v1723
      %1725 = vmatmul.f32.gmra.mxu0 %v1390
      %v1726 = vpop.f32.mrf.mxu0
      %v1727 = vadd.f32 0.0, %v1726
      %1728 = vmatmul.f32.gmra.mxu0 %v1391
      %v1729 = vpop.f32.mrf.mxu0
      %v1730 = vadd.f32 0.0, %v1729
      %1731 = vmatmul.f32.gmra.mxu0 %v1392
      %v1732 = vpop.f32.mrf.mxu0
      %v1733 = vadd.f32 0.0, %v1732
      %1734 = vmatmul.f32.gmra.mxu0 %v1393
      %v1735 = vpop.f32.mrf.mxu0
      %v1736 = vadd.f32 0.0, %v1735
      %1737 = vmatmul.f32.gmra.mxu0 %v1506
      %v1738 = vpop.f32.mrf.mxu0
      %v1739 = vadd.f32 0.0, %v1738
      %1740 = vmatmul.f32.gmra.mxu0 %v1507
      %v1741 = vpop.f32.mrf.mxu0
      %v1742 = vadd.f32 0.0, %v1741
      %1743 = vdwg.mxu0
      %1744 = vmatpush.msra.mxu0 0.0
      %1745 = vmatpush.msra.mxu0 0.0
      %1746 = vmatpush.msra.mxu0 0.0
      %1747 = vmatpush.msra.mxu0 0.0
      %1748 = vmatpush.msra.mxu0 0.0
      %1749 = vmatpush.msra.mxu0 0.0
      %1750 = vmatpush.msra.mxu0 0.0
      %1751 = vmatpush.msra.mxu0 0.0
      %1752 = vmatpush.msra.mxu0 %v1534
      %1753 = vmatpush.msra.mxu0 %v1533
      %1754 = vmatpush.msra.mxu0 %v1532
      %1755 = vmatpush.msra.mxu0 %v1531
      %1756 = vmatpush.msra.mxu0 %v1530
      %1757 = vmatpush.msra.mxu0 %v1529
      %1758 = vmatpush.msra.mxu0 %v1528
      %1759 = vmatpush.msra.mxu0 %v1527
      %1760 = vmatmul.f32.gmra.mxu0 %v1536
      %v1761 = vpop.f32.mrf.mxu0
      %v1762 = vadd.f32 %v1649, %v1761
      %1763 = vmatmul.f32.gmra.mxu0 %v1539
      %v1764 = vpop.f32.mrf.mxu0
      %v1765 = vadd.f32 %v1652, %v1764
      %1766 = vmatmul.f32.gmra.mxu0 %v1542
      %v1767 = vpop.f32.mrf.mxu0
      %v1768 = vadd.f32 %v1655, %v1767
      %1769 = vmatmul.f32.gmra.mxu0 %v1545
      %v1770 = vpop.f32.mrf.mxu0
      %v1771 = vadd.f32 %v1658, %v1770
      %1772 = vmatmul.f32.gmra.mxu0 %v1548
      %v1773 = vpop.f32.mrf.mxu0
      %v1774 = vadd.f32 %v1661, %v1773
      %1775 = vmatmul.f32.gmra.mxu0 %v1551
      %v1776 = vpop.f32.mrf.mxu0
      %v1777 = vadd.f32 %v1664, %v1776
      %1778 = vmatmul.f32.gmra.mxu0 %v1554
      %v1779 = vpop.f32.mrf.mxu0
      %v1780 = vadd.f32 %v1667, %v1779
      %1781 = vmatmul.f32.gmra.mxu0 %v1557
      %v1782 = vpop.f32.mrf.mxu0
      %v1783 = vadd.f32 %v1670, %v1782
      %1784 = vmatmul.f32.gmra.mxu0 %v1560
      %v1785 = vpop.f32.mrf.mxu0
      %v1786 = vadd.f32 %v1673, %v1785
      %1787 = vmatmul.f32.gmra.mxu0 %v1563
      %v1788 = vpop.f32.mrf.mxu0
      %v1789 = vadd.f32 %v1676, %v1788
      %1790 = vmatmul.f32.gmra.mxu0 %v1566
      %v1791 = vpop.f32.mrf.mxu0
      %v1792 = vadd.f32 %v1679, %v1791
      %1793 = vmatmul.f32.gmra.mxu0 %v1569
      %v1794 = vpop.f32.mrf.mxu0
      %v1795 = vadd.f32 %v1682, %v1794
      %1796 = vmatmul.f32.gmra.mxu0 %v1572
      %v1797 = vpop.f32.mrf.mxu0
      %v1798 = vadd.f32 %v1685, %v1797
      %1799 = vmatmul.f32.gmra.mxu0 %v1575
      %v1800 = vpop.f32.mrf.mxu0
      %v1801 = vadd.f32 %v1688, %v1800
      %1802 = vmatmul.f32.gmra.mxu0 %v1578
      %v1803 = vpop.f32.mrf.mxu0
      %v1804 = vadd.f32 %v1691, %v1803
      %1805 = vmatmul.f32.gmra.mxu0 %v1581
      %v1806 = vpop.f32.mrf.mxu0
      %v1807 = vadd.f32 %v1694, %v1806
      %1808 = vmatmul.f32.gmra.mxu0 %v1584
      %v1809 = vpop.f32.mrf.mxu0
      %v1810 = vadd.f32 %v1697, %v1809
      %1811 = vmatmul.f32.gmra.mxu0 %v1587
      %v1812 = vpop.f32.mrf.mxu0
      %v1813 = vadd.f32 %v1700, %v1812
      %1814 = vmatmul.f32.gmra.mxu0 %v1590
      %v1815 = vpop.f32.mrf.mxu0
      %v1816 = vadd.f32 %v1703, %v1815
      %1817 = vmatmul.f32.gmra.mxu0 %v1593
      %v1818 = vpop.f32.mrf.mxu0
      %v1819 = vadd.f32 %v1706, %v1818
      %1820 = vmatmul.f32.gmra.mxu0 %v1596
      %v1821 = vpop.f32.mrf.mxu0
      %v1822 = vadd.f32 %v1709, %v1821
      %1823 = vmatmul.f32.gmra.mxu0 %v1599
      %v1824 = vpop.f32.mrf.mxu0
      %v1825 = vadd.f32 %v1712, %v1824
      %1826 = vmatmul.f32.gmra.mxu0 %v1602
      %v1827 = vpop.f32.mrf.mxu0
      %v1828 = vadd.f32 %v1715, %v1827
      %1829 = vmatmul.f32.gmra.mxu0 %v1605
      %v1830 = vpop.f32.mrf.mxu0
      %v1831 = vadd.f32 %v1718, %v1830
      %1832 = vmatmul.f32.gmra.mxu0 %v1608
      %v1833 = vpop.f32.mrf.mxu0
      %v1834 = vadd.f32 %v1721, %v1833
      %1835 = vmatmul.f32.gmra.mxu0 %v1611
      %v1836 = vpop.f32.mrf.mxu0
      %v1837 = vadd.f32 %v1724, %v1836
      %1838 = vmatmul.f32.gmra.mxu0 %v1614
      %v1839 = vpop.f32.mrf.mxu0
      %v1840 = vadd.f32 %v1727, %v1839
      %1841 = vmatmul.f32.gmra.mxu0 %v1617
      %v1842 = vpop.f32.mrf.mxu0
      %v1843 = vadd.f32 %v1730, %v1842
      %1844 = vmatmul.f32.gmra.mxu0 %v1620
      %v1845 = vpop.f32.mrf.mxu0
      %v1846 = vadd.f32 %v1733, %v1845
      %1847 = vmatmul.f32.gmra.mxu0 %v1623
      %v1848 = vpop.f32.mrf.mxu0
      %v1849 = vadd.f32 %v1736, %v1848
      %1850 = vmatmul.f32.gmra.mxu0 %v1626
      %v1851 = vpop.f32.mrf.mxu0
      %v1852 = vadd.f32 %v1739, %v1851
      %1853 = vmatmul.f32.gmra.mxu0 %v1629
      %v1854 = vpop.f32.mrf.mxu0
      %v1855 = vadd.f32 %v1742, %v1854
      %1856 = vdwg.mxu0
      %v1858 = vsel %vm1328, %v1394, 0
      %v1861 = vsel %vm1328, %v1395, 0
      %1863 = vmatpush.msra.mxu0 %v1441
      %1864 = vmatpush.msra.mxu0 %v1440
      %1865 = vmatpush.msra.mxu0 %v1439
      %1866 = vmatpush.msra.mxu0 %v1438
      %1867 = vmatpush.msra.mxu0 %v1437
      %1868 = vmatpush.msra.mxu0 %v1436
      %1869 = vmatpush.msra.mxu0 %v1435
      %1870 = vmatpush.msra.mxu0 %v1434
      %1871 = vmatpush.msra.mxu0 %v1433
      %1872 = vmatpush.msra.mxu0 %v1432
      %1873 = vmatpush.msra.mxu0 %v1431
      %1874 = vmatpush.msra.mxu0 %v1430
      %1875 = vmatpush.msra.mxu0 %v1429
      %1876 = vmatpush.msra.mxu0 %v1428
      %1877 = vmatpush.msra.mxu0 %v1427
      %1878 = vmatpush.msra.mxu0 %v1426
      %1879 = vmatmul.f32.gmra.mxu0 %v1362
      %v1880 = vpop.f32.mrf.mxu0
      %v1881 = vadd.f32 %v1762, %v1880
      %1882 = vmatmul.f32.gmra.mxu0 %v1363
      %v1883 = vpop.f32.mrf.mxu0
      %v1884 = vadd.f32 %v1765, %v1883
      %1885 = vmatmul.f32.gmra.mxu0 %v1364
      %v1886 = vpop.f32.mrf.mxu0
      %v1887 = vadd.f32 %v1768, %v1886
      %1888 = vmatmul.f32.gmra.mxu0 %v1365
      %v1889 = vpop.f32.mrf.mxu0
      %v1890 = vadd.f32 %v1771, %v1889
      %1891 = vmatmul.f32.gmra.mxu0 %v1366
      %v1892 = vpop.f32.mrf.mxu0
      %v1893 = vadd.f32 %v1774, %v1892
      %1894 = vmatmul.f32.gmra.mxu0 %v1367
      %v1895 = vpop.f32.mrf.mxu0
      %v1896 = vadd.f32 %v1777, %v1895
      %1897 = vmatmul.f32.gmra.mxu0 %v1368
      %v1898 = vpop.f32.mrf.mxu0
      %v1899 = vadd.f32 %v1780, %v1898
      %1900 = vmatmul.f32.gmra.mxu0 %v1369
      %v1901 = vpop.f32.mrf.mxu0
      %v1902 = vadd.f32 %v1783, %v1901
      %1903 = vmatmul.f32.gmra.mxu0 %v1370
      %v1904 = vpop.f32.mrf.mxu0
      %v1905 = vadd.f32 %v1786, %v1904
      %1906 = vmatmul.f32.gmra.mxu0 %v1371
      %v1907 = vpop.f32.mrf.mxu0
      %v1908 = vadd.f32 %v1789, %v1907
      %1909 = vmatmul.f32.gmra.mxu0 %v1372
      %v1910 = vpop.f32.mrf.mxu0
      %v1911 = vadd.f32 %v1792, %v1910
      %1912 = vmatmul.f32.gmra.mxu0 %v1373
      %v1913 = vpop.f32.mrf.mxu0
      %v1914 = vadd.f32 %v1795, %v1913
      %1915 = vmatmul.f32.gmra.mxu0 %v1374
      %v1916 = vpop.f32.mrf.mxu0
      %v1917 = vadd.f32 %v1798, %v1916
      %1918 = vmatmul.f32.gmra.mxu0 %v1375
      %v1919 = vpop.f32.mrf.mxu0
      %v1920 = vadd.f32 %v1801, %v1919
      %1921 = vmatmul.f32.gmra.mxu0 %v1376
      %v1922 = vpop.f32.mrf.mxu0
      %v1923 = vadd.f32 %v1804, %v1922
      %1924 = vmatmul.f32.gmra.mxu0 %v1377
      %v1925 = vpop.f32.mrf.mxu0
      %v1926 = vadd.f32 %v1807, %v1925
      %1927 = vmatmul.f32.gmra.mxu0 %v1378
      %v1928 = vpop.f32.mrf.mxu0
      %v1929 = vadd.f32 %v1810, %v1928
      %1930 = vmatmul.f32.gmra.mxu0 %v1379
      %v1931 = vpop.f32.mrf.mxu0
      %v1932 = vadd.f32 %v1813, %v1931
      %1933 = vmatmul.f32.gmra.mxu0 %v1380
      %v1934 = vpop.f32.mrf.mxu0
      %v1935 = vadd.f32 %v1816, %v1934
      %1936 = vmatmul.f32.gmra.mxu0 %v1381
      %v1937 = vpop.f32.mrf.mxu0
      %v1938 = vadd.f32 %v1819, %v1937
      %1939 = vmatmul.f32.gmra.mxu0 %v1382
      %v1940 = vpop.f32.mrf.mxu0
      %v1941 = vadd.f32 %v1822, %v1940
      %1942 = vmatmul.f32.gmra.mxu0 %v1383
      %v1943 = vpop.f32.mrf.mxu0
      %v1944 = vadd.f32 %v1825, %v1943
      %1945 = vmatmul.f32.gmra.mxu0 %v1384
      %v1946 = vpop.f32.mrf.mxu0
      %v1947 = vadd.f32 %v1828, %v1946
      %1948 = vmatmul.f32.gmra.mxu0 %v1385
      %v1949 = vpop.f32.mrf.mxu0
      %v1950 = vadd.f32 %v1831, %v1949
      %1951 = vmatmul.f32.gmra.mxu0 %v1386
      %v1952 = vpop.f32.mrf.mxu0
      %v1953 = vadd.f32 %v1834, %v1952
      %1954 = vmatmul.f32.gmra.mxu0 %v1387
      %v1955 = vpop.f32.mrf.mxu0
      %v1956 = vadd.f32 %v1837, %v1955
      %1957 = vmatmul.f32.gmra.mxu0 %v1388
      %v1958 = vpop.f32.mrf.mxu0
      %v1959 = vadd.f32 %v1840, %v1958
      %1960 = vmatmul.f32.gmra.mxu0 %v1389
      %v1961 = vpop.f32.mrf.mxu0
      %v1962 = vadd.f32 %v1843, %v1961
      %1963 = vmatmul.f32.gmra.mxu0 %v1390
      %v1964 = vpop.f32.mrf.mxu0
      %v1965 = vadd.f32 %v1846, %v1964
      %1966 = vmatmul.f32.gmra.mxu0 %v1391
      %v1967 = vpop.f32.mrf.mxu0
      %v1968 = vadd.f32 %v1849, %v1967
      %1969 = vmatmul.f32.gmra.mxu0 %v1392
      %v1970 = vpop.f32.mrf.mxu0
      %v1971 = vadd.f32 %v1852, %v1970
      %1972 = vmatmul.f32.gmra.mxu0 %v1393
      %v1973 = vpop.f32.mrf.mxu0
      %v1974 = vadd.f32 %v1855, %v1973
      %1975 = vdwg.mxu0
      %1976 = vmatpush.msra.mxu0 0.0
      %1977 = vmatpush.msra.mxu0 0.0
      %1978 = vmatpush.msra.mxu0 0.0
      %1979 = vmatpush.msra.mxu0 0.0
      %1980 = vmatpush.msra.mxu0 0.0
      %1981 = vmatpush.msra.mxu0 0.0
      %1982 = vmatpush.msra.mxu0 0.0
      %1983 = vmatpush.msra.mxu0 0.0
      %1984 = vmatpush.msra.mxu0 %v1449
      %1985 = vmatpush.msra.mxu0 %v1448
      %1986 = vmatpush.msra.mxu0 %v1447
      %1987 = vmatpush.msra.mxu0 %v1446
      %1988 = vmatpush.msra.mxu0 %v1445
      %1989 = vmatpush.msra.mxu0 %v1444
      %1990 = vmatpush.msra.mxu0 %v1443
      %1991 = vmatpush.msra.mxu0 %v1442
      %1992 = vmatmul.f32.gmra.mxu0 %v1858
      %v1993 = vpop.f32.mrf.mxu0
      %v1994 = vadd.f32 %v1881, %v1993
      %1995 = vmatmul.f32.gmra.mxu0 %v1861
      %v1996 = vpop.f32.mrf.mxu0
      %v1997 = vadd.f32 %v1884, %v1996
      %1998 = vmatmul.f32.gmra.mxu0 %v1536
      %v1999 = vpop.f32.mrf.mxu0
      %v2000 = vadd.f32 %v1887, %v1999
      %2001 = vmatmul.f32.gmra.mxu0 %v1539
      %v2002 = vpop.f32.mrf.mxu0
      %v2003 = vadd.f32 %v1890, %v2002
      %2004 = vmatmul.f32.gmra.mxu0 %v1542
      %v2005 = vpop.f32.mrf.mxu0
      %v2006 = vadd.f32 %v1893, %v2005
      %2007 = vmatmul.f32.gmra.mxu0 %v1545
      %v2008 = vpop.f32.mrf.mxu0
      %v2009 = vadd.f32 %v1896, %v2008
      %2010 = vmatmul.f32.gmra.mxu0 %v1548
      %v2011 = vpop.f32.mrf.mxu0
      %v2012 = vadd.f32 %v1899, %v2011
      %2013 = vmatmul.f32.gmra.mxu0 %v1551
      %v2014 = vpop.f32.mrf.mxu0
      %v2015 = vadd.f32 %v1902, %v2014
      %2016 = vmatmul.f32.gmra.mxu0 %v1554
      %v2017 = vpop.f32.mrf.mxu0
      %v2018 = vadd.f32 %v1905, %v2017
      %2019 = vmatmul.f32.gmra.mxu0 %v1557
      %v2020 = vpop.f32.mrf.mxu0
      %v2021 = vadd.f32 %v1908, %v2020
      %2022 = vmatmul.f32.gmra.mxu0 %v1560
      %v2023 = vpop.f32.mrf.mxu0
      %v2024 = vadd.f32 %v1911, %v2023
      %2025 = vmatmul.f32.gmra.mxu0 %v1563
      %v2026 = vpop.f32.mrf.mxu0
      %v2027 = vadd.f32 %v1914, %v2026
      %2028 = vmatmul.f32.gmra.mxu0 %v1566
      %v2029 = vpop.f32.mrf.mxu0
      %v2030 = vadd.f32 %v1917, %v2029
      %2031 = vmatmul.f32.gmra.mxu0 %v1569
      %v2032 = vpop.f32.mrf.mxu0
      %v2033 = vadd.f32 %v1920, %v2032
      %2034 = vmatmul.f32.gmra.mxu0 %v1572
      %v2035 = vpop.f32.mrf.mxu0
      %v2036 = vadd.f32 %v1923, %v2035
      %2037 = vmatmul.f32.gmra.mxu0 %v1575
      %v2038 = vpop.f32.mrf.mxu0
      %v2039 = vadd.f32 %v1926, %v2038
      %2040 = vmatmul.f32.gmra.mxu0 %v1578
      %v2041 = vpop.f32.mrf.mxu0
      %v2042 = vadd.f32 %v1929, %v2041
      %2043 = vmatmul.f32.gmra.mxu0 %v1581
      %v2044 = vpop.f32.mrf.mxu0
      %v2045 = vadd.f32 %v1932, %v2044
      %2046 = vmatmul.f32.gmra.mxu0 %v1584
      %v2047 = vpop.f32.mrf.mxu0
      %v2048 = vadd.f32 %v1935, %v2047
      %2049 = vmatmul.f32.gmra.mxu0 %v1587
      %v2050 = vpop.f32.mrf.mxu0
      %v2051 = vadd.f32 %v1938, %v2050
      %2052 = vmatmul.f32.gmra.mxu0 %v1590
      %v2053 = vpop.f32.mrf.mxu0
      %v2054 = vadd.f32 %v1941, %v2053
      %2055 = vmatmul.f32.gmra.mxu0 %v1593
      %v2056 = vpop.f32.mrf.mxu0
      %v2057 = vadd.f32 %v1944, %v2056
      %2058 = vmatmul.f32.gmra.mxu0 %v1596
      %v2059 = vpop.f32.mrf.mxu0
      %v2060 = vadd.f32 %v1947, %v2059
      %2061 = vmatmul.f32.gmra.mxu0 %v1599
      %v2062 = vpop.f32.mrf.mxu0
      %v2063 = vadd.f32 %v1950, %v2062
      %2064 = vmatmul.f32.gmra.mxu0 %v1602
      %v2065 = vpop.f32.mrf.mxu0
      %v2066 = vadd.f32 %v1953, %v2065
      %2067 = vmatmul.f32.gmra.mxu0 %v1605
      %v2068 = vpop.f32.mrf.mxu0
      %v2069 = vadd.f32 %v1956, %v2068
      %2070 = vmatmul.f32.gmra.mxu0 %v1608
      %v2071 = vpop.f32.mrf.mxu0
      %v2072 = vadd.f32 %v1959, %v2071
      %2073 = vmatmul.f32.gmra.mxu0 %v1611
      %v2074 = vpop.f32.mrf.mxu0
      %v2075 = vadd.f32 %v1962, %v2074
      %2076 = vmatmul.f32.gmra.mxu0 %v1614
      %v2077 = vpop.f32.mrf.mxu0
      %v2078 = vadd.f32 %v1965, %v2077
      %2079 = vmatmul.f32.gmra.mxu0 %v1617
      %v2080 = vpop.f32.mrf.mxu0
      %v2081 = vadd.f32 %v1968, %v2080
      %2082 = vmatmul.f32.gmra.mxu0 %v1620
      %v2083 = vpop.f32.mrf.mxu0
      %v2084 = vadd.f32 %v1971, %v2083
      %2085 = vmatmul.f32.gmra.mxu0 %v1623
      %v2086 = vpop.f32.mrf.mxu0
      %v2087 = vadd.f32 %v1974, %v2086
      %2088 = vdwg.mxu0
      %v2092 = vrot.slane %v404, 1
      %v2093 = vrot.slane %v405, 1
      %v2094 = vsel %vm509, %v2092, %v2093
      %v2095 = vrot.slane %v406, 1
      %v2096 = vsel %vm509, %v2093, %v2095
      %v2097 = vrot.slane %v404, 2
      %v2098 = vrot.slane %v405, 2
      %v2099 = vsel %vm590, %v2097, %v2098
      %v2100 = vrot.slane %v406, 2
      %v2101 = vsel %vm590, %v2098, %v2100
      %v2105 = vrot.slane %v458, 1
      %v2106 = vrot.slane %v459, 1
      %v2107 = vsel %vm509, %v2105, %v2106
      %v2108 = vrot.slane %v460, 1
      %v2109 = vsel %vm509, %v2106, %v2108
      %v2112 = vrot.slane %v458, 2
      %v2113 = vrot.slane %v459, 2
      %v2114 = vsel %vm590, %v2112, %v2113
      %v2115 = vrot.slane %v460, 2
      %v2116 = vsel %vm590, %v2113, %v2115
      %2117 = vrot.lane.b32.xlu0 %v2094, 32
      %v2118 = vpop.permute.xlu0 %2117
      %2119 = vrot.lane.b32.xlu0 %v2096, 32
      %v2120 = vpop.permute.xlu0 %2119
      %2123 = vrot.lane.b32.xlu0 %v2099, 64
      %v2124 = vpop.permute.xlu0 %2123
      %2125 = vrot.lane.b32.xlu0 %v2101, 64
      %v2126 = vpop.permute.xlu0 %2125
      %2129 = vrot.lane.b32.xlu0 %v458, 96
      %v2130 = vpop.permute.xlu0 %2129
      %2131 = vrot.lane.b32.xlu0 %v459, 96
      %v2132 = vpop.permute.xlu0 %2131
      %2135 = vrot.lane.b32.xlu0 %v2114, 32
      %v2136 = vpop.permute.xlu0 %2135
      %2137 = vrot.lane.b32.xlu0 %v2116, 32
      %v2138 = vpop.permute.xlu0 %2137
      %v2141 = vsel %vm1295, %v404, %v2118
      %v2142 = vsel %vm1295, %v405, %v2120
      %v2143 = vsel %vm1328, %v2141, %v2124
      %v2144 = vsel %vm1328, %v2142, %v2126
      %v2145 = vsel %vm1361, %v2143, %v2130
      %v2146 = vsel %vm1361, %v2144, %v2132
      %v2147 = vsel %vm1295, %v2107, %v2136
      %v2148 = vsel %vm1295, %v2109, %v2138
      %s2149 = scalar_lea.vmem %s1, 384
      %v2150 = vld [vmem:[%s2149] sm:$0xff]
      %v2151 = vld [vmem:[%s2149 + $0x8] sm:$0xff]
      %v2152 = vld [vmem:[%s2149 + $0x10] sm:$0xff]
      %v2153 = vld [vmem:[%s2149 + $0x18] sm:$0xff]
      %v2154 = vld [vmem:[%s2149 + $0x20] sm:$0xff]
      %v2155 = vld [vmem:[%s2149 + $0x28] sm:$0xff]
      %v2156 = vld [vmem:[%s2149 + $0x30] sm:$0xff]
      %v2157 = vld [vmem:[%s2149 + $0x38] sm:$0xff]
      %v2158 = vld [vmem:[%s2149 + $0x40] sm:$0xff]
      %v2159 = vld [vmem:[%s2149 + $0x48] sm:$0xff]
      %v2160 = vld [vmem:[%s2149 + $0x50] sm:$0xff]
      %v2161 = vld [vmem:[%s2149 + $0x58] sm:$0xff]
      %v2162 = vld [vmem:[%s2149 + $0x60] sm:$0xff]
      %v2163 = vld [vmem:[%s2149 + $0x68] sm:$0xff]
      %v2164 = vld [vmem:[%s2149 + $0x70] sm:$0xff]
      %v2165 = vld [vmem:[%s2149 + $0x78] sm:$0xff]
      %v2166 = vld [vmem:[%s2149 + $0x80] sm:$0xff]
      %v2167 = vld [vmem:[%s2149 + $0x88] sm:$0xff]
      %v2168 = vld [vmem:[%s2149 + $0x90] sm:$0xff]
      %v2169 = vld [vmem:[%s2149 + $0x98] sm:$0xff]
      %v2170 = vld [vmem:[%s2149 + $0xa0] sm:$0xff]
      %v2171 = vld [vmem:[%s2149 + $0xa8] sm:$0xff]
      %v2172 = vld [vmem:[%s2149 + $0xb0] sm:$0xff]
      %v2173 = vld [vmem:[%s2149 + $0xb8] sm:$0xff]
      %v2175 = vsel %vm1328, %v2147, 0
      %v2178 = vsel %vm1328, %v2148, 0
      %2180 = vmatpush.msra.mxu0 %v2165
      %2181 = vmatpush.msra.mxu0 %v2164
      %2182 = vmatpush.msra.mxu0 %v2163
      %2183 = vmatpush.msra.mxu0 %v2162
      %2184 = vmatpush.msra.mxu0 %v2161
      %2185 = vmatpush.msra.mxu0 %v2160
      %2186 = vmatpush.msra.mxu0 %v2159
      %2187 = vmatpush.msra.mxu0 %v2158
      %2188 = vmatpush.msra.mxu0 %v2157
      %2189 = vmatpush.msra.mxu0 %v2156
      %2190 = vmatpush.msra.mxu0 %v2155
      %2191 = vmatpush.msra.mxu0 %v2154
      %2192 = vmatpush.msra.mxu0 %v2153
      %2193 = vmatpush.msra.mxu0 %v2152
      %2194 = vmatpush.msra.mxu0 %v2151
      %2195 = vmatpush.msra.mxu0 %v2150
      %2196 = vmatmul.f32.gmra.mxu0 %v1366
      %v2197 = vpop.f32.mrf.mxu0
      %v2198 = vadd.f32 0.0, %v2197
      %2199 = vmatmul.f32.gmra.mxu0 %v1367
      %v2200 = vpop.f32.mrf.mxu0
      %v2201 = vadd.f32 0.0, %v2200
      %2202 = vmatmul.f32.gmra.mxu0 %v1368
      %v2203 = vpop.f32.mrf.mxu0
      %v2204 = vadd.f32 0.0, %v2203
      %2205 = vmatmul.f32.gmra.mxu0 %v1369
      %v2206 = vpop.f32.mrf.mxu0
      %v2207 = vadd.f32 0.0, %v2206
      %2208 = vmatmul.f32.gmra.mxu0 %v1370
      %v2209 = vpop.f32.mrf.mxu0
      %v2210 = vadd.f32 0.0, %v2209
      %2211 = vmatmul.f32.gmra.mxu0 %v1371
      %v2212 = vpop.f32.mrf.mxu0
      %v2213 = vadd.f32 0.0, %v2212
      %2214 = vmatmul.f32.gmra.mxu0 %v1372
      %v2215 = vpop.f32.mrf.mxu0
      %v2216 = vadd.f32 0.0, %v2215
      %2217 = vmatmul.f32.gmra.mxu0 %v1373
      %v2218 = vpop.f32.mrf.mxu0
      %v2219 = vadd.f32 0.0, %v2218
      %2220 = vmatmul.f32.gmra.mxu0 %v1374
      %v2221 = vpop.f32.mrf.mxu0
      %v2222 = vadd.f32 0.0, %v2221
      %2223 = vmatmul.f32.gmra.mxu0 %v1375
      %v2224 = vpop.f32.mrf.mxu0
      %v2225 = vadd.f32 0.0, %v2224
      %2226 = vmatmul.f32.gmra.mxu0 %v1376
      %v2227 = vpop.f32.mrf.mxu0
      %v2228 = vadd.f32 0.0, %v2227
      %2229 = vmatmul.f32.gmra.mxu0 %v1377
      %v2230 = vpop.f32.mrf.mxu0
      %v2231 = vadd.f32 0.0, %v2230
      %2232 = vmatmul.f32.gmra.mxu0 %v1378
      %v2233 = vpop.f32.mrf.mxu0
      %v2234 = vadd.f32 0.0, %v2233
      %2235 = vmatmul.f32.gmra.mxu0 %v1379
      %v2236 = vpop.f32.mrf.mxu0
      %v2237 = vadd.f32 0.0, %v2236
      %2238 = vmatmul.f32.gmra.mxu0 %v1380
      %v2239 = vpop.f32.mrf.mxu0
      %v2240 = vadd.f32 0.0, %v2239
      %2241 = vmatmul.f32.gmra.mxu0 %v1381
      %v2242 = vpop.f32.mrf.mxu0
      %v2243 = vadd.f32 0.0, %v2242
      %2244 = vmatmul.f32.gmra.mxu0 %v1382
      %v2245 = vpop.f32.mrf.mxu0
      %v2246 = vadd.f32 0.0, %v2245
      %2247 = vmatmul.f32.gmra.mxu0 %v1383
      %v2248 = vpop.f32.mrf.mxu0
      %v2249 = vadd.f32 0.0, %v2248
      %2250 = vmatmul.f32.gmra.mxu0 %v1384
      %v2251 = vpop.f32.mrf.mxu0
      %v2252 = vadd.f32 0.0, %v2251
      %2253 = vmatmul.f32.gmra.mxu0 %v1385
      %v2254 = vpop.f32.mrf.mxu0
      %v2255 = vadd.f32 0.0, %v2254
      %2256 = vmatmul.f32.gmra.mxu0 %v1386
      %v2257 = vpop.f32.mrf.mxu0
      %v2258 = vadd.f32 0.0, %v2257
      %2259 = vmatmul.f32.gmra.mxu0 %v1387
      %v2260 = vpop.f32.mrf.mxu0
      %v2261 = vadd.f32 0.0, %v2260
      %2262 = vmatmul.f32.gmra.mxu0 %v1388
      %v2263 = vpop.f32.mrf.mxu0
      %v2264 = vadd.f32 0.0, %v2263
      %2265 = vmatmul.f32.gmra.mxu0 %v1389
      %v2266 = vpop.f32.mrf.mxu0
      %v2267 = vadd.f32 0.0, %v2266
      %2268 = vmatmul.f32.gmra.mxu0 %v1390
      %v2269 = vpop.f32.mrf.mxu0
      %v2270 = vadd.f32 0.0, %v2269
      %2271 = vmatmul.f32.gmra.mxu0 %v1391
      %v2272 = vpop.f32.mrf.mxu0
      %v2273 = vadd.f32 0.0, %v2272
      %2274 = vmatmul.f32.gmra.mxu0 %v1392
      %v2275 = vpop.f32.mrf.mxu0
      %v2276 = vadd.f32 0.0, %v2275
      %2277 = vmatmul.f32.gmra.mxu0 %v1393
      %v2278 = vpop.f32.mrf.mxu0
      %v2279 = vadd.f32 0.0, %v2278
      %2280 = vmatmul.f32.gmra.mxu0 %v1506
      %v2281 = vpop.f32.mrf.mxu0
      %v2282 = vadd.f32 0.0, %v2281
      %2283 = vmatmul.f32.gmra.mxu0 %v1507
      %v2284 = vpop.f32.mrf.mxu0
      %v2285 = vadd.f32 0.0, %v2284
      %2286 = vmatmul.f32.gmra.mxu0 %v2145
      %v2287 = vpop.f32.mrf.mxu0
      %v2288 = vadd.f32 0.0, %v2287
      %2289 = vmatmul.f32.gmra.mxu0 %v2146
      %v2290 = vpop.f32.mrf.mxu0
      %v2291 = vadd.f32 0.0, %v2290
      %2292 = vdwg.mxu0
      %2293 = vmatpush.msra.mxu0 0.0
      %2294 = vmatpush.msra.mxu0 0.0
      %2295 = vmatpush.msra.mxu0 0.0
      %2296 = vmatpush.msra.mxu0 0.0
      %2297 = vmatpush.msra.mxu0 0.0
      %2298 = vmatpush.msra.mxu0 0.0
      %2299 = vmatpush.msra.mxu0 0.0
      %2300 = vmatpush.msra.mxu0 0.0
      %2301 = vmatpush.msra.mxu0 %v2173
      %2302 = vmatpush.msra.mxu0 %v2172
      %2303 = vmatpush.msra.mxu0 %v2171
      %2304 = vmatpush.msra.mxu0 %v2170
      %2305 = vmatpush.msra.mxu0 %v2169
      %2306 = vmatpush.msra.mxu0 %v2168
      %2307 = vmatpush.msra.mxu0 %v2167
      %2308 = vmatpush.msra.mxu0 %v2166
      %2309 = vmatmul.f32.gmra.mxu0 %v1542
      %v2310 = vpop.f32.mrf.mxu0
      %v2311 = vadd.f32 %v2198, %v2310
      %2312 = vmatmul.f32.gmra.mxu0 %v1545
      %v2313 = vpop.f32.mrf.mxu0
      %v2314 = vadd.f32 %v2201, %v2313
      %2315 = vmatmul.f32.gmra.mxu0 %v1548
      %v2316 = vpop.f32.mrf.mxu0
      %v2317 = vadd.f32 %v2204, %v2316
      %2318 = vmatmul.f32.gmra.mxu0 %v1551
      %v2319 = vpop.f32.mrf.mxu0
      %v2320 = vadd.f32 %v2207, %v2319
      %2321 = vmatmul.f32.gmra.mxu0 %v1554
      %v2322 = vpop.f32.mrf.mxu0
      %v2323 = vadd.f32 %v2210, %v2322
      %2324 = vmatmul.f32.gmra.mxu0 %v1557
      %v2325 = vpop.f32.mrf.mxu0
      %v2326 = vadd.f32 %v2213, %v2325
      %2327 = vmatmul.f32.gmra.mxu0 %v1560
      %v2328 = vpop.f32.mrf.mxu0
      %v2329 = vadd.f32 %v2216, %v2328
      %2330 = vmatmul.f32.gmra.mxu0 %v1563
      %v2331 = vpop.f32.mrf.mxu0
      %v2332 = vadd.f32 %v2219, %v2331
      %2333 = vmatmul.f32.gmra.mxu0 %v1566
      %v2334 = vpop.f32.mrf.mxu0
      %v2335 = vadd.f32 %v2222, %v2334
      %2336 = vmatmul.f32.gmra.mxu0 %v1569
      %v2337 = vpop.f32.mrf.mxu0
      %v2338 = vadd.f32 %v2225, %v2337
      %2339 = vmatmul.f32.gmra.mxu0 %v1572
      %v2340 = vpop.f32.mrf.mxu0
      %v2341 = vadd.f32 %v2228, %v2340
      %2342 = vmatmul.f32.gmra.mxu0 %v1575
      %v2343 = vpop.f32.mrf.mxu0
      %v2344 = vadd.f32 %v2231, %v2343
      %2345 = vmatmul.f32.gmra.mxu0 %v1578
      %v2346 = vpop.f32.mrf.mxu0
      %v2347 = vadd.f32 %v2234, %v2346
      %2348 = vmatmul.f32.gmra.mxu0 %v1581
      %v2349 = vpop.f32.mrf.mxu0
      %v2350 = vadd.f32 %v2237, %v2349
      %2351 = vmatmul.f32.gmra.mxu0 %v1584
      %v2352 = vpop.f32.mrf.mxu0
      %v2353 = vadd.f32 %v2240, %v2352
      %2354 = vmatmul.f32.gmra.mxu0 %v1587
      %v2355 = vpop.f32.mrf.mxu0
      %v2356 = vadd.f32 %v2243, %v2355
      %2357 = vmatmul.f32.gmra.mxu0 %v1590
      %v2358 = vpop.f32.mrf.mxu0
      %v2359 = vadd.f32 %v2246, %v2358
      %2360 = vmatmul.f32.gmra.mxu0 %v1593
      %v2361 = vpop.f32.mrf.mxu0
      %v2362 = vadd.f32 %v2249, %v2361
      %2363 = vmatmul.f32.gmra.mxu0 %v1596
      %v2364 = vpop.f32.mrf.mxu0
      %v2365 = vadd.f32 %v2252, %v2364
      %2366 = vmatmul.f32.gmra.mxu0 %v1599
      %v2367 = vpop.f32.mrf.mxu0
      %v2368 = vadd.f32 %v2255, %v2367
      %2369 = vmatmul.f32.gmra.mxu0 %v1602
      %v2370 = vpop.f32.mrf.mxu0
      %v2371 = vadd.f32 %v2258, %v2370
      %2372 = vmatmul.f32.gmra.mxu0 %v1605
      %v2373 = vpop.f32.mrf.mxu0
      %v2374 = vadd.f32 %v2261, %v2373
      %2375 = vmatmul.f32.gmra.mxu0 %v1608
      %v2376 = vpop.f32.mrf.mxu0
      %v2377 = vadd.f32 %v2264, %v2376
      %2378 = vmatmul.f32.gmra.mxu0 %v1611
      %v2379 = vpop.f32.mrf.mxu0
      %v2380 = vadd.f32 %v2267, %v2379
      %2381 = vmatmul.f32.gmra.mxu0 %v1614
      %v2382 = vpop.f32.mrf.mxu0
      %v2383 = vadd.f32 %v2270, %v2382
      %2384 = vmatmul.f32.gmra.mxu0 %v1617
      %v2385 = vpop.f32.mrf.mxu0
      %v2386 = vadd.f32 %v2273, %v2385
      %2387 = vmatmul.f32.gmra.mxu0 %v1620
      %v2388 = vpop.f32.mrf.mxu0
      %v2389 = vadd.f32 %v2276, %v2388
      %2390 = vmatmul.f32.gmra.mxu0 %v1623
      %v2391 = vpop.f32.mrf.mxu0
      %v2392 = vadd.f32 %v2279, %v2391
      %2393 = vmatmul.f32.gmra.mxu0 %v1626
      %v2394 = vpop.f32.mrf.mxu0
      %v2395 = vadd.f32 %v2282, %v2394
      %2396 = vmatmul.f32.gmra.mxu0 %v1629
      %v2397 = vpop.f32.mrf.mxu0
      %v2398 = vadd.f32 %v2285, %v2397
      %2399 = vmatmul.f32.gmra.mxu0 %v2175
      %v2400 = vpop.f32.mrf.mxu0
      %v2401 = vadd.f32 %v2288, %v2400
      %2402 = vmatmul.f32.gmra.mxu0 %v2178
      %v2403 = vpop.f32.mrf.mxu0
      %v2404 = vadd.f32 %v2291, %v2403
      %2405 = vdwg.mxu0
      %v2406 = vadd.f32 %v1994, %v2311
      %v2407 = vadd.f32 %v1997, %v2314
      %v2408 = vadd.f32 %v2000, %v2317
      %v2409 = vadd.f32 %v2003, %v2320
      %v2410 = vadd.f32 %v2006, %v2323
      %v2411 = vadd.f32 %v2009, %v2326
      %v2412 = vadd.f32 %v2012, %v2329
      %v2413 = vadd.f32 %v2015, %v2332
      %v2414 = vadd.f32 %v2018, %v2335
      %v2415 = vadd.f32 %v2021, %v2338
      %v2416 = vadd.f32 %v2024, %v2341
      %v2417 = vadd.f32 %v2027, %v2344
      %v2418 = vadd.f32 %v2030, %v2347
      %v2419 = vadd.f32 %v2033, %v2350
      %v2420 = vadd.f32 %v2036, %v2353
      %v2421 = vadd.f32 %v2039, %v2356
      %v2422 = vadd.f32 %v2042, %v2359
      %v2423 = vadd.f32 %v2045, %v2362
      %v2424 = vadd.f32 %v2048, %v2365
      %v2425 = vadd.f32 %v2051, %v2368
      %v2426 = vadd.f32 %v2054, %v2371
      %v2427 = vadd.f32 %v2057, %v2374
      %v2428 = vadd.f32 %v2060, %v2377
      %v2429 = vadd.f32 %v2063, %v2380
      %v2430 = vadd.f32 %v2066, %v2383
      %v2431 = vadd.f32 %v2069, %v2386
      %v2432 = vadd.f32 %v2072, %v2389
      %v2433 = vadd.f32 %v2075, %v2392
      %v2434 = vadd.f32 %v2078, %v2395
      %v2435 = vadd.f32 %v2081, %v2398
      %v2436 = vadd.f32 %v2084, %v2401
      %v2437 = vadd.f32 %v2087, %v2404
      %v2438 = vld [vmem:[%s2] sm:$0x1]
      %v2440 = vperm.slane %v2438, 0
      %v2442 = vadd.f32 %v2406, %v2440
      %v2443 = vadd.f32 %v2407, %v2440
      %v2444 = vadd.f32 %v2408, %v2440
      %v2445 = vadd.f32 %v2409, %v2440
      %v2446 = vadd.f32 %v2410, %v2440
      %v2447 = vadd.f32 %v2411, %v2440
      %v2448 = vadd.f32 %v2412, %v2440
      %v2449 = vadd.f32 %v2413, %v2440
      %v2450 = vadd.f32 %v2414, %v2440
      %v2451 = vadd.f32 %v2415, %v2440
      %v2452 = vadd.f32 %v2416, %v2440
      %v2453 = vadd.f32 %v2417, %v2440
      %v2454 = vadd.f32 %v2418, %v2440
      %v2455 = vadd.f32 %v2419, %v2440
      %v2456 = vadd.f32 %v2420, %v2440
      %v2457 = vadd.f32 %v2421, %v2440
      %v2458 = vadd.f32 %v2422, %v2440
      %v2459 = vadd.f32 %v2423, %v2440
      %v2460 = vadd.f32 %v2424, %v2440
      %v2461 = vadd.f32 %v2425, %v2440
      %v2462 = vadd.f32 %v2426, %v2440
      %v2463 = vadd.f32 %v2427, %v2440
      %v2464 = vadd.f32 %v2428, %v2440
      %v2465 = vadd.f32 %v2429, %v2440
      %v2466 = vadd.f32 %v2430, %v2440
      %v2467 = vadd.f32 %v2431, %v2440
      %v2468 = vadd.f32 %v2432, %v2440
      %v2469 = vadd.f32 %v2433, %v2440
      %v2470 = vadd.f32 %v2434, %v2440
      %v2471 = vadd.f32 %v2435, %v2440
      %v2472 = vadd.f32 %v2436, %v2440
      %v2473 = vadd.f32 %v2437, %v2440
      %v2474 = vlaneseq
      %v2475 = vand.u32 %v2474, 127
      %vm2476 = vcmp.lt.s32.totalorder %v2475, 96
      %v2477 = vxor.u32 %v2442, 2147483648
      %v2478 = vxor.u32 %v2443, 2147483648
      %v2479 = vxor.u32 %v2444, 2147483648
      %v2480 = vxor.u32 %v2445, 2147483648
      %v2481 = vxor.u32 %v2446, 2147483648
      %v2482 = vxor.u32 %v2447, 2147483648
      %v2483 = vxor.u32 %v2448, 2147483648
      %v2484 = vxor.u32 %v2449, 2147483648
      %v2485 = vxor.u32 %v2450, 2147483648
      %v2486 = vxor.u32 %v2451, 2147483648
      %v2487 = vxor.u32 %v2452, 2147483648
      %v2488 = vxor.u32 %v2453, 2147483648
      %v2489 = vxor.u32 %v2454, 2147483648
      %v2490 = vxor.u32 %v2455, 2147483648
      %v2491 = vxor.u32 %v2456, 2147483648
      %v2492 = vxor.u32 %v2457, 2147483648
      %v2493 = vxor.u32 %v2458, 2147483648
      %v2494 = vxor.u32 %v2459, 2147483648
      %v2495 = vxor.u32 %v2460, 2147483648
      %v2496 = vxor.u32 %v2461, 2147483648
      %v2497 = vxor.u32 %v2462, 2147483648
      %v2498 = vxor.u32 %v2463, 2147483648
      %v2499 = vxor.u32 %v2464, 2147483648
      %v2500 = vxor.u32 %v2465, 2147483648
      %v2501 = vxor.u32 %v2466, 2147483648
      %v2502 = vxor.u32 %v2467, 2147483648
      %v2503 = vxor.u32 %v2468, 2147483648
      %v2504 = vxor.u32 %v2469, 2147483648
      %v2505 = vxor.u32 %v2470, 2147483648
      %v2506 = vxor.u32 %v2471, 2147483648
      %v2507 = vxor.u32 %v2472, 2147483648
      %v2508 = vxor.u32 %v2473, 2147483648
      %v2509 = vmul.f32 %v2477, 1.442695
      %v2510 = vpow.pop %v2509
      %v2511 = vmul.f32 %v2478, 1.442695
      %v2512 = vpow.pop %v2511
      %v2513 = vmul.f32 %v2479, 1.442695
      %v2514 = vpow.pop %v2513
      %v2515 = vmul.f32 %v2480, 1.442695
      %v2516 = vpow.pop %v2515
      %v2517 = vmul.f32 %v2481, 1.442695
      %v2518 = vpow.pop %v2517
      %v2519 = vmul.f32 %v2482, 1.442695
      %v2520 = vpow.pop %v2519
      %v2521 = vmul.f32 %v2483, 1.442695
      %v2522 = vpow.pop %v2521
      %v2523 = vmul.f32 %v2484, 1.442695
      %v2524 = vpow.pop %v2523
      %v2525 = vmul.f32 %v2485, 1.442695
      %v2526 = vpow.pop %v2525
      %v2527 = vmul.f32 %v2486, 1.442695
      %v2528 = vpow.pop %v2527
      %v2529 = vmul.f32 %v2487, 1.442695
      %v2530 = vpow.pop %v2529
      %v2531 = vmul.f32 %v2488, 1.442695
      %v2532 = vpow.pop %v2531
      %v2533 = vmul.f32 %v2489, 1.442695
      %v2534 = vpow.pop %v2533
      %v2535 = vmul.f32 %v2490, 1.442695
      %v2536 = vpow.pop %v2535
      %v2537 = vmul.f32 %v2491, 1.442695
      %v2538 = vpow.pop %v2537
      %v2539 = vmul.f32 %v2492, 1.442695
      %v2540 = vpow.pop %v2539
      %v2541 = vmul.f32 %v2493, 1.442695
      %v2542 = vpow.pop %v2541
      %v2543 = vmul.f32 %v2494, 1.442695
      %v2544 = vpow.pop %v2543
      %v2545 = vmul.f32 %v2495, 1.442695
      %v2546 = vpow.pop %v2545
      %v2547 = vmul.f32 %v2496, 1.442695
      %v2548 = vpow.pop %v2547
      %v2549 = vmul.f32 %v2497, 1.442695
      %v2550 = vpow.pop %v2549
      %v2551 = vmul.f32 %v2498, 1.442695
      %v2552 = vpow.pop %v2551
      %v2553 = vmul.f32 %v2499, 1.442695
      %v2554 = vpow.pop %v2553
      %v2555 = vmul.f32 %v2500, 1.442695
      %v2556 = vpow.pop %v2555
      %v2557 = vmul.f32 %v2501, 1.442695
      %v2558 = vpow.pop %v2557
      %v2559 = vmul.f32 %v2502, 1.442695
      %v2560 = vpow.pop %v2559
      %v2561 = vmul.f32 %v2503, 1.442695
      %v2562 = vpow.pop %v2561
      %v2563 = vmul.f32 %v2504, 1.442695
      %v2564 = vpow.pop %v2563
      %v2565 = vmul.f32 %v2505, 1.442695
      %v2566 = vpow.pop %v2565
      %v2567 = vmul.f32 %v2506, 1.442695
      %v2568 = vpow.pop %v2567
      %v2569 = vmul.f32 %v2507, 1.442695
      %v2570 = vpow.pop %v2569
      %v2571 = vmul.f32 %v2508, 1.442695
      %v2572 = vpow.pop %v2571
      %v2573 = vadd.f32 %v2510, 1.0
      %v2574 = vadd.f32 %v2512, 1.0
      %v2575 = vadd.f32 %v2514, 1.0
      %v2576 = vadd.f32 %v2516, 1.0
      %v2577 = vadd.f32 %v2518, 1.0
      %v2578 = vadd.f32 %v2520, 1.0
      %v2579 = vadd.f32 %v2522, 1.0
      %v2580 = vadd.f32 %v2524, 1.0
      %v2581 = vadd.f32 %v2526, 1.0
      %v2582 = vadd.f32 %v2528, 1.0
      %v2583 = vadd.f32 %v2530, 1.0
      %v2584 = vadd.f32 %v2532, 1.0
      %v2585 = vadd.f32 %v2534, 1.0
      %v2586 = vadd.f32 %v2536, 1.0
      %v2587 = vadd.f32 %v2538, 1.0
      %v2588 = vadd.f32 %v2540, 1.0
      %v2589 = vadd.f32 %v2542, 1.0
      %v2590 = vadd.f32 %v2544, 1.0
      %v2591 = vadd.f32 %v2546, 1.0
      %v2592 = vadd.f32 %v2548, 1.0
      %v2593 = vadd.f32 %v2550, 1.0
      %v2594 = vadd.f32 %v2552, 1.0
      %v2595 = vadd.f32 %v2554, 1.0
      %v2596 = vadd.f32 %v2556, 1.0
      %v2597 = vadd.f32 %v2558, 1.0
      %v2598 = vadd.f32 %v2560, 1.0
      %v2599 = vadd.f32 %v2562, 1.0
      %v2600 = vadd.f32 %v2564, 1.0
      %v2601 = vadd.f32 %v2566, 1.0
      %v2602 = vadd.f32 %v2568, 1.0
      %v2603 = vadd.f32 %v2570, 1.0
      %v2604 = vadd.f32 %v2572, 1.0
      %v2605 = vrcp.pop %v2573
      %v2606 = vmul.f32 %v2573, %v2605
      %v2607 = vsub.f32 1.0, %v2606
      %v2608 = vmul.f32 %v2605, %v2607
      %v2609 = vadd.f32 %v2605, %v2608
      %vm2610 = vweird.f32 %v2573
      %vm2611 = vweird.f32 %v2605
      %vm2612 = vmor %vm2610, %vm2611
      %v2613 = vsel %vm2612, %v2605, %v2609
      %v2614 = vand.u32 2147483647, %v2573
      %vm2615 = vcmp.eq.f32.partialorder %v2614, 8.507059e+37
      %v2616 = vand.u32 %v2573, 2147483648
      %v2617 = vor.u32 1.1754944e-38, %v2616
      %v2618 = vsel %vm2615, %v2617, %v2613
      %v2619 = vmul.f32 1.0, %v2618
      %v2620 = vrcp.pop %v2574
      %v2621 = vmul.f32 %v2574, %v2620
      %v2622 = vsub.f32 1.0, %v2621
      %v2623 = vmul.f32 %v2620, %v2622
      %v2624 = vadd.f32 %v2620, %v2623
      %vm2625 = vweird.f32 %v2574
      %vm2626 = vweird.f32 %v2620
      %vm2627 = vmor %vm2625, %vm2626
      %v2628 = vsel %vm2627, %v2620, %v2624
      %v2629 = vand.u32 2147483647, %v2574
      %vm2630 = vcmp.eq.f32.partialorder %v2629, 8.507059e+37
      %v2631 = vand.u32 %v2574, 2147483648
      %v2632 = vor.u32 1.1754944e-38, %v2631
      %v2633 = vsel %vm2630, %v2632, %v2628
      %v2634 = vmul.f32 1.0, %v2633
      %v2635 = vrcp.pop %v2575
      %v2636 = vmul.f32 %v2575, %v2635
      %v2637 = vsub.f32 1.0, %v2636
      %v2638 = vmul.f32 %v2635, %v2637
      %v2639 = vadd.f32 %v2635, %v2638
      %vm2640 = vweird.f32 %v2575
      %vm2641 = vweird.f32 %v2635
      %vm2642 = vmor %vm2640, %vm2641
      %v2643 = vsel %vm2642, %v2635, %v2639
      %v2644 = vand.u32 2147483647, %v2575
      %vm2645 = vcmp.eq.f32.partialorder %v2644, 8.507059e+37
      %v2646 = vand.u32 %v2575, 2147483648
      %v2647 = vor.u32 1.1754944e-38, %v2646
      %v2648 = vsel %vm2645, %v2647, %v2643
      %v2649 = vmul.f32 1.0, %v2648
      %v2650 = vrcp.pop %v2576
      %v2651 = vmul.f32 %v2576, %v2650
      %v2652 = vsub.f32 1.0, %v2651
      %v2653 = vmul.f32 %v2650, %v2652
      %v2654 = vadd.f32 %v2650, %v2653
      %vm2655 = vweird.f32 %v2576
      %vm2656 = vweird.f32 %v2650
      %vm2657 = vmor %vm2655, %vm2656
      %v2658 = vsel %vm2657, %v2650, %v2654
      %v2659 = vand.u32 2147483647, %v2576
      %vm2660 = vcmp.eq.f32.partialorder %v2659, 8.507059e+37
      %v2661 = vand.u32 %v2576, 2147483648
      %v2662 = vor.u32 1.1754944e-38, %v2661
      %v2663 = vsel %vm2660, %v2662, %v2658
      %v2664 = vmul.f32 1.0, %v2663
      %v2665 = vrcp.pop %v2577
      %v2666 = vmul.f32 %v2577, %v2665
      %v2667 = vsub.f32 1.0, %v2666
      %v2668 = vmul.f32 %v2665, %v2667
      %v2669 = vadd.f32 %v2665, %v2668
      %vm2670 = vweird.f32 %v2577
      %vm2671 = vweird.f32 %v2665
      %vm2672 = vmor %vm2670, %vm2671
      %v2673 = vsel %vm2672, %v2665, %v2669
      %v2674 = vand.u32 2147483647, %v2577
      %vm2675 = vcmp.eq.f32.partialorder %v2674, 8.507059e+37
      %v2676 = vand.u32 %v2577, 2147483648
      %v2677 = vor.u32 1.1754944e-38, %v2676
      %v2678 = vsel %vm2675, %v2677, %v2673
      %v2679 = vmul.f32 1.0, %v2678
      %v2680 = vrcp.pop %v2578
      %v2681 = vmul.f32 %v2578, %v2680
      %v2682 = vsub.f32 1.0, %v2681
      %v2683 = vmul.f32 %v2680, %v2682
      %v2684 = vadd.f32 %v2680, %v2683
      %vm2685 = vweird.f32 %v2578
      %vm2686 = vweird.f32 %v2680
      %vm2687 = vmor %vm2685, %vm2686
      %v2688 = vsel %vm2687, %v2680, %v2684
      %v2689 = vand.u32 2147483647, %v2578
      %vm2690 = vcmp.eq.f32.partialorder %v2689, 8.507059e+37
      %v2691 = vand.u32 %v2578, 2147483648
      %v2692 = vor.u32 1.1754944e-38, %v2691
      %v2693 = vsel %vm2690, %v2692, %v2688
      %v2694 = vmul.f32 1.0, %v2693
      %v2695 = vrcp.pop %v2579
      %v2696 = vmul.f32 %v2579, %v2695
      %v2697 = vsub.f32 1.0, %v2696
      %v2698 = vmul.f32 %v2695, %v2697
      %v2699 = vadd.f32 %v2695, %v2698
      %vm2700 = vweird.f32 %v2579
      %vm2701 = vweird.f32 %v2695
      %vm2702 = vmor %vm2700, %vm2701
      %v2703 = vsel %vm2702, %v2695, %v2699
      %v2704 = vand.u32 2147483647, %v2579
      %vm2705 = vcmp.eq.f32.partialorder %v2704, 8.507059e+37
      %v2706 = vand.u32 %v2579, 2147483648
      %v2707 = vor.u32 1.1754944e-38, %v2706
      %v2708 = vsel %vm2705, %v2707, %v2703
      %v2709 = vmul.f32 1.0, %v2708
      %v2710 = vrcp.pop %v2580
      %v2711 = vmul.f32 %v2580, %v2710
      %v2712 = vsub.f32 1.0, %v2711
      %v2713 = vmul.f32 %v2710, %v2712
      %v2714 = vadd.f32 %v2710, %v2713
      %vm2715 = vweird.f32 %v2580
      %vm2716 = vweird.f32 %v2710
      %vm2717 = vmor %vm2715, %vm2716
      %v2718 = vsel %vm2717, %v2710, %v2714
      %v2719 = vand.u32 2147483647, %v2580
      %vm2720 = vcmp.eq.f32.partialorder %v2719, 8.507059e+37
      %v2721 = vand.u32 %v2580, 2147483648
      %v2722 = vor.u32 1.1754944e-38, %v2721
      %v2723 = vsel %vm2720, %v2722, %v2718
      %v2724 = vmul.f32 1.0, %v2723
      %v2725 = vrcp.pop %v2581
      %v2726 = vmul.f32 %v2581, %v2725
      %v2727 = vsub.f32 1.0, %v2726
      %v2728 = vmul.f32 %v2725, %v2727
      %v2729 = vadd.f32 %v2725, %v2728
      %vm2730 = vweird.f32 %v2581
      %vm2731 = vweird.f32 %v2725
      %vm2732 = vmor %vm2730, %vm2731
      %v2733 = vsel %vm2732, %v2725, %v2729
      %v2734 = vand.u32 2147483647, %v2581
      %vm2735 = vcmp.eq.f32.partialorder %v2734, 8.507059e+37
      %v2736 = vand.u32 %v2581, 2147483648
      %v2737 = vor.u32 1.1754944e-38, %v2736
      %v2738 = vsel %vm2735, %v2737, %v2733
      %v2739 = vmul.f32 1.0, %v2738
      %v2740 = vrcp.pop %v2582
      %v2741 = vmul.f32 %v2582, %v2740
      %v2742 = vsub.f32 1.0, %v2741
      %v2743 = vmul.f32 %v2740, %v2742
      %v2744 = vadd.f32 %v2740, %v2743
      %vm2745 = vweird.f32 %v2582
      %vm2746 = vweird.f32 %v2740
      %vm2747 = vmor %vm2745, %vm2746
      %v2748 = vsel %vm2747, %v2740, %v2744
      %v2749 = vand.u32 2147483647, %v2582
      %vm2750 = vcmp.eq.f32.partialorder %v2749, 8.507059e+37
      %v2751 = vand.u32 %v2582, 2147483648
      %v2752 = vor.u32 1.1754944e-38, %v2751
      %v2753 = vsel %vm2750, %v2752, %v2748
      %v2754 = vmul.f32 1.0, %v2753
      %v2755 = vrcp.pop %v2583
      %v2756 = vmul.f32 %v2583, %v2755
      %v2757 = vsub.f32 1.0, %v2756
      %v2758 = vmul.f32 %v2755, %v2757
      %v2759 = vadd.f32 %v2755, %v2758
      %vm2760 = vweird.f32 %v2583
      %vm2761 = vweird.f32 %v2755
      %vm2762 = vmor %vm2760, %vm2761
      %v2763 = vsel %vm2762, %v2755, %v2759
      %v2764 = vand.u32 2147483647, %v2583
      %vm2765 = vcmp.eq.f32.partialorder %v2764, 8.507059e+37
      %v2766 = vand.u32 %v2583, 2147483648
      %v2767 = vor.u32 1.1754944e-38, %v2766
      %v2768 = vsel %vm2765, %v2767, %v2763
      %v2769 = vmul.f32 1.0, %v2768
      %v2770 = vrcp.pop %v2584
      %v2771 = vmul.f32 %v2584, %v2770
      %v2772 = vsub.f32 1.0, %v2771
      %v2773 = vmul.f32 %v2770, %v2772
      %v2774 = vadd.f32 %v2770, %v2773
      %vm2775 = vweird.f32 %v2584
      %vm2776 = vweird.f32 %v2770
      %vm2777 = vmor %vm2775, %vm2776
      %v2778 = vsel %vm2777, %v2770, %v2774
      %v2779 = vand.u32 2147483647, %v2584
      %vm2780 = vcmp.eq.f32.partialorder %v2779, 8.507059e+37
      %v2781 = vand.u32 %v2584, 2147483648
      %v2782 = vor.u32 1.1754944e-38, %v2781
      %v2783 = vsel %vm2780, %v2782, %v2778
      %v2784 = vmul.f32 1.0, %v2783
      %v2785 = vrcp.pop %v2585
      %v2786 = vmul.f32 %v2585, %v2785
      %v2787 = vsub.f32 1.0, %v2786
      %v2788 = vmul.f32 %v2785, %v2787
      %v2789 = vadd.f32 %v2785, %v2788
      %vm2790 = vweird.f32 %v2585
      %vm2791 = vweird.f32 %v2785
      %vm2792 = vmor %vm2790, %vm2791
      %v2793 = vsel %vm2792, %v2785, %v2789
      %v2794 = vand.u32 2147483647, %v2585
      %vm2795 = vcmp.eq.f32.partialorder %v2794, 8.507059e+37
      %v2796 = vand.u32 %v2585, 2147483648
      %v2797 = vor.u32 1.1754944e-38, %v2796
      %v2798 = vsel %vm2795, %v2797, %v2793
      %v2799 = vmul.f32 1.0, %v2798
      %v2800 = vrcp.pop %v2586
      %v2801 = vmul.f32 %v2586, %v2800
      %v2802 = vsub.f32 1.0, %v2801
      %v2803 = vmul.f32 %v2800, %v2802
      %v2804 = vadd.f32 %v2800, %v2803
      %vm2805 = vweird.f32 %v2586
      %vm2806 = vweird.f32 %v2800
      %vm2807 = vmor %vm2805, %vm2806
      %v2808 = vsel %vm2807, %v2800, %v2804
      %v2809 = vand.u32 2147483647, %v2586
      %vm2810 = vcmp.eq.f32.partialorder %v2809, 8.507059e+37
      %v2811 = vand.u32 %v2586, 2147483648
      %v2812 = vor.u32 1.1754944e-38, %v2811
      %v2813 = vsel %vm2810, %v2812, %v2808
      %v2814 = vmul.f32 1.0, %v2813
      %v2815 = vrcp.pop %v2587
      %v2816 = vmul.f32 %v2587, %v2815
      %v2817 = vsub.f32 1.0, %v2816
      %v2818 = vmul.f32 %v2815, %v2817
      %v2819 = vadd.f32 %v2815, %v2818
      %vm2820 = vweird.f32 %v2587
      %vm2821 = vweird.f32 %v2815
      %vm2822 = vmor %vm2820, %vm2821
      %v2823 = vsel %vm2822, %v2815, %v2819
      %v2824 = vand.u32 2147483647, %v2587
      %vm2825 = vcmp.eq.f32.partialorder %v2824, 8.507059e+37
      %v2826 = vand.u32 %v2587, 2147483648
      %v2827 = vor.u32 1.1754944e-38, %v2826
      %v2828 = vsel %vm2825, %v2827, %v2823
      %v2829 = vmul.f32 1.0, %v2828
      %v2830 = vrcp.pop %v2588
      %v2831 = vmul.f32 %v2588, %v2830
      %v2832 = vsub.f32 1.0, %v2831
      %v2833 = vmul.f32 %v2830, %v2832
      %v2834 = vadd.f32 %v2830, %v2833
      %vm2835 = vweird.f32 %v2588
      %vm2836 = vweird.f32 %v2830
      %vm2837 = vmor %vm2835, %vm2836
      %v2838 = vsel %vm2837, %v2830, %v2834
      %v2839 = vand.u32 2147483647, %v2588
      %vm2840 = vcmp.eq.f32.partialorder %v2839, 8.507059e+37
      %v2841 = vand.u32 %v2588, 2147483648
      %v2842 = vor.u32 1.1754944e-38, %v2841
      %v2843 = vsel %vm2840, %v2842, %v2838
      %v2844 = vmul.f32 1.0, %v2843
      %v2845 = vrcp.pop %v2589
      %v2846 = vmul.f32 %v2589, %v2845
      %v2847 = vsub.f32 1.0, %v2846
      %v2848 = vmul.f32 %v2845, %v2847
      %v2849 = vadd.f32 %v2845, %v2848
      %vm2850 = vweird.f32 %v2589
      %vm2851 = vweird.f32 %v2845
      %vm2852 = vmor %vm2850, %vm2851
      %v2853 = vsel %vm2852, %v2845, %v2849
      %v2854 = vand.u32 2147483647, %v2589
      %vm2855 = vcmp.eq.f32.partialorder %v2854, 8.507059e+37
      %v2856 = vand.u32 %v2589, 2147483648
      %v2857 = vor.u32 1.1754944e-38, %v2856
      %v2858 = vsel %vm2855, %v2857, %v2853
      %v2859 = vmul.f32 1.0, %v2858
      %v2860 = vrcp.pop %v2590
      %v2861 = vmul.f32 %v2590, %v2860
      %v2862 = vsub.f32 1.0, %v2861
      %v2863 = vmul.f32 %v2860, %v2862
      %v2864 = vadd.f32 %v2860, %v2863
      %vm2865 = vweird.f32 %v2590
      %vm2866 = vweird.f32 %v2860
      %vm2867 = vmor %vm2865, %vm2866
      %v2868 = vsel %vm2867, %v2860, %v2864
      %v2869 = vand.u32 2147483647, %v2590
      %vm2870 = vcmp.eq.f32.partialorder %v2869, 8.507059e+37
      %v2871 = vand.u32 %v2590, 2147483648
      %v2872 = vor.u32 1.1754944e-38, %v2871
      %v2873 = vsel %vm2870, %v2872, %v2868
      %v2874 = vmul.f32 1.0, %v2873
      %v2875 = vrcp.pop %v2591
      %v2876 = vmul.f32 %v2591, %v2875
      %v2877 = vsub.f32 1.0, %v2876
      %v2878 = vmul.f32 %v2875, %v2877
      %v2879 = vadd.f32 %v2875, %v2878
      %vm2880 = vweird.f32 %v2591
      %vm2881 = vweird.f32 %v2875
      %vm2882 = vmor %vm2880, %vm2881
      %v2883 = vsel %vm2882, %v2875, %v2879
      %v2884 = vand.u32 2147483647, %v2591
      %vm2885 = vcmp.eq.f32.partialorder %v2884, 8.507059e+37
      %v2886 = vand.u32 %v2591, 2147483648
      %v2887 = vor.u32 1.1754944e-38, %v2886
      %v2888 = vsel %vm2885, %v2887, %v2883
      %v2889 = vmul.f32 1.0, %v2888
      %v2890 = vrcp.pop %v2592
      %v2891 = vmul.f32 %v2592, %v2890
      %v2892 = vsub.f32 1.0, %v2891
      %v2893 = vmul.f32 %v2890, %v2892
      %v2894 = vadd.f32 %v2890, %v2893
      %vm2895 = vweird.f32 %v2592
      %vm2896 = vweird.f32 %v2890
      %vm2897 = vmor %vm2895, %vm2896
      %v2898 = vsel %vm2897, %v2890, %v2894
      %v2899 = vand.u32 2147483647, %v2592
      %vm2900 = vcmp.eq.f32.partialorder %v2899, 8.507059e+37
      %v2901 = vand.u32 %v2592, 2147483648
      %v2902 = vor.u32 1.1754944e-38, %v2901
      %v2903 = vsel %vm2900, %v2902, %v2898
      %v2904 = vmul.f32 1.0, %v2903
      %v2905 = vrcp.pop %v2593
      %v2906 = vmul.f32 %v2593, %v2905
      %v2907 = vsub.f32 1.0, %v2906
      %v2908 = vmul.f32 %v2905, %v2907
      %v2909 = vadd.f32 %v2905, %v2908
      %vm2910 = vweird.f32 %v2593
      %vm2911 = vweird.f32 %v2905
      %vm2912 = vmor %vm2910, %vm2911
      %v2913 = vsel %vm2912, %v2905, %v2909
      %v2914 = vand.u32 2147483647, %v2593
      %vm2915 = vcmp.eq.f32.partialorder %v2914, 8.507059e+37
      %v2916 = vand.u32 %v2593, 2147483648
      %v2917 = vor.u32 1.1754944e-38, %v2916
      %v2918 = vsel %vm2915, %v2917, %v2913
      %v2919 = vmul.f32 1.0, %v2918
      %v2920 = vrcp.pop %v2594
      %v2921 = vmul.f32 %v2594, %v2920
      %v2922 = vsub.f32 1.0, %v2921
      %v2923 = vmul.f32 %v2920, %v2922
      %v2924 = vadd.f32 %v2920, %v2923
      %vm2925 = vweird.f32 %v2594
      %vm2926 = vweird.f32 %v2920
      %vm2927 = vmor %vm2925, %vm2926
      %v2928 = vsel %vm2927, %v2920, %v2924
      %v2929 = vand.u32 2147483647, %v2594
      %vm2930 = vcmp.eq.f32.partialorder %v2929, 8.507059e+37
      %v2931 = vand.u32 %v2594, 2147483648
      %v2932 = vor.u32 1.1754944e-38, %v2931
      %v2933 = vsel %vm2930, %v2932, %v2928
      %v2934 = vmul.f32 1.0, %v2933
      %v2935 = vrcp.pop %v2595
      %v2936 = vmul.f32 %v2595, %v2935
      %v2937 = vsub.f32 1.0, %v2936
      %v2938 = vmul.f32 %v2935, %v2937
      %v2939 = vadd.f32 %v2935, %v2938
      %vm2940 = vweird.f32 %v2595
      %vm2941 = vweird.f32 %v2935
      %vm2942 = vmor %vm2940, %vm2941
      %v2943 = vsel %vm2942, %v2935, %v2939
      %v2944 = vand.u32 2147483647, %v2595
      %vm2945 = vcmp.eq.f32.partialorder %v2944, 8.507059e+37
      %v2946 = vand.u32 %v2595, 2147483648
      %v2947 = vor.u32 1.1754944e-38, %v2946
      %v2948 = vsel %vm2945, %v2947, %v2943
      %v2949 = vmul.f32 1.0, %v2948
      %v2950 = vrcp.pop %v2596
      %v2951 = vmul.f32 %v2596, %v2950
      %v2952 = vsub.f32 1.0, %v2951
      %v2953 = vmul.f32 %v2950, %v2952
      %v2954 = vadd.f32 %v2950, %v2953
      %vm2955 = vweird.f32 %v2596
      %vm2956 = vweird.f32 %v2950
      %vm2957 = vmor %vm2955, %vm2956
      %v2958 = vsel %vm2957, %v2950, %v2954
      %v2959 = vand.u32 2147483647, %v2596
      %vm2960 = vcmp.eq.f32.partialorder %v2959, 8.507059e+37
      %v2961 = vand.u32 %v2596, 2147483648
      %v2962 = vor.u32 1.1754944e-38, %v2961
      %v2963 = vsel %vm2960, %v2962, %v2958
      %v2964 = vmul.f32 1.0, %v2963
      %v2965 = vrcp.pop %v2597
      %v2966 = vmul.f32 %v2597, %v2965
      %v2967 = vsub.f32 1.0, %v2966
      %v2968 = vmul.f32 %v2965, %v2967
      %v2969 = vadd.f32 %v2965, %v2968
      %vm2970 = vweird.f32 %v2597
      %vm2971 = vweird.f32 %v2965
      %vm2972 = vmor %vm2970, %vm2971
      %v2973 = vsel %vm2972, %v2965, %v2969
      %v2974 = vand.u32 2147483647, %v2597
      %vm2975 = vcmp.eq.f32.partialorder %v2974, 8.507059e+37
      %v2976 = vand.u32 %v2597, 2147483648
      %v2977 = vor.u32 1.1754944e-38, %v2976
      %v2978 = vsel %vm2975, %v2977, %v2973
      %v2979 = vmul.f32 1.0, %v2978
      %v2980 = vrcp.pop %v2598
      %v2981 = vmul.f32 %v2598, %v2980
      %v2982 = vsub.f32 1.0, %v2981
      %v2983 = vmul.f32 %v2980, %v2982
      %v2984 = vadd.f32 %v2980, %v2983
      %vm2985 = vweird.f32 %v2598
      %vm2986 = vweird.f32 %v2980
      %vm2987 = vmor %vm2985, %vm2986
      %v2988 = vsel %vm2987, %v2980, %v2984
      %v2989 = vand.u32 2147483647, %v2598
      %vm2990 = vcmp.eq.f32.partialorder %v2989, 8.507059e+37
      %v2991 = vand.u32 %v2598, 2147483648
      %v2992 = vor.u32 1.1754944e-38, %v2991
      %v2993 = vsel %vm2990, %v2992, %v2988
      %v2994 = vmul.f32 1.0, %v2993
      %v2995 = vrcp.pop %v2599
      %v2996 = vmul.f32 %v2599, %v2995
      %v2997 = vsub.f32 1.0, %v2996
      %v2998 = vmul.f32 %v2995, %v2997
      %v2999 = vadd.f32 %v2995, %v2998
      %vm3000 = vweird.f32 %v2599
      %vm3001 = vweird.f32 %v2995
      %vm3002 = vmor %vm3000, %vm3001
      %v3003 = vsel %vm3002, %v2995, %v2999
      %v3004 = vand.u32 2147483647, %v2599
      %vm3005 = vcmp.eq.f32.partialorder %v3004, 8.507059e+37
      %v3006 = vand.u32 %v2599, 2147483648
      %v3007 = vor.u32 1.1754944e-38, %v3006
      %v3008 = vsel %vm3005, %v3007, %v3003
      %v3009 = vmul.f32 1.0, %v3008
      %v3010 = vrcp.pop %v2600
      %v3011 = vmul.f32 %v2600, %v3010
      %v3012 = vsub.f32 1.0, %v3011
      %v3013 = vmul.f32 %v3010, %v3012
      %v3014 = vadd.f32 %v3010, %v3013
      %vm3015 = vweird.f32 %v2600
      %vm3016 = vweird.f32 %v3010
      %vm3017 = vmor %vm3015, %vm3016
      %v3018 = vsel %vm3017, %v3010, %v3014
      %v3019 = vand.u32 2147483647, %v2600
      %vm3020 = vcmp.eq.f32.partialorder %v3019, 8.507059e+37
      %v3021 = vand.u32 %v2600, 2147483648
      %v3022 = vor.u32 1.1754944e-38, %v3021
      %v3023 = vsel %vm3020, %v3022, %v3018
      %v3024 = vmul.f32 1.0, %v3023
      %v3025 = vrcp.pop %v2601
      %v3026 = vmul.f32 %v2601, %v3025
      %v3027 = vsub.f32 1.0, %v3026
      %v3028 = vmul.f32 %v3025, %v3027
      %v3029 = vadd.f32 %v3025, %v3028
      %vm3030 = vweird.f32 %v2601
      %vm3031 = vweird.f32 %v3025
      %vm3032 = vmor %vm3030, %vm3031
      %v3033 = vsel %vm3032, %v3025, %v3029
      %v3034 = vand.u32 2147483647, %v2601
      %vm3035 = vcmp.eq.f32.partialorder %v3034, 8.507059e+37
      %v3036 = vand.u32 %v2601, 2147483648
      %v3037 = vor.u32 1.1754944e-38, %v3036
      %v3038 = vsel %vm3035, %v3037, %v3033
      %v3039 = vmul.f32 1.0, %v3038
      %v3040 = vrcp.pop %v2602
      %v3041 = vmul.f32 %v2602, %v3040
      %v3042 = vsub.f32 1.0, %v3041
      %v3043 = vmul.f32 %v3040, %v3042
      %v3044 = vadd.f32 %v3040, %v3043
      %vm3045 = vweird.f32 %v2602
      %vm3046 = vweird.f32 %v3040
      %vm3047 = vmor %vm3045, %vm3046
      %v3048 = vsel %vm3047, %v3040, %v3044
      %v3049 = vand.u32 2147483647, %v2602
      %vm3050 = vcmp.eq.f32.partialorder %v3049, 8.507059e+37
      %v3051 = vand.u32 %v2602, 2147483648
      %v3052 = vor.u32 1.1754944e-38, %v3051
      %v3053 = vsel %vm3050, %v3052, %v3048
      %v3054 = vmul.f32 1.0, %v3053
      %v3055 = vrcp.pop %v2603
      %v3056 = vmul.f32 %v2603, %v3055
      %v3057 = vsub.f32 1.0, %v3056
      %v3058 = vmul.f32 %v3055, %v3057
      %v3059 = vadd.f32 %v3055, %v3058
      %vm3060 = vweird.f32 %v2603
      %vm3061 = vweird.f32 %v3055
      %vm3062 = vmor %vm3060, %vm3061
      %v3063 = vsel %vm3062, %v3055, %v3059
      %v3064 = vand.u32 2147483647, %v2603
      %vm3065 = vcmp.eq.f32.partialorder %v3064, 8.507059e+37
      %v3066 = vand.u32 %v2603, 2147483648
      %v3067 = vor.u32 1.1754944e-38, %v3066
      %v3068 = vsel %vm3065, %v3067, %v3063
      %v3069 = vmul.f32 1.0, %v3068
      %v3070 = vrcp.pop %v2604
      %v3071 = vmul.f32 %v2604, %v3070
      %v3072 = vsub.f32 1.0, %v3071
      %v3073 = vmul.f32 %v3070, %v3072
      %v3074 = vadd.f32 %v3070, %v3073
      %vm3075 = vweird.f32 %v2604
      %vm3076 = vweird.f32 %v3070
      %vm3077 = vmor %vm3075, %vm3076
      %v3078 = vsel %vm3077, %v3070, %v3074
      %v3079 = vand.u32 2147483647, %v2604
      %vm3080 = vcmp.eq.f32.partialorder %v3079, 8.507059e+37
      %v3081 = vand.u32 %v2604, 2147483648
      %v3082 = vor.u32 1.1754944e-38, %v3081
      %v3083 = vsel %vm3080, %v3082, %v3078
      %v3084 = vmul.f32 1.0, %v3083
      %v3085 = vtanh.pop %v2442
      %v3086 = vtanh.pop %v2443
      %v3087 = vtanh.pop %v2444
      %v3088 = vtanh.pop %v2445
      %v3089 = vtanh.pop %v2446
      %v3090 = vtanh.pop %v2447
      %v3091 = vtanh.pop %v2448
      %v3092 = vtanh.pop %v2449
      %v3093 = vtanh.pop %v2450
      %v3094 = vtanh.pop %v2451
      %v3095 = vtanh.pop %v2452
      %v3096 = vtanh.pop %v2453
      %v3097 = vtanh.pop %v2454
      %v3098 = vtanh.pop %v2455
      %v3099 = vtanh.pop %v2456
      %v3100 = vtanh.pop %v2457
      %v3101 = vtanh.pop %v2458
      %v3102 = vtanh.pop %v2459
      %v3103 = vtanh.pop %v2460
      %v3104 = vtanh.pop %v2461
      %v3105 = vtanh.pop %v2462
      %v3106 = vtanh.pop %v2463
      %v3107 = vtanh.pop %v2464
      %v3108 = vtanh.pop %v2465
      %v3109 = vtanh.pop %v2466
      %v3110 = vtanh.pop %v2467
      %v3111 = vtanh.pop %v2468
      %v3112 = vtanh.pop %v2469
      %v3113 = vtanh.pop %v2470
      %v3114 = vtanh.pop %v2471
      %v3115 = vtanh.pop %v2472
      %v3116 = vtanh.pop %v2473
      %v3117 = vsel %vm2476, %v2619, %v3085
      %v3118 = vsel %vm2476, %v2634, %v3086
      %v3119 = vsel %vm2476, %v2649, %v3087
      %v3120 = vsel %vm2476, %v2664, %v3088
      %v3121 = vsel %vm2476, %v2679, %v3089
      %v3122 = vsel %vm2476, %v2694, %v3090
      %v3123 = vsel %vm2476, %v2709, %v3091
      %v3124 = vsel %vm2476, %v2724, %v3092
      %v3125 = vsel %vm2476, %v2739, %v3093
      %v3126 = vsel %vm2476, %v2754, %v3094
      %v3127 = vsel %vm2476, %v2769, %v3095
      %v3128 = vsel %vm2476, %v2784, %v3096
      %v3129 = vsel %vm2476, %v2799, %v3097
      %v3130 = vsel %vm2476, %v2814, %v3098
      %v3131 = vsel %vm2476, %v2829, %v3099
      %v3132 = vsel %vm2476, %v2844, %v3100
      %v3133 = vsel %vm2476, %v2859, %v3101
      %v3134 = vsel %vm2476, %v2874, %v3102
      %v3135 = vsel %vm2476, %v2889, %v3103
      %v3136 = vsel %vm2476, %v2904, %v3104
      %v3137 = vsel %vm2476, %v2919, %v3105
      %v3138 = vsel %vm2476, %v2934, %v3106
      %v3139 = vsel %vm2476, %v2949, %v3107
      %v3140 = vsel %vm2476, %v2964, %v3108
      %v3141 = vsel %vm2476, %v2979, %v3109
      %v3142 = vsel %vm2476, %v2994, %v3110
      %v3143 = vsel %vm2476, %v3009, %v3111
      %v3144 = vsel %vm2476, %v3024, %v3112
      %v3145 = vsel %vm2476, %v3039, %v3113
      %v3146 = vsel %vm2476, %v3054, %v3114
      %v3147 = vsel %vm2476, %v3069, %v3115
      %v3148 = vsel %vm2476, %v3084, %v3116
      %v3149 = vld [vmem:[#allocation3] sm:$0xff]
      %v3150 = vld [vmem:[#allocation3 + $0x8] sm:$0xff]
      %v3151 = vld [vmem:[#allocation3 + $0x10] sm:$0xff]
      %v3152 = vld [vmem:[#allocation3 + $0x18] sm:$0xff]
      %v3153 = vld [vmem:[#allocation3 + $0x20] sm:$0xff]
      %v3154 = vld [vmem:[#allocation3 + $0x28] sm:$0xff]
      %v3155 = vld [vmem:[#allocation3 + $0x30] sm:$0xff]
      %v3156 = vld [vmem:[#allocation3 + $0x38] sm:$0xff]
      %v3157 = vld [vmem:[#allocation3 + $0x40] sm:$0xff]
      %v3158 = vld [vmem:[#allocation3 + $0x48] sm:$0xff]
      %v3159 = vld [vmem:[#allocation3 + $0x50] sm:$0xff]
      %v3160 = vld [vmem:[#allocation3 + $0x58] sm:$0xff]
      %v3161 = vld [vmem:[#allocation3 + $0x60] sm:$0xff]
      %v3162 = vld [vmem:[#allocation3 + $0x68] sm:$0xff]
      %v3163 = vld [vmem:[#allocation3 + $0x70] sm:$0xff]
      %v3164 = vld [vmem:[#allocation3 + $0x78] sm:$0xff]
      %v3165 = vld [vmem:[#allocation3 + $0x80] sm:$0xff]
      %v3166 = vld [vmem:[#allocation3 + $0x88] sm:$0xff]
      %v3167 = vld [vmem:[#allocation3 + $0x90] sm:$0xff]
      %v3168 = vld [vmem:[#allocation3 + $0x98] sm:$0xff]
      %v3169 = vld [vmem:[#allocation3 + $0xa0] sm:$0xff]
      %v3170 = vld [vmem:[#allocation3 + $0xa8] sm:$0xff]
      %v3171 = vld [vmem:[#allocation3 + $0xb0] sm:$0xff]
      %v3172 = vld [vmem:[#allocation3 + $0xb8] sm:$0xff]
      %v3173 = vld [vmem:[#allocation3 + $0xc0] sm:$0xff]
      %v3174 = vld [vmem:[#allocation3 + $0xc8] sm:$0xff]
      %v3175 = vld [vmem:[#allocation3 + $0xd0] sm:$0xff]
      %v3176 = vld [vmem:[#allocation3 + $0xd8] sm:$0xff]
      %v3177 = vld [vmem:[#allocation3 + $0xe0] sm:$0xff]
      %v3178 = vld [vmem:[#allocation3 + $0xe8] sm:$0xff]
      %v3179 = vld [vmem:[#allocation3 + $0xf0] sm:$0xff]
      %v3180 = vld [vmem:[#allocation3 + $0xf8] sm:$0xff]
      %3213 = vrot.lane.b32.xlu0 %v3149, 32
      %v3214 = vpop.permute.xlu0 %3213
      %3215 = vrot.lane.b32.xlu0 %v3150, 32
      %v3216 = vpop.permute.xlu0 %3215
      %3217 = vrot.lane.b32.xlu0 %v3151, 32
      %v3218 = vpop.permute.xlu0 %3217
      %3219 = vrot.lane.b32.xlu0 %v3152, 32
      %v3220 = vpop.permute.xlu0 %3219
      %3221 = vrot.lane.b32.xlu0 %v3153, 32
      %v3222 = vpop.permute.xlu0 %3221
      %3223 = vrot.lane.b32.xlu0 %v3154, 32
      %v3224 = vpop.permute.xlu0 %3223
      %3225 = vrot.lane.b32.xlu0 %v3155, 32
      %v3226 = vpop.permute.xlu0 %3225
      %3227 = vrot.lane.b32.xlu0 %v3156, 32
      %v3228 = vpop.permute.xlu0 %3227
      %3229 = vrot.lane.b32.xlu0 %v3157, 32
      %v3230 = vpop.permute.xlu0 %3229
      %3231 = vrot.lane.b32.xlu0 %v3158, 32
      %v3232 = vpop.permute.xlu0 %3231
      %3233 = vrot.lane.b32.xlu0 %v3159, 32
      %v3234 = vpop.permute.xlu0 %3233
      %3235 = vrot.lane.b32.xlu0 %v3160, 32
      %v3236 = vpop.permute.xlu0 %3235
      %3237 = vrot.lane.b32.xlu0 %v3161, 32
      %v3238 = vpop.permute.xlu0 %3237
      %3239 = vrot.lane.b32.xlu0 %v3162, 32
      %v3240 = vpop.permute.xlu0 %3239
      %3241 = vrot.lane.b32.xlu0 %v3163, 32
      %v3242 = vpop.permute.xlu0 %3241
      %3243 = vrot.lane.b32.xlu0 %v3164, 32
      %v3244 = vpop.permute.xlu0 %3243
      %3245 = vrot.lane.b32.xlu0 %v3165, 32
      %v3246 = vpop.permute.xlu0 %3245
      %3247 = vrot.lane.b32.xlu0 %v3166, 32
      %v3248 = vpop.permute.xlu0 %3247
      %3249 = vrot.lane.b32.xlu0 %v3167, 32
      %v3250 = vpop.permute.xlu0 %3249
      %3251 = vrot.lane.b32.xlu0 %v3168, 32
      %v3252 = vpop.permute.xlu0 %3251
      %3253 = vrot.lane.b32.xlu0 %v3169, 32
      %v3254 = vpop.permute.xlu0 %3253
      %3255 = vrot.lane.b32.xlu0 %v3170, 32
      %v3256 = vpop.permute.xlu0 %3255
      %3257 = vrot.lane.b32.xlu0 %v3171, 32
      %v3258 = vpop.permute.xlu0 %3257
      %3259 = vrot.lane.b32.xlu0 %v3172, 32
      %v3260 = vpop.permute.xlu0 %3259
      %3261 = vrot.lane.b32.xlu0 %v3173, 32
      %v3262 = vpop.permute.xlu0 %3261
      %3263 = vrot.lane.b32.xlu0 %v3174, 32
      %v3264 = vpop.permute.xlu0 %3263
      %3265 = vrot.lane.b32.xlu0 %v3175, 32
      %v3266 = vpop.permute.xlu0 %3265
      %3267 = vrot.lane.b32.xlu0 %v3176, 32
      %v3268 = vpop.permute.xlu0 %3267
      %3269 = vrot.lane.b32.xlu0 %v3177, 32
      %v3270 = vpop.permute.xlu0 %3269
      %3271 = vrot.lane.b32.xlu0 %v3178, 32
      %v3272 = vpop.permute.xlu0 %3271
      %3273 = vrot.lane.b32.xlu0 %v3179, 32
      %v3274 = vpop.permute.xlu0 %3273
      %3275 = vrot.lane.b32.xlu0 %v3180, 32
      %v3276 = vpop.permute.xlu0 %3275
      %v3309 = vmul.f32 %v3117, %v3214
      %v3310 = vmul.f32 %v3118, %v3216
      %v3311 = vmul.f32 %v3119, %v3218
      %v3312 = vmul.f32 %v3120, %v3220
      %v3313 = vmul.f32 %v3121, %v3222
      %v3314 = vmul.f32 %v3122, %v3224
      %v3315 = vmul.f32 %v3123, %v3226
      %v3316 = vmul.f32 %v3124, %v3228
      %v3317 = vmul.f32 %v3125, %v3230
      %v3318 = vmul.f32 %v3126, %v3232
      %v3319 = vmul.f32 %v3127, %v3234
      %v3320 = vmul.f32 %v3128, %v3236
      %v3321 = vmul.f32 %v3129, %v3238
      %v3322 = vmul.f32 %v3130, %v3240
      %v3323 = vmul.f32 %v3131, %v3242
      %v3324 = vmul.f32 %v3132, %v3244
      %v3325 = vmul.f32 %v3133, %v3246
      %v3326 = vmul.f32 %v3134, %v3248
      %v3327 = vmul.f32 %v3135, %v3250
      %v3328 = vmul.f32 %v3136, %v3252
      %v3329 = vmul.f32 %v3137, %v3254
      %v3330 = vmul.f32 %v3138, %v3256
      %v3331 = vmul.f32 %v3139, %v3258
      %v3332 = vmul.f32 %v3140, %v3260
      %v3333 = vmul.f32 %v3141, %v3262
      %v3334 = vmul.f32 %v3142, %v3264
      %v3335 = vmul.f32 %v3143, %v3266
      %v3336 = vmul.f32 %v3144, %v3268
      %v3337 = vmul.f32 %v3145, %v3270
      %v3338 = vmul.f32 %v3146, %v3272
      %v3339 = vmul.f32 %v3147, %v3274
      %v3340 = vmul.f32 %v3148, %v3276
      %3373 = vrot.lane.b32.xlu0 %v3117, 32
      %v3374 = vpop.permute.xlu0 %3373
      %3375 = vrot.lane.b32.xlu0 %v3118, 32
      %v3376 = vpop.permute.xlu0 %3375
      %3377 = vrot.lane.b32.xlu0 %v3119, 32
      %v3378 = vpop.permute.xlu0 %3377
      %3379 = vrot.lane.b32.xlu0 %v3120, 32
      %v3380 = vpop.permute.xlu0 %3379
      %3381 = vrot.lane.b32.xlu0 %v3121, 32
      %v3382 = vpop.permute.xlu0 %3381
      %3383 = vrot.lane.b32.xlu0 %v3122, 32
      %v3384 = vpop.permute.xlu0 %3383
      %3385 = vrot.lane.b32.xlu0 %v3123, 32
      %v3386 = vpop.permute.xlu0 %3385
      %3387 = vrot.lane.b32.xlu0 %v3124, 32
      %v3388 = vpop.permute.xlu0 %3387
      %3389 = vrot.lane.b32.xlu0 %v3125, 32
      %v3390 = vpop.permute.xlu0 %3389
      %3391 = vrot.lane.b32.xlu0 %v3126, 32
      %v3392 = vpop.permute.xlu0 %3391
      %3393 = vrot.lane.b32.xlu0 %v3127, 32
      %v3394 = vpop.permute.xlu0 %3393
      %3395 = vrot.lane.b32.xlu0 %v3128, 32
      %v3396 = vpop.permute.xlu0 %3395
      %3397 = vrot.lane.b32.xlu0 %v3129, 32
      %v3398 = vpop.permute.xlu0 %3397
      %3399 = vrot.lane.b32.xlu0 %v3130, 32
      %v3400 = vpop.permute.xlu0 %3399
      %3401 = vrot.lane.b32.xlu0 %v3131, 32
      %v3402 = vpop.permute.xlu0 %3401
      %3403 = vrot.lane.b32.xlu0 %v3132, 32
      %v3404 = vpop.permute.xlu0 %3403
      %3405 = vrot.lane.b32.xlu0 %v3133, 32
      %v3406 = vpop.permute.xlu0 %3405
      %3407 = vrot.lane.b32.xlu0 %v3134, 32
      %v3408 = vpop.permute.xlu0 %3407
      %3409 = vrot.lane.b32.xlu0 %v3135, 32
      %v3410 = vpop.permute.xlu0 %3409
      %3411 = vrot.lane.b32.xlu0 %v3136, 32
      %v3412 = vpop.permute.xlu0 %3411
      %3413 = vrot.lane.b32.xlu0 %v3137, 32
      %v3414 = vpop.permute.xlu0 %3413
      %3415 = vrot.lane.b32.xlu0 %v3138, 32
      %v3416 = vpop.permute.xlu0 %3415
      %3417 = vrot.lane.b32.xlu0 %v3139, 32
      %v3418 = vpop.permute.xlu0 %3417
      %3419 = vrot.lane.b32.xlu0 %v3140, 32
      %v3420 = vpop.permute.xlu0 %3419
      %3421 = vrot.lane.b32.xlu0 %v3141, 32
      %v3422 = vpop.permute.xlu0 %3421
      %3423 = vrot.lane.b32.xlu0 %v3142, 32
      %v3424 = vpop.permute.xlu0 %3423
      %3425 = vrot.lane.b32.xlu0 %v3143, 32
      %v3426 = vpop.permute.xlu0 %3425
      %3427 = vrot.lane.b32.xlu0 %v3144, 32
      %v3428 = vpop.permute.xlu0 %3427
      %3429 = vrot.lane.b32.xlu0 %v3145, 32
      %v3430 = vpop.permute.xlu0 %3429
      %3431 = vrot.lane.b32.xlu0 %v3146, 32
      %v3432 = vpop.permute.xlu0 %3431
      %3433 = vrot.lane.b32.xlu0 %v3147, 32
      %v3434 = vpop.permute.xlu0 %3433
      %3435 = vrot.lane.b32.xlu0 %v3148, 32
      %v3436 = vpop.permute.xlu0 %3435
      %v3469 = vmul.f32 %v3117, %v3374
      %v3470 = vmul.f32 %v3118, %v3376
      %v3471 = vmul.f32 %v3119, %v3378
      %v3472 = vmul.f32 %v3120, %v3380
      %v3473 = vmul.f32 %v3121, %v3382
      %v3474 = vmul.f32 %v3122, %v3384
      %v3475 = vmul.f32 %v3123, %v3386
      %v3476 = vmul.f32 %v3124, %v3388
      %v3477 = vmul.f32 %v3125, %v3390
      %v3478 = vmul.f32 %v3126, %v3392
      %v3479 = vmul.f32 %v3127, %v3394
      %v3480 = vmul.f32 %v3128, %v3396
      %v3481 = vmul.f32 %v3129, %v3398
      %v3482 = vmul.f32 %v3130, %v3400
      %v3483 = vmul.f32 %v3131, %v3402
      %v3484 = vmul.f32 %v3132, %v3404
      %v3485 = vmul.f32 %v3133, %v3406
      %v3486 = vmul.f32 %v3134, %v3408
      %v3487 = vmul.f32 %v3135, %v3410
      %v3488 = vmul.f32 %v3136, %v3412
      %v3489 = vmul.f32 %v3137, %v3414
      %v3490 = vmul.f32 %v3138, %v3416
      %v3491 = vmul.f32 %v3139, %v3418
      %v3492 = vmul.f32 %v3140, %v3420
      %v3493 = vmul.f32 %v3141, %v3422
      %v3494 = vmul.f32 %v3142, %v3424
      %v3495 = vmul.f32 %v3143, %v3426
      %v3496 = vmul.f32 %v3144, %v3428
      %v3497 = vmul.f32 %v3145, %v3430
      %v3498 = vmul.f32 %v3146, %v3432
      %v3499 = vmul.f32 %v3147, %v3434
      %v3500 = vmul.f32 %v3148, %v3436
      %3533 = vrot.lane.b32.xlu0 %v3469, 32
      %v3534 = vpop.permute.xlu0 %3533
      %3535 = vrot.lane.b32.xlu0 %v3470, 32
      %v3536 = vpop.permute.xlu0 %3535
      %3537 = vrot.lane.b32.xlu0 %v3471, 32
      %v3538 = vpop.permute.xlu0 %3537
      %3539 = vrot.lane.b32.xlu0 %v3472, 32
      %v3540 = vpop.permute.xlu0 %3539
      %3541 = vrot.lane.b32.xlu0 %v3473, 32
      %v3542 = vpop.permute.xlu0 %3541
      %3543 = vrot.lane.b32.xlu0 %v3474, 32
      %v3544 = vpop.permute.xlu0 %3543
      %3545 = vrot.lane.b32.xlu0 %v3475, 32
      %v3546 = vpop.permute.xlu0 %3545
      %3547 = vrot.lane.b32.xlu0 %v3476, 32
      %v3548 = vpop.permute.xlu0 %3547
      %3549 = vrot.lane.b32.xlu0 %v3477, 32
      %v3550 = vpop.permute.xlu0 %3549
      %3551 = vrot.lane.b32.xlu0 %v3478, 32
      %v3552 = vpop.permute.xlu0 %3551
      %3553 = vrot.lane.b32.xlu0 %v3479, 32
      %v3554 = vpop.permute.xlu0 %3553
      %3555 = vrot.lane.b32.xlu0 %v3480, 32
      %v3556 = vpop.permute.xlu0 %3555
      %3557 = vrot.lane.b32.xlu0 %v3481, 32
      %v3558 = vpop.permute.xlu0 %3557
      %3559 = vrot.lane.b32.xlu0 %v3482, 32
      %v3560 = vpop.permute.xlu0 %3559
      %3561 = vrot.lane.b32.xlu0 %v3483, 32
      %v3562 = vpop.permute.xlu0 %3561
      %3563 = vrot.lane.b32.xlu0 %v3484, 32
      %v3564 = vpop.permute.xlu0 %3563
      %3565 = vrot.lane.b32.xlu0 %v3485, 32
      %v3566 = vpop.permute.xlu0 %3565
      %3567 = vrot.lane.b32.xlu0 %v3486, 32
      %v3568 = vpop.permute.xlu0 %3567
      %3569 = vrot.lane.b32.xlu0 %v3487, 32
      %v3570 = vpop.permute.xlu0 %3569
      %3571 = vrot.lane.b32.xlu0 %v3488, 32
      %v3572 = vpop.permute.xlu0 %3571
      %3573 = vrot.lane.b32.xlu0 %v3489, 32
      %v3574 = vpop.permute.xlu0 %3573
      %3575 = vrot.lane.b32.xlu0 %v3490, 32
      %v3576 = vpop.permute.xlu0 %3575
      %3577 = vrot.lane.b32.xlu0 %v3491, 32
      %v3578 = vpop.permute.xlu0 %3577
      %3579 = vrot.lane.b32.xlu0 %v3492, 32
      %v3580 = vpop.permute.xlu0 %3579
      %3581 = vrot.lane.b32.xlu0 %v3493, 32
      %v3582 = vpop.permute.xlu0 %3581
      %3583 = vrot.lane.b32.xlu0 %v3494, 32
      %v3584 = vpop.permute.xlu0 %3583
      %3585 = vrot.lane.b32.xlu0 %v3495, 32
      %v3586 = vpop.permute.xlu0 %3585
      %3587 = vrot.lane.b32.xlu0 %v3496, 32
      %v3588 = vpop.permute.xlu0 %3587
      %3589 = vrot.lane.b32.xlu0 %v3497, 32
      %v3590 = vpop.permute.xlu0 %3589
      %3591 = vrot.lane.b32.xlu0 %v3498, 32
      %v3592 = vpop.permute.xlu0 %3591
      %3593 = vrot.lane.b32.xlu0 %v3499, 32
      %v3594 = vpop.permute.xlu0 %3593
      %3595 = vrot.lane.b32.xlu0 %v3500, 32
      %v3596 = vpop.permute.xlu0 %3595
      %v3629 = vadd.f32 %v3309, %v3534
      %v3630 = vadd.f32 %v3310, %v3536
      %v3631 = vadd.f32 %v3311, %v3538
      %v3632 = vadd.f32 %v3312, %v3540
      %v3633 = vadd.f32 %v3313, %v3542
      %v3634 = vadd.f32 %v3314, %v3544
      %v3635 = vadd.f32 %v3315, %v3546
      %v3636 = vadd.f32 %v3316, %v3548
      %v3637 = vadd.f32 %v3317, %v3550
      %v3638 = vadd.f32 %v3318, %v3552
      %v3639 = vadd.f32 %v3319, %v3554
      %v3640 = vadd.f32 %v3320, %v3556
      %v3641 = vadd.f32 %v3321, %v3558
      %v3642 = vadd.f32 %v3322, %v3560
      %v3643 = vadd.f32 %v3323, %v3562
      %v3644 = vadd.f32 %v3324, %v3564
      %v3645 = vadd.f32 %v3325, %v3566
      %v3646 = vadd.f32 %v3326, %v3568
      %v3647 = vadd.f32 %v3327, %v3570
      %v3648 = vadd.f32 %v3328, %v3572
      %v3649 = vadd.f32 %v3329, %v3574
      %v3650 = vadd.f32 %v3330, %v3576
      %v3651 = vadd.f32 %v3331, %v3578
      %v3652 = vadd.f32 %v3332, %v3580
      %v3653 = vadd.f32 %v3333, %v3582
      %v3654 = vadd.f32 %v3334, %v3584
      %v3655 = vadd.f32 %v3335, %v3586
      %v3656 = vadd.f32 %v3336, %v3588
      %v3657 = vadd.f32 %v3337, %v3590
      %v3658 = vadd.f32 %v3338, %v3592
      %v3659 = vadd.f32 %v3339, %v3594
      %v3660 = vadd.f32 %v3340, %v3596
      %v3661 = vtanh.pop %v3629
      %v3662 = vtanh.pop %v3630
      %v3663 = vtanh.pop %v3631
      %v3664 = vtanh.pop %v3632
      %v3665 = vtanh.pop %v3633
      %v3666 = vtanh.pop %v3634
      %v3667 = vtanh.pop %v3635
      %v3668 = vtanh.pop %v3636
      %v3669 = vtanh.pop %v3637
      %v3670 = vtanh.pop %v3638
      %v3671 = vtanh.pop %v3639
      %v3672 = vtanh.pop %v3640
      %v3673 = vtanh.pop %v3641
      %v3674 = vtanh.pop %v3642
      %v3675 = vtanh.pop %v3643
      %v3676 = vtanh.pop %v3644
      %v3677 = vtanh.pop %v3645
      %v3678 = vtanh.pop %v3646
      %v3679 = vtanh.pop %v3647
      %v3680 = vtanh.pop %v3648
      %v3681 = vtanh.pop %v3649
      %v3682 = vtanh.pop %v3650
      %v3683 = vtanh.pop %v3651
      %v3684 = vtanh.pop %v3652
      %v3685 = vtanh.pop %v3653
      %v3686 = vtanh.pop %v3654
      %v3687 = vtanh.pop %v3655
      %v3688 = vtanh.pop %v3656
      %v3689 = vtanh.pop %v3657
      %v3690 = vtanh.pop %v3658
      %v3691 = vtanh.pop %v3659
      %v3692 = vtanh.pop %v3660
      %3725 = vrot.lane.b32.xlu0 %v3661, 32
      %v3726 = vpop.permute.xlu0 %3725
      %3727 = vrot.lane.b32.xlu0 %v3662, 32
      %v3728 = vpop.permute.xlu0 %3727
      %3729 = vrot.lane.b32.xlu0 %v3663, 32
      %v3730 = vpop.permute.xlu0 %3729
      %3731 = vrot.lane.b32.xlu0 %v3664, 32
      %v3732 = vpop.permute.xlu0 %3731
      %3733 = vrot.lane.b32.xlu0 %v3665, 32
      %v3734 = vpop.permute.xlu0 %3733
      %3735 = vrot.lane.b32.xlu0 %v3666, 32
      %v3736 = vpop.permute.xlu0 %3735
      %3737 = vrot.lane.b32.xlu0 %v3667, 32
      %v3738 = vpop.permute.xlu0 %3737
      %3739 = vrot.lane.b32.xlu0 %v3668, 32
      %v3740 = vpop.permute.xlu0 %3739
      %3741 = vrot.lane.b32.xlu0 %v3669, 32
      %v3742 = vpop.permute.xlu0 %3741
      %3743 = vrot.lane.b32.xlu0 %v3670, 32
      %v3744 = vpop.permute.xlu0 %3743
      %3745 = vrot.lane.b32.xlu0 %v3671, 32
      %v3746 = vpop.permute.xlu0 %3745
      %3747 = vrot.lane.b32.xlu0 %v3672, 32
      %v3748 = vpop.permute.xlu0 %3747
      %3749 = vrot.lane.b32.xlu0 %v3673, 32
      %v3750 = vpop.permute.xlu0 %3749
      %3751 = vrot.lane.b32.xlu0 %v3674, 32
      %v3752 = vpop.permute.xlu0 %3751
      %3753 = vrot.lane.b32.xlu0 %v3675, 32
      %v3754 = vpop.permute.xlu0 %3753
      %3755 = vrot.lane.b32.xlu0 %v3676, 32
      %v3756 = vpop.permute.xlu0 %3755
      %3757 = vrot.lane.b32.xlu0 %v3677, 32
      %v3758 = vpop.permute.xlu0 %3757
      %3759 = vrot.lane.b32.xlu0 %v3678, 32
      %v3760 = vpop.permute.xlu0 %3759
      %3761 = vrot.lane.b32.xlu0 %v3679, 32
      %v3762 = vpop.permute.xlu0 %3761
      %3763 = vrot.lane.b32.xlu0 %v3680, 32
      %v3764 = vpop.permute.xlu0 %3763
      %3765 = vrot.lane.b32.xlu0 %v3681, 32
      %v3766 = vpop.permute.xlu0 %3765
      %3767 = vrot.lane.b32.xlu0 %v3682, 32
      %v3768 = vpop.permute.xlu0 %3767
      %3769 = vrot.lane.b32.xlu0 %v3683, 32
      %v3770 = vpop.permute.xlu0 %3769
      %3771 = vrot.lane.b32.xlu0 %v3684, 32
      %v3772 = vpop.permute.xlu0 %3771
      %3773 = vrot.lane.b32.xlu0 %v3685, 32
      %v3774 = vpop.permute.xlu0 %3773
      %3775 = vrot.lane.b32.xlu0 %v3686, 32
      %v3776 = vpop.permute.xlu0 %3775
      %3777 = vrot.lane.b32.xlu0 %v3687, 32
      %v3778 = vpop.permute.xlu0 %3777
      %3779 = vrot.lane.b32.xlu0 %v3688, 32
      %v3780 = vpop.permute.xlu0 %3779
      %3781 = vrot.lane.b32.xlu0 %v3689, 32
      %v3782 = vpop.permute.xlu0 %3781
      %3783 = vrot.lane.b32.xlu0 %v3690, 32
      %v3784 = vpop.permute.xlu0 %3783
      %3785 = vrot.lane.b32.xlu0 %v3691, 32
      %v3786 = vpop.permute.xlu0 %3785
      %3787 = vrot.lane.b32.xlu0 %v3692, 32
      %v3788 = vpop.permute.xlu0 %3787
      %v3821 = vmul.f32 %v3117, %v3726
      %v3822 = vmul.f32 %v3118, %v3728
      %v3823 = vmul.f32 %v3119, %v3730
      %v3824 = vmul.f32 %v3120, %v3732
      %v3825 = vmul.f32 %v3121, %v3734
      %v3826 = vmul.f32 %v3122, %v3736
      %v3827 = vmul.f32 %v3123, %v3738
      %v3828 = vmul.f32 %v3124, %v3740
      %v3829 = vmul.f32 %v3125, %v3742
      %v3830 = vmul.f32 %v3126, %v3744
      %v3831 = vmul.f32 %v3127, %v3746
      %v3832 = vmul.f32 %v3128, %v3748
      %v3833 = vmul.f32 %v3129, %v3750
      %v3834 = vmul.f32 %v3130, %v3752
      %v3835 = vmul.f32 %v3131, %v3754
      %v3836 = vmul.f32 %v3132, %v3756
      %v3837 = vmul.f32 %v3133, %v3758
      %v3838 = vmul.f32 %v3134, %v3760
      %v3839 = vmul.f32 %v3135, %v3762
      %v3840 = vmul.f32 %v3136, %v3764
      %v3841 = vmul.f32 %v3137, %v3766
      %v3842 = vmul.f32 %v3138, %v3768
      %v3843 = vmul.f32 %v3139, %v3770
      %v3844 = vmul.f32 %v3140, %v3772
      %v3845 = vmul.f32 %v3141, %v3774
      %v3846 = vmul.f32 %v3142, %v3776
      %v3847 = vmul.f32 %v3143, %v3778
      %v3848 = vmul.f32 %v3144, %v3780
      %v3849 = vmul.f32 %v3145, %v3782
      %v3850 = vmul.f32 %v3146, %v3784
      %v3851 = vmul.f32 %v3147, %v3786
      %v3852 = vmul.f32 %v3148, %v3788
      %3885 = vrot.lane.b32.xlu0 %v3629, 96
      %v3886 = vpop.permute.xlu0 %3885
      %3887 = vrot.lane.b32.xlu0 %v3630, 96
      %v3888 = vpop.permute.xlu0 %3887
      %3889 = vrot.lane.b32.xlu0 %v3631, 96
      %v3890 = vpop.permute.xlu0 %3889
      %3891 = vrot.lane.b32.xlu0 %v3632, 96
      %v3892 = vpop.permute.xlu0 %3891
      %3893 = vrot.lane.b32.xlu0 %v3633, 96
      %v3894 = vpop.permute.xlu0 %3893
      %3895 = vrot.lane.b32.xlu0 %v3634, 96
      %v3896 = vpop.permute.xlu0 %3895
      %3897 = vrot.lane.b32.xlu0 %v3635, 96
      %v3898 = vpop.permute.xlu0 %3897
      %3899 = vrot.lane.b32.xlu0 %v3636, 96
      %v3900 = vpop.permute.xlu0 %3899
      %3901 = vrot.lane.b32.xlu0 %v3637, 96
      %v3902 = vpop.permute.xlu0 %3901
      %3903 = vrot.lane.b32.xlu0 %v3638, 96
      %v3904 = vpop.permute.xlu0 %3903
      %3905 = vrot.lane.b32.xlu0 %v3639, 96
      %v3906 = vpop.permute.xlu0 %3905
      %3907 = vrot.lane.b32.xlu0 %v3640, 96
      %v3908 = vpop.permute.xlu0 %3907
      %3909 = vrot.lane.b32.xlu0 %v3641, 96
      %v3910 = vpop.permute.xlu0 %3909
      %3911 = vrot.lane.b32.xlu0 %v3642, 96
      %v3912 = vpop.permute.xlu0 %3911
      %3913 = vrot.lane.b32.xlu0 %v3643, 96
      %v3914 = vpop.permute.xlu0 %3913
      %3915 = vrot.lane.b32.xlu0 %v3644, 96
      %v3916 = vpop.permute.xlu0 %3915
      %3917 = vrot.lane.b32.xlu0 %v3645, 96
      %v3918 = vpop.permute.xlu0 %3917
      %3919 = vrot.lane.b32.xlu0 %v3646, 96
      %v3920 = vpop.permute.xlu0 %3919
      %3921 = vrot.lane.b32.xlu0 %v3647, 96
      %v3922 = vpop.permute.xlu0 %3921
      %3923 = vrot.lane.b32.xlu0 %v3648, 96
      %v3924 = vpop.permute.xlu0 %3923
      %3925 = vrot.lane.b32.xlu0 %v3649, 96
      %v3926 = vpop.permute.xlu0 %3925
      %3927 = vrot.lane.b32.xlu0 %v3650, 96
      %v3928 = vpop.permute.xlu0 %3927
      %3929 = vrot.lane.b32.xlu0 %v3651, 96
      %v3930 = vpop.permute.xlu0 %3929
      %3931 = vrot.lane.b32.xlu0 %v3652, 96
      %v3932 = vpop.permute.xlu0 %3931
      %3933 = vrot.lane.b32.xlu0 %v3653, 96
      %v3934 = vpop.permute.xlu0 %3933
      %3935 = vrot.lane.b32.xlu0 %v3654, 96
      %v3936 = vpop.permute.xlu0 %3935
      %3937 = vrot.lane.b32.xlu0 %v3655, 96
      %v3938 = vpop.permute.xlu0 %3937
      %3939 = vrot.lane.b32.xlu0 %v3656, 96
      %v3940 = vpop.permute.xlu0 %3939
      %3941 = vrot.lane.b32.xlu0 %v3657, 96
      %v3942 = vpop.permute.xlu0 %3941
      %3943 = vrot.lane.b32.xlu0 %v3658, 96
      %v3944 = vpop.permute.xlu0 %3943
      %3945 = vrot.lane.b32.xlu0 %v3659, 96
      %v3946 = vpop.permute.xlu0 %3945
      %3947 = vrot.lane.b32.xlu0 %v3660, 96
      %v3948 = vpop.permute.xlu0 %3947
      %3981 = vst.msk [vmem:[#allocation3] sm:$0xff] %vm1295, %v3886
      %3982 = vst.msk [vmem:[#allocation3 + $0x8] sm:$0xff] %vm1295, %v3888
      %3983 = vst.msk [vmem:[#allocation3 + $0x10] sm:$0xff] %vm1295, %v3890
      %3984 = vst.msk [vmem:[#allocation3 + $0x18] sm:$0xff] %vm1295, %v3892
      %3985 = vst.msk [vmem:[#allocation3 + $0x20] sm:$0xff] %vm1295, %v3894
      %3986 = vst.msk [vmem:[#allocation3 + $0x28] sm:$0xff] %vm1295, %v3896
      %3987 = vst.msk [vmem:[#allocation3 + $0x30] sm:$0xff] %vm1295, %v3898
      %3988 = vst.msk [vmem:[#allocation3 + $0x38] sm:$0xff] %vm1295, %v3900
      %3989 = vst.msk [vmem:[#allocation3 + $0x40] sm:$0xff] %vm1295, %v3902
      %3990 = vst.msk [vmem:[#allocation3 + $0x48] sm:$0xff] %vm1295, %v3904
      %3991 = vst.msk [vmem:[#allocation3 + $0x50] sm:$0xff] %vm1295, %v3906
      %3992 = vst.msk [vmem:[#allocation3 + $0x58] sm:$0xff] %vm1295, %v3908
      %3993 = vst.msk [vmem:[#allocation3 + $0x60] sm:$0xff] %vm1295, %v3910
      %3994 = vst.msk [vmem:[#allocation3 + $0x68] sm:$0xff] %vm1295, %v3912
      %3995 = vst.msk [vmem:[#allocation3 + $0x70] sm:$0xff] %vm1295, %v3914
      %3996 = vst.msk [vmem:[#allocation3 + $0x78] sm:$0xff] %vm1295, %v3916
      %3997 = vst.msk [vmem:[#allocation3 + $0x80] sm:$0xff] %vm1295, %v3918
      %3998 = vst.msk [vmem:[#allocation3 + $0x88] sm:$0xff] %vm1295, %v3920
      %3999 = vst.msk [vmem:[#allocation3 + $0x90] sm:$0xff] %vm1295, %v3922
      %4000 = vst.msk [vmem:[#allocation3 + $0x98] sm:$0xff] %vm1295, %v3924
      %4001 = vst.msk [vmem:[#allocation3 + $0xa0] sm:$0xff] %vm1295, %v3926
      %4002 = vst.msk [vmem:[#allocation3 + $0xa8] sm:$0xff] %vm1295, %v3928
      %4003 = vst.msk [vmem:[#allocation3 + $0xb0] sm:$0xff] %vm1295, %v3930
      %4004 = vst.msk [vmem:[#allocation3 + $0xb8] sm:$0xff] %vm1295, %v3932
      %4005 = vst.msk [vmem:[#allocation3 + $0xc0] sm:$0xff] %vm1295, %v3934
      %4006 = vst.msk [vmem:[#allocation3 + $0xc8] sm:$0xff] %vm1295, %v3936
      %4007 = vst.msk [vmem:[#allocation3 + $0xd0] sm:$0xff] %vm1295, %v3938
      %4008 = vst.msk [vmem:[#allocation3 + $0xd8] sm:$0xff] %vm1295, %v3940
      %4009 = vst.msk [vmem:[#allocation3 + $0xe0] sm:$0xff] %vm1295, %v3942
      %4010 = vst.msk [vmem:[#allocation3 + $0xe8] sm:$0xff] %vm1295, %v3944
      %4011 = vst.msk [vmem:[#allocation3 + $0xf0] sm:$0xff] %vm1295, %v3946
      %4012 = vst.msk [vmem:[#allocation3 + $0xf8] sm:$0xff] %vm1295, %v3948
      %4045 = vrot.lane.b32.xlu0 %v3821, 64
      %v4046 = vpop.permute.xlu0 %4045
      %4047 = vrot.lane.b32.xlu0 %v3822, 64
      %v4048 = vpop.permute.xlu0 %4047
      %4049 = vrot.lane.b32.xlu0 %v3823, 64
      %v4050 = vpop.permute.xlu0 %4049
      %4051 = vrot.lane.b32.xlu0 %v3824, 64
      %v4052 = vpop.permute.xlu0 %4051
      %4053 = vrot.lane.b32.xlu0 %v3825, 64
      %v4054 = vpop.permute.xlu0 %4053
      %4055 = vrot.lane.b32.xlu0 %v3826, 64
      %v4056 = vpop.permute.xlu0 %4055
      %4057 = vrot.lane.b32.xlu0 %v3827, 64
      %v4058 = vpop.permute.xlu0 %4057
      %4059 = vrot.lane.b32.xlu0 %v3828, 64
      %v4060 = vpop.permute.xlu0 %4059
      %4061 = vrot.lane.b32.xlu0 %v3829, 64
      %v4062 = vpop.permute.xlu0 %4061
      %4063 = vrot.lane.b32.xlu0 %v3830, 64
      %v4064 = vpop.permute.xlu0 %4063
      %4065 = vrot.lane.b32.xlu0 %v3831, 64
      %v4066 = vpop.permute.xlu0 %4065
      %4067 = vrot.lane.b32.xlu0 %v3832, 64
      %v4068 = vpop.permute.xlu0 %4067
      %4069 = vrot.lane.b32.xlu0 %v3833, 64
      %v4070 = vpop.permute.xlu0 %4069
      %4071 = vrot.lane.b32.xlu0 %v3834, 64
      %v4072 = vpop.permute.xlu0 %4071
      %4073 = vrot.lane.b32.xlu0 %v3835, 64
      %v4074 = vpop.permute.xlu0 %4073
      %4075 = vrot.lane.b32.xlu0 %v3836, 64
      %v4076 = vpop.permute.xlu0 %4075
      %4077 = vrot.lane.b32.xlu0 %v3837, 64
      %v4078 = vpop.permute.xlu0 %4077
      %4079 = vrot.lane.b32.xlu0 %v3838, 64
      %v4080 = vpop.permute.xlu0 %4079
      %4081 = vrot.lane.b32.xlu0 %v3839, 64
      %v4082 = vpop.permute.xlu0 %4081
      %4083 = vrot.lane.b32.xlu0 %v3840, 64
      %v4084 = vpop.permute.xlu0 %4083
      %4085 = vrot.lane.b32.xlu0 %v3841, 64
      %v4086 = vpop.permute.xlu0 %4085
      %4087 = vrot.lane.b32.xlu0 %v3842, 64
      %v4088 = vpop.permute.xlu0 %4087
      %4089 = vrot.lane.b32.xlu0 %v3843, 64
      %v4090 = vpop.permute.xlu0 %4089
      %4091 = vrot.lane.b32.xlu0 %v3844, 64
      %v4092 = vpop.permute.xlu0 %4091
      %4093 = vrot.lane.b32.xlu0 %v3845, 64
      %v4094 = vpop.permute.xlu0 %4093
      %4095 = vrot.lane.b32.xlu0 %v3846, 64
      %v4096 = vpop.permute.xlu0 %4095
      %4097 = vrot.lane.b32.xlu0 %v3847, 64
      %v4098 = vpop.permute.xlu0 %4097
      %4099 = vrot.lane.b32.xlu0 %v3848, 64
      %v4100 = vpop.permute.xlu0 %4099
      %4101 = vrot.lane.b32.xlu0 %v3849, 64
      %v4102 = vpop.permute.xlu0 %4101
      %4103 = vrot.lane.b32.xlu0 %v3850, 64
      %v4104 = vpop.permute.xlu0 %4103
      %4105 = vrot.lane.b32.xlu0 %v3851, 64
      %v4106 = vpop.permute.xlu0 %4105
      %4107 = vrot.lane.b32.xlu0 %v3852, 64
      %v4108 = vpop.permute.xlu0 %4107
      %s4141 = scalar_lea.vmem [#allocation2], 24
      %4142 = vst.msk [vmem:[%s4141 + $0x1] sm:$0xff] %vm1295, %v4046
      %4143 = vst.msk [vmem:[%s4141 + $0x9] sm:$0xff] %vm1295, %v4048
      %4144 = vst.msk [vmem:[%s4141 + $0x19] sm:$0xff] %vm1295, %v4050
      %4145 = vst.msk [vmem:[%s4141 + $0x21] sm:$0xff] %vm1295, %v4052
      %4146 = vst.msk [vmem:[%s4141 + $0x31] sm:$0xff] %vm1295, %v4054
      %4147 = vst.msk [vmem:[%s4141 + $0x39] sm:$0xff] %vm1295, %v4056
      %4148 = vst.msk [vmem:[%s4141 + $0x49] sm:$0xff] %vm1295, %v4058
      %4149 = vst.msk [vmem:[%s4141 + $0x51] sm:$0xff] %vm1295, %v4060
      %4150 = vst.msk [vmem:[%s4141 + $0x61] sm:$0xff] %vm1295, %v4062
      %4151 = vst.msk [vmem:[%s4141 + $0x69] sm:$0xff] %vm1295, %v4064
      %4152 = vst.msk [vmem:[%s4141 + $0x79] sm:$0xff] %vm1295, %v4066
      %4153 = vst.msk [vmem:[%s4141 + $0x81] sm:$0xff] %vm1295, %v4068
      %4154 = vst.msk [vmem:[%s4141 + $0x91] sm:$0xff] %vm1295, %v4070
      %4155 = vst.msk [vmem:[%s4141 + $0x99] sm:$0xff] %vm1295, %v4072
      %4156 = vst.msk [vmem:[%s4141 + $0xa9] sm:$0xff] %vm1295, %v4074
      %4157 = vst.msk [vmem:[%s4141 + $0xb1] sm:$0xff] %vm1295, %v4076
      %4158 = vst.msk [vmem:[%s4141 + $0xc1] sm:$0xff] %vm1295, %v4078
      %4159 = vst.msk [vmem:[%s4141 + $0xc9] sm:$0xff] %vm1295, %v4080
      %4160 = vst.msk [vmem:[%s4141 + $0xd9] sm:$0xff] %vm1295, %v4082
      %4161 = vst.msk [vmem:[%s4141 + $0xe1] sm:$0xff] %vm1295, %v4084
      %4162 = vst.msk [vmem:[%s4141 + $0xf1] sm:$0xff] %vm1295, %v4086
      %4163 = vst.msk [vmem:[%s4141 + $0xf9] sm:$0xff] %vm1295, %v4088
      %4164 = vst.msk [vmem:[%s4141 + $0x109] sm:$0xff] %vm1295, %v4090
      %4165 = vst.msk [vmem:[%s4141 + $0x111] sm:$0xff] %vm1295, %v4092
      %4166 = vst.msk [vmem:[%s4141 + $0x121] sm:$0xff] %vm1295, %v4094
      %4167 = vst.msk [vmem:[%s4141 + $0x129] sm:$0xff] %vm1295, %v4096
      %4168 = vst.msk [vmem:[%s4141 + $0x139] sm:$0xff] %vm1295, %v4098
      %4169 = vst.msk [vmem:[%s4141 + $0x141] sm:$0xff] %vm1295, %v4100
      %4170 = vst.msk [vmem:[%s4141 + $0x151] sm:$0xff] %vm1295, %v4102
      %4171 = vst.msk [vmem:[%s4141 + $0x159] sm:$0xff] %vm1295, %v4104
      %4172 = vst.msk [vmem:[%s4141 + $0x169] sm:$0xff] %vm1295, %v4106
      %4173 = vst.msk [vmem:[%s4141 + $0x171] sm:$0xff] %vm1295, %v4108
      %v4174 = vld [vmem:[#allocation2] sm:$0xff]
      %v4175 = vld [vmem:[#allocation2 + $0x8] sm:$0xff]
      %v4176 = vld [vmem:[#allocation2 + $0x10] sm:$0x3]
      %v4177 = vld [vmem:[#allocation2 + $0x18] sm:$0xff]
      %v4178 = vld [vmem:[#allocation2 + $0x20] sm:$0xff]
      %v4179 = vld [vmem:[#allocation2 + $0x28] sm:$0x3]
      %v4180 = vld [vmem:[#allocation2 + $0x30] sm:$0xff]
      %v4181 = vld [vmem:[#allocation2 + $0x38] sm:$0xff]
      %v4182 = vld [vmem:[#allocation2 + $0x40] sm:$0x3]
      %v4183 = vld [vmem:[#allocation2 + $0x48] sm:$0xff]
      %v4184 = vld [vmem:[#allocation2 + $0x50] sm:$0xff]
      %v4185 = vld [vmem:[#allocation2 + $0x58] sm:$0x3]
      %v4186 = vld [vmem:[#allocation2 + $0x60] sm:$0xff]
      %v4187 = vld [vmem:[#allocation2 + $0x68] sm:$0xff]
      %v4188 = vld [vmem:[#allocation2 + $0x70] sm:$0x3]
      %v4189 = vld [vmem:[#allocation2 + $0x78] sm:$0xff]
      %v4190 = vld [vmem:[#allocation2 + $0x80] sm:$0xff]
      %v4191 = vld [vmem:[#allocation2 + $0x88] sm:$0x3]
      %v4192 = vld [vmem:[#allocation2 + $0x90] sm:$0xff]
      %v4193 = vld [vmem:[#allocation2 + $0x98] sm:$0xff]
      %v4194 = vld [vmem:[#allocation2 + $0xa0] sm:$0x3]
      %v4195 = vld [vmem:[#allocation2 + $0xa8] sm:$0xff]
      %v4196 = vld [vmem:[#allocation2 + $0xb0] sm:$0xff]
      %v4197 = vld [vmem:[#allocation2 + $0xb8] sm:$0x3]
      %v4198 = vld [vmem:[#allocation2 + $0xc0] sm:$0xff]
      %v4199 = vld [vmem:[#allocation2 + $0xc8] sm:$0xff]
      %v4200 = vld [vmem:[#allocation2 + $0xd0] sm:$0x3]
      %v4201 = vld [vmem:[#allocation2 + $0xd8] sm:$0xff]
      %v4202 = vld [vmem:[#allocation2 + $0xe0] sm:$0xff]
      %v4203 = vld [vmem:[#allocation2 + $0xe8] sm:$0x3]
      %v4204 = vld [vmem:[#allocation2 + $0xf0] sm:$0xff]
      %v4205 = vld [vmem:[#allocation2 + $0xf8] sm:$0xff]
      %v4206 = vld [vmem:[#allocation2 + $0x100] sm:$0x3]
      %v4207 = vld [vmem:[#allocation2 + $0x108] sm:$0xff]
      %v4208 = vld [vmem:[#allocation2 + $0x110] sm:$0xff]
      %v4209 = vld [vmem:[#allocation2 + $0x118] sm:$0x3]
      %v4210 = vld [vmem:[#allocation2 + $0x120] sm:$0xff]
      %v4211 = vld [vmem:[#allocation2 + $0x128] sm:$0xff]
      %v4212 = vld [vmem:[#allocation2 + $0x130] sm:$0x3]
      %v4213 = vld [vmem:[#allocation2 + $0x138] sm:$0xff]
      %v4214 = vld [vmem:[#allocation2 + $0x140] sm:$0xff]
      %v4215 = vld [vmem:[#allocation2 + $0x148] sm:$0x3]
      %v4216 = vld [vmem:[#allocation2 + $0x150] sm:$0xff]
      %v4217 = vld [vmem:[#allocation2 + $0x158] sm:$0xff]
      %v4218 = vld [vmem:[#allocation2 + $0x160] sm:$0x3]
      %v4219 = vld [vmem:[#allocation2 + $0x168] sm:$0xff]
      %v4220 = vld [vmem:[#allocation2 + $0x170] sm:$0xff]
      %v4221 = vld [vmem:[#allocation2 + $0x178] sm:$0x3]
      %v4222 = vld [vmem:[#allocation2 + $0x180] sm:$0xff]
      %v4223 = vld [vmem:[#allocation2 + $0x188] sm:$0xff]
      %v4224 = vld [vmem:[#allocation2 + $0x190] sm:$0x3]
      %v4225 = vld [vmem:[#allocation2 + $0x198] sm:$0xff]
      %v4226 = vld [vmem:[#allocation2 + $0x1a0] sm:$0xff]
      %v4227 = vld [vmem:[#allocation2 + $0x1a8] sm:$0x3]
      %v4276 = vrot.slane %v4174, 1
      %v4277 = vrot.slane %v4175, 1
      %v4278 = vsel %vm509, %v4276, %v4277
      %v4279 = vrot.slane %v4176, 1
      %v4280 = vsel %vm509, %v4277, %v4279
      %v4281 = vrot.slane %v4177, 1
      %v4282 = vrot.slane %v4178, 1
      %v4283 = vsel %vm509, %v4281, %v4282
      %v4284 = vrot.slane %v4179, 1
      %v4285 = vsel %vm509, %v4282, %v4284
      %v4286 = vrot.slane %v4180, 1
      %v4287 = vrot.slane %v4181, 1
      %v4288 = vsel %vm509, %v4286, %v4287
      %v4289 = vrot.slane %v4182, 1
      %v4290 = vsel %vm509, %v4287, %v4289
      %v4291 = vrot.slane %v4183, 1
      %v4292 = vrot.slane %v4184, 1
      %v4293 = vsel %vm509, %v4291, %v4292
      %v4294 = vrot.slane %v4185, 1
      %v4295 = vsel %vm509, %v4292, %v4294
      %v4296 = vrot.slane %v4186, 1
      %v4297 = vrot.slane %v4187, 1
      %v4298 = vsel %vm509, %v4296, %v4297
      %v4299 = vrot.slane %v4188, 1
      %v4300 = vsel %vm509, %v4297, %v4299
      %v4301 = vrot.slane %v4189, 1
      %v4302 = vrot.slane %v4190, 1
      %v4303 = vsel %vm509, %v4301, %v4302
      %v4304 = vrot.slane %v4191, 1
      %v4305 = vsel %vm509, %v4302, %v4304
      %v4306 = vrot.slane %v4192, 1
      %v4307 = vrot.slane %v4193, 1
      %v4308 = vsel %vm509, %v4306, %v4307
      %v4309 = vrot.slane %v4194, 1
      %v4310 = vsel %vm509, %v4307, %v4309
      %v4311 = vrot.slane %v4195, 1
      %v4312 = vrot.slane %v4196, 1
      %v4313 = vsel %vm509, %v4311, %v4312
      %v4314 = vrot.slane %v4197, 1
      %v4315 = vsel %vm509, %v4312, %v4314
      %v4316 = vrot.slane %v4198, 1
      %v4317 = vrot.slane %v4199, 1
      %v4318 = vsel %vm509, %v4316, %v4317
      %v4319 = vrot.slane %v4200, 1
      %v4320 = vsel %vm509, %v4317, %v4319
      %v4321 = vrot.slane %v4201, 1
      %v4322 = vrot.slane %v4202, 1
      %v4323 = vsel %vm509, %v4321, %v4322
      %v4324 = vrot.slane %v4203, 1
      %v4325 = vsel %vm509, %v4322, %v4324
      %v4326 = vrot.slane %v4204, 1
      %v4327 = vrot.slane %v4205, 1
      %v4328 = vsel %vm509, %v4326, %v4327
      %v4329 = vrot.slane %v4206, 1
      %v4330 = vsel %vm509, %v4327, %v4329
      %v4331 = vrot.slane %v4207, 1
      %v4332 = vrot.slane %v4208, 1
      %v4333 = vsel %vm509, %v4331, %v4332
      %v4334 = vrot.slane %v4209, 1
      %v4335 = vsel %vm509, %v4332, %v4334
      %v4336 = vrot.slane %v4210, 1
      %v4337 = vrot.slane %v4211, 1
      %v4338 = vsel %vm509, %v4336, %v4337
      %v4339 = vrot.slane %v4212, 1
      %v4340 = vsel %vm509, %v4337, %v4339
      %v4341 = vrot.slane %v4213, 1
      %v4342 = vrot.slane %v4214, 1
      %v4343 = vsel %vm509, %v4341, %v4342
      %v4344 = vrot.slane %v4215, 1
      %v4345 = vsel %vm509, %v4342, %v4344
      %v4346 = vrot.slane %v4216, 1
      %v4347 = vrot.slane %v4217, 1
      %v4348 = vsel %vm509, %v4346, %v4347
      %v4349 = vrot.slane %v4218, 1
      %v4350 = vsel %vm509, %v4347, %v4349
      %v4351 = vrot.slane %v4219, 1
      %v4352 = vrot.slane %v4220, 1
      %v4353 = vsel %vm509, %v4351, %v4352
      %v4354 = vrot.slane %v4221, 1
      %v4355 = vsel %vm509, %v4352, %v4354
      %v4356 = vrot.slane %v4174, 2
      %v4357 = vrot.slane %v4175, 2
      %v4358 = vsel %vm590, %v4356, %v4357
      %v4359 = vrot.slane %v4176, 2
      %v4360 = vsel %vm590, %v4357, %v4359
      %v4361 = vrot.slane %v4177, 2
      %v4362 = vrot.slane %v4178, 2
      %v4363 = vsel %vm590, %v4361, %v4362
      %v4364 = vrot.slane %v4179, 2
      %v4365 = vsel %vm590, %v4362, %v4364
      %v4366 = vrot.slane %v4180, 2
      %v4367 = vrot.slane %v4181, 2
      %v4368 = vsel %vm590, %v4366, %v4367
      %v4369 = vrot.slane %v4182, 2
      %v4370 = vsel %vm590, %v4367, %v4369
      %v4371 = vrot.slane %v4183, 2
      %v4372 = vrot.slane %v4184, 2
      %v4373 = vsel %vm590, %v4371, %v4372
      %v4374 = vrot.slane %v4185, 2
      %v4375 = vsel %vm590, %v4372, %v4374
      %v4376 = vrot.slane %v4186, 2
      %v4377 = vrot.slane %v4187, 2
      %v4378 = vsel %vm590, %v4376, %v4377
      %v4379 = vrot.slane %v4188, 2
      %v4380 = vsel %vm590, %v4377, %v4379
      %v4381 = vrot.slane %v4189, 2
      %v4382 = vrot.slane %v4190, 2
      %v4383 = vsel %vm590, %v4381, %v4382
      %v4384 = vrot.slane %v4191, 2
      %v4385 = vsel %vm590, %v4382, %v4384
      %v4386 = vrot.slane %v4192, 2
      %v4387 = vrot.slane %v4193, 2
      %v4388 = vsel %vm590, %v4386, %v4387
      %v4389 = vrot.slane %v4194, 2
      %v4390 = vsel %vm590, %v4387, %v4389
      %v4391 = vrot.slane %v4195, 2
      %v4392 = vrot.slane %v4196, 2
      %v4393 = vsel %vm590, %v4391, %v4392
      %v4394 = vrot.slane %v4197, 2
      %v4395 = vsel %vm590, %v4392, %v4394
      %v4396 = vrot.slane %v4198, 2
      %v4397 = vrot.slane %v4199, 2
      %v4398 = vsel %vm590, %v4396, %v4397
      %v4399 = vrot.slane %v4200, 2
      %v4400 = vsel %vm590, %v4397, %v4399
      %v4401 = vrot.slane %v4201, 2
      %v4402 = vrot.slane %v4202, 2
      %v4403 = vsel %vm590, %v4401, %v4402
      %v4404 = vrot.slane %v4203, 2
      %v4405 = vsel %vm590, %v4402, %v4404
      %v4406 = vrot.slane %v4204, 2
      %v4407 = vrot.slane %v4205, 2
      %v4408 = vsel %vm590, %v4406, %v4407
      %v4409 = vrot.slane %v4206, 2
      %v4410 = vsel %vm590, %v4407, %v4409
      %v4411 = vrot.slane %v4207, 2
      %v4412 = vrot.slane %v4208, 2
      %v4413 = vsel %vm590, %v4411, %v4412
      %v4414 = vrot.slane %v4209, 2
      %v4415 = vsel %vm590, %v4412, %v4414
      %v4416 = vrot.slane %v4210, 2
      %v4417 = vrot.slane %v4211, 2
      %v4418 = vsel %vm590, %v4416, %v4417
      %v4419 = vrot.slane %v4212, 2
      %v4420 = vsel %vm590, %v4417, %v4419
      %v4421 = vrot.slane %v4213, 2
      %v4422 = vrot.slane %v4214, 2
      %v4423 = vsel %vm590, %v4421, %v4422
      %v4424 = vrot.slane %v4215, 2
      %v4425 = vsel %vm590, %v4422, %v4424
      %v4426 = vrot.slane %v4216, 2
      %v4427 = vrot.slane %v4217, 2
      %v4428 = vsel %vm590, %v4426, %v4427
      %v4429 = vrot.slane %v4218, 2
      %v4430 = vsel %vm590, %v4427, %v4429
      %v4431 = vrot.slane %v4219, 2
      %v4432 = vrot.slane %v4220, 2
      %v4433 = vsel %vm590, %v4431, %v4432
      %v4434 = vrot.slane %v4221, 2
      %v4435 = vsel %vm590, %v4432, %v4434
      %4436 = vrot.lane.b32.xlu0 %v4278, 32
      %v4437 = vpop.permute.xlu0 %4436
      %4438 = vrot.lane.b32.xlu0 %v4280, 32
      %v4439 = vpop.permute.xlu0 %4438
      %4440 = vrot.lane.b32.xlu0 %v4283, 32
      %v4441 = vpop.permute.xlu0 %4440
      %4442 = vrot.lane.b32.xlu0 %v4285, 32
      %v4443 = vpop.permute.xlu0 %4442
      %4444 = vrot.lane.b32.xlu0 %v4288, 32
      %v4445 = vpop.permute.xlu0 %4444
      %4446 = vrot.lane.b32.xlu0 %v4290, 32
      %v4447 = vpop.permute.xlu0 %4446
      %4448 = vrot.lane.b32.xlu0 %v4293, 32
      %v4449 = vpop.permute.xlu0 %4448
      %4450 = vrot.lane.b32.xlu0 %v4295, 32
      %v4451 = vpop.permute.xlu0 %4450
      %4452 = vrot.lane.b32.xlu0 %v4298, 32
      %v4453 = vpop.permute.xlu0 %4452
      %4454 = vrot.lane.b32.xlu0 %v4300, 32
      %v4455 = vpop.permute.xlu0 %4454
      %4456 = vrot.lane.b32.xlu0 %v4303, 32
      %v4457 = vpop.permute.xlu0 %4456
      %4458 = vrot.lane.b32.xlu0 %v4305, 32
      %v4459 = vpop.permute.xlu0 %4458
      %4460 = vrot.lane.b32.xlu0 %v4308, 32
      %v4461 = vpop.permute.xlu0 %4460
      %4462 = vrot.lane.b32.xlu0 %v4310, 32
      %v4463 = vpop.permute.xlu0 %4462
      %4464 = vrot.lane.b32.xlu0 %v4313, 32
      %v4465 = vpop.permute.xlu0 %4464
      %4466 = vrot.lane.b32.xlu0 %v4315, 32
      %v4467 = vpop.permute.xlu0 %4466
      %4468 = vrot.lane.b32.xlu0 %v4318, 32
      %v4469 = vpop.permute.xlu0 %4468
      %4470 = vrot.lane.b32.xlu0 %v4320, 32
      %v4471 = vpop.permute.xlu0 %4470
      %4472 = vrot.lane.b32.xlu0 %v4323, 32
      %v4473 = vpop.permute.xlu0 %4472
      %4474 = vrot.lane.b32.xlu0 %v4325, 32
      %v4475 = vpop.permute.xlu0 %4474
      %4476 = vrot.lane.b32.xlu0 %v4328, 32
      %v4477 = vpop.permute.xlu0 %4476
      %4478 = vrot.lane.b32.xlu0 %v4330, 32
      %v4479 = vpop.permute.xlu0 %4478
      %4480 = vrot.lane.b32.xlu0 %v4333, 32
      %v4481 = vpop.permute.xlu0 %4480
      %4482 = vrot.lane.b32.xlu0 %v4335, 32
      %v4483 = vpop.permute.xlu0 %4482
      %4484 = vrot.lane.b32.xlu0 %v4338, 32
      %v4485 = vpop.permute.xlu0 %4484
      %4486 = vrot.lane.b32.xlu0 %v4340, 32
      %v4487 = vpop.permute.xlu0 %4486
      %4488 = vrot.lane.b32.xlu0 %v4343, 32
      %v4489 = vpop.permute.xlu0 %4488
      %4490 = vrot.lane.b32.xlu0 %v4345, 32
      %v4491 = vpop.permute.xlu0 %4490
      %4492 = vrot.lane.b32.xlu0 %v4348, 32
      %v4493 = vpop.permute.xlu0 %4492
      %4494 = vrot.lane.b32.xlu0 %v4350, 32
      %v4495 = vpop.permute.xlu0 %4494
      %4496 = vrot.lane.b32.xlu0 %v4353, 32
      %v4497 = vpop.permute.xlu0 %4496
      %4498 = vrot.lane.b32.xlu0 %v4355, 32
      %v4499 = vpop.permute.xlu0 %4498
      %4532 = vrot.lane.b32.xlu0 %v4358, 64
      %v4533 = vpop.permute.xlu0 %4532
      %4534 = vrot.lane.b32.xlu0 %v4360, 64
      %v4535 = vpop.permute.xlu0 %4534
      %4536 = vrot.lane.b32.xlu0 %v4363, 64
      %v4537 = vpop.permute.xlu0 %4536
      %4538 = vrot.lane.b32.xlu0 %v4365, 64
      %v4539 = vpop.permute.xlu0 %4538
      %4540 = vrot.lane.b32.xlu0 %v4368, 64
      %v4541 = vpop.permute.xlu0 %4540
      %4542 = vrot.lane.b32.xlu0 %v4370, 64
      %v4543 = vpop.permute.xlu0 %4542
      %4544 = vrot.lane.b32.xlu0 %v4373, 64
      %v4545 = vpop.permute.xlu0 %4544
      %4546 = vrot.lane.b32.xlu0 %v4375, 64
      %v4547 = vpop.permute.xlu0 %4546
      %4548 = vrot.lane.b32.xlu0 %v4378, 64
      %v4549 = vpop.permute.xlu0 %4548
      %4550 = vrot.lane.b32.xlu0 %v4380, 64
      %v4551 = vpop.permute.xlu0 %4550
      %4552 = vrot.lane.b32.xlu0 %v4383, 64
      %v4553 = vpop.permute.xlu0 %4552
      %4554 = vrot.lane.b32.xlu0 %v4385, 64
      %v4555 = vpop.permute.xlu0 %4554
      %4556 = vrot.lane.b32.xlu0 %v4388, 64
      %v4557 = vpop.permute.xlu0 %4556
      %4558 = vrot.lane.b32.xlu0 %v4390, 64
      %v4559 = vpop.permute.xlu0 %4558
      %4560 = vrot.lane.b32.xlu0 %v4393, 64
      %v4561 = vpop.permute.xlu0 %4560
      %4562 = vrot.lane.b32.xlu0 %v4395, 64
      %v4563 = vpop.permute.xlu0 %4562
      %4564 = vrot.lane.b32.xlu0 %v4398, 64
      %v4565 = vpop.permute.xlu0 %4564
      %4566 = vrot.lane.b32.xlu0 %v4400, 64
      %v4567 = vpop.permute.xlu0 %4566
      %4568 = vrot.lane.b32.xlu0 %v4403, 64
      %v4569 = vpop.permute.xlu0 %4568
      %4570 = vrot.lane.b32.xlu0 %v4405, 64
      %v4571 = vpop.permute.xlu0 %4570
      %4572 = vrot.lane.b32.xlu0 %v4408, 64
      %v4573 = vpop.permute.xlu0 %4572
      %4574 = vrot.lane.b32.xlu0 %v4410, 64
      %v4575 = vpop.permute.xlu0 %4574
      %4576 = vrot.lane.b32.xlu0 %v4413, 64
      %v4577 = vpop.permute.xlu0 %4576
      %4578 = vrot.lane.b32.xlu0 %v4415, 64
      %v4579 = vpop.permute.xlu0 %4578
      %4580 = vrot.lane.b32.xlu0 %v4418, 64
      %v4581 = vpop.permute.xlu0 %4580
      %4582 = vrot.lane.b32.xlu0 %v4420, 64
      %v4583 = vpop.permute.xlu0 %4582
      %4584 = vrot.lane.b32.xlu0 %v4423, 64
      %v4585 = vpop.permute.xlu0 %4584
      %4586 = vrot.lane.b32.xlu0 %v4425, 64
      %v4587 = vpop.permute.xlu0 %4586
      %4588 = vrot.lane.b32.xlu0 %v4428, 64
      %v4589 = vpop.permute.xlu0 %4588
      %4590 = vrot.lane.b32.xlu0 %v4430, 64
      %v4591 = vpop.permute.xlu0 %4590
      %4592 = vrot.lane.b32.xlu0 %v4433, 64
      %v4593 = vpop.permute.xlu0 %4592
      %4594 = vrot.lane.b32.xlu0 %v4435, 64
      %v4595 = vpop.permute.xlu0 %4594
      %v4628 = vsel %vm1295, %v4174, %v4437
      %v4629 = vsel %vm1295, %v4175, %v4439
      %v4630 = vsel %vm1295, %v4177, %v4441
      %v4631 = vsel %vm1295, %v4178, %v4443
      %v4632 = vsel %vm1295, %v4180, %v4445
      %v4633 = vsel %vm1295, %v4181, %v4447
      %v4634 = vsel %vm1295, %v4183, %v4449
      %v4635 = vsel %vm1295, %v4184, %v4451
      %v4636 = vsel %vm1295, %v4186, %v4453
      %v4637 = vsel %vm1295, %v4187, %v4455
      %v4638 = vsel %vm1295, %v4189, %v4457
      %v4639 = vsel %vm1295, %v4190, %v4459
      %v4640 = vsel %vm1295, %v4192, %v4461
      %v4641 = vsel %vm1295, %v4193, %v4463
      %v4642 = vsel %vm1295, %v4195, %v4465
      %v4643 = vsel %vm1295, %v4196, %v4467
      %v4644 = vsel %vm1295, %v4198, %v4469
      %v4645 = vsel %vm1295, %v4199, %v4471
      %v4646 = vsel %vm1295, %v4201, %v4473
      %v4647 = vsel %vm1295, %v4202, %v4475
      %v4648 = vsel %vm1295, %v4204, %v4477
      %v4649 = vsel %vm1295, %v4205, %v4479
      %v4650 = vsel %vm1295, %v4207, %v4481
      %v4651 = vsel %vm1295, %v4208, %v4483
      %v4652 = vsel %vm1295, %v4210, %v4485
      %v4653 = vsel %vm1295, %v4211, %v4487
      %v4654 = vsel %vm1295, %v4213, %v4489
      %v4655 = vsel %vm1295, %v4214, %v4491
      %v4656 = vsel %vm1295, %v4216, %v4493
      %v4657 = vsel %vm1295, %v4217, %v4495
      %v4658 = vsel %vm1295, %v4219, %v4497
      %v4659 = vsel %vm1295, %v4220, %v4499
      %v4660 = vsel %vm1328, %v4628, %v4533
      %v4661 = vsel %vm1328, %v4629, %v4535
      %v4662 = vsel %vm1328, %v4630, %v4537
      %v4663 = vsel %vm1328, %v4631, %v4539
      %v4664 = vsel %vm1328, %v4632, %v4541
      %v4665 = vsel %vm1328, %v4633, %v4543
      %v4666 = vsel %vm1328, %v4634, %v4545
      %v4667 = vsel %vm1328, %v4635, %v4547
      %v4668 = vsel %vm1328, %v4636, %v4549
      %v4669 = vsel %vm1328, %v4637, %v4551
      %v4670 = vsel %vm1328, %v4638, %v4553
      %v4671 = vsel %vm1328, %v4639, %v4555
      %v4672 = vsel %vm1328, %v4640, %v4557
      %v4673 = vsel %vm1328, %v4641, %v4559
      %v4674 = vsel %vm1328, %v4642, %v4561
      %v4675 = vsel %vm1328, %v4643, %v4563
      %v4676 = vsel %vm1328, %v4644, %v4565
      %v4677 = vsel %vm1328, %v4645, %v4567
      %v4678 = vsel %vm1328, %v4646, %v4569
      %v4679 = vsel %vm1328, %v4647, %v4571
      %v4680 = vsel %vm1328, %v4648, %v4573
      %v4681 = vsel %vm1328, %v4649, %v4575
      %v4682 = vsel %vm1328, %v4650, %v4577
      %v4683 = vsel %vm1328, %v4651, %v4579
      %v4684 = vsel %vm1328, %v4652, %v4581
      %v4685 = vsel %vm1328, %v4653, %v4583
      %v4686 = vsel %vm1328, %v4654, %v4585
      %v4687 = vsel %vm1328, %v4655, %v4587
      %v4688 = vsel %vm1328, %v4656, %v4589
      %v4689 = vsel %vm1328, %v4657, %v4591
      %v4690 = vsel %vm1328, %v4658, %v4593
      %v4691 = vsel %vm1328, %v4659, %v4595
      %v4692 = vld [vmem:[%s3] sm:$0xff]
      %v4693 = vld [vmem:[%s3 + $0x8] sm:$0xff]
      %v4694 = vld [vmem:[%s3 + $0x10] sm:$0xff]
      %v4695 = vld [vmem:[%s3 + $0x18] sm:$0xff]
      %v4696 = vld [vmem:[%s3 + $0x20] sm:$0xff]
      %v4697 = vld [vmem:[%s3 + $0x28] sm:$0xff]
      %v4698 = vld [vmem:[%s3 + $0x30] sm:$0xff]
      %v4699 = vld [vmem:[%s3 + $0x38] sm:$0xff]
      %v4700 = vld [vmem:[%s3 + $0x40] sm:$0xff]
      %v4701 = vld [vmem:[%s3 + $0x48] sm:$0xff]
      %v4702 = vld [vmem:[%s3 + $0x50] sm:$0xff]
      %v4703 = vld [vmem:[%s3 + $0x58] sm:$0xff]
      %v4707 = vrot.slane %v4222, 1
      %v4708 = vrot.slane %v4223, 1
      %v4709 = vsel %vm509, %v4707, %v4708
      %v4710 = vrot.slane %v4224, 1
      %v4711 = vsel %vm509, %v4708, %v4710
      %v4712 = vrot.slane %v4222, 2
      %v4713 = vrot.slane %v4223, 2
      %v4714 = vsel %vm590, %v4712, %v4713
      %v4715 = vrot.slane %v4224, 2
      %v4716 = vsel %vm590, %v4713, %v4715
      %4717 = vrot.lane.b32.xlu0 %v4709, 32
      %v4718 = vpop.permute.xlu0 %4717
      %4719 = vrot.lane.b32.xlu0 %v4711, 32
      %v4720 = vpop.permute.xlu0 %4719
      %4723 = vrot.lane.b32.xlu0 %v4714, 64
      %v4724 = vpop.permute.xlu0 %4723
      %4725 = vrot.lane.b32.xlu0 %v4716, 64
      %v4726 = vpop.permute.xlu0 %4725
      %v4729 = vsel %vm1295, %v4222, %v4718
      %v4730 = vsel %vm1295, %v4223, %v4720
      %v4731 = vsel %vm1328, %v4729, %v4724
      %v4732 = vsel %vm1328, %v4730, %v4726
      %s4733 = scalar_lea.vmem %s3, 96
      %v4734 = vld [vmem:[%s4733] sm:$0xff]
      %v4735 = vld [vmem:[%s4733 + $0x8] sm:$0xff]
      %v4736 = vld [vmem:[%s4733 + $0x10] sm:$0xff]
      %v4737 = vld [vmem:[%s4733 + $0x18] sm:$0xff]
      %v4738 = vld [vmem:[%s4733 + $0x20] sm:$0xff]
      %v4739 = vld [vmem:[%s4733 + $0x28] sm:$0xff]
      %v4740 = vld [vmem:[%s4733 + $0x30] sm:$0xff]
      %v4741 = vld [vmem:[%s4733 + $0x38] sm:$0xff]
      %v4742 = vld [vmem:[%s4733 + $0x40] sm:$0xff]
      %v4743 = vld [vmem:[%s4733 + $0x48] sm:$0xff]
      %v4744 = vld [vmem:[%s4733 + $0x50] sm:$0xff]
      %v4745 = vld [vmem:[%s4733 + $0x58] sm:$0xff]
      %v4747 = vsel %vm1361, %v4662, 0
      %v4750 = vsel %vm1361, %v4663, 0
      %v4753 = vsel %vm1361, %v4664, 0
      %v4756 = vsel %vm1361, %v4665, 0
      %v4759 = vsel %vm1361, %v4666, 0
      %v4762 = vsel %vm1361, %v4667, 0
      %v4765 = vsel %vm1361, %v4668, 0
      %v4768 = vsel %vm1361, %v4669, 0
      %v4771 = vsel %vm1361, %v4670, 0
      %v4774 = vsel %vm1361, %v4671, 0
      %v4777 = vsel %vm1361, %v4672, 0
      %v4780 = vsel %vm1361, %v4673, 0
      %v4783 = vsel %vm1361, %v4674, 0
      %v4786 = vsel %vm1361, %v4675, 0
      %v4789 = vsel %vm1361, %v4676, 0
      %v4792 = vsel %vm1361, %v4677, 0
      %v4795 = vsel %vm1361, %v4678, 0
      %v4798 = vsel %vm1361, %v4679, 0
      %v4801 = vsel %vm1361, %v4680, 0
      %v4804 = vsel %vm1361, %v4681, 0
      %v4807 = vsel %vm1361, %v4682, 0
      %v4810 = vsel %vm1361, %v4683, 0
      %v4813 = vsel %vm1361, %v4684, 0
      %v4816 = vsel %vm1361, %v4685, 0
      %v4819 = vsel %vm1361, %v4686, 0
      %v4822 = vsel %vm1361, %v4687, 0
      %v4825 = vsel %vm1361, %v4688, 0
      %v4828 = vsel %vm1361, %v4689, 0
      %v4831 = vsel %vm1361, %v4690, 0
      %v4834 = vsel %vm1361, %v4691, 0
      %v4837 = vsel %vm1361, %v4731, 0
      %v4840 = vsel %vm1361, %v4732, 0
      %4842 = vmatpush.msra.mxu0 0.0
      %4843 = vmatpush.msra.mxu0 0.0
      %4844 = vmatpush.msra.mxu0 0.0
      %4845 = vmatpush.msra.mxu0 0.0
      %4846 = vmatpush.msra.mxu0 %v4745
      %4847 = vmatpush.msra.mxu0 %v4744
      %4848 = vmatpush.msra.mxu0 %v4743
      %4849 = vmatpush.msra.mxu0 %v4742
      %4850 = vmatpush.msra.mxu0 %v4741
      %4851 = vmatpush.msra.mxu0 %v4740
      %4852 = vmatpush.msra.mxu0 %v4739
      %4853 = vmatpush.msra.mxu0 %v4738
      %4854 = vmatpush.msra.mxu0 %v4737
      %4855 = vmatpush.msra.mxu0 %v4736
      %4856 = vmatpush.msra.mxu0 %v4735
      %4857 = vmatpush.msra.mxu0 %v4734
      %4858 = vmatmul.f32.gmra.mxu0 %v4747
      %v4859 = vpop.f32.mrf.mxu0
      %v4860 = vadd.f32 0.0, %v4859
      %4861 = vmatmul.f32.gmra.mxu0 %v4750
      %v4862 = vpop.f32.mrf.mxu0
      %v4863 = vadd.f32 0.0, %v4862
      %4864 = vmatmul.f32.gmra.mxu0 %v4753
      %v4865 = vpop.f32.mrf.mxu0
      %v4866 = vadd.f32 0.0, %v4865
      %4867 = vmatmul.f32.gmra.mxu0 %v4756
      %v4868 = vpop.f32.mrf.mxu0
      %v4869 = vadd.f32 0.0, %v4868
      %4870 = vmatmul.f32.gmra.mxu0 %v4759
      %v4871 = vpop.f32.mrf.mxu0
      %v4872 = vadd.f32 0.0, %v4871
      %4873 = vmatmul.f32.gmra.mxu0 %v4762
      %v4874 = vpop.f32.mrf.mxu0
      %v4875 = vadd.f32 0.0, %v4874
      %4876 = vmatmul.f32.gmra.mxu0 %v4765
      %v4877 = vpop.f32.mrf.mxu0
      %v4878 = vadd.f32 0.0, %v4877
      %4879 = vmatmul.f32.gmra.mxu0 %v4768
      %v4880 = vpop.f32.mrf.mxu0
      %v4881 = vadd.f32 0.0, %v4880
      %4882 = vmatmul.f32.gmra.mxu0 %v4771
      %v4883 = vpop.f32.mrf.mxu0
      %v4884 = vadd.f32 0.0, %v4883
      %4885 = vmatmul.f32.gmra.mxu0 %v4774
      %v4886 = vpop.f32.mrf.mxu0
      %v4887 = vadd.f32 0.0, %v4886
      %4888 = vmatmul.f32.gmra.mxu0 %v4777
      %v4889 = vpop.f32.mrf.mxu0
      %v4890 = vadd.f32 0.0, %v4889
      %4891 = vmatmul.f32.gmra.mxu0 %v4780
      %v4892 = vpop.f32.mrf.mxu0
      %v4893 = vadd.f32 0.0, %v4892
      %4894 = vmatmul.f32.gmra.mxu0 %v4783
      %v4895 = vpop.f32.mrf.mxu0
      %v4896 = vadd.f32 0.0, %v4895
      %4897 = vmatmul.f32.gmra.mxu0 %v4786
      %v4898 = vpop.f32.mrf.mxu0
      %v4899 = vadd.f32 0.0, %v4898
      %4900 = vmatmul.f32.gmra.mxu0 %v4789
      %v4901 = vpop.f32.mrf.mxu0
      %v4902 = vadd.f32 0.0, %v4901
      %4903 = vmatmul.f32.gmra.mxu0 %v4792
      %v4904 = vpop.f32.mrf.mxu0
      %v4905 = vadd.f32 0.0, %v4904
      %4906 = vmatmul.f32.gmra.mxu0 %v4795
      %v4907 = vpop.f32.mrf.mxu0
      %v4908 = vadd.f32 0.0, %v4907
      %4909 = vmatmul.f32.gmra.mxu0 %v4798
      %v4910 = vpop.f32.mrf.mxu0
      %v4911 = vadd.f32 0.0, %v4910
      %4912 = vmatmul.f32.gmra.mxu0 %v4801
      %v4913 = vpop.f32.mrf.mxu0
      %v4914 = vadd.f32 0.0, %v4913
      %4915 = vmatmul.f32.gmra.mxu0 %v4804
      %v4916 = vpop.f32.mrf.mxu0
      %v4917 = vadd.f32 0.0, %v4916
      %4918 = vmatmul.f32.gmra.mxu0 %v4807
      %v4919 = vpop.f32.mrf.mxu0
      %v4920 = vadd.f32 0.0, %v4919
      %4921 = vmatmul.f32.gmra.mxu0 %v4810
      %v4922 = vpop.f32.mrf.mxu0
      %v4923 = vadd.f32 0.0, %v4922
      %4924 = vmatmul.f32.gmra.mxu0 %v4813
      %v4925 = vpop.f32.mrf.mxu0
      %v4926 = vadd.f32 0.0, %v4925
      %4927 = vmatmul.f32.gmra.mxu0 %v4816
      %v4928 = vpop.f32.mrf.mxu0
      %v4929 = vadd.f32 0.0, %v4928
      %4930 = vmatmul.f32.gmra.mxu0 %v4819
      %v4931 = vpop.f32.mrf.mxu0
      %v4932 = vadd.f32 0.0, %v4931
      %4933 = vmatmul.f32.gmra.mxu0 %v4822
      %v4934 = vpop.f32.mrf.mxu0
      %v4935 = vadd.f32 0.0, %v4934
      %4936 = vmatmul.f32.gmra.mxu0 %v4825
      %v4937 = vpop.f32.mrf.mxu0
      %v4938 = vadd.f32 0.0, %v4937
      %4939 = vmatmul.f32.gmra.mxu0 %v4828
      %v4940 = vpop.f32.mrf.mxu0
      %v4941 = vadd.f32 0.0, %v4940
      %4942 = vmatmul.f32.gmra.mxu0 %v4831
      %v4943 = vpop.f32.mrf.mxu0
      %v4944 = vadd.f32 0.0, %v4943
      %4945 = vmatmul.f32.gmra.mxu0 %v4834
      %v4946 = vpop.f32.mrf.mxu0
      %v4947 = vadd.f32 0.0, %v4946
      %4948 = vmatmul.f32.gmra.mxu0 %v4837
      %v4949 = vpop.f32.mrf.mxu0
      %v4950 = vadd.f32 0.0, %v4949
      %4951 = vmatmul.f32.gmra.mxu0 %v4840
      %v4952 = vpop.f32.mrf.mxu0
      %v4953 = vadd.f32 0.0, %v4952
      %4954 = vdwg.mxu0
      %v4956 = vsel %vm1361, %v4660, 0
      %v4959 = vsel %vm1361, %v4661, 0
      %4961 = vmatpush.msra.mxu0 0.0
      %4962 = vmatpush.msra.mxu0 0.0
      %4963 = vmatpush.msra.mxu0 0.0
      %4964 = vmatpush.msra.mxu0 0.0
      %4965 = vmatpush.msra.mxu0 %v4703
      %4966 = vmatpush.msra.mxu0 %v4702
      %4967 = vmatpush.msra.mxu0 %v4701
      %4968 = vmatpush.msra.mxu0 %v4700
      %4969 = vmatpush.msra.mxu0 %v4699
      %4970 = vmatpush.msra.mxu0 %v4698
      %4971 = vmatpush.msra.mxu0 %v4697
      %4972 = vmatpush.msra.mxu0 %v4696
      %4973 = vmatpush.msra.mxu0 %v4695
      %4974 = vmatpush.msra.mxu0 %v4694
      %4975 = vmatpush.msra.mxu0 %v4693
      %4976 = vmatpush.msra.mxu0 %v4692
      %4977 = vmatmul.f32.gmra.mxu0 %v4956
      %v4978 = vpop.f32.mrf.mxu0
      %v4979 = vadd.f32 %v4860, %v4978
      %4980 = vmatmul.f32.gmra.mxu0 %v4959
      %v4981 = vpop.f32.mrf.mxu0
      %v4982 = vadd.f32 %v4863, %v4981
      %4983 = vmatmul.f32.gmra.mxu0 %v4747
      %v4984 = vpop.f32.mrf.mxu0
      %v4985 = vadd.f32 %v4866, %v4984
      %4986 = vmatmul.f32.gmra.mxu0 %v4750
      %v4987 = vpop.f32.mrf.mxu0
      %v4988 = vadd.f32 %v4869, %v4987
      %4989 = vmatmul.f32.gmra.mxu0 %v4753
      %v4990 = vpop.f32.mrf.mxu0
      %v4991 = vadd.f32 %v4872, %v4990
      %4992 = vmatmul.f32.gmra.mxu0 %v4756
      %v4993 = vpop.f32.mrf.mxu0
      %v4994 = vadd.f32 %v4875, %v4993
      %4995 = vmatmul.f32.gmra.mxu0 %v4759
      %v4996 = vpop.f32.mrf.mxu0
      %v4997 = vadd.f32 %v4878, %v4996
      %4998 = vmatmul.f32.gmra.mxu0 %v4762
      %v4999 = vpop.f32.mrf.mxu0
      %v5000 = vadd.f32 %v4881, %v4999
      %5001 = vmatmul.f32.gmra.mxu0 %v4765
      %v5002 = vpop.f32.mrf.mxu0
      %v5003 = vadd.f32 %v4884, %v5002
      %5004 = vmatmul.f32.gmra.mxu0 %v4768
      %v5005 = vpop.f32.mrf.mxu0
      %v5006 = vadd.f32 %v4887, %v5005
      %5007 = vmatmul.f32.gmra.mxu0 %v4771
      %v5008 = vpop.f32.mrf.mxu0
      %v5009 = vadd.f32 %v4890, %v5008
      %5010 = vmatmul.f32.gmra.mxu0 %v4774
      %v5011 = vpop.f32.mrf.mxu0
      %v5012 = vadd.f32 %v4893, %v5011
      %5013 = vmatmul.f32.gmra.mxu0 %v4777
      %v5014 = vpop.f32.mrf.mxu0
      %v5015 = vadd.f32 %v4896, %v5014
      %5016 = vmatmul.f32.gmra.mxu0 %v4780
      %v5017 = vpop.f32.mrf.mxu0
      %v5018 = vadd.f32 %v4899, %v5017
      %5019 = vmatmul.f32.gmra.mxu0 %v4783
      %v5020 = vpop.f32.mrf.mxu0
      %v5021 = vadd.f32 %v4902, %v5020
      %5022 = vmatmul.f32.gmra.mxu0 %v4786
      %v5023 = vpop.f32.mrf.mxu0
      %v5024 = vadd.f32 %v4905, %v5023
      %5025 = vmatmul.f32.gmra.mxu0 %v4789
      %v5026 = vpop.f32.mrf.mxu0
      %v5027 = vadd.f32 %v4908, %v5026
      %5028 = vmatmul.f32.gmra.mxu0 %v4792
      %v5029 = vpop.f32.mrf.mxu0
      %v5030 = vadd.f32 %v4911, %v5029
      %5031 = vmatmul.f32.gmra.mxu0 %v4795
      %v5032 = vpop.f32.mrf.mxu0
      %v5033 = vadd.f32 %v4914, %v5032
      %5034 = vmatmul.f32.gmra.mxu0 %v4798
      %v5035 = vpop.f32.mrf.mxu0
      %v5036 = vadd.f32 %v4917, %v5035
      %5037 = vmatmul.f32.gmra.mxu0 %v4801
      %v5038 = vpop.f32.mrf.mxu0
      %v5039 = vadd.f32 %v4920, %v5038
      %5040 = vmatmul.f32.gmra.mxu0 %v4804
      %v5041 = vpop.f32.mrf.mxu0
      %v5042 = vadd.f32 %v4923, %v5041
      %5043 = vmatmul.f32.gmra.mxu0 %v4807
      %v5044 = vpop.f32.mrf.mxu0
      %v5045 = vadd.f32 %v4926, %v5044
      %5046 = vmatmul.f32.gmra.mxu0 %v4810
      %v5047 = vpop.f32.mrf.mxu0
      %v5048 = vadd.f32 %v4929, %v5047
      %5049 = vmatmul.f32.gmra.mxu0 %v4813
      %v5050 = vpop.f32.mrf.mxu0
      %v5051 = vadd.f32 %v4932, %v5050
      %5052 = vmatmul.f32.gmra.mxu0 %v4816
      %v5053 = vpop.f32.mrf.mxu0
      %v5054 = vadd.f32 %v4935, %v5053
      %5055 = vmatmul.f32.gmra.mxu0 %v4819
      %v5056 = vpop.f32.mrf.mxu0
      %v5057 = vadd.f32 %v4938, %v5056
      %5058 = vmatmul.f32.gmra.mxu0 %v4822
      %v5059 = vpop.f32.mrf.mxu0
      %v5060 = vadd.f32 %v4941, %v5059
      %5061 = vmatmul.f32.gmra.mxu0 %v4825
      %v5062 = vpop.f32.mrf.mxu0
      %v5063 = vadd.f32 %v4944, %v5062
      %5064 = vmatmul.f32.gmra.mxu0 %v4828
      %v5065 = vpop.f32.mrf.mxu0
      %v5066 = vadd.f32 %v4947, %v5065
      %5067 = vmatmul.f32.gmra.mxu0 %v4831
      %v5068 = vpop.f32.mrf.mxu0
      %v5069 = vadd.f32 %v4950, %v5068
      %5070 = vmatmul.f32.gmra.mxu0 %v4834
      %v5071 = vpop.f32.mrf.mxu0
      %v5072 = vadd.f32 %v4953, %v5071
      %5073 = vdwg.mxu0
      %v5077 = vrot.slane %v4225, 1
      %v5078 = vrot.slane %v4226, 1
      %v5079 = vsel %vm509, %v5077, %v5078
      %v5080 = vrot.slane %v4227, 1
      %v5081 = vsel %vm509, %v5078, %v5080
      %v5082 = vrot.slane %v4225, 2
      %v5083 = vrot.slane %v4226, 2
      %v5084 = vsel %vm590, %v5082, %v5083
      %v5085 = vrot.slane %v4227, 2
      %v5086 = vsel %vm590, %v5083, %v5085
      %5087 = vrot.lane.b32.xlu0 %v5079, 32
      %v5088 = vpop.permute.xlu0 %5087
      %5089 = vrot.lane.b32.xlu0 %v5081, 32
      %v5090 = vpop.permute.xlu0 %5089
      %5093 = vrot.lane.b32.xlu0 %v5084, 64
      %v5094 = vpop.permute.xlu0 %5093
      %5095 = vrot.lane.b32.xlu0 %v5086, 64
      %v5096 = vpop.permute.xlu0 %5095
      %v5099 = vsel %vm1295, %v4225, %v5088
      %v5100 = vsel %vm1295, %v4226, %v5090
      %v5101 = vsel %vm1328, %v5099, %v5094
      %v5102 = vsel %vm1328, %v5100, %v5096
      %s5103 = scalar_lea.vmem %s3, 192
      %v5104 = vld [vmem:[%s5103] sm:$0xff]
      %v5105 = vld [vmem:[%s5103 + $0x8] sm:$0xff]
      %v5106 = vld [vmem:[%s5103 + $0x10] sm:$0xff]
      %v5107 = vld [vmem:[%s5103 + $0x18] sm:$0xff]
      %v5108 = vld [vmem:[%s5103 + $0x20] sm:$0xff]
      %v5109 = vld [vmem:[%s5103 + $0x28] sm:$0xff]
      %v5110 = vld [vmem:[%s5103 + $0x30] sm:$0xff]
      %v5111 = vld [vmem:[%s5103 + $0x38] sm:$0xff]
      %v5112 = vld [vmem:[%s5103 + $0x40] sm:$0xff]
      %v5113 = vld [vmem:[%s5103 + $0x48] sm:$0xff]
      %v5114 = vld [vmem:[%s5103 + $0x50] sm:$0xff]
      %v5115 = vld [vmem:[%s5103 + $0x58] sm:$0xff]
      %v5117 = vsel %vm1361, %v5101, 0
      %v5120 = vsel %vm1361, %v5102, 0
      %5122 = vmatpush.msra.mxu0 0.0
      %5123 = vmatpush.msra.mxu0 0.0
      %5124 = vmatpush.msra.mxu0 0.0
      %5125 = vmatpush.msra.mxu0 0.0
      %5126 = vmatpush.msra.mxu0 %v5115
      %5127 = vmatpush.msra.mxu0 %v5114
      %5128 = vmatpush.msra.mxu0 %v5113
      %5129 = vmatpush.msra.mxu0 %v5112
      %5130 = vmatpush.msra.mxu0 %v5111
      %5131 = vmatpush.msra.mxu0 %v5110
      %5132 = vmatpush.msra.mxu0 %v5109
      %5133 = vmatpush.msra.mxu0 %v5108
      %5134 = vmatpush.msra.mxu0 %v5107
      %5135 = vmatpush.msra.mxu0 %v5106
      %5136 = vmatpush.msra.mxu0 %v5105
      %5137 = vmatpush.msra.mxu0 %v5104
      %5138 = vmatmul.f32.gmra.mxu0 %v4753
      %v5139 = vpop.f32.mrf.mxu0
      %v5140 = vadd.f32 0.0, %v5139
      %5141 = vmatmul.f32.gmra.mxu0 %v4756
      %v5142 = vpop.f32.mrf.mxu0
      %v5143 = vadd.f32 0.0, %v5142
      %5144 = vmatmul.f32.gmra.mxu0 %v4759
      %v5145 = vpop.f32.mrf.mxu0
      %v5146 = vadd.f32 0.0, %v5145
      %5147 = vmatmul.f32.gmra.mxu0 %v4762
      %v5148 = vpop.f32.mrf.mxu0
      %v5149 = vadd.f32 0.0, %v5148
      %5150 = vmatmul.f32.gmra.mxu0 %v4765
      %v5151 = vpop.f32.mrf.mxu0
      %v5152 = vadd.f32 0.0, %v5151
      %5153 = vmatmul.f32.gmra.mxu0 %v4768
      %v5154 = vpop.f32.mrf.mxu0
      %v5155 = vadd.f32 0.0, %v5154
      %5156 = vmatmul.f32.gmra.mxu0 %v4771
      %v5157 = vpop.f32.mrf.mxu0
      %v5158 = vadd.f32 0.0, %v5157
      %5159 = vmatmul.f32.gmra.mxu0 %v4774
      %v5160 = vpop.f32.mrf.mxu0
      %v5161 = vadd.f32 0.0, %v5160
      %5162 = vmatmul.f32.gmra.mxu0 %v4777
      %v5163 = vpop.f32.mrf.mxu0
      %v5164 = vadd.f32 0.0, %v5163
      %5165 = vmatmul.f32.gmra.mxu0 %v4780
      %v5166 = vpop.f32.mrf.mxu0
      %v5167 = vadd.f32 0.0, %v5166
      %5168 = vmatmul.f32.gmra.mxu0 %v4783
      %v5169 = vpop.f32.mrf.mxu0
      %v5170 = vadd.f32 0.0, %v5169
      %5171 = vmatmul.f32.gmra.mxu0 %v4786
      %v5172 = vpop.f32.mrf.mxu0
      %v5173 = vadd.f32 0.0, %v5172
      %5174 = vmatmul.f32.gmra.mxu0 %v4789
      %v5175 = vpop.f32.mrf.mxu0
      %v5176 = vadd.f32 0.0, %v5175
      %5177 = vmatmul.f32.gmra.mxu0 %v4792
      %v5178 = vpop.f32.mrf.mxu0
      %v5179 = vadd.f32 0.0, %v5178
      %5180 = vmatmul.f32.gmra.mxu0 %v4795
      %v5181 = vpop.f32.mrf.mxu0
      %v5182 = vadd.f32 0.0, %v5181
      %5183 = vmatmul.f32.gmra.mxu0 %v4798
      %v5184 = vpop.f32.mrf.mxu0
      %v5185 = vadd.f32 0.0, %v5184
      %5186 = vmatmul.f32.gmra.mxu0 %v4801
      %v5187 = vpop.f32.mrf.mxu0
      %v5188 = vadd.f32 0.0, %v5187
      %5189 = vmatmul.f32.gmra.mxu0 %v4804
      %v5190 = vpop.f32.mrf.mxu0
      %v5191 = vadd.f32 0.0, %v5190
      %5192 = vmatmul.f32.gmra.mxu0 %v4807
      %v5193 = vpop.f32.mrf.mxu0
      %v5194 = vadd.f32 0.0, %v5193
      %5195 = vmatmul.f32.gmra.mxu0 %v4810
      %v5196 = vpop.f32.mrf.mxu0
      %v5197 = vadd.f32 0.0, %v5196
      %5198 = vmatmul.f32.gmra.mxu0 %v4813
      %v5199 = vpop.f32.mrf.mxu0
      %v5200 = vadd.f32 0.0, %v5199
      %5201 = vmatmul.f32.gmra.mxu0 %v4816
      %v5202 = vpop.f32.mrf.mxu0
      %v5203 = vadd.f32 0.0, %v5202
      %5204 = vmatmul.f32.gmra.mxu0 %v4819
      %v5205 = vpop.f32.mrf.mxu0
      %v5206 = vadd.f32 0.0, %v5205
      %5207 = vmatmul.f32.gmra.mxu0 %v4822
      %v5208 = vpop.f32.mrf.mxu0
      %v5209 = vadd.f32 0.0, %v5208
      %5210 = vmatmul.f32.gmra.mxu0 %v4825
      %v5211 = vpop.f32.mrf.mxu0
      %v5212 = vadd.f32 0.0, %v5211
      %5213 = vmatmul.f32.gmra.mxu0 %v4828
      %v5214 = vpop.f32.mrf.mxu0
      %v5215 = vadd.f32 0.0, %v5214
      %5216 = vmatmul.f32.gmra.mxu0 %v4831
      %v5217 = vpop.f32.mrf.mxu0
      %v5218 = vadd.f32 0.0, %v5217
      %5219 = vmatmul.f32.gmra.mxu0 %v4834
      %v5220 = vpop.f32.mrf.mxu0
      %v5221 = vadd.f32 0.0, %v5220
      %5222 = vmatmul.f32.gmra.mxu0 %v4837
      %v5223 = vpop.f32.mrf.mxu0
      %v5224 = vadd.f32 0.0, %v5223
      %5225 = vmatmul.f32.gmra.mxu0 %v4840
      %v5226 = vpop.f32.mrf.mxu0
      %v5227 = vadd.f32 0.0, %v5226
      %5228 = vmatmul.f32.gmra.mxu0 %v5117
      %v5229 = vpop.f32.mrf.mxu0
      %v5230 = vadd.f32 0.0, %v5229
      %5231 = vmatmul.f32.gmra.mxu0 %v5120
      %v5232 = vpop.f32.mrf.mxu0
      %v5233 = vadd.f32 0.0, %v5232
      %5234 = vdwg.mxu0
      %v5235 = vadd.f32 %v4979, %v5140
      %v5236 = vadd.f32 %v4982, %v5143
      %v5237 = vadd.f32 %v4985, %v5146
      %v5238 = vadd.f32 %v4988, %v5149
      %v5239 = vadd.f32 %v4991, %v5152
      %v5240 = vadd.f32 %v4994, %v5155
      %v5241 = vadd.f32 %v4997, %v5158
      %v5242 = vadd.f32 %v5000, %v5161
      %v5243 = vadd.f32 %v5003, %v5164
      %v5244 = vadd.f32 %v5006, %v5167
      %v5245 = vadd.f32 %v5009, %v5170
      %v5246 = vadd.f32 %v5012, %v5173
      %v5247 = vadd.f32 %v5015, %v5176
      %v5248 = vadd.f32 %v5018, %v5179
      %v5249 = vadd.f32 %v5021, %v5182
      %v5250 = vadd.f32 %v5024, %v5185
      %v5251 = vadd.f32 %v5027, %v5188
      %v5252 = vadd.f32 %v5030, %v5191
      %v5253 = vadd.f32 %v5033, %v5194
      %v5254 = vadd.f32 %v5036, %v5197
      %v5255 = vadd.f32 %v5039, %v5200
      %v5256 = vadd.f32 %v5042, %v5203
      %v5257 = vadd.f32 %v5045, %v5206
      %v5258 = vadd.f32 %v5048, %v5209
      %v5259 = vadd.f32 %v5051, %v5212
      %v5260 = vadd.f32 %v5054, %v5215
      %v5261 = vadd.f32 %v5057, %v5218
      %v5262 = vadd.f32 %v5060, %v5221
      %v5263 = vadd.f32 %v5063, %v5224
      %v5264 = vadd.f32 %v5066, %v5227
      %v5265 = vadd.f32 %v5069, %v5230
      %v5266 = vadd.f32 %v5072, %v5233
      %v5267 = vld [vmem:[%s4] sm:$0x1]
      %v5269 = vperm.slane %v5267, 0
      %v5271 = vadd.f32 %v5235, %v5269
      %v5272 = vadd.f32 %v5236, %v5269
      %v5273 = vadd.f32 %v5237, %v5269
      %v5274 = vadd.f32 %v5238, %v5269
      %v5275 = vadd.f32 %v5239, %v5269
      %v5276 = vadd.f32 %v5240, %v5269
      %v5277 = vadd.f32 %v5241, %v5269
      %v5278 = vadd.f32 %v5242, %v5269
      %v5279 = vadd.f32 %v5243, %v5269
      %v5280 = vadd.f32 %v5244, %v5269
      %v5281 = vadd.f32 %v5245, %v5269
      %v5282 = vadd.f32 %v5246, %v5269
      %v5283 = vadd.f32 %v5247, %v5269
      %v5284 = vadd.f32 %v5248, %v5269
      %v5285 = vadd.f32 %v5249, %v5269
      %v5286 = vadd.f32 %v5250, %v5269
      %v5287 = vadd.f32 %v5251, %v5269
      %v5288 = vadd.f32 %v5252, %v5269
      %v5289 = vadd.f32 %v5253, %v5269
      %v5290 = vadd.f32 %v5254, %v5269
      %v5291 = vadd.f32 %v5255, %v5269
      %v5292 = vadd.f32 %v5256, %v5269
      %v5293 = vadd.f32 %v5257, %v5269
      %v5294 = vadd.f32 %v5258, %v5269
      %v5295 = vadd.f32 %v5259, %v5269
      %v5296 = vadd.f32 %v5260, %v5269
      %v5297 = vadd.f32 %v5261, %v5269
      %v5298 = vadd.f32 %v5262, %v5269
      %v5299 = vadd.f32 %v5263, %v5269
      %v5300 = vadd.f32 %v5264, %v5269
      %v5301 = vadd.f32 %v5265, %v5269
      %v5302 = vadd.f32 %v5266, %v5269
      %v5303 = vmax.f32 %v5271, 0.0
      %v5304 = vmax.f32 %v5272, 0.0
      %v5305 = vmax.f32 %v5273, 0.0
      %v5306 = vmax.f32 %v5274, 0.0
      %v5307 = vmax.f32 %v5275, 0.0
      %v5308 = vmax.f32 %v5276, 0.0
      %v5309 = vmax.f32 %v5277, 0.0
      %v5310 = vmax.f32 %v5278, 0.0
      %v5311 = vmax.f32 %v5279, 0.0
      %v5312 = vmax.f32 %v5280, 0.0
      %v5313 = vmax.f32 %v5281, 0.0
      %v5314 = vmax.f32 %v5282, 0.0
      %v5315 = vmax.f32 %v5283, 0.0
      %v5316 = vmax.f32 %v5284, 0.0
      %v5317 = vmax.f32 %v5285, 0.0
      %v5318 = vmax.f32 %v5286, 0.0
      %v5319 = vmax.f32 %v5287, 0.0
      %v5320 = vmax.f32 %v5288, 0.0
      %v5321 = vmax.f32 %v5289, 0.0
      %v5322 = vmax.f32 %v5290, 0.0
      %v5323 = vmax.f32 %v5291, 0.0
      %v5324 = vmax.f32 %v5292, 0.0
      %v5325 = vmax.f32 %v5293, 0.0
      %v5326 = vmax.f32 %v5294, 0.0
      %v5327 = vmax.f32 %v5295, 0.0
      %v5328 = vmax.f32 %v5296, 0.0
      %v5329 = vmax.f32 %v5297, 0.0
      %v5330 = vmax.f32 %v5298, 0.0
      %v5331 = vmax.f32 %v5299, 0.0
      %v5332 = vmax.f32 %v5300, 0.0
      %v5333 = vmax.f32 %v5301, 0.0
      %v5334 = vmax.f32 %v5302, 0.0
      %vm5335 = vcmask 64512
      %5336 = vst.msk [vmem:[%s260] sm:$0xff] %vm5335, %v5303
      %5337 = vst.msk [vmem:[%s260 + $0x8] sm:$0xff] %vm5335, %v5304
      %5338 = vst.msk [vmem:[%s260 + $0x10] sm:$0xff] %vm5335, %v5305
      %5339 = vst.msk [vmem:[%s260 + $0x18] sm:$0xff] %vm5335, %v5306
      %5340 = vst.msk [vmem:[%s260 + $0x20] sm:$0xff] %vm5335, %v5307
      %5341 = vst.msk [vmem:[%s260 + $0x28] sm:$0xff] %vm5335, %v5308
      %5342 = vst.msk [vmem:[%s260 + $0x30] sm:$0xff] %vm5335, %v5309
      %5343 = vst.msk [vmem:[%s260 + $0x38] sm:$0xff] %vm5335, %v5310
      %5344 = vst.msk [vmem:[%s260 + $0x40] sm:$0xff] %vm5335, %v5311
      %5345 = vst.msk [vmem:[%s260 + $0x48] sm:$0xff] %vm5335, %v5312
      %5346 = vst.msk [vmem:[%s260 + $0x50] sm:$0xff] %vm5335, %v5313
      %5347 = vst.msk [vmem:[%s260 + $0x58] sm:$0xff] %vm5335, %v5314
      %5348 = vst.msk [vmem:[%s260 + $0x60] sm:$0xff] %vm5335, %v5315
      %5349 = vst.msk [vmem:[%s260 + $0x68] sm:$0xff] %vm5335, %v5316
      %5350 = vst.msk [vmem:[%s260 + $0x70] sm:$0xff] %vm5335, %v5317
      %5351 = vst.msk [vmem:[%s260 + $0x78] sm:$0xff] %vm5335, %v5318
      %5352 = vst.msk [vmem:[%s260 + $0x80] sm:$0xff] %vm5335, %v5319
      %5353 = vst.msk [vmem:[%s260 + $0x88] sm:$0xff] %vm5335, %v5320
      %5354 = vst.msk [vmem:[%s260 + $0x90] sm:$0xff] %vm5335, %v5321
      %5355 = vst.msk [vmem:[%s260 + $0x98] sm:$0xff] %vm5335, %v5322
      %5356 = vst.msk [vmem:[%s260 + $0xa0] sm:$0xff] %vm5335, %v5323
      %5357 = vst.msk [vmem:[%s260 + $0xa8] sm:$0xff] %vm5335, %v5324
      %5358 = vst.msk [vmem:[%s260 + $0xb0] sm:$0xff] %vm5335, %v5325
      %5359 = vst.msk [vmem:[%s260 + $0xb8] sm:$0xff] %vm5335, %v5326
      %5360 = vst.msk [vmem:[%s260 + $0xc0] sm:$0xff] %vm5335, %v5327
      %5361 = vst.msk [vmem:[%s260 + $0xc8] sm:$0xff] %vm5335, %v5328
      %5362 = vst.msk [vmem:[%s260 + $0xd0] sm:$0xff] %vm5335, %v5329
      %5363 = vst.msk [vmem:[%s260 + $0xd8] sm:$0xff] %vm5335, %v5330
      %5364 = vst.msk [vmem:[%s260 + $0xe0] sm:$0xff] %vm5335, %v5331
      %5365 = vst.msk [vmem:[%s260 + $0xe8] sm:$0xff] %vm5335, %v5332
      %5366 = vst.msk [vmem:[%s260 + $0xf0] sm:$0xff] %vm5335, %v5333
      %5367 = vst.msk [vmem:[%s260 + $0xf8] sm:$0xff] %vm5335, %v5334
      %p5368 = scmp.lt.s32.totalorder %s20, 1
      %s5369 = scalar_select %p5368, %s20, 1
      %p5370 = scmp.lt.s32.totalorder %s21, 3
      %s5371 = scalar_select %p5370, %s21, 3
      %s5372 = smul.addr %s5371, 32
      %s5373 = smul.addr %s5369, 128
      %s5374 = sadd.s32 %s5372, %s5373
      %s5375 = smul.addr %s5374, 8
      %s5376 = scalar_lea.vmem %s5, %s5375
      // Predicated region
      $region45: #{convlstm_forward.3} parent=39 // pred_check
        %p5377 = pneg %p160
      $region46: #{convlstm_forward.3} parent=39 // pred_check_branch
        %5379 = sbr.rel (%p5377) target = $region48
      $region47: #{convlstm_forward.3} parent=39 // pred_region
        _
      $region48: #{convlstm_forward.3} parent=39 // pred_fallthru
        _
    $region40: #{convlstm_forward.3} parent=5 // pred_fallthru
      _
    %p5380 = scmp.le.s32.totalorder 2, %s11
    // Predicated region
    $region49: #{convlstm_forward.3} parent=5 // pred_check
      %p5381 = pneg %p5380
    $region50: #{convlstm_forward.3} parent=5 // pred_check_branch
      %5383 = sbr.rel (%p5381) target = $region52
    $region51: #{convlstm_forward.3} parent=5 // pred_region
      %s5384 = ssub.s32 %s11, 2
      // Predicated region
      $region53: #{convlstm_forward.3} parent=51 // pred_check
        %p5385 = pneg %p166
      $region54: #{convlstm_forward.3} parent=51 // pred_check_branch
        %5387 = sbr.rel (%p5385) target = $region56
      $region55: #{convlstm_forward.3} parent=51 // pred_region
        %p5388 = scmp.lt.s32.totalorder %s22, 1
        %s5389 = scalar_select %p5388, %s22, 1
        %p5390 = scmp.lt.s32.totalorder %s23, 3
        %s5391 = scalar_select %p5390, %s23, 3
        %s5392 = smul.addr %s5391, 32
        %s5393 = smul.addr %s5389, 128
        %s5394 = sadd.s32 %s5392, %s5393
        %s5395 = smul.addr %s5394, 8
        %s5396 = scalar_lea.vmem %s5, %s5395
      $region56: #{convlstm_forward.3} parent=51 // pred_fallthru
        _
    $region52: #{convlstm_forward.3} parent=5 // pred_fallthru
      _
  $region6: #{convlstm_forward.3} parent=0 // loop_footer
    %s15 = sadd.s32 1, %s11
  $region7: #{convlstm_forward.3} parent=0 // loop_footer_branch
    %10 = sbr.rel target = $region3
  $region8: #{convlstm_forward.3} parent=0 // loop_exit
    _

</llo_original>
